<compile_context>
chip_gen: v7x
topology: tpu7x:2x2x1
jax: 0.10.0
libtpu: 0.0.40
codegen_flags: <defaults>
</compile_context>

<pallas_src>
import functools

import numpy as np

import jax
import jax.numpy as jnp
from jax import lax
from jax.experimental import pallas as pl
from jax.experimental.pallas import tpu as pltpu


# ---------------------------------------------------------------------------
# Hyper-parameters (matching the params object of the PyTorch module)
# ---------------------------------------------------------------------------
N_INITIAL_FILTERS = 8
DEPTH = 2
BLOCKS_PER_LAYER = 2
N_OUTPUT_FILTERS = 8  # growth_rate = multiplicative
N_PLANES = 3          # dimension == 2 case: 3 planes, conv depth 1


# ---------------------------------------------------------------------------
# Deterministic parameter init
# ---------------------------------------------------------------------------
def _conv_init(key, kh, kw, cin, cout):
    wkey, bkey = jax.random.split(key)
    std = (2.0 / (kh * kw * cin)) ** 0.5
    w = jax.random.normal(wkey, (kh, kw, cin, cout), jnp.float32) * std
    b = jax.random.normal(bkey, (1, cout), jnp.float32) * 0.01
    return w, b


def make_encoder_params(key):
    params = {}
    keys = jax.random.split(key, 64)
    k = iter(keys)
    cur = N_INITIAL_FILTERS
    params["initial"] = _conv_init(next(k), 5, 5, 1, cur)
    layers = []
    for _ in range(DEPTH):
        blocks = [_conv_init(next(k), 3, 3, cur, cur)
                  for _ in range(BLOCKS_PER_LAYER)]
        nxt = cur * 2
        down = _conv_init(next(k), 2, 2, cur, nxt)
        layers.append({"blocks": blocks, "down": down})
        cur = nxt
    params["layers"] = layers
    params["final_blocks"] = [_conv_init(next(k), 3, 3, cur, cur)
                              for _ in range(BLOCKS_PER_LAYER)]
    params["bottleneck"] = _conv_init(next(k), 1, 1, cur, N_OUTPUT_FILTERS)
    return params


# ---------------------------------------------------------------------------
# Host-side packing: conv weights -> block-banded "row matrices"
#   activation row layout: length W*C, index = x*C + c
#   R[i][xin*Cin + ci, xout*Cout + co] = W[i, j, ci, co]  with
#       xin = xout*stride + j - pad   (out-of-range xin stays 0 -> horizontal
#                                      zero padding is implicit)
# ---------------------------------------------------------------------------
def _conv_row_mats(w, w_in, stride, pad):
    w = np.asarray(jax.device_get(w), np.float32)
    kh, kw, cin, cout = w.shape
    w_out = (w_in + 2 * pad - kw) // stride + 1
    mats = np.zeros((kh, w_in * cin, w_out * cout), np.float32)
    for i in range(kh):
        for xo in range(w_out):
            for j in range(kw):
                xi = xo * stride + j - pad
                if 0 <= xi < w_in:
                    mats[i, xi * cin:(xi + 1) * cin,
                         xo * cout:(xo + 1) * cout] = w[i, j]
    return mats


def _bias_row(b, w_out):
    b = np.asarray(jax.device_get(b), np.float32).reshape(-1)
    return np.tile(b, w_out)[None, :]


def pack_encoder_params(params, H, W, n_planes):
    """Pack all weights into stacked, MXU-ready arrays (done once)."""
    bpl = len(params["layers"][0]["blocks"])

    # Stage geometry (each BlockSeries runs BEFORE its downsample, plus the
    # final BlockSeries after the last downsample).
    H_st, W_st, C_st = [], [], []
    h, w = H, W
    c = params["initial"][0].shape[-1]
    for layer in params["layers"]:
        H_st.append(h); W_st.append(w); C_st.append(c)
        c = layer["down"][0].shape[-1]
        h //= 2; w //= 2
    H_st.append(h); W_st.append(w); C_st.append(c)

    lanes_set = {W_st[i] * C_st[i] for i in range(len(W_st))}
    assert len(lanes_set) == 1, "kernel assumes W*C is constant across stages"

    wi, bi = params["initial"]
    kh0 = wi.shape[0]
    r_init = _conv_row_mats(wi, W, stride=1, pad=(kh0 - 1) // 2)   # (5,16,128)
    b_init = _bias_row(bi, W)

    blk_R, blk_B, dwn_R, dwn_B = [], [], [], []
    for s, layer in enumerate(params["layers"]):
        for (bw, bb) in layer["blocks"]:
            taps = _conv_row_mats(bw, W_st[s], 1, 1)               # (3,128,128)
            blk_R.append(np.concatenate(list(taps), axis=0))       # K-stacked
            blk_B.append(_bias_row(bb, W_st[s]))
        dw, db = layer["down"]
        dwn_R.append(_conv_row_mats(dw, W_st[s], 2, 0))            # (2,128,128)
        dwn_B.append(_bias_row(db, W_st[s] // 2))
    for (bw, bb) in params["final_blocks"]:
        taps = _conv_row_mats(bw, W_st[-1], 1, 1)
        blk_R.append(np.concatenate(list(taps), axis=0))
        blk_B.append(_bias_row(bb, W_st[-1]))

    assert len({m.shape for m in blk_R}) == 1
    assert len({m.shape for m in dwn_R}) == 1

    # Fused bottleneck + average pool: out[b] = tanh(rowsum_b @ mbp + bbp)
    wb, bbn = params["bottleneck"]
    wb = np.asarray(jax.device_get(wb), np.float32)[0, 0]          # (Cin,Cout)
    hf, wf, cf = H_st[-1], W_st[-1], C_st[-1]
    count = n_planes * hf * wf
    mbp = np.zeros((wf * cf, wb.shape[1]), np.float32)
    for xcol in range(wf):
        mbp[xcol * cf:(xcol + 1) * cf, :] = wb / count
    bbp = np.asarray(jax.device_get(bbn), np.float32).reshape(1, -1)

    return dict(
        r_init=jnp.asarray(r_init, jnp.bfloat16),                  # (5,16,128)
        b_init=jnp.asarray(b_init, jnp.float32),                   # (1,128)
        blk_R=jnp.asarray(np.stack(blk_R), jnp.bfloat16),          # (6,384,128)
        blk_B=jnp.asarray(np.stack(blk_B), jnp.float32),           # (6,1,128)
        dwn_R=jnp.asarray(np.stack(dwn_R), jnp.bfloat16),          # (2,2,128,128)
        dwn_B=jnp.asarray(np.stack(dwn_B), jnp.float32),           # (2,1,128)
        mbp=jnp.asarray(mbp, jnp.float32),                         # (128,8)
        bbp=jnp.asarray(bbp, jnp.float32),                         # (1,8)
        H_stages=tuple(H_st), W_stages=tuple(W_st), C_stages=tuple(C_st),
        blocks_per_layer=bpl, kh_init=kh0,
        n_planes=n_planes, H=H, W=W, n_out=wb.shape[1],
    )


# ---------------------------------------------------------------------------
# The fused Pallas kernel: whole encoder for BB batch elements per grid step
# ---------------------------------------------------------------------------
def _encoder_kernel(cfg, x_ref, rinit_ref, binit_ref, blkR_ref, blkB_ref,
                    dwnR_ref, dwnB_ref, mbp_ref, bbp_ref, out_ref, *scratch):
    (BB, D, H, kh0, hp_in, h_st, hp_st, bpl, n_out) = cfg
    P = BB * D                                  # planes handled per grid step
    n_stages = len(h_st)
    f32, bf16 = jnp.float32, jnp.bfloat16

    xstage = scratch[0]                                     # (P*hp_in, W) f32
    bufs = [(scratch[1 + 2 * s], scratch[2 + 2 * s]) for s in range(n_stages)]
    wide = scratch[1 + 2 * n_stages]                        # (M0, 3*128) bf16
    lanes = bufs[0][0].shape[1]                             # == W*C everywhere

    zrow1 = jnp.zeros((1, lanes), f32)
    zrow2 = jnp.zeros((2, lanes), f32)
    zin2 = jnp.zeros((2, xstage.shape[1]), f32)

    # ---- zero ONLY the padding rows (interiors are fully rewritten each
    # step).  Done every step (not just program_id==0) so the kernel stays
    # correct if the parallel grid axis is sharded across TensorCores.
    for p in range(P):
        xstage[pl.ds(p * hp_in, 2), :] = zin2
        xstage[pl.ds(p * hp_in + 2 + H, 2), :] = zin2
    for s in range(n_stages):
        hp = hp_st[s]
        for buf in bufs[s]:
            buf[pl.ds(0, 1), :] = zrow1
            buf[pl.ds(P * hp - 1, 1), :] = zrow1
            for p in range(1, P):
                buf[pl.ds(p * hp - 1, 2), :] = zrow2

    # ---- stage raw input planes into the zero-framed xstage buffer ---------
    for b in range(BB):
        for n in range(D):
            p = b * D + n
            xstage[pl.ds(p * hp_in + 2, H), :] = x_ref[b, pl.ds(n * H, H), :]

    # ---- initial 5x5 conv (stride 1, 'same'), no activation ----------------
    # One fat shifted-row matmul per vertical tap: each (16,128) weight tile
    # is pushed once and M spans every plane of every batched element.
    M0 = P * hp_in - (kh0 - 1)
    acc = jnp.broadcast_to(binit_ref[...], (M0, lanes))
    for i in range(kh0):
        acc = acc + jnp.dot(xstage[pl.ds(i, M0), :].astype(bf16),
                            rinit_ref[i], preferred_element_type=f32)
    h0, hp0 = h_st[0], hp_st[0]
    dst = bufs[0][0]
    for p in range(P):
        dst[pl.ds(p * hp0 + 1, h0), :] = acc[p * hp_in:p * hp_in + h0, :]

    # ---- block series per stage + 2x2/stride-2 downsample between stages ---
    blk = 0
    cur = bufs[0][0]
    for s in range(n_stages):
        hp = hp_st[s]
        rows = P * hp
        Mb = rows - 2
        other = bufs[s][1]
        for _ in range(bpl):
            # 3x3 conv + ReLU: stage the 3 shifted row-views side by side
            # along lanes (bf16, K = 3*128) so one wide matmul uses the full
            # MXU width on v6e/v7x and each weight is pushed once.  Output
            # rows that would mix neighbouring planes land only in padding
            # rows, which are re-zeroed right after the store.
            for i in range(3):
                wide[pl.ds(0, Mb), pl.ds(i * lanes, lanes)] = (
                    cur[pl.ds(i, Mb), :].astype(bf16))
            acc = jnp.dot(wide[pl.ds(0, Mb), :], blkR_ref[blk],
                          preferred_element_type=f32)
            other[pl.ds(1, Mb), :] = jnp.maximum(acc + blkB_ref[blk], 0.0)
            for p in range(1, P):           # restore inter-plane zero padding
                other[pl.ds(p * hp - 1, 2), :] = zrow2
            cur, other = other, cur
            blk += 1
        if s + 1 < n_stages:
            # 2x2 stride-2 conv + ReLU, channels doubled.  One full-buffer
            # strided matmul per vertical tap (strided reads stay on f32
            # scratch); junk rows straddling plane boundaries are never stored.
            hn, hpn = h_st[s + 1], hp_st[s + 1]
            half = hp // 2
            Md = (rows - 2) // 2
            acc = jnp.broadcast_to(dwnB_ref[s], (Md, lanes))
            for i in range(2):
                acc = acc + jnp.dot(cur[pl.ds(1 + i, Md, 2), :].astype(bf16),
                                    dwnR_ref[s, i], preferred_element_type=f32)
            acc = jnp.maximum(acc, 0.0)
            nxt = bufs[s + 1][0]
            for p in range(P):
                nxt[pl.ds(p * hpn + 1, hn), :] = acc[p * half:p * half + hn, :]
            cur = nxt

    # ---- fused bottleneck (1x1) + per-element global average pool + tanh ---
    # Padding rows are zero, so a plain row-sum over each element's block of
    # rows equals the interior sum; 1/(planes*h*w) and the per-x fold are
    # baked into mbp at pack time.
    hpf = hp_st[-1]
    rows_f = D * hpf
    totals = jnp.concatenate(
        [jnp.sum(cur[pl.ds(b * rows_f, rows_f), :], axis=0, keepdims=True)
         for b in range(BB)], axis=0)                        # (BB, lanes)
    feat = jnp.dot(totals, mbp_ref[...], preferred_element_type=f32)
    feat = jnp.tanh(feat + bbp_ref[...])                     # (BB, n_out)
    out_ref[...] = feat[None]                                # (1, BB, n_out)


# ---------------------------------------------------------------------------
# Forward pass wrapper
# ---------------------------------------------------------------------------
def encoder_forward(packed, x, batch_block=None):
    B = x.shape[0]
    D, H, W = packed["n_planes"], packed["H"], packed["W"]
    kh0 = packed["kh_init"]
    ph0 = (kh0 - 1) // 2
    hp_in = H + 2 * ph0
    h_st = packed["H_stages"]
    hp_st = tuple(h + 2 for h in h_st)
    lanes = packed["W_stages"][0] * packed["C_stages"][0]
    n_out = packed["n_out"]
    bpl = packed["blocks_per_layer"]

    # Batch blocking: several elements per grid step amortizes per-step
    # overhead and MXU weight pushes.  Default keeps >= 2 grid steps so the
    # "parallel" axis can still shard across v7x's two TensorCores; on
    # v5e/v6e a single fat step (batch_block=B) is also fine.
    if batch_block is None:
        batch_block = B // 2 if (B % 2 == 0 and B >= 2) else 1
    BB = batch_block
    assert B % BB == 0, "batch must be divisible by the batch block"
    n_steps = B // BB
    P = BB * D
    for hp in hp_st:
        assert (P * hp) % 2 == 0     # keeps bf16 staging stores pack-aligned

    # Pure layout metadata only (no pad, no copy): vertical zero padding is
    # applied inside the kernel via the zero-framed xstage scratch buffer.
    planes = x[:, 0].reshape(B, D * H, W).astype(jnp.float32)

    cfg = (BB, D, H, kh0, hp_in, h_st, hp_st, bpl, n_out)

    scratch = [pltpu.VMEM((P * hp_in, W), jnp.float32)]        # input staging
    for s in range(len(h_st)):                                 # ping-pong act.
        scratch.append(pltpu.VMEM((P * hp_st[s], lanes), jnp.float32))
        scratch.append(pltpu.VMEM((P * hp_st[s], lanes), jnp.float32))
    wide_rows = P * hp_st[0] - 2                               # K-concat stage
    scratch.append(pltpu.VMEM((wide_rows, 3 * lanes), jnp.bfloat16))

    def const_spec(arr):
        nd = arr.ndim
        return pl.BlockSpec(arr.shape, lambda g, _n=nd: (0,) * _n)

    weights = (packed["r_init"], packed["b_init"], packed["blk_R"],
               packed["blk_B"], packed["dwn_R"], packed["dwn_B"],
               packed["mbp"], packed["bbp"])

    out = pl.pallas_call(
        functools.partial(_encoder_kernel, cfg),
        out_shape=jax.ShapeDtypeStruct((n_steps, BB, n_out), jnp.float32),
        grid_spec=pltpu.PrefetchScalarGridSpec(
            num_scalar_prefetch=0,
            grid=(n_steps,),
            in_specs=[pl.BlockSpec((BB, D * H, W), lambda g: (g, 0, 0))]
                     + [const_spec(a) for a in weights],
            out_specs=pl.BlockSpec((1, BB, n_out), lambda g: (g, 0, 0)),
            scratch_shapes=scratch,
        ),
        compiler_params=pltpu.CompilerParams(
            dimension_semantics=("parallel",),
            vmem_limit_bytes=32 * 1024 * 1024),
    )(planes, *weights)

    # match torch AvgPool3d output shape: (B, Cout, 1, 1, 1)
    return out.reshape(B, n_out, 1, 1, 1)


# ---------------------------------------------------------------------------
# Pure-JAX reference with the same numerics as the kernel:
# bf16 weights and bf16 matmul inputs, f32 accumulation (bottleneck kept f32).
# ---------------------------------------------------------------------------
def _ref_conv(x, w, b, stride, pad, relu, low_precision=True):
    if low_precision:
        x = x.astype(jnp.bfloat16)
        w = w.astype(jnp.bfloat16)
    y = lax.conv_general_dilated(
        x, w, window_strides=(stride, stride),
        padding=[(pad, pad), (pad, pad)],
        dimension_numbers=("NHWC", "HWIO", "NHWC"),
        preferred_element_type=jnp.float32)
    y = y + b.reshape(1, 1, 1, -1)
    return jnp.maximum(y, 0.0) if relu else y


def encoder_reference(params, x):
    B, _, D, H, W = x.shape
    h = jnp.transpose(x, (0, 2, 3, 4, 1)).reshape(B * D, H, W, 1)
    w, b = params["initial"]
    h = _ref_conv(h, w, b, 1, 2, False)
    for layer in params["layers"]:
        for (bw, bb) in layer["blocks"]:
            h = _ref_conv(h, bw, bb, 1, 1, True)
        dw, db = layer["down"]
        h = _ref_conv(h, dw, db, 2, 0, True)
    for (bw, bb) in params["final_blocks"]:
        h = _ref_conv(h, bw, bb, 1, 1, True)
    bw, bb = params["bottleneck"]
    h = _ref_conv(h, bw, bb, 1, 0, False, low_precision=False)
    _, ho, wo, co = h.shape
    pooled = jnp.mean(h.reshape(B, D * ho * wo, co), axis=1)
    return jnp.tanh(pooled).reshape(B, co, 1, 1, 1)


# ---------------------------------------------------------------------------
if __name__ == "__main__":
    key = jax.random.PRNGKey(0)
    pkey, xkey = jax.random.split(key)
    params = make_encoder_params(pkey)

    B, H, W = 4, 16, 16
    x = jax.random.normal(xkey, (B, 1, N_PLANES, H, W), jnp.float32)

    packed = pack_encoder_params(params, H=H, W=W, n_planes=N_PLANES)

    fwd = jax.jit(functools.partial(encoder_forward, packed))
    out = jax.block_until_ready(fwd(x))

    assert out.shape == (B, N_OUTPUT_FILTERS, 1, 1, 1), out.shape
    assert bool(jnp.all(jnp.isfinite(out)))

    ref = encoder_reference(params, x)
    err = float(jnp.max(jnp.abs(out - ref)))
    assert err < 5e-2, f"mismatch vs reference: max abs err = {err}"

    print("KERNEL_OK")
</pallas_src>

<mosaic_0001>
module attributes {stable_mosaic.version = 11 : i64} {
  func.func @_encoder_kernel(%arg0: i32, %arg1: memref<2x48x16xf32, #tpu.memory_space<vmem>>, %arg2: memref<5x16x128xbf16, #tpu.memory_space<vmem>>, %arg3: memref<1x128xf32, #tpu.memory_space<vmem>>, %arg4: memref<6x384x128xbf16, #tpu.memory_space<vmem>>, %arg5: memref<6x1x128xf32, #tpu.memory_space<vmem>>, %arg6: memref<2x2x128x128xbf16, #tpu.memory_space<vmem>>, %arg7: memref<2x1x128xf32, #tpu.memory_space<vmem>>, %arg8: memref<128x8xf32, #tpu.memory_space<vmem>>, %arg9: memref<1x8xf32, #tpu.memory_space<vmem>>, %arg10: memref<1x2x8xf32, #tpu.memory_space<vmem>>, %arg11: memref<120x16xf32, #tpu.memory_space<vmem>>, %arg12: memref<108x128xf32, #tpu.memory_space<vmem>>, %arg13: memref<108x128xf32, #tpu.memory_space<vmem>>, %arg14: memref<60x128xf32, #tpu.memory_space<vmem>>, %arg15: memref<60x128xf32, #tpu.memory_space<vmem>>, %arg16: memref<36x128xf32, #tpu.memory_space<vmem>>, %arg17: memref<36x128xf32, #tpu.memory_space<vmem>>, %arg18: memref<106x384xbf16, #tpu.memory_space<vmem>>) attributes {dimension_semantics = [#tpu.dimension_semantics<parallel>], iteration_bounds = array<i64: 2>, scalar_prefetch = 0 : i64, scratch_operands = 8 : i64, tpu.core_type = #tpu.core_type<tc>, window_params = [{transform_indices = @transform_0, window_bounds = array<i64: 2, 48, 16>}, {pipeline_mode = #tpu.pipeline_mode<synchronous>, transform_indices = @transform_1, window_bounds = array<i64: 5, 16, 128>}, {pipeline_mode = #tpu.pipeline_mode<synchronous>, transform_indices = @transform_2, window_bounds = array<i64: 1, 128>}, {pipeline_mode = #tpu.pipeline_mode<synchronous>, transform_indices = @transform_3, window_bounds = array<i64: 6, 384, 128>}, {pipeline_mode = #tpu.pipeline_mode<synchronous>, transform_indices = @transform_4, window_bounds = array<i64: 6, 1, 128>}, {pipeline_mode = #tpu.pipeline_mode<synchronous>, transform_indices = @transform_5, window_bounds = array<i64: 2, 2, 128, 128>}, {pipeline_mode = #tpu.pipeline_mode<synchronous>, transform_indices = @transform_6, window_bounds = array<i64: 2, 1, 128>}, {pipeline_mode = #tpu.pipeline_mode<synchronous>, transform_indices = @transform_7, window_bounds = array<i64: 128, 8>}, {pipeline_mode = #tpu.pipeline_mode<synchronous>, transform_indices = @transform_8, window_bounds = array<i64: 1, 8>}, {transform_indices = @transform_9, window_bounds = array<i64: 1, 2, 8>}]} {
    %cst = arith.constant 0.000000e+00 : f32
    %0 = vector.broadcast %cst : f32 to vector<1x128xf32>
    %cst_0 = arith.constant 0.000000e+00 : f32
    %1 = vector.broadcast %cst_0 : f32 to vector<2x128xf32>
    %cst_1 = arith.constant 0.000000e+00 : f32
    %2 = vector.broadcast %cst_1 : f32 to vector<2x16xf32>
    %c0 = arith.constant 0 : index
    %c0_2 = arith.constant 0 : index
    %3 = vector.load %arg11[%c0, %c0_2] : memref<120x16xf32, #tpu.memory_space<vmem>>, vector<2x16xf32>
    tpu.vector_store %arg11[%c0, %c0_2], %2 {strides = array<i32>} : memref<120x16xf32, #tpu.memory_space<vmem>>, vector<2x16xf32>,
    %c18 = arith.constant 18 : index
    %c0_3 = arith.constant 0 : index
    %4 = vector.load %arg11[%c18, %c0_3] : memref<120x16xf32, #tpu.memory_space<vmem>>, vector<2x16xf32>
    tpu.vector_store %arg11[%c18, %c0_3], %2 {strides = array<i32>} : memref<120x16xf32, #tpu.memory_space<vmem>>, vector<2x16xf32>,
    %c20 = arith.constant 20 : index
    %c0_4 = arith.constant 0 : index
    %5 = vector.load %arg11[%c20, %c0_4] : memref<120x16xf32, #tpu.memory_space<vmem>>, vector<2x16xf32>
    tpu.vector_store %arg11[%c20, %c0_4], %2 {strides = array<i32>} : memref<120x16xf32, #tpu.memory_space<vmem>>, vector<2x16xf32>,
    %c38 = arith.constant 38 : index
    %c0_5 = arith.constant 0 : index
    %6 = vector.load %arg11[%c38, %c0_5] : memref<120x16xf32, #tpu.memory_space<vmem>>, vector<2x16xf32>
    tpu.vector_store %arg11[%c38, %c0_5], %2 {strides = array<i32>} : memref<120x16xf32, #tpu.memory_space<vmem>>, vector<2x16xf32>,
    %c40 = arith.constant 40 : index
    %c0_6 = arith.constant 0 : index
    %7 = vector.load %arg11[%c40, %c0_6] : memref<120x16xf32, #tpu.memory_space<vmem>>, vector<2x16xf32>
    tpu.vector_store %arg11[%c40, %c0_6], %2 {strides = array<i32>} : memref<120x16xf32, #tpu.memory_space<vmem>>, vector<2x16xf32>,
    %c58 = arith.constant 58 : index
    %c0_7 = arith.constant 0 : index
    %8 = vector.load %arg11[%c58, %c0_7] : memref<120x16xf32, #tpu.memory_space<vmem>>, vector<2x16xf32>
    tpu.vector_store %arg11[%c58, %c0_7], %2 {strides = array<i32>} : memref<120x16xf32, #tpu.memory_space<vmem>>, vector<2x16xf32>,
    %c60 = arith.constant 60 : index
    %c0_8 = arith.constant 0 : index
    %9 = vector.load %arg11[%c60, %c0_8] : memref<120x16xf32, #tpu.memory_space<vmem>>, vector<2x16xf32>
    tpu.vector_store %arg11[%c60, %c0_8], %2 {strides = array<i32>} : memref<120x16xf32, #tpu.memory_space<vmem>>, vector<2x16xf32>,
    %c78 = arith.constant 78 : index
    %c0_9 = arith.constant 0 : index
    %10 = vector.load %arg11[%c78, %c0_9] : memref<120x16xf32, #tpu.memory_space<vmem>>, vector<2x16xf32>
    tpu.vector_store %arg11[%c78, %c0_9], %2 {strides = array<i32>} : memref<120x16xf32, #tpu.memory_space<vmem>>, vector<2x16xf32>,
    %c80 = arith.constant 80 : index
    %c0_10 = arith.constant 0 : index
    %11 = vector.load %arg11[%c80, %c0_10] : memref<120x16xf32, #tpu.memory_space<vmem>>, vector<2x16xf32>
    tpu.vector_store %arg11[%c80, %c0_10], %2 {strides = array<i32>} : memref<120x16xf32, #tpu.memory_space<vmem>>, vector<2x16xf32>,
    %c98 = arith.constant 98 : index
    %c0_11 = arith.constant 0 : index
    %12 = vector.load %arg11[%c98, %c0_11] : memref<120x16xf32, #tpu.memory_space<vmem>>, vector<2x16xf32>
    tpu.vector_store %arg11[%c98, %c0_11], %2 {strides = array<i32>} : memref<120x16xf32, #tpu.memory_space<vmem>>, vector<2x16xf32>,
    %c100 = arith.constant 100 : index
    %c0_12 = arith.constant 0 : index
    %13 = vector.load %arg11[%c100, %c0_12] : memref<120x16xf32, #tpu.memory_space<vmem>>, vector<2x16xf32>
    tpu.vector_store %arg11[%c100, %c0_12], %2 {strides = array<i32>} : memref<120x16xf32, #tpu.memory_space<vmem>>, vector<2x16xf32>,
    %c118 = arith.constant 118 : index
    %c0_13 = arith.constant 0 : index
    %14 = vector.load %arg11[%c118, %c0_13] : memref<120x16xf32, #tpu.memory_space<vmem>>, vector<2x16xf32>
    tpu.vector_store %arg11[%c118, %c0_13], %2 {strides = array<i32>} : memref<120x16xf32, #tpu.memory_space<vmem>>, vector<2x16xf32>,
    %c0_14 = arith.constant 0 : index
    %c0_15 = arith.constant 0 : index
    %15 = vector.load %arg12[%c0_14, %c0_15] : memref<108x128xf32, #tpu.memory_space<vmem>>, vector<1x128xf32>
    tpu.vector_store %arg12[%c0_14, %c0_15], %0 {strides = array<i32>} : memref<108x128xf32, #tpu.memory_space<vmem>>, vector<1x128xf32>,
    %c107 = arith.constant 107 : index
    %c0_16 = arith.constant 0 : index
    %16 = vector.load %arg12[%c107, %c0_16] : memref<108x128xf32, #tpu.memory_space<vmem>>, vector<1x128xf32>
    tpu.vector_store %arg12[%c107, %c0_16], %0 {strides = array<i32>} : memref<108x128xf32, #tpu.memory_space<vmem>>, vector<1x128xf32>,
    %c17 = arith.constant 17 : index
    %c0_17 = arith.constant 0 : index
    %17 = vector.load %arg12[%c17, %c0_17] : memref<108x128xf32, #tpu.memory_space<vmem>>, vector<2x128xf32>
    tpu.vector_store %arg12[%c17, %c0_17], %1 {strides = array<i32>} : memref<108x128xf32, #tpu.memory_space<vmem>>, vector<2x128xf32>,
    %c35 = arith.constant 35 : index
    %c0_18 = arith.constant 0 : index
    %18 = vector.load %arg12[%c35, %c0_18] : memref<108x128xf32, #tpu.memory_space<vmem>>, vector<2x128xf32>
    tpu.vector_store %arg12[%c35, %c0_18], %1 {strides = array<i32>} : memref<108x128xf32, #tpu.memory_space<vmem>>, vector<2x128xf32>,
    %c53 = arith.constant 53 : index
    %c0_19 = arith.constant 0 : index
    %19 = vector.load %arg12[%c53, %c0_19] : memref<108x128xf32, #tpu.memory_space<vmem>>, vector<2x128xf32>
    tpu.vector_store %arg12[%c53, %c0_19], %1 {strides = array<i32>} : memref<108x128xf32, #tpu.memory_space<vmem>>, vector<2x128xf32>,
    %c71 = arith.constant 71 : index
    %c0_20 = arith.constant 0 : index
    %20 = vector.load %arg12[%c71, %c0_20] : memref<108x128xf32, #tpu.memory_space<vmem>>, vector<2x128xf32>
    tpu.vector_store %arg12[%c71, %c0_20], %1 {strides = array<i32>} : memref<108x128xf32, #tpu.memory_space<vmem>>, vector<2x128xf32>,
    %c89 = arith.constant 89 : index
    %c0_21 = arith.constant 0 : index
    %21 = vector.load %arg12[%c89, %c0_21] : memref<108x128xf32, #tpu.memory_space<vmem>>, vector<2x128xf32>
    tpu.vector_store %arg12[%c89, %c0_21], %1 {strides = array<i32>} : memref<108x128xf32, #tpu.memory_space<vmem>>, vector<2x128xf32>,
    %c0_22 = arith.constant 0 : index
    %c0_23 = arith.constant 0 : index
    %22 = vector.load %arg13[%c0_22, %c0_23] : memref<108x128xf32, #tpu.memory_space<vmem>>, vector<1x128xf32>
    tpu.vector_store %arg13[%c0_22, %c0_23], %0 {strides = array<i32>} : memref<108x128xf32, #tpu.memory_space<vmem>>, vector<1x128xf32>,
    %c107_24 = arith.constant 107 : index
    %c0_25 = arith.constant 0 : index
    %23 = vector.load %arg13[%c107_24, %c0_25] : memref<108x128xf32, #tpu.memory_space<vmem>>, vector<1x128xf32>
    tpu.vector_store %arg13[%c107_24, %c0_25], %0 {strides = array<i32>} : memref<108x128xf32, #tpu.memory_space<vmem>>, vector<1x128xf32>,
    %c17_26 = arith.constant 17 : index
    %c0_27 = arith.constant 0 : index
    %24 = vector.load %arg13[%c17_26, %c0_27] : memref<108x128xf32, #tpu.memory_space<vmem>>, vector<2x128xf32>
    tpu.vector_store %arg13[%c17_26, %c0_27], %1 {strides = array<i32>} : memref<108x128xf32, #tpu.memory_space<vmem>>, vector<2x128xf32>,
    %c35_28 = arith.constant 35 : index
    %c0_29 = arith.constant 0 : index
    %25 = vector.load %arg13[%c35_28, %c0_29] : memref<108x128xf32, #tpu.memory_space<vmem>>, vector<2x128xf32>
    tpu.vector_store %arg13[%c35_28, %c0_29], %1 {strides = array<i32>} : memref<108x128xf32, #tpu.memory_space<vmem>>, vector<2x128xf32>,
    %c53_30 = arith.constant 53 : index
    %c0_31 = arith.constant 0 : index
    %26 = vector.load %arg13[%c53_30, %c0_31] : memref<108x128xf32, #tpu.memory_space<vmem>>, vector<2x128xf32>
    tpu.vector_store %arg13[%c53_30, %c0_31], %1 {strides = array<i32>} : memref<108x128xf32, #tpu.memory_space<vmem>>, vector<2x128xf32>,
    %c71_32 = arith.constant 71 : index
    %c0_33 = arith.constant 0 : index
    %27 = vector.load %arg13[%c71_32, %c0_33] : memref<108x128xf32, #tpu.memory_space<vmem>>, vector<2x128xf32>
    tpu.vector_store %arg13[%c71_32, %c0_33], %1 {strides = array<i32>} : memref<108x128xf32, #tpu.memory_space<vmem>>, vector<2x128xf32>,
    %c89_34 = arith.constant 89 : index
    %c0_35 = arith.constant 0 : index
    %28 = vector.load %arg13[%c89_34, %c0_35] : memref<108x128xf32, #tpu.memory_space<vmem>>, vector<2x128xf32>
    tpu.vector_store %arg13[%c89_34, %c0_35], %1 {strides = array<i32>} : memref<108x128xf32, #tpu.memory_space<vmem>>, vector<2x128xf32>,
    %c0_36 = arith.constant 0 : index
    %c0_37 = arith.constant 0 : index
    %29 = vector.load %arg14[%c0_36, %c0_37] : memref<60x128xf32, #tpu.memory_space<vmem>>, vector<1x128xf32>
    tpu.vector_store %arg14[%c0_36, %c0_37], %0 {strides = array<i32>} : memref<60x128xf32, #tpu.memory_space<vmem>>, vector<1x128xf32>,
    %c59 = arith.constant 59 : index
    %c0_38 = arith.constant 0 : index
    %30 = vector.load %arg14[%c59, %c0_38] : memref<60x128xf32, #tpu.memory_space<vmem>>, vector<1x128xf32>
    tpu.vector_store %arg14[%c59, %c0_38], %0 {strides = array<i32>} : memref<60x128xf32, #tpu.memory_space<vmem>>, vector<1x128xf32>,
    %c9 = arith.constant 9 : index
    %c0_39 = arith.constant 0 : index
    %31 = vector.load %arg14[%c9, %c0_39] : memref<60x128xf32, #tpu.memory_space<vmem>>, vector<2x128xf32>
    tpu.vector_store %arg14[%c9, %c0_39], %1 {strides = array<i32>} : memref<60x128xf32, #tpu.memory_space<vmem>>, vector<2x128xf32>,
    %c19 = arith.constant 19 : index
    %c0_40 = arith.constant 0 : index
    %32 = vector.load %arg14[%c19, %c0_40] : memref<60x128xf32, #tpu.memory_space<vmem>>, vector<2x128xf32>
    tpu.vector_store %arg14[%c19, %c0_40], %1 {strides = array<i32>} : memref<60x128xf32, #tpu.memory_space<vmem>>, vector<2x128xf32>,
    %c29 = arith.constant 29 : index
    %c0_41 = arith.constant 0 : index
    %33 = vector.load %arg14[%c29, %c0_41] : memref<60x128xf32, #tpu.memory_space<vmem>>, vector<2x128xf32>
    tpu.vector_store %arg14[%c29, %c0_41], %1 {strides = array<i32>} : memref<60x128xf32, #tpu.memory_space<vmem>>, vector<2x128xf32>,
    %c39 = arith.constant 39 : index
    %c0_42 = arith.constant 0 : index
    %34 = vector.load %arg14[%c39, %c0_42] : memref<60x128xf32, #tpu.memory_space<vmem>>, vector<2x128xf32>
    tpu.vector_store %arg14[%c39, %c0_42], %1 {strides = array<i32>} : memref<60x128xf32, #tpu.memory_space<vmem>>, vector<2x128xf32>,
    %c49 = arith.constant 49 : index
    %c0_43 = arith.constant 0 : index
    %35 = vector.load %arg14[%c49, %c0_43] : memref<60x128xf32, #tpu.memory_space<vmem>>, vector<2x128xf32>
    tpu.vector_store %arg14[%c49, %c0_43], %1 {strides = array<i32>} : memref<60x128xf32, #tpu.memory_space<vmem>>, vector<2x128xf32>,
    %c0_44 = arith.constant 0 : index
    %c0_45 = arith.constant 0 : index
    %36 = vector.load %arg15[%c0_44, %c0_45] : memref<60x128xf32, #tpu.memory_space<vmem>>, vector<1x128xf32>
    tpu.vector_store %arg15[%c0_44, %c0_45], %0 {strides = array<i32>} : memref<60x128xf32, #tpu.memory_space<vmem>>, vector<1x128xf32>,
    %c59_46 = arith.constant 59 : index
    %c0_47 = arith.constant 0 : index
    %37 = vector.load %arg15[%c59_46, %c0_47] : memref<60x128xf32, #tpu.memory_space<vmem>>, vector<1x128xf32>
    tpu.vector_store %arg15[%c59_46, %c0_47], %0 {strides = array<i32>} : memref<60x128xf32, #tpu.memory_space<vmem>>, vector<1x128xf32>,
    %c9_48 = arith.constant 9 : index
    %c0_49 = arith.constant 0 : index
    %38 = vector.load %arg15[%c9_48, %c0_49] : memref<60x128xf32, #tpu.memory_space<vmem>>, vector<2x128xf32>
    tpu.vector_store %arg15[%c9_48, %c0_49], %1 {strides = array<i32>} : memref<60x128xf32, #tpu.memory_space<vmem>>, vector<2x128xf32>,
    %c19_50 = arith.constant 19 : index
    %c0_51 = arith.constant 0 : index
    %39 = vector.load %arg15[%c19_50, %c0_51] : memref<60x128xf32, #tpu.memory_space<vmem>>, vector<2x128xf32>
    tpu.vector_store %arg15[%c19_50, %c0_51], %1 {strides = array<i32>} : memref<60x128xf32, #tpu.memory_space<vmem>>, vector<2x128xf32>,
    %c29_52 = arith.constant 29 : index
    %c0_53 = arith.constant 0 : index
    %40 = vector.load %arg15[%c29_52, %c0_53] : memref<60x128xf32, #tpu.memory_space<vmem>>, vector<2x128xf32>
    tpu.vector_store %arg15[%c29_52, %c0_53], %1 {strides = array<i32>} : memref<60x128xf32, #tpu.memory_space<vmem>>, vector<2x128xf32>,
    %c39_54 = arith.constant 39 : index
    %c0_55 = arith.constant 0 : index
    %41 = vector.load %arg15[%c39_54, %c0_55] : memref<60x128xf32, #tpu.memory_space<vmem>>, vector<2x128xf32>
    tpu.vector_store %arg15[%c39_54, %c0_55], %1 {strides = array<i32>} : memref<60x128xf32, #tpu.memory_space<vmem>>, vector<2x128xf32>,
    %c49_56 = arith.constant 49 : index
    %c0_57 = arith.constant 0 : index
    %42 = vector.load %arg15[%c49_56, %c0_57] : memref<60x128xf32, #tpu.memory_space<vmem>>, vector<2x128xf32>
    tpu.vector_store %arg15[%c49_56, %c0_57], %1 {strides = array<i32>} : memref<60x128xf32, #tpu.memory_space<vmem>>, vector<2x128xf32>,
    %c0_58 = arith.constant 0 : index
    %c0_59 = arith.constant 0 : index
    %43 = vector.load %arg16[%c0_58, %c0_59] : memref<36x128xf32, #tpu.memory_space<vmem>>, vector<1x128xf32>
    tpu.vector_store %arg16[%c0_58, %c0_59], %0 {strides = array<i32>} : memref<36x128xf32, #tpu.memory_space<vmem>>, vector<1x128xf32>,
    %c35_60 = arith.constant 35 : index
    %c0_61 = arith.constant 0 : index
    %44 = vector.load %arg16[%c35_60, %c0_61] : memref<36x128xf32, #tpu.memory_space<vmem>>, vector<1x128xf32>
    tpu.vector_store %arg16[%c35_60, %c0_61], %0 {strides = array<i32>} : memref<36x128xf32, #tpu.memory_space<vmem>>, vector<1x128xf32>,
    %c5 = arith.constant 5 : index
    %c0_62 = arith.constant 0 : index
    %45 = vector.load %arg16[%c5, %c0_62] : memref<36x128xf32, #tpu.memory_space<vmem>>, vector<2x128xf32>
    tpu.vector_store %arg16[%c5, %c0_62], %1 {strides = array<i32>} : memref<36x128xf32, #tpu.memory_space<vmem>>, vector<2x128xf32>,
    %c11 = arith.constant 11 : index
    %c0_63 = arith.constant 0 : index
    %46 = vector.load %arg16[%c11, %c0_63] : memref<36x128xf32, #tpu.memory_space<vmem>>, vector<2x128xf32>
    tpu.vector_store %arg16[%c11, %c0_63], %1 {strides = array<i32>} : memref<36x128xf32, #tpu.memory_space<vmem>>, vector<2x128xf32>,
    %c17_64 = arith.constant 17 : index
    %c0_65 = arith.constant 0 : index
    %47 = vector.load %arg16[%c17_64, %c0_65] : memref<36x128xf32, #tpu.memory_space<vmem>>, vector<2x128xf32>
    tpu.vector_store %arg16[%c17_64, %c0_65], %1 {strides = array<i32>} : memref<36x128xf32, #tpu.memory_space<vmem>>, vector<2x128xf32>,
    %c23 = arith.constant 23 : index
    %c0_66 = arith.constant 0 : index
    %48 = vector.load %arg16[%c23, %c0_66] : memref<36x128xf32, #tpu.memory_space<vmem>>, vector<2x128xf32>
    tpu.vector_store %arg16[%c23, %c0_66], %1 {strides = array<i32>} : memref<36x128xf32, #tpu.memory_space<vmem>>, vector<2x128xf32>,
    %c29_67 = arith.constant 29 : index
    %c0_68 = arith.constant 0 : index
    %49 = vector.load %arg16[%c29_67, %c0_68] : memref<36x128xf32, #tpu.memory_space<vmem>>, vector<2x128xf32>
    tpu.vector_store %arg16[%c29_67, %c0_68], %1 {strides = array<i32>} : memref<36x128xf32, #tpu.memory_space<vmem>>, vector<2x128xf32>,
    %c0_69 = arith.constant 0 : index
    %c0_70 = arith.constant 0 : index
    %50 = vector.load %arg17[%c0_69, %c0_70] : memref<36x128xf32, #tpu.memory_space<vmem>>, vector<1x128xf32>
    tpu.vector_store %arg17[%c0_69, %c0_70], %0 {strides = array<i32>} : memref<36x128xf32, #tpu.memory_space<vmem>>, vector<1x128xf32>,
    %c35_71 = arith.constant 35 : index
    %c0_72 = arith.constant 0 : index
    %51 = vector.load %arg17[%c35_71, %c0_72] : memref<36x128xf32, #tpu.memory_space<vmem>>, vector<1x128xf32>
    tpu.vector_store %arg17[%c35_71, %c0_72], %0 {strides = array<i32>} : memref<36x128xf32, #tpu.memory_space<vmem>>, vector<1x128xf32>,
    %c5_73 = arith.constant 5 : index
    %c0_74 = arith.constant 0 : index
    %52 = vector.load %arg17[%c5_73, %c0_74] : memref<36x128xf32, #tpu.memory_space<vmem>>, vector<2x128xf32>
    tpu.vector_store %arg17[%c5_73, %c0_74], %1 {strides = array<i32>} : memref<36x128xf32, #tpu.memory_space<vmem>>, vector<2x128xf32>,
    %c11_75 = arith.constant 11 : index
    %c0_76 = arith.constant 0 : index
    %53 = vector.load %arg17[%c11_75, %c0_76] : memref<36x128xf32, #tpu.memory_space<vmem>>, vector<2x128xf32>
    tpu.vector_store %arg17[%c11_75, %c0_76], %1 {strides = array<i32>} : memref<36x128xf32, #tpu.memory_space<vmem>>, vector<2x128xf32>,
    %c17_77 = arith.constant 17 : index
    %c0_78 = arith.constant 0 : index
    %54 = vector.load %arg17[%c17_77, %c0_78] : memref<36x128xf32, #tpu.memory_space<vmem>>, vector<2x128xf32>
    tpu.vector_store %arg17[%c17_77, %c0_78], %1 {strides = array<i32>} : memref<36x128xf32, #tpu.memory_space<vmem>>, vector<2x128xf32>,
    %c23_79 = arith.constant 23 : index
    %c0_80 = arith.constant 0 : index
    %55 = vector.load %arg17[%c23_79, %c0_80] : memref<36x128xf32, #tpu.memory_space<vmem>>, vector<2x128xf32>
    tpu.vector_store %arg17[%c23_79, %c0_80], %1 {strides = array<i32>} : memref<36x128xf32, #tpu.memory_space<vmem>>, vector<2x128xf32>,
    %c29_81 = arith.constant 29 : index
    %c0_82 = arith.constant 0 : index
    %56 = vector.load %arg17[%c29_81, %c0_82] : memref<36x128xf32, #tpu.memory_space<vmem>>, vector<2x128xf32>
    tpu.vector_store %arg17[%c29_81, %c0_82], %1 {strides = array<i32>} : memref<36x128xf32, #tpu.memory_space<vmem>>, vector<2x128xf32>,
    %c0_83 = arith.constant 0 : index
    %c0_84 = arith.constant 0 : index
    %c0_85 = arith.constant 0 : index
    %57 = vector.load %arg1[%c0_83, %c0_84, %c0_85] : memref<2x48x16xf32, #tpu.memory_space<vmem>>, vector<1x16x16xf32>
    %58 = vector.shape_cast %57 : vector<1x16x16xf32> to vector<16x16xf32>
    %c2 = arith.constant 2 : index
    %c0_86 = arith.constant 0 : index
    %59 = vector.load %arg11[%c2, %c0_86] : memref<120x16xf32, #tpu.memory_space<vmem>>, vector<16x16xf32>
    tpu.vector_store %arg11[%c2, %c0_86], %58 {strides = array<i32>} : memref<120x16xf32, #tpu.memory_space<vmem>>, vector<16x16xf32>,
    %c0_87 = arith.constant 0 : index
    %c16 = arith.constant 16 : index
    %c0_88 = arith.constant 0 : index
    %60 = vector.load %arg1[%c0_87, %c16, %c0_88] : memref<2x48x16xf32, #tpu.memory_space<vmem>>, vector<1x16x16xf32>
    %61 = vector.shape_cast %60 : vector<1x16x16xf32> to vector<16x16xf32>
    %c22 = arith.constant 22 : index
    %c0_89 = arith.constant 0 : index
    %62 = vector.load %arg11[%c22, %c0_89] : memref<120x16xf32, #tpu.memory_space<vmem>>, vector<16x16xf32>
    tpu.vector_store %arg11[%c22, %c0_89], %61 {strides = array<i32>} : memref<120x16xf32, #tpu.memory_space<vmem>>, vector<16x16xf32>,
    %c0_90 = arith.constant 0 : index
    %c32 = arith.constant 32 : index
    %c0_91 = arith.constant 0 : index
    %63 = vector.load %arg1[%c0_90, %c32, %c0_91] : memref<2x48x16xf32, #tpu.memory_space<vmem>>, vector<1x16x16xf32>
    %64 = vector.shape_cast %63 : vector<1x16x16xf32> to vector<16x16xf32>
    %c42 = arith.constant 42 : index
    %c0_92 = arith.constant 0 : index
    %65 = vector.load %arg11[%c42, %c0_92] : memref<120x16xf32, #tpu.memory_space<vmem>>, vector<16x16xf32>
    tpu.vector_store %arg11[%c42, %c0_92], %64 {strides = array<i32>} : memref<120x16xf32, #tpu.memory_space<vmem>>, vector<16x16xf32>,
    %c1 = arith.constant 1 : index
    %c0_93 = arith.constant 0 : index
    %c0_94 = arith.constant 0 : index
    %66 = vector.load %arg1[%c1, %c0_93, %c0_94] : memref<2x48x16xf32, #tpu.memory_space<vmem>>, vector<1x16x16xf32>
    %67 = vector.shape_cast %66 : vector<1x16x16xf32> to vector<16x16xf32>
    %c62 = arith.constant 62 : index
    %c0_95 = arith.constant 0 : index
    %68 = vector.load %arg11[%c62, %c0_95] : memref<120x16xf32, #tpu.memory_space<vmem>>, vector<16x16xf32>
    tpu.vector_store %arg11[%c62, %c0_95], %67 {strides = array<i32>} : memref<120x16xf32, #tpu.memory_space<vmem>>, vector<16x16xf32>,
    %c1_96 = arith.constant 1 : index
    %c16_97 = arith.constant 16 : index
    %c0_98 = arith.constant 0 : index
    %69 = vector.load %arg1[%c1_96, %c16_97, %c0_98] : memref<2x48x16xf32, #tpu.memory_space<vmem>>, vector<1x16x16xf32>
    %70 = vector.shape_cast %69 : vector<1x16x16xf32> to vector<16x16xf32>
    %c82 = arith.constant 82 : index
    %c0_99 = arith.constant 0 : index
    %71 = vector.load %arg11[%c82, %c0_99] : memref<120x16xf32, #tpu.memory_space<vmem>>, vector<16x16xf32>
    tpu.vector_store %arg11[%c82, %c0_99], %70 {strides = array<i32>} : memref<120x16xf32, #tpu.memory_space<vmem>>, vector<16x16xf32>,
    %c1_100 = arith.constant 1 : index
    %c32_101 = arith.constant 32 : index
    %c0_102 = arith.constant 0 : index
    %72 = vector.load %arg1[%c1_100, %c32_101, %c0_102] : memref<2x48x16xf32, #tpu.memory_space<vmem>>, vector<1x16x16xf32>
    %73 = vector.shape_cast %72 : vector<1x16x16xf32> to vector<16x16xf32>
    %c102 = arith.constant 102 : index
    %c0_103 = arith.constant 0 : index
    %74 = vector.load %arg11[%c102, %c0_103] : memref<120x16xf32, #tpu.memory_space<vmem>>, vector<16x16xf32>
    tpu.vector_store %arg11[%c102, %c0_103], %73 {strides = array<i32>} : memref<120x16xf32, #tpu.memory_space<vmem>>, vector<16x16xf32>,
    %c0_104 = arith.constant 0 : index
    %c0_105 = arith.constant 0 : index
    %75 = vector.load %arg3[%c0_104, %c0_105] : memref<1x128xf32, #tpu.memory_space<vmem>>, vector<1x128xf32>
    %76 = vector.shape_cast %75 : vector<1x128xf32> to vector<1x128xf32>
    %77 = vector.broadcast %76 : vector<1x128xf32> to vector<116x128xf32>
    %c0_106 = arith.constant 0 : index
    %c0_107 = arith.constant 0 : index
    %78 = vector.load %arg11[%c0_106, %c0_107] : memref<120x16xf32, #tpu.memory_space<vmem>>, vector<116x16xf32>
    %79 = arith.truncf %78 : vector<116x16xf32> to vector<116x16xbf16>
    %c0_108 = arith.constant 0 : index
    %c0_109 = arith.constant 0 : index
    %c0_110 = arith.constant 0 : index
    %80 = vector.load %arg2[%c0_108, %c0_109, %c0_110] : memref<5x16x128xbf16, #tpu.memory_space<vmem>>, vector<1x16x128xbf16>
    %81 = vector.shape_cast %80 : vector<1x16x128xbf16> to vector<16x128xbf16>
    %cst_111 = arith.constant dense<0.000000e+00> : vector<116x128xf32>
    %82 = tpu.matmul %79, %81, %cst_111 {dimension_numbers = #tpu.dot_dimension_numbers<[1], [0], [0], [1], [0, 0, 1, 1], [], []>} : vector<116x16xbf16>, vector<16x128xbf16>, vector<116x128xf32> -> vector<116x128xf32>
    %83 = arith.addf %77, %82 : vector<116x128xf32>
    %c1_112 = arith.constant 1 : index
    %c0_113 = arith.constant 0 : index
    %84 = vector.load %arg11[%c1_112, %c0_113] : memref<120x16xf32, #tpu.memory_space<vmem>>, vector<116x16xf32>
    %85 = arith.truncf %84 : vector<116x16xf32> to vector<116x16xbf16>
    %c1_114 = arith.constant 1 : index
    %c0_115 = arith.constant 0 : index
    %c0_116 = arith.constant 0 : index
    %86 = vector.load %arg2[%c1_114, %c0_115, %c0_116] : memref<5x16x128xbf16, #tpu.memory_space<vmem>>, vector<1x16x128xbf16>
    %87 = vector.shape_cast %86 : vector<1x16x128xbf16> to vector<16x128xbf16>
    %cst_117 = arith.constant dense<0.000000e+00> : vector<116x128xf32>
    %88 = tpu.matmul %85, %87, %cst_117 {dimension_numbers = #tpu.dot_dimension_numbers<[1], [0], [0], [1], [0, 0, 1, 1], [], []>} : vector<116x16xbf16>, vector<16x128xbf16>, vector<116x128xf32> -> vector<116x128xf32>
    %89 = arith.addf %83, %88 : vector<116x128xf32>
    %c2_118 = arith.constant 2 : index
    %c0_119 = arith.constant 0 : index
    %90 = vector.load %arg11[%c2_118, %c0_119] : memref<120x16xf32, #tpu.memory_space<vmem>>, vector<116x16xf32>
    %91 = arith.truncf %90 : vector<116x16xf32> to vector<116x16xbf16>
    %c2_120 = arith.constant 2 : index
    %c0_121 = arith.constant 0 : index
    %c0_122 = arith.constant 0 : index
    %92 = vector.load %arg2[%c2_120, %c0_121, %c0_122] : memref<5x16x128xbf16, #tpu.memory_space<vmem>>, vector<1x16x128xbf16>
    %93 = vector.shape_cast %92 : vector<1x16x128xbf16> to vector<16x128xbf16>
    %cst_123 = arith.constant dense<0.000000e+00> : vector<116x128xf32>
    %94 = tpu.matmul %91, %93, %cst_123 {dimension_numbers = #tpu.dot_dimension_numbers<[1], [0], [0], [1], [0, 0, 1, 1], [], []>} : vector<116x16xbf16>, vector<16x128xbf16>, vector<116x128xf32> -> vector<116x128xf32>
    %95 = arith.addf %89, %94 : vector<116x128xf32>
    %c3 = arith.constant 3 : index
    %c0_124 = arith.constant 0 : index
    %96 = vector.load %arg11[%c3, %c0_124] : memref<120x16xf32, #tpu.memory_space<vmem>>, vector<116x16xf32>
    %97 = arith.truncf %96 : vector<116x16xf32> to vector<116x16xbf16>
    %c3_125 = arith.constant 3 : index
    %c0_126 = arith.constant 0 : index
    %c0_127 = arith.constant 0 : index
    %98 = vector.load %arg2[%c3_125, %c0_126, %c0_127] : memref<5x16x128xbf16, #tpu.memory_space<vmem>>, vector<1x16x128xbf16>
    %99 = vector.shape_cast %98 : vector<1x16x128xbf16> to vector<16x128xbf16>
    %cst_128 = arith.constant dense<0.000000e+00> : vector<116x128xf32>
    %100 = tpu.matmul %97, %99, %cst_128 {dimension_numbers = #tpu.dot_dimension_numbers<[1], [0], [0], [1], [0, 0, 1, 1], [], []>} : vector<116x16xbf16>, vector<16x128xbf16>, vector<116x128xf32> -> vector<116x128xf32>
    %101 = arith.addf %95, %100 : vector<116x128xf32>
    %c4 = arith.constant 4 : index
    %c0_129 = arith.constant 0 : index
    %102 = vector.load %arg11[%c4, %c0_129] : memref<120x16xf32, #tpu.memory_space<vmem>>, vector<116x16xf32>
    %103 = arith.truncf %102 : vector<116x16xf32> to vector<116x16xbf16>
    %c4_130 = arith.constant 4 : index
    %c0_131 = arith.constant 0 : index
    %c0_132 = arith.constant 0 : index
    %104 = vector.load %arg2[%c4_130, %c0_131, %c0_132] : memref<5x16x128xbf16, #tpu.memory_space<vmem>>, vector<1x16x128xbf16>
    %105 = vector.shape_cast %104 : vector<1x16x128xbf16> to vector<16x128xbf16>
    %cst_133 = arith.constant dense<0.000000e+00> : vector<116x128xf32>
    %106 = tpu.matmul %103, %105, %cst_133 {dimension_numbers = #tpu.dot_dimension_numbers<[1], [0], [0], [1], [0, 0, 1, 1], [], []>} : vector<116x16xbf16>, vector<16x128xbf16>, vector<116x128xf32> -> vector<116x128xf32>
    %107 = arith.addf %101, %106 : vector<116x128xf32>
    %108 = vector.extract_strided_slice %107 {offsets = [0, 0], sizes = [16, 128], strides = [1, 1]} : vector<116x128xf32> to vector<16x128xf32>
    %c1_134 = arith.constant 1 : index
    %c0_135 = arith.constant 0 : index
    %109 = vector.load %arg12[%c1_134, %c0_135] : memref<108x128xf32, #tpu.memory_space<vmem>>, vector<16x128xf32>
    tpu.vector_store %arg12[%c1_134, %c0_135], %108 {strides = array<i32>} : memref<108x128xf32, #tpu.memory_space<vmem>>, vector<16x128xf32>,
    %110 = vector.extract_strided_slice %107 {offsets = [20, 0], sizes = [16, 128], strides = [1, 1]} : vector<116x128xf32> to vector<16x128xf32>
    %c19_136 = arith.constant 19 : index
    %c0_137 = arith.constant 0 : index
    %111 = vector.load %arg12[%c19_136, %c0_137] : memref<108x128xf32, #tpu.memory_space<vmem>>, vector<16x128xf32>
    tpu.vector_store %arg12[%c19_136, %c0_137], %110 {strides = array<i32>} : memref<108x128xf32, #tpu.memory_space<vmem>>, vector<16x128xf32>,
    %112 = vector.extract_strided_slice %107 {offsets = [40, 0], sizes = [16, 128], strides = [1, 1]} : vector<116x128xf32> to vector<16x128xf32>
    %c37 = arith.constant 37 : index
    %c0_138 = arith.constant 0 : index
    %113 = vector.load %arg12[%c37, %c0_138] : memref<108x128xf32, #tpu.memory_space<vmem>>, vector<16x128xf32>
    tpu.vector_store %arg12[%c37, %c0_138], %112 {strides = array<i32>} : memref<108x128xf32, #tpu.memory_space<vmem>>, vector<16x128xf32>,
    %114 = vector.extract_strided_slice %107 {offsets = [60, 0], sizes = [16, 128], strides = [1, 1]} : vector<116x128xf32> to vector<16x128xf32>
    %c55 = arith.constant 55 : index
    %c0_139 = arith.constant 0 : index
    %115 = vector.load %arg12[%c55, %c0_139] : memref<108x128xf32, #tpu.memory_space<vmem>>, vector<16x128xf32>
    tpu.vector_store %arg12[%c55, %c0_139], %114 {strides = array<i32>} : memref<108x128xf32, #tpu.memory_space<vmem>>, vector<16x128xf32>,
    %116 = vector.extract_strided_slice %107 {offsets = [80, 0], sizes = [16, 128], strides = [1, 1]} : vector<116x128xf32> to vector<16x128xf32>
    %c73 = arith.constant 73 : index
    %c0_140 = arith.constant 0 : index
    %117 = vector.load %arg12[%c73, %c0_140] : memref<108x128xf32, #tpu.memory_space<vmem>>, vector<16x128xf32>
    tpu.vector_store %arg12[%c73, %c0_140], %116 {strides = array<i32>} : memref<108x128xf32, #tpu.memory_space<vmem>>, vector<16x128xf32>,
    %118 = vector.extract_strided_slice %107 {offsets = [100, 0], sizes = [16, 128], strides = [1, 1]} : vector<116x128xf32> to vector<16x128xf32>
    %c91 = arith.constant 91 : index
    %c0_141 = arith.constant 0 : index
    %119 = vector.load %arg12[%c91, %c0_141] : memref<108x128xf32, #tpu.memory_space<vmem>>, vector<16x128xf32>
    tpu.vector_store %arg12[%c91, %c0_141], %118 {strides = array<i32>} : memref<108x128xf32, #tpu.memory_space<vmem>>, vector<16x128xf32>,
    %c0_142 = arith.constant 0 : index
    %c0_143 = arith.constant 0 : index
    %120 = vector.load %arg12[%c0_142, %c0_143] : memref<108x128xf32, #tpu.memory_space<vmem>>, vector<106x128xf32>
    %121 = arith.truncf %120 : vector<106x128xf32> to vector<106x128xbf16>
    %c0_144 = arith.constant 0 : index
    %c0_145 = arith.constant 0 : index
    %122 = vector.load %arg18[%c0_144, %c0_145] : memref<106x384xbf16, #tpu.memory_space<vmem>>, vector<106x128xbf16>
    tpu.vector_store %arg18[%c0_144, %c0_145], %121 {strides = array<i32>} : memref<106x384xbf16, #tpu.memory_space<vmem>>, vector<106x128xbf16>,
    %c1_146 = arith.constant 1 : index
    %c0_147 = arith.constant 0 : index
    %123 = vector.load %arg12[%c1_146, %c0_147] : memref<108x128xf32, #tpu.memory_space<vmem>>, vector<106x128xf32>
    %124 = arith.truncf %123 : vector<106x128xf32> to vector<106x128xbf16>
    %c0_148 = arith.constant 0 : index
    %c128 = arith.constant 128 : index
    %125 = vector.load %arg18[%c0_148, %c128] : memref<106x384xbf16, #tpu.memory_space<vmem>>, vector<106x128xbf16>
    tpu.vector_store %arg18[%c0_148, %c128], %124 {strides = array<i32>} : memref<106x384xbf16, #tpu.memory_space<vmem>>, vector<106x128xbf16>,
    %c2_149 = arith.constant 2 : index
    %c0_150 = arith.constant 0 : index
    %126 = vector.load %arg12[%c2_149, %c0_150] : memref<108x128xf32, #tpu.memory_space<vmem>>, vector<106x128xf32>
    %127 = arith.truncf %126 : vector<106x128xf32> to vector<106x128xbf16>
    %c0_151 = arith.constant 0 : index
    %c256 = arith.constant 256 : index
    %128 = vector.load %arg18[%c0_151, %c256] : memref<106x384xbf16, #tpu.memory_space<vmem>>, vector<106x128xbf16>
    tpu.vector_store %arg18[%c0_151, %c256], %127 {strides = array<i32>} : memref<106x384xbf16, #tpu.memory_space<vmem>>, vector<106x128xbf16>,
    %c0_152 = arith.constant 0 : index
    %c0_153 = arith.constant 0 : index
    %129 = vector.load %arg18[%c0_152, %c0_153] : memref<106x384xbf16, #tpu.memory_space<vmem>>, vector<106x384xbf16>
    %c0_154 = arith.constant 0 : index
    %c0_155 = arith.constant 0 : index
    %c0_156 = arith.constant 0 : index
    %130 = vector.load %arg4[%c0_154, %c0_155, %c0_156] : memref<6x384x128xbf16, #tpu.memory_space<vmem>>, vector<1x384x128xbf16>
    %131 = vector.shape_cast %130 : vector<1x384x128xbf16> to vector<384x128xbf16>
    %cst_157 = arith.constant dense<0.000000e+00> : vector<106x128xf32>
    %132 = tpu.matmul %129, %131, %cst_157 {dimension_numbers = #tpu.dot_dimension_numbers<[1], [0], [0], [1], [0, 0, 1, 1], [], []>} : vector<106x384xbf16>, vector<384x128xbf16>, vector<106x128xf32> -> vector<106x128xf32>
    %c0_158 = arith.constant 0 : index
    %c0_159 = arith.constant 0 : index
    %c0_160 = arith.constant 0 : index
    %133 = vector.load %arg5[%c0_158, %c0_159, %c0_160] : memref<6x1x128xf32, #tpu.memory_space<vmem>>, vector<1x1x128xf32>
    %134 = vector.shape_cast %133 : vector<1x1x128xf32> to vector<1x128xf32>
    %135 = vector.broadcast %134 : vector<1x128xf32> to vector<106x128xf32>
    %136 = arith.addf %132, %135 : vector<106x128xf32>
    %cst_161 = arith.constant 0.000000e+00 : f32
    %137 = vector.broadcast %cst_161 : f32 to vector<106x128xf32>
    %138 = arith.maximumf %136, %137 : vector<106x128xf32>
    %c1_162 = arith.constant 1 : index
    %c0_163 = arith.constant 0 : index
    %139 = vector.load %arg13[%c1_162, %c0_163] : memref<108x128xf32, #tpu.memory_space<vmem>>, vector<106x128xf32>
    tpu.vector_store %arg13[%c1_162, %c0_163], %138 {strides = array<i32>} : memref<108x128xf32, #tpu.memory_space<vmem>>, vector<106x128xf32>,
    %c17_164 = arith.constant 17 : index
    %c0_165 = arith.constant 0 : index
    %140 = vector.load %arg13[%c17_164, %c0_165] : memref<108x128xf32, #tpu.memory_space<vmem>>, vector<2x128xf32>
    tpu.vector_store %arg13[%c17_164, %c0_165], %1 {strides = array<i32>} : memref<108x128xf32, #tpu.memory_space<vmem>>, vector<2x128xf32>,
    %c35_166 = arith.constant 35 : index
    %c0_167 = arith.constant 0 : index
    %141 = vector.load %arg13[%c35_166, %c0_167] : memref<108x128xf32, #tpu.memory_space<vmem>>, vector<2x128xf32>
    tpu.vector_store %arg13[%c35_166, %c0_167], %1 {strides = array<i32>} : memref<108x128xf32, #tpu.memory_space<vmem>>, vector<2x128xf32>,
    %c53_168 = arith.constant 53 : index
    %c0_169 = arith.constant 0 : index
    %142 = vector.load %arg13[%c53_168, %c0_169] : memref<108x128xf32, #tpu.memory_space<vmem>>, vector<2x128xf32>
    tpu.vector_store %arg13[%c53_168, %c0_169], %1 {strides = array<i32>} : memref<108x128xf32, #tpu.memory_space<vmem>>, vector<2x128xf32>,
    %c71_170 = arith.constant 71 : index
    %c0_171 = arith.constant 0 : index
    %143 = vector.load %arg13[%c71_170, %c0_171] : memref<108x128xf32, #tpu.memory_space<vmem>>, vector<2x128xf32>
    tpu.vector_store %arg13[%c71_170, %c0_171], %1 {strides = array<i32>} : memref<108x128xf32, #tpu.memory_space<vmem>>, vector<2x128xf32>,
    %c89_172 = arith.constant 89 : index
    %c0_173 = arith.constant 0 : index
    %144 = vector.load %arg13[%c89_172, %c0_173] : memref<108x128xf32, #tpu.memory_space<vmem>>, vector<2x128xf32>
    tpu.vector_store %arg13[%c89_172, %c0_173], %1 {strides = array<i32>} : memref<108x128xf32, #tpu.memory_space<vmem>>, vector<2x128xf32>,
    %c0_174 = arith.constant 0 : index
    %c0_175 = arith.constant 0 : index
    %145 = vector.load %arg13[%c0_174, %c0_175] : memref<108x128xf32, #tpu.memory_space<vmem>>, vector<106x128xf32>
    %146 = arith.truncf %145 : vector<106x128xf32> to vector<106x128xbf16>
    %c0_176 = arith.constant 0 : index
    %c0_177 = arith.constant 0 : index
    %147 = vector.load %arg18[%c0_176, %c0_177] : memref<106x384xbf16, #tpu.memory_space<vmem>>, vector<106x128xbf16>
    tpu.vector_store %arg18[%c0_176, %c0_177], %146 {strides = array<i32>} : memref<106x384xbf16, #tpu.memory_space<vmem>>, vector<106x128xbf16>,
    %c1_178 = arith.constant 1 : index
    %c0_179 = arith.constant 0 : index
    %148 = vector.load %arg13[%c1_178, %c0_179] : memref<108x128xf32, #tpu.memory_space<vmem>>, vector<106x128xf32>
    %149 = arith.truncf %148 : vector<106x128xf32> to vector<106x128xbf16>
    %c0_180 = arith.constant 0 : index
    %c128_181 = arith.constant 128 : index
    %150 = vector.load %arg18[%c0_180, %c128_181] : memref<106x384xbf16, #tpu.memory_space<vmem>>, vector<106x128xbf16>
    tpu.vector_store %arg18[%c0_180, %c128_181], %149 {strides = array<i32>} : memref<106x384xbf16, #tpu.memory_space<vmem>>, vector<106x128xbf16>,
    %c2_182 = arith.constant 2 : index
    %c0_183 = arith.constant 0 : index
    %151 = vector.load %arg13[%c2_182, %c0_183] : memref<108x128xf32, #tpu.memory_space<vmem>>, vector<106x128xf32>
    %152 = arith.truncf %151 : vector<106x128xf32> to vector<106x128xbf16>
    %c0_184 = arith.constant 0 : index
    %c256_185 = arith.constant 256 : index
    %153 = vector.load %arg18[%c0_184, %c256_185] : memref<106x384xbf16, #tpu.memory_space<vmem>>, vector<106x128xbf16>
    tpu.vector_store %arg18[%c0_184, %c256_185], %152 {strides = array<i32>} : memref<106x384xbf16, #tpu.memory_space<vmem>>, vector<106x128xbf16>,
    %c0_186 = arith.constant 0 : index
    %c0_187 = arith.constant 0 : index
    %154 = vector.load %arg18[%c0_186, %c0_187] : memref<106x384xbf16, #tpu.memory_space<vmem>>, vector<106x384xbf16>
    %c1_188 = arith.constant 1 : index
    %c0_189 = arith.constant 0 : index
    %c0_190 = arith.constant 0 : index
    %155 = vector.load %arg4[%c1_188, %c0_189, %c0_190] : memref<6x384x128xbf16, #tpu.memory_space<vmem>>, vector<1x384x128xbf16>
    %156 = vector.shape_cast %155 : vector<1x384x128xbf16> to vector<384x128xbf16>
    %cst_191 = arith.constant dense<0.000000e+00> : vector<106x128xf32>
    %157 = tpu.matmul %154, %156, %cst_191 {dimension_numbers = #tpu.dot_dimension_numbers<[1], [0], [0], [1], [0, 0, 1, 1], [], []>} : vector<106x384xbf16>, vector<384x128xbf16>, vector<106x128xf32> -> vector<106x128xf32>
    %c1_192 = arith.constant 1 : index
    %c0_193 = arith.constant 0 : index
    %c0_194 = arith.constant 0 : index
    %158 = vector.load %arg5[%c1_192, %c0_193, %c0_194] : memref<6x1x128xf32, #tpu.memory_space<vmem>>, vector<1x1x128xf32>
    %159 = vector.shape_cast %158 : vector<1x1x128xf32> to vector<1x128xf32>
    %160 = vector.broadcast %159 : vector<1x128xf32> to vector<106x128xf32>
    %161 = arith.addf %157, %160 : vector<106x128xf32>
    %cst_195 = arith.constant 0.000000e+00 : f32
    %162 = vector.broadcast %cst_195 : f32 to vector<106x128xf32>
    %163 = arith.maximumf %161, %162 : vector<106x128xf32>
    %c1_196 = arith.constant 1 : index
    %c0_197 = arith.constant 0 : index
    %164 = vector.load %arg12[%c1_196, %c0_197] : memref<108x128xf32, #tpu.memory_space<vmem>>, vector<106x128xf32>
    tpu.vector_store %arg12[%c1_196, %c0_197], %163 {strides = array<i32>} : memref<108x128xf32, #tpu.memory_space<vmem>>, vector<106x128xf32>,
    %c17_198 = arith.constant 17 : index
    %c0_199 = arith.constant 0 : index
    %165 = vector.load %arg12[%c17_198, %c0_199] : memref<108x128xf32, #tpu.memory_space<vmem>>, vector<2x128xf32>
    tpu.vector_store %arg12[%c17_198, %c0_199], %1 {strides = array<i32>} : memref<108x128xf32, #tpu.memory_space<vmem>>, vector<2x128xf32>,
    %c35_200 = arith.constant 35 : index
    %c0_201 = arith.constant 0 : index
    %166 = vector.load %arg12[%c35_200, %c0_201] : memref<108x128xf32, #tpu.memory_space<vmem>>, vector<2x128xf32>
    tpu.vector_store %arg12[%c35_200, %c0_201], %1 {strides = array<i32>} : memref<108x128xf32, #tpu.memory_space<vmem>>, vector<2x128xf32>,
    %c53_202 = arith.constant 53 : index
    %c0_203 = arith.constant 0 : index
    %167 = vector.load %arg12[%c53_202, %c0_203] : memref<108x128xf32, #tpu.memory_space<vmem>>, vector<2x128xf32>
    tpu.vector_store %arg12[%c53_202, %c0_203], %1 {strides = array<i32>} : memref<108x128xf32, #tpu.memory_space<vmem>>, vector<2x128xf32>,
    %c71_204 = arith.constant 71 : index
    %c0_205 = arith.constant 0 : index
    %168 = vector.load %arg12[%c71_204, %c0_205] : memref<108x128xf32, #tpu.memory_space<vmem>>, vector<2x128xf32>
    tpu.vector_store %arg12[%c71_204, %c0_205], %1 {strides = array<i32>} : memref<108x128xf32, #tpu.memory_space<vmem>>, vector<2x128xf32>,
    %c89_206 = arith.constant 89 : index
    %c0_207 = arith.constant 0 : index
    %169 = vector.load %arg12[%c89_206, %c0_207] : memref<108x128xf32, #tpu.memory_space<vmem>>, vector<2x128xf32>
    tpu.vector_store %arg12[%c89_206, %c0_207], %1 {strides = array<i32>} : memref<108x128xf32, #tpu.memory_space<vmem>>, vector<2x128xf32>,
    %c0_208 = arith.constant 0 : index
    %c0_209 = arith.constant 0 : index
    %c0_210 = arith.constant 0 : index
    %170 = vector.load %arg7[%c0_208, %c0_209, %c0_210] : memref<2x1x128xf32, #tpu.memory_space<vmem>>, vector<1x1x128xf32>
    %171 = vector.shape_cast %170 : vector<1x1x128xf32> to vector<1x128xf32>
    %172 = vector.shape_cast %171 : vector<1x128xf32> to vector<1x128xf32>
    %173 = vector.broadcast %172 : vector<1x128xf32> to vector<53x128xf32>
    %c1_211 = arith.constant 1 : index
    %c0_212 = arith.constant 0 : index
    %174 = tpu.strided_load %arg12[%c1_211, %c0_212] {strides = array<i32: 2, 1>} : memref<108x128xf32, #tpu.memory_space<vmem>>, vector<53x128xf32>
    %175 = arith.truncf %174 : vector<53x128xf32> to vector<53x128xbf16>
    %c0_213 = arith.constant 0 : index
    %c0_214 = arith.constant 0 : index
    %c0_215 = arith.constant 0 : index
    %c0_216 = arith.constant 0 : index
    %176 = vector.load %arg6[%c0_213, %c0_214, %c0_215, %c0_216] : memref<2x2x128x128xbf16, #tpu.memory_space<vmem>>, vector<1x1x128x128xbf16>
    %177 = vector.shape_cast %176 : vector<1x1x128x128xbf16> to vector<128x128xbf16>
    %cst_217 = arith.constant dense<0.000000e+00> : vector<53x128xf32>
    %178 = tpu.matmul %175, %177, %cst_217 {dimension_numbers = #tpu.dot_dimension_numbers<[1], [0], [0], [1], [0, 0, 1, 1], [], []>} : vector<53x128xbf16>, vector<128x128xbf16>, vector<53x128xf32> -> vector<53x128xf32>
    %179 = arith.addf %173, %178 : vector<53x128xf32>
    %c2_218 = arith.constant 2 : index
    %c0_219 = arith.constant 0 : index
    %180 = tpu.strided_load %arg12[%c2_218, %c0_219] {strides = array<i32: 2, 1>} : memref<108x128xf32, #tpu.memory_space<vmem>>, vector<53x128xf32>
    %181 = arith.truncf %180 : vector<53x128xf32> to vector<53x128xbf16>
    %c0_220 = arith.constant 0 : index
    %c1_221 = arith.constant 1 : index
    %c0_222 = arith.constant 0 : index
    %c0_223 = arith.constant 0 : index
    %182 = vector.load %arg6[%c0_220, %c1_221, %c0_222, %c0_223] : memref<2x2x128x128xbf16, #tpu.memory_space<vmem>>, vector<1x1x128x128xbf16>
    %183 = vector.shape_cast %182 : vector<1x1x128x128xbf16> to vector<128x128xbf16>
    %cst_224 = arith.constant dense<0.000000e+00> : vector<53x128xf32>
    %184 = tpu.matmul %181, %183, %cst_224 {dimension_numbers = #tpu.dot_dimension_numbers<[1], [0], [0], [1], [0, 0, 1, 1], [], []>} : vector<53x128xbf16>, vector<128x128xbf16>, vector<53x128xf32> -> vector<53x128xf32>
    %185 = arith.addf %179, %184 : vector<53x128xf32>
    %cst_225 = arith.constant 0.000000e+00 : f32
    %186 = vector.broadcast %cst_225 : f32 to vector<53x128xf32>
    %187 = arith.maximumf %185, %186 : vector<53x128xf32>
    %188 = vector.extract_strided_slice %187 {offsets = [0, 0], sizes = [8, 128], strides = [1, 1]} : vector<53x128xf32> to vector<8x128xf32>
    %c1_226 = arith.constant 1 : index
    %c0_227 = arith.constant 0 : index
    %189 = vector.load %arg14[%c1_226, %c0_227] : memref<60x128xf32, #tpu.memory_space<vmem>>, vector<8x128xf32>
    tpu.vector_store %arg14[%c1_226, %c0_227], %188 {strides = array<i32>} : memref<60x128xf32, #tpu.memory_space<vmem>>, vector<8x128xf32>,
    %190 = vector.extract_strided_slice %187 {offsets = [9, 0], sizes = [8, 128], strides = [1, 1]} : vector<53x128xf32> to vector<8x128xf32>
    %c11_228 = arith.constant 11 : index
    %c0_229 = arith.constant 0 : index
    %191 = vector.load %arg14[%c11_228, %c0_229] : memref<60x128xf32, #tpu.memory_space<vmem>>, vector<8x128xf32>
    tpu.vector_store %arg14[%c11_228, %c0_229], %190 {strides = array<i32>} : memref<60x128xf32, #tpu.memory_space<vmem>>, vector<8x128xf32>,
    %192 = vector.extract_strided_slice %187 {offsets = [18, 0], sizes = [8, 128], strides = [1, 1]} : vector<53x128xf32> to vector<8x128xf32>
    %c21 = arith.constant 21 : index
    %c0_230 = arith.constant 0 : index
    %193 = vector.load %arg14[%c21, %c0_230] : memref<60x128xf32, #tpu.memory_space<vmem>>, vector<8x128xf32>
    tpu.vector_store %arg14[%c21, %c0_230], %192 {strides = array<i32>} : memref<60x128xf32, #tpu.memory_space<vmem>>, vector<8x128xf32>,
    %194 = vector.extract_strided_slice %187 {offsets = [27, 0], sizes = [8, 128], strides = [1, 1]} : vector<53x128xf32> to vector<8x128xf32>
    %c31 = arith.constant 31 : index
    %c0_231 = arith.constant 0 : index
    %195 = vector.load %arg14[%c31, %c0_231] : memref<60x128xf32, #tpu.memory_space<vmem>>, vector<8x128xf32>
    tpu.vector_store %arg14[%c31, %c0_231], %194 {strides = array<i32>} : memref<60x128xf32, #tpu.memory_space<vmem>>, vector<8x128xf32>,
    %196 = vector.extract_strided_slice %187 {offsets = [36, 0], sizes = [8, 128], strides = [1, 1]} : vector<53x128xf32> to vector<8x128xf32>
    %c41 = arith.constant 41 : index
    %c0_232 = arith.constant 0 : index
    %197 = vector.load %arg14[%c41, %c0_232] : memref<60x128xf32, #tpu.memory_space<vmem>>, vector<8x128xf32>
    tpu.vector_store %arg14[%c41, %c0_232], %196 {strides = array<i32>} : memref<60x128xf32, #tpu.memory_space<vmem>>, vector<8x128xf32>,
    %198 = vector.extract_strided_slice %187 {offsets = [45, 0], sizes = [8, 128], strides = [1, 1]} : vector<53x128xf32> to vector<8x128xf32>
    %c51 = arith.constant 51 : index
    %c0_233 = arith.constant 0 : index
    %199 = vector.load %arg14[%c51, %c0_233] : memref<60x128xf32, #tpu.memory_space<vmem>>, vector<8x128xf32>
    tpu.vector_store %arg14[%c51, %c0_233], %198 {strides = array<i32>} : memref<60x128xf32, #tpu.memory_space<vmem>>, vector<8x128xf32>,
    %c0_234 = arith.constant 0 : index
    %c0_235 = arith.constant 0 : index
    %200 = vector.load %arg14[%c0_234, %c0_235] : memref<60x128xf32, #tpu.memory_space<vmem>>, vector<58x128xf32>
    %201 = arith.truncf %200 : vector<58x128xf32> to vector<58x128xbf16>
    %c0_236 = arith.constant 0 : index
    %c0_237 = arith.constant 0 : index
    %202 = vector.load %arg18[%c0_236, %c0_237] : memref<106x384xbf16, #tpu.memory_space<vmem>>, vector<58x128xbf16>
    tpu.vector_store %arg18[%c0_236, %c0_237], %201 {strides = array<i32>} : memref<106x384xbf16, #tpu.memory_space<vmem>>, vector<58x128xbf16>,
    %c1_238 = arith.constant 1 : index
    %c0_239 = arith.constant 0 : index
    %203 = vector.load %arg14[%c1_238, %c0_239] : memref<60x128xf32, #tpu.memory_space<vmem>>, vector<58x128xf32>
    %204 = arith.truncf %203 : vector<58x128xf32> to vector<58x128xbf16>
    %c0_240 = arith.constant 0 : index
    %c128_241 = arith.constant 128 : index
    %205 = vector.load %arg18[%c0_240, %c128_241] : memref<106x384xbf16, #tpu.memory_space<vmem>>, vector<58x128xbf16>
    tpu.vector_store %arg18[%c0_240, %c128_241], %204 {strides = array<i32>} : memref<106x384xbf16, #tpu.memory_space<vmem>>, vector<58x128xbf16>,
    %c2_242 = arith.constant 2 : index
    %c0_243 = arith.constant 0 : index
    %206 = vector.load %arg14[%c2_242, %c0_243] : memref<60x128xf32, #tpu.memory_space<vmem>>, vector<58x128xf32>
    %207 = arith.truncf %206 : vector<58x128xf32> to vector<58x128xbf16>
    %c0_244 = arith.constant 0 : index
    %c256_245 = arith.constant 256 : index
    %208 = vector.load %arg18[%c0_244, %c256_245] : memref<106x384xbf16, #tpu.memory_space<vmem>>, vector<58x128xbf16>
    tpu.vector_store %arg18[%c0_244, %c256_245], %207 {strides = array<i32>} : memref<106x384xbf16, #tpu.memory_space<vmem>>, vector<58x128xbf16>,
    %c0_246 = arith.constant 0 : index
    %c0_247 = arith.constant 0 : index
    %209 = vector.load %arg18[%c0_246, %c0_247] : memref<106x384xbf16, #tpu.memory_space<vmem>>, vector<58x384xbf16>
    %c2_248 = arith.constant 2 : index
    %c0_249 = arith.constant 0 : index
    %c0_250 = arith.constant 0 : index
    %210 = vector.load %arg4[%c2_248, %c0_249, %c0_250] : memref<6x384x128xbf16, #tpu.memory_space<vmem>>, vector<1x384x128xbf16>
    %211 = vector.shape_cast %210 : vector<1x384x128xbf16> to vector<384x128xbf16>
    %cst_251 = arith.constant dense<0.000000e+00> : vector<58x128xf32>
    %212 = tpu.matmul %209, %211, %cst_251 {dimension_numbers = #tpu.dot_dimension_numbers<[1], [0], [0], [1], [0, 0, 1, 1], [], []>} : vector<58x384xbf16>, vector<384x128xbf16>, vector<58x128xf32> -> vector<58x128xf32>
    %c2_252 = arith.constant 2 : index
    %c0_253 = arith.constant 0 : index
    %c0_254 = arith.constant 0 : index
    %213 = vector.load %arg5[%c2_252, %c0_253, %c0_254] : memref<6x1x128xf32, #tpu.memory_space<vmem>>, vector<1x1x128xf32>
    %214 = vector.shape_cast %213 : vector<1x1x128xf32> to vector<1x128xf32>
    %215 = vector.broadcast %214 : vector<1x128xf32> to vector<58x128xf32>
    %216 = arith.addf %212, %215 : vector<58x128xf32>
    %cst_255 = arith.constant 0.000000e+00 : f32
    %217 = vector.broadcast %cst_255 : f32 to vector<58x128xf32>
    %218 = arith.maximumf %216, %217 : vector<58x128xf32>
    %c1_256 = arith.constant 1 : index
    %c0_257 = arith.constant 0 : index
    %219 = vector.load %arg15[%c1_256, %c0_257] : memref<60x128xf32, #tpu.memory_space<vmem>>, vector<58x128xf32>
    tpu.vector_store %arg15[%c1_256, %c0_257], %218 {strides = array<i32>} : memref<60x128xf32, #tpu.memory_space<vmem>>, vector<58x128xf32>,
    %c9_258 = arith.constant 9 : index
    %c0_259 = arith.constant 0 : index
    %220 = vector.load %arg15[%c9_258, %c0_259] : memref<60x128xf32, #tpu.memory_space<vmem>>, vector<2x128xf32>
    tpu.vector_store %arg15[%c9_258, %c0_259], %1 {strides = array<i32>} : memref<60x128xf32, #tpu.memory_space<vmem>>, vector<2x128xf32>,
    %c19_260 = arith.constant 19 : index
    %c0_261 = arith.constant 0 : index
    %221 = vector.load %arg15[%c19_260, %c0_261] : memref<60x128xf32, #tpu.memory_space<vmem>>, vector<2x128xf32>
    tpu.vector_store %arg15[%c19_260, %c0_261], %1 {strides = array<i32>} : memref<60x128xf32, #tpu.memory_space<vmem>>, vector<2x128xf32>,
    %c29_262 = arith.constant 29 : index
    %c0_263 = arith.constant 0 : index
    %222 = vector.load %arg15[%c29_262, %c0_263] : memref<60x128xf32, #tpu.memory_space<vmem>>, vector<2x128xf32>
    tpu.vector_store %arg15[%c29_262, %c0_263], %1 {strides = array<i32>} : memref<60x128xf32, #tpu.memory_space<vmem>>, vector<2x128xf32>,
    %c39_264 = arith.constant 39 : index
    %c0_265 = arith.constant 0 : index
    %223 = vector.load %arg15[%c39_264, %c0_265] : memref<60x128xf32, #tpu.memory_space<vmem>>, vector<2x128xf32>
    tpu.vector_store %arg15[%c39_264, %c0_265], %1 {strides = array<i32>} : memref<60x128xf32, #tpu.memory_space<vmem>>, vector<2x128xf32>,
    %c49_266 = arith.constant 49 : index
    %c0_267 = arith.constant 0 : index
    %224 = vector.load %arg15[%c49_266, %c0_267] : memref<60x128xf32, #tpu.memory_space<vmem>>, vector<2x128xf32>
    tpu.vector_store %arg15[%c49_266, %c0_267], %1 {strides = array<i32>} : memref<60x128xf32, #tpu.memory_space<vmem>>, vector<2x128xf32>,
    %c0_268 = arith.constant 0 : index
    %c0_269 = arith.constant 0 : index
    %225 = vector.load %arg15[%c0_268, %c0_269] : memref<60x128xf32, #tpu.memory_space<vmem>>, vector<58x128xf32>
    %226 = arith.truncf %225 : vector<58x128xf32> to vector<58x128xbf16>
    %c0_270 = arith.constant 0 : index
    %c0_271 = arith.constant 0 : index
    %227 = vector.load %arg18[%c0_270, %c0_271] : memref<106x384xbf16, #tpu.memory_space<vmem>>, vector<58x128xbf16>
    tpu.vector_store %arg18[%c0_270, %c0_271], %226 {strides = array<i32>} : memref<106x384xbf16, #tpu.memory_space<vmem>>, vector<58x128xbf16>,
    %c1_272 = arith.constant 1 : index
    %c0_273 = arith.constant 0 : index
    %228 = vector.load %arg15[%c1_272, %c0_273] : memref<60x128xf32, #tpu.memory_space<vmem>>, vector<58x128xf32>
    %229 = arith.truncf %228 : vector<58x128xf32> to vector<58x128xbf16>
    %c0_274 = arith.constant 0 : index
    %c128_275 = arith.constant 128 : index
    %230 = vector.load %arg18[%c0_274, %c128_275] : memref<106x384xbf16, #tpu.memory_space<vmem>>, vector<58x128xbf16>
    tpu.vector_store %arg18[%c0_274, %c128_275], %229 {strides = array<i32>} : memref<106x384xbf16, #tpu.memory_space<vmem>>, vector<58x128xbf16>,
    %c2_276 = arith.constant 2 : index
    %c0_277 = arith.constant 0 : index
    %231 = vector.load %arg15[%c2_276, %c0_277] : memref<60x128xf32, #tpu.memory_space<vmem>>, vector<58x128xf32>
    %232 = arith.truncf %231 : vector<58x128xf32> to vector<58x128xbf16>
    %c0_278 = arith.constant 0 : index
    %c256_279 = arith.constant 256 : index
    %233 = vector.load %arg18[%c0_278, %c256_279] : memref<106x384xbf16, #tpu.memory_space<vmem>>, vector<58x128xbf16>
    tpu.vector_store %arg18[%c0_278, %c256_279], %232 {strides = array<i32>} : memref<106x384xbf16, #tpu.memory_space<vmem>>, vector<58x128xbf16>,
    %c0_280 = arith.constant 0 : index
    %c0_281 = arith.constant 0 : index
    %234 = vector.load %arg18[%c0_280, %c0_281] : memref<106x384xbf16, #tpu.memory_space<vmem>>, vector<58x384xbf16>
    %c3_282 = arith.constant 3 : index
    %c0_283 = arith.constant 0 : index
    %c0_284 = arith.constant 0 : index
    %235 = vector.load %arg4[%c3_282, %c0_283, %c0_284] : memref<6x384x128xbf16, #tpu.memory_space<vmem>>, vector<1x384x128xbf16>
    %236 = vector.shape_cast %235 : vector<1x384x128xbf16> to vector<384x128xbf16>
    %cst_285 = arith.constant dense<0.000000e+00> : vector<58x128xf32>
    %237 = tpu.matmul %234, %236, %cst_285 {dimension_numbers = #tpu.dot_dimension_numbers<[1], [0], [0], [1], [0, 0, 1, 1], [], []>} : vector<58x384xbf16>, vector<384x128xbf16>, vector<58x128xf32> -> vector<58x128xf32>
    %c3_286 = arith.constant 3 : index
    %c0_287 = arith.constant 0 : index
    %c0_288 = arith.constant 0 : index
    %238 = vector.load %arg5[%c3_286, %c0_287, %c0_288] : memref<6x1x128xf32, #tpu.memory_space<vmem>>, vector<1x1x128xf32>
    %239 = vector.shape_cast %238 : vector<1x1x128xf32> to vector<1x128xf32>
    %240 = vector.broadcast %239 : vector<1x128xf32> to vector<58x128xf32>
    %241 = arith.addf %237, %240 : vector<58x128xf32>
    %cst_289 = arith.constant 0.000000e+00 : f32
    %242 = vector.broadcast %cst_289 : f32 to vector<58x128xf32>
    %243 = arith.maximumf %241, %242 : vector<58x128xf32>
    %c1_290 = arith.constant 1 : index
    %c0_291 = arith.constant 0 : index
    %244 = vector.load %arg14[%c1_290, %c0_291] : memref<60x128xf32, #tpu.memory_space<vmem>>, vector<58x128xf32>
    tpu.vector_store %arg14[%c1_290, %c0_291], %243 {strides = array<i32>} : memref<60x128xf32, #tpu.memory_space<vmem>>, vector<58x128xf32>,
    %c9_292 = arith.constant 9 : index
    %c0_293 = arith.constant 0 : index
    %245 = vector.load %arg14[%c9_292, %c0_293] : memref<60x128xf32, #tpu.memory_space<vmem>>, vector<2x128xf32>
    tpu.vector_store %arg14[%c9_292, %c0_293], %1 {strides = array<i32>} : memref<60x128xf32, #tpu.memory_space<vmem>>, vector<2x128xf32>,
    %c19_294 = arith.constant 19 : index
    %c0_295 = arith.constant 0 : index
    %246 = vector.load %arg14[%c19_294, %c0_295] : memref<60x128xf32, #tpu.memory_space<vmem>>, vector<2x128xf32>
    tpu.vector_store %arg14[%c19_294, %c0_295], %1 {strides = array<i32>} : memref<60x128xf32, #tpu.memory_space<vmem>>, vector<2x128xf32>,
    %c29_296 = arith.constant 29 : index
    %c0_297 = arith.constant 0 : index
    %247 = vector.load %arg14[%c29_296, %c0_297] : memref<60x128xf32, #tpu.memory_space<vmem>>, vector<2x128xf32>
    tpu.vector_store %arg14[%c29_296, %c0_297], %1 {strides = array<i32>} : memref<60x128xf32, #tpu.memory_space<vmem>>, vector<2x128xf32>,
    %c39_298 = arith.constant 39 : index
    %c0_299 = arith.constant 0 : index
    %248 = vector.load %arg14[%c39_298, %c0_299] : memref<60x128xf32, #tpu.memory_space<vmem>>, vector<2x128xf32>
    tpu.vector_store %arg14[%c39_298, %c0_299], %1 {strides = array<i32>} : memref<60x128xf32, #tpu.memory_space<vmem>>, vector<2x128xf32>,
    %c49_300 = arith.constant 49 : index
    %c0_301 = arith.constant 0 : index
    %249 = vector.load %arg14[%c49_300, %c0_301] : memref<60x128xf32, #tpu.memory_space<vmem>>, vector<2x128xf32>
    tpu.vector_store %arg14[%c49_300, %c0_301], %1 {strides = array<i32>} : memref<60x128xf32, #tpu.memory_space<vmem>>, vector<2x128xf32>,
    %c1_302 = arith.constant 1 : index
    %c0_303 = arith.constant 0 : index
    %c0_304 = arith.constant 0 : index
    %250 = vector.load %arg7[%c1_302, %c0_303, %c0_304] : memref<2x1x128xf32, #tpu.memory_space<vmem>>, vector<1x1x128xf32>
    %251 = vector.shape_cast %250 : vector<1x1x128xf32> to vector<1x128xf32>
    %252 = vector.shape_cast %251 : vector<1x128xf32> to vector<1x128xf32>
    %253 = vector.broadcast %252 : vector<1x128xf32> to vector<29x128xf32>
    %c1_305 = arith.constant 1 : index
    %c0_306 = arith.constant 0 : index
    %254 = tpu.strided_load %arg14[%c1_305, %c0_306] {strides = array<i32: 2, 1>} : memref<60x128xf32, #tpu.memory_space<vmem>>, vector<29x128xf32>
    %255 = arith.truncf %254 : vector<29x128xf32> to vector<29x128xbf16>
    %c1_307 = arith.constant 1 : index
    %c0_308 = arith.constant 0 : index
    %c0_309 = arith.constant 0 : index
    %c0_310 = arith.constant 0 : index
    %256 = vector.load %arg6[%c1_307, %c0_308, %c0_309, %c0_310] : memref<2x2x128x128xbf16, #tpu.memory_space<vmem>>, vector<1x1x128x128xbf16>
    %257 = vector.shape_cast %256 : vector<1x1x128x128xbf16> to vector<128x128xbf16>
    %cst_311 = arith.constant dense<0.000000e+00> : vector<29x128xf32>
    %258 = tpu.matmul %255, %257, %cst_311 {dimension_numbers = #tpu.dot_dimension_numbers<[1], [0], [0], [1], [0, 0, 1, 1], [], []>} : vector<29x128xbf16>, vector<128x128xbf16>, vector<29x128xf32> -> vector<29x128xf32>
    %259 = arith.addf %253, %258 : vector<29x128xf32>
    %c2_312 = arith.constant 2 : index
    %c0_313 = arith.constant 0 : index
    %260 = tpu.strided_load %arg14[%c2_312, %c0_313] {strides = array<i32: 2, 1>} : memref<60x128xf32, #tpu.memory_space<vmem>>, vector<29x128xf32>
    %261 = arith.truncf %260 : vector<29x128xf32> to vector<29x128xbf16>
    %c1_314 = arith.constant 1 : index
    %c1_315 = arith.constant 1 : index
    %c0_316 = arith.constant 0 : index
    %c0_317 = arith.constant 0 : index
    %262 = vector.load %arg6[%c1_314, %c1_315, %c0_316, %c0_317] : memref<2x2x128x128xbf16, #tpu.memory_space<vmem>>, vector<1x1x128x128xbf16>
    %263 = vector.shape_cast %262 : vector<1x1x128x128xbf16> to vector<128x128xbf16>
    %cst_318 = arith.constant dense<0.000000e+00> : vector<29x128xf32>
    %264 = tpu.matmul %261, %263, %cst_318 {dimension_numbers = #tpu.dot_dimension_numbers<[1], [0], [0], [1], [0, 0, 1, 1], [], []>} : vector<29x128xbf16>, vector<128x128xbf16>, vector<29x128xf32> -> vector<29x128xf32>
    %265 = arith.addf %259, %264 : vector<29x128xf32>
    %cst_319 = arith.constant 0.000000e+00 : f32
    %266 = vector.broadcast %cst_319 : f32 to vector<29x128xf32>
    %267 = arith.maximumf %265, %266 : vector<29x128xf32>
    %268 = vector.extract_strided_slice %267 {offsets = [0, 0], sizes = [4, 128], strides = [1, 1]} : vector<29x128xf32> to vector<4x128xf32>
    %c1_320 = arith.constant 1 : index
    %c0_321 = arith.constant 0 : index
    %269 = vector.load %arg16[%c1_320, %c0_321] : memref<36x128xf32, #tpu.memory_space<vmem>>, vector<4x128xf32>
    tpu.vector_store %arg16[%c1_320, %c0_321], %268 {strides = array<i32>} : memref<36x128xf32, #tpu.memory_space<vmem>>, vector<4x128xf32>,
    %270 = vector.extract_strided_slice %267 {offsets = [5, 0], sizes = [4, 128], strides = [1, 1]} : vector<29x128xf32> to vector<4x128xf32>
    %c7 = arith.constant 7 : index
    %c0_322 = arith.constant 0 : index
    %271 = vector.load %arg16[%c7, %c0_322] : memref<36x128xf32, #tpu.memory_space<vmem>>, vector<4x128xf32>
    tpu.vector_store %arg16[%c7, %c0_322], %270 {strides = array<i32>} : memref<36x128xf32, #tpu.memory_space<vmem>>, vector<4x128xf32>,
    %272 = vector.extract_strided_slice %267 {offsets = [10, 0], sizes = [4, 128], strides = [1, 1]} : vector<29x128xf32> to vector<4x128xf32>
    %c13 = arith.constant 13 : index
    %c0_323 = arith.constant 0 : index
    %273 = vector.load %arg16[%c13, %c0_323] : memref<36x128xf32, #tpu.memory_space<vmem>>, vector<4x128xf32>
    tpu.vector_store %arg16[%c13, %c0_323], %272 {strides = array<i32>} : memref<36x128xf32, #tpu.memory_space<vmem>>, vector<4x128xf32>,
    %274 = vector.extract_strided_slice %267 {offsets = [15, 0], sizes = [4, 128], strides = [1, 1]} : vector<29x128xf32> to vector<4x128xf32>
    %c19_324 = arith.constant 19 : index
    %c0_325 = arith.constant 0 : index
    %275 = vector.load %arg16[%c19_324, %c0_325] : memref<36x128xf32, #tpu.memory_space<vmem>>, vector<4x128xf32>
    tpu.vector_store %arg16[%c19_324, %c0_325], %274 {strides = array<i32>} : memref<36x128xf32, #tpu.memory_space<vmem>>, vector<4x128xf32>,
    %276 = vector.extract_strided_slice %267 {offsets = [20, 0], sizes = [4, 128], strides = [1, 1]} : vector<29x128xf32> to vector<4x128xf32>
    %c25 = arith.constant 25 : index
    %c0_326 = arith.constant 0 : index
    %277 = vector.load %arg16[%c25, %c0_326] : memref<36x128xf32, #tpu.memory_space<vmem>>, vector<4x128xf32>
    tpu.vector_store %arg16[%c25, %c0_326], %276 {strides = array<i32>} : memref<36x128xf32, #tpu.memory_space<vmem>>, vector<4x128xf32>,
    %278 = vector.extract_strided_slice %267 {offsets = [25, 0], sizes = [4, 128], strides = [1, 1]} : vector<29x128xf32> to vector<4x128xf32>
    %c31_327 = arith.constant 31 : index
    %c0_328 = arith.constant 0 : index
    %279 = vector.load %arg16[%c31_327, %c0_328] : memref<36x128xf32, #tpu.memory_space<vmem>>, vector<4x128xf32>
    tpu.vector_store %arg16[%c31_327, %c0_328], %278 {strides = array<i32>} : memref<36x128xf32, #tpu.memory_space<vmem>>, vector<4x128xf32>,
    %c0_329 = arith.constant 0 : index
    %c0_330 = arith.constant 0 : index
    %280 = vector.load %arg16[%c0_329, %c0_330] : memref<36x128xf32, #tpu.memory_space<vmem>>, vector<34x128xf32>
    %281 = arith.truncf %280 : vector<34x128xf32> to vector<34x128xbf16>
    %c0_331 = arith.constant 0 : index
    %c0_332 = arith.constant 0 : index
    %282 = vector.load %arg18[%c0_331, %c0_332] : memref<106x384xbf16, #tpu.memory_space<vmem>>, vector<34x128xbf16>
    tpu.vector_store %arg18[%c0_331, %c0_332], %281 {strides = array<i32>} : memref<106x384xbf16, #tpu.memory_space<vmem>>, vector<34x128xbf16>,
    %c1_333 = arith.constant 1 : index
    %c0_334 = arith.constant 0 : index
    %283 = vector.load %arg16[%c1_333, %c0_334] : memref<36x128xf32, #tpu.memory_space<vmem>>, vector<34x128xf32>
    %284 = arith.truncf %283 : vector<34x128xf32> to vector<34x128xbf16>
    %c0_335 = arith.constant 0 : index
    %c128_336 = arith.constant 128 : index
    %285 = vector.load %arg18[%c0_335, %c128_336] : memref<106x384xbf16, #tpu.memory_space<vmem>>, vector<34x128xbf16>
    tpu.vector_store %arg18[%c0_335, %c128_336], %284 {strides = array<i32>} : memref<106x384xbf16, #tpu.memory_space<vmem>>, vector<34x128xbf16>,
    %c2_337 = arith.constant 2 : index
    %c0_338 = arith.constant 0 : index
    %286 = vector.load %arg16[%c2_337, %c0_338] : memref<36x128xf32, #tpu.memory_space<vmem>>, vector<34x128xf32>
    %287 = arith.truncf %286 : vector<34x128xf32> to vector<34x128xbf16>
    %c0_339 = arith.constant 0 : index
    %c256_340 = arith.constant 256 : index
    %288 = vector.load %arg18[%c0_339, %c256_340] : memref<106x384xbf16, #tpu.memory_space<vmem>>, vector<34x128xbf16>
    tpu.vector_store %arg18[%c0_339, %c256_340], %287 {strides = array<i32>} : memref<106x384xbf16, #tpu.memory_space<vmem>>, vector<34x128xbf16>,
    %c0_341 = arith.constant 0 : index
    %c0_342 = arith.constant 0 : index
    %289 = vector.load %arg18[%c0_341, %c0_342] : memref<106x384xbf16, #tpu.memory_space<vmem>>, vector<34x384xbf16>
    %c4_343 = arith.constant 4 : index
    %c0_344 = arith.constant 0 : index
    %c0_345 = arith.constant 0 : index
    %290 = vector.load %arg4[%c4_343, %c0_344, %c0_345] : memref<6x384x128xbf16, #tpu.memory_space<vmem>>, vector<1x384x128xbf16>
    %291 = vector.shape_cast %290 : vector<1x384x128xbf16> to vector<384x128xbf16>
    %cst_346 = arith.constant dense<0.000000e+00> : vector<34x128xf32>
    %292 = tpu.matmul %289, %291, %cst_346 {dimension_numbers = #tpu.dot_dimension_numbers<[1], [0], [0], [1], [0, 0, 1, 1], [], []>} : vector<34x384xbf16>, vector<384x128xbf16>, vector<34x128xf32> -> vector<34x128xf32>
    %c4_347 = arith.constant 4 : index
    %c0_348 = arith.constant 0 : index
    %c0_349 = arith.constant 0 : index
    %293 = vector.load %arg5[%c4_347, %c0_348, %c0_349] : memref<6x1x128xf32, #tpu.memory_space<vmem>>, vector<1x1x128xf32>
    %294 = vector.shape_cast %293 : vector<1x1x128xf32> to vector<1x128xf32>
    %295 = vector.broadcast %294 : vector<1x128xf32> to vector<34x128xf32>
    %296 = arith.addf %292, %295 : vector<34x128xf32>
    %cst_350 = arith.constant 0.000000e+00 : f32
    %297 = vector.broadcast %cst_350 : f32 to vector<34x128xf32>
    %298 = arith.maximumf %296, %297 : vector<34x128xf32>
    %c1_351 = arith.constant 1 : index
    %c0_352 = arith.constant 0 : index
    %299 = vector.load %arg17[%c1_351, %c0_352] : memref<36x128xf32, #tpu.memory_space<vmem>>, vector<34x128xf32>
    tpu.vector_store %arg17[%c1_351, %c0_352], %298 {strides = array<i32>} : memref<36x128xf32, #tpu.memory_space<vmem>>, vector<34x128xf32>,
    %c5_353 = arith.constant 5 : index
    %c0_354 = arith.constant 0 : index
    %300 = vector.load %arg17[%c5_353, %c0_354] : memref<36x128xf32, #tpu.memory_space<vmem>>, vector<2x128xf32>
    tpu.vector_store %arg17[%c5_353, %c0_354], %1 {strides = array<i32>} : memref<36x128xf32, #tpu.memory_space<vmem>>, vector<2x128xf32>,
    %c11_355 = arith.constant 11 : index
    %c0_356 = arith.constant 0 : index
    %301 = vector.load %arg17[%c11_355, %c0_356] : memref<36x128xf32, #tpu.memory_space<vmem>>, vector<2x128xf32>
    tpu.vector_store %arg17[%c11_355, %c0_356], %1 {strides = array<i32>} : memref<36x128xf32, #tpu.memory_space<vmem>>, vector<2x128xf32>,
    %c17_357 = arith.constant 17 : index
    %c0_358 = arith.constant 0 : index
    %302 = vector.load %arg17[%c17_357, %c0_358] : memref<36x128xf32, #tpu.memory_space<vmem>>, vector<2x128xf32>
    tpu.vector_store %arg17[%c17_357, %c0_358], %1 {strides = array<i32>} : memref<36x128xf32, #tpu.memory_space<vmem>>, vector<2x128xf32>,
    %c23_359 = arith.constant 23 : index
    %c0_360 = arith.constant 0 : index
    %303 = vector.load %arg17[%c23_359, %c0_360] : memref<36x128xf32, #tpu.memory_space<vmem>>, vector<2x128xf32>
    tpu.vector_store %arg17[%c23_359, %c0_360], %1 {strides = array<i32>} : memref<36x128xf32, #tpu.memory_space<vmem>>, vector<2x128xf32>,
    %c29_361 = arith.constant 29 : index
    %c0_362 = arith.constant 0 : index
    %304 = vector.load %arg17[%c29_361, %c0_362] : memref<36x128xf32, #tpu.memory_space<vmem>>, vector<2x128xf32>
    tpu.vector_store %arg17[%c29_361, %c0_362], %1 {strides = array<i32>} : memref<36x128xf32, #tpu.memory_space<vmem>>, vector<2x128xf32>,
    %c0_363 = arith.constant 0 : index
    %c0_364 = arith.constant 0 : index
    %305 = vector.load %arg17[%c0_363, %c0_364] : memref<36x128xf32, #tpu.memory_space<vmem>>, vector<34x128xf32>
    %306 = arith.truncf %305 : vector<34x128xf32> to vector<34x128xbf16>
    %c0_365 = arith.constant 0 : index
    %c0_366 = arith.constant 0 : index
    %307 = vector.load %arg18[%c0_365, %c0_366] : memref<106x384xbf16, #tpu.memory_space<vmem>>, vector<34x128xbf16>
    tpu.vector_store %arg18[%c0_365, %c0_366], %306 {strides = array<i32>} : memref<106x384xbf16, #tpu.memory_space<vmem>>, vector<34x128xbf16>,
    %c1_367 = arith.constant 1 : index
    %c0_368 = arith.constant 0 : index
    %308 = vector.load %arg17[%c1_367, %c0_368] : memref<36x128xf32, #tpu.memory_space<vmem>>, vector<34x128xf32>
    %309 = arith.truncf %308 : vector<34x128xf32> to vector<34x128xbf16>
    %c0_369 = arith.constant 0 : index
    %c128_370 = arith.constant 128 : index
    %310 = vector.load %arg18[%c0_369, %c128_370] : memref<106x384xbf16, #tpu.memory_space<vmem>>, vector<34x128xbf16>
    tpu.vector_store %arg18[%c0_369, %c128_370], %309 {strides = array<i32>} : memref<106x384xbf16, #tpu.memory_space<vmem>>, vector<34x128xbf16>,
    %c2_371 = arith.constant 2 : index
    %c0_372 = arith.constant 0 : index
    %311 = vector.load %arg17[%c2_371, %c0_372] : memref<36x128xf32, #tpu.memory_space<vmem>>, vector<34x128xf32>
    %312 = arith.truncf %311 : vector<34x128xf32> to vector<34x128xbf16>
    %c0_373 = arith.constant 0 : index
    %c256_374 = arith.constant 256 : index
    %313 = vector.load %arg18[%c0_373, %c256_374] : memref<106x384xbf16, #tpu.memory_space<vmem>>, vector<34x128xbf16>
    tpu.vector_store %arg18[%c0_373, %c256_374], %312 {strides = array<i32>} : memref<106x384xbf16, #tpu.memory_space<vmem>>, vector<34x128xbf16>,
    %c0_375 = arith.constant 0 : index
    %c0_376 = arith.constant 0 : index
    %314 = vector.load %arg18[%c0_375, %c0_376] : memref<106x384xbf16, #tpu.memory_space<vmem>>, vector<34x384xbf16>
    %c5_377 = arith.constant 5 : index
    %c0_378 = arith.constant 0 : index
    %c0_379 = arith.constant 0 : index
    %315 = vector.load %arg4[%c5_377, %c0_378, %c0_379] : memref<6x384x128xbf16, #tpu.memory_space<vmem>>, vector<1x384x128xbf16>
    %316 = vector.shape_cast %315 : vector<1x384x128xbf16> to vector<384x128xbf16>
    %cst_380 = arith.constant dense<0.000000e+00> : vector<34x128xf32>
    %317 = tpu.matmul %314, %316, %cst_380 {dimension_numbers = #tpu.dot_dimension_numbers<[1], [0], [0], [1], [0, 0, 1, 1], [], []>} : vector<34x384xbf16>, vector<384x128xbf16>, vector<34x128xf32> -> vector<34x128xf32>
    %c5_381 = arith.constant 5 : index
    %c0_382 = arith.constant 0 : index
    %c0_383 = arith.constant 0 : index
    %318 = vector.load %arg5[%c5_381, %c0_382, %c0_383] : memref<6x1x128xf32, #tpu.memory_space<vmem>>, vector<1x1x128xf32>
    %319 = vector.shape_cast %318 : vector<1x1x128xf32> to vector<1x128xf32>
    %320 = vector.broadcast %319 : vector<1x128xf32> to vector<34x128xf32>
    %321 = arith.addf %317, %320 : vector<34x128xf32>
    %cst_384 = arith.constant 0.000000e+00 : f32
    %322 = vector.broadcast %cst_384 : f32 to vector<34x128xf32>
    %323 = arith.maximumf %321, %322 : vector<34x128xf32>
    %c1_385 = arith.constant 1 : index
    %c0_386 = arith.constant 0 : index
    %324 = vector.load %arg16[%c1_385, %c0_386] : memref<36x128xf32, #tpu.memory_space<vmem>>, vector<34x128xf32>
    tpu.vector_store %arg16[%c1_385, %c0_386], %323 {strides = array<i32>} : memref<36x128xf32, #tpu.memory_space<vmem>>, vector<34x128xf32>,
    %c5_387 = arith.constant 5 : index
    %c0_388 = arith.constant 0 : index
    %325 = vector.load %arg16[%c5_387, %c0_388] : memref<36x128xf32, #tpu.memory_space<vmem>>, vector<2x128xf32>
    tpu.vector_store %arg16[%c5_387, %c0_388], %1 {strides = array<i32>} : memref<36x128xf32, #tpu.memory_space<vmem>>, vector<2x128xf32>,
    %c11_389 = arith.constant 11 : index
    %c0_390 = arith.constant 0 : index
    %326 = vector.load %arg16[%c11_389, %c0_390] : memref<36x128xf32, #tpu.memory_space<vmem>>, vector<2x128xf32>
    tpu.vector_store %arg16[%c11_389, %c0_390], %1 {strides = array<i32>} : memref<36x128xf32, #tpu.memory_space<vmem>>, vector<2x128xf32>,
    %c17_391 = arith.constant 17 : index
    %c0_392 = arith.constant 0 : index
    %327 = vector.load %arg16[%c17_391, %c0_392] : memref<36x128xf32, #tpu.memory_space<vmem>>, vector<2x128xf32>
    tpu.vector_store %arg16[%c17_391, %c0_392], %1 {strides = array<i32>} : memref<36x128xf32, #tpu.memory_space<vmem>>, vector<2x128xf32>,
    %c23_393 = arith.constant 23 : index
    %c0_394 = arith.constant 0 : index
    %328 = vector.load %arg16[%c23_393, %c0_394] : memref<36x128xf32, #tpu.memory_space<vmem>>, vector<2x128xf32>
    tpu.vector_store %arg16[%c23_393, %c0_394], %1 {strides = array<i32>} : memref<36x128xf32, #tpu.memory_space<vmem>>, vector<2x128xf32>,
    %c29_395 = arith.constant 29 : index
    %c0_396 = arith.constant 0 : index
    %329 = vector.load %arg16[%c29_395, %c0_396] : memref<36x128xf32, #tpu.memory_space<vmem>>, vector<2x128xf32>
    tpu.vector_store %arg16[%c29_395, %c0_396], %1 {strides = array<i32>} : memref<36x128xf32, #tpu.memory_space<vmem>>, vector<2x128xf32>,
    %c0_397 = arith.constant 0 : index
    %c0_398 = arith.constant 0 : index
    %330 = vector.load %arg16[%c0_397, %c0_398] : memref<36x128xf32, #tpu.memory_space<vmem>>, vector<18x128xf32>
    %cst_399 = arith.constant dense<0.000000e+00> : vector<128xf32>
    %331 = vector.multi_reduction <add>, %330, %cst_399 [0] : vector<18x128xf32> to vector<128xf32>
    %332 = vector.shape_cast %331 : vector<128xf32> to vector<1x128xf32>
    %c18_400 = arith.constant 18 : index
    %c0_401 = arith.constant 0 : index
    %333 = vector.load %arg16[%c18_400, %c0_401] : memref<36x128xf32, #tpu.memory_space<vmem>>, vector<18x128xf32>
    %cst_402 = arith.constant dense<0.000000e+00> : vector<128xf32>
    %334 = vector.multi_reduction <add>, %333, %cst_402 [0] : vector<18x128xf32> to vector<128xf32>
    %335 = vector.shape_cast %334 : vector<128xf32> to vector<1x128xf32>
    %336 = tpu.concatenate %332, %335 in 0 : vector<1x128xf32>, vector<1x128xf32> -> vector<2x128xf32>
    %c0_403 = arith.constant 0 : index
    %c0_404 = arith.constant 0 : index
    %337 = vector.load %arg8[%c0_403, %c0_404] : memref<128x8xf32, #tpu.memory_space<vmem>>, vector<128x8xf32>
    %cst_405 = arith.constant dense<0.000000e+00> : vector<2x8xf32>
    %338 = tpu.matmul %336, %337, %cst_405 {dimension_numbers = #tpu.dot_dimension_numbers<[1], [0], [0], [1], [0, 0, 1, 1], [], []>} : vector<2x128xf32>, vector<128x8xf32>, vector<2x8xf32> -> vector<2x8xf32>
    %c0_406 = arith.constant 0 : index
    %c0_407 = arith.constant 0 : index
    %339 = vector.load %arg9[%c0_406, %c0_407] : memref<1x8xf32, #tpu.memory_space<vmem>>, vector<1x8xf32>
    %340 = vector.broadcast %339 : vector<1x8xf32> to vector<2x8xf32>
    %341 = arith.addf %338, %340 : vector<2x8xf32>
    %342 = math.tanh %341 : vector<2x8xf32>
    %343 = vector.shape_cast %342 : vector<2x8xf32> to vector<1x2x8xf32>
    %c0_408 = arith.constant 0 : index
    %c0_409 = arith.constant 0 : index
    %c0_410 = arith.constant 0 : index
    %344 = vector.load %arg10[%c0_408, %c0_409, %c0_410] : memref<1x2x8xf32, #tpu.memory_space<vmem>>, vector<1x2x8xf32>
    tpu.vector_store %arg10[%c0_408, %c0_409, %c0_410], %343 {strides = array<i32>} : memref<1x2x8xf32, #tpu.memory_space<vmem>>, vector<1x2x8xf32>,
    return
  }
  func.func @transform_0(%arg0: i32) -> (i32, i32, i32) {
    %c0_i32 = arith.constant 0 : i32
    %c0_i32_0 = arith.constant 0 : i32
    %c0_i32_1 = arith.constant 0 : i32
    return %arg0, %c0_i32, %c0_i32_0 : i32, i32, i32
  }
  func.func @transform_1(%arg0: i32) -> (i32, i32, i32) {
    %c0_i32 = arith.constant 0 : i32
    %c0_i32_0 = arith.constant 0 : i32
    %c0_i32_1 = arith.constant 0 : i32
    %c0_i32_2 = arith.constant 0 : i32
    return %c0_i32, %c0_i32_0, %c0_i32_1 : i32, i32, i32
  }
  func.func @transform_2(%arg0: i32) -> (i32, i32) {
    %c0_i32 = arith.constant 0 : i32
    %c0_i32_0 = arith.constant 0 : i32
    %c0_i32_1 = arith.constant 0 : i32
    return %c0_i32, %c0_i32_0 : i32, i32
  }
  func.func @transform_3(%arg0: i32) -> (i32, i32, i32) {
    %c0_i32 = arith.constant 0 : i32
    %c0_i32_0 = arith.constant 0 : i32
    %c0_i32_1 = arith.constant 0 : i32
    %c0_i32_2 = arith.constant 0 : i32
    return %c0_i32, %c0_i32_0, %c0_i32_1 : i32, i32, i32
  }
  func.func @transform_4(%arg0: i32) -> (i32, i32, i32) {
    %c0_i32 = arith.constant 0 : i32
    %c0_i32_0 = arith.constant 0 : i32
    %c0_i32_1 = arith.constant 0 : i32
    %c0_i32_2 = arith.constant 0 : i32
    return %c0_i32, %c0_i32_0, %c0_i32_1 : i32, i32, i32
  }
  func.func @transform_5(%arg0: i32) -> (i32, i32, i32, i32) {
    %c0_i32 = arith.constant 0 : i32
    %c0_i32_0 = arith.constant 0 : i32
    %c0_i32_1 = arith.constant 0 : i32
    %c0_i32_2 = arith.constant 0 : i32
    %c0_i32_3 = arith.constant 0 : i32
    return %c0_i32, %c0_i32_0, %c0_i32_1, %c0_i32_2 : i32, i32, i32, i32
  }
  func.func @transform_6(%arg0: i32) -> (i32, i32, i32) {
    %c0_i32 = arith.constant 0 : i32
    %c0_i32_0 = arith.constant 0 : i32
    %c0_i32_1 = arith.constant 0 : i32
    %c0_i32_2 = arith.constant 0 : i32
    return %c0_i32, %c0_i32_0, %c0_i32_1 : i32, i32, i32
  }
  func.func @transform_7(%arg0: i32) -> (i32, i32) {
    %c0_i32 = arith.constant 0 : i32
    %c0_i32_0 = arith.constant 0 : i32
    %c0_i32_1 = arith.constant 0 : i32
    return %c0_i32, %c0_i32_0 : i32, i32
  }
  func.func @transform_8(%arg0: i32) -> (i32, i32) {
    %c0_i32 = arith.constant 0 : i32
    %c0_i32_0 = arith.constant 0 : i32
    %c0_i32_1 = arith.constant 0 : i32
    return %c0_i32, %c0_i32_0 : i32, i32
  }
  func.func @transform_9(%arg0: i32) -> (i32, i32, i32) {
    %c0_i32 = arith.constant 0 : i32
    %c0_i32_0 = arith.constant 0 : i32
    %c0_i32_1 = arith.constant 0 : i32
    return %arg0, %c0_i32, %c0_i32_0 : i32, i32, i32
  }
}

</mosaic_0001>

<llo_original>
// kernel: encoder_forward.1
$region0: #{encoder_forward.1}
  #allocation0 [shape = 'u32[]', space=smem, size = 0x4, offset = 0x4, fixed_abs, tag = 'smem constant byte address 0x4 - core index']
  #allocation1 [shape = 'u32[144,128]{1,0:T(1,128)}', space=vmem, size = 0x12000, scoped, tag = 'internal scratch']
  #allocation2 [shape = 'f32[120,16]{1,0:T(8,128)}', space=vmem, size = 0xf000, scoped, tag = 'scratch operand']
  #allocation3 [shape = 'f32[108,128]{1,0:T(8,128)}', space=vmem, size = 0xe000, scoped, tag = 'scratch operand']
  #allocation4 [shape = 'f32[108,128]{1,0:T(8,128)}', space=vmem, size = 0xe000, scoped, tag = 'scratch operand']
  #allocation5 [shape = 'f32[60,128]{1,0:T(8,128)}', space=vmem, size = 0x8000, scoped, tag = 'scratch operand']
  #allocation6 [shape = 'f32[60,128]{1,0:T(8,128)}', space=vmem, size = 0x8000, scoped, tag = 'scratch operand']
  #allocation7 [shape = 'f32[36,128]{1,0:T(8,128)}', space=vmem, size = 0x5000, scoped, tag = 'scratch operand']
  #allocation8 [shape = 'f32[36,128]{1,0:T(8,128)}', space=vmem, size = 0x5000, scoped, tag = 'scratch operand']
  #allocation9 [shape = 'bf16[106,384]{1,0:T(8,128)(2,1)}', space=vmem, size = 0x15000, scoped, tag = 'scratch operand']
  %s0 = inlined_call_operand.hbm [shape: f32[4,48,16], index: 0, kind: input, shape index: {}]
  %s1 = inlined_call_operand.hbm [shape: bf16[5,16,128], index: 1, kind: input, shape index: {}]
  %s2 = inlined_call_operand.vmem [shape: f32[1,128], index: 2, kind: input, shape index: {}]
  %s3 = inlined_call_operand.hbm [shape: bf16[6,384,128], index: 3, kind: input, shape index: {}]
  %s4 = inlined_call_operand.vmem [shape: f32[6,1,128], index: 4, kind: input, shape index: {}]
  %s5 = inlined_call_operand.hbm [shape: bf16[2,2,128,128], index: 5, kind: input, shape index: {}]
  %s6 = inlined_call_operand.vmem [shape: f32[2,1,128], index: 6, kind: input, shape index: {}]
  %s7 = inlined_call_operand.hbm [shape: f32[128,8], index: 7, kind: input, shape index: {}]
  %s8 = inlined_call_operand.vmem [shape: f32[1,8], index: 8, kind: input, shape index: {}]
  %s9 = inlined_call_operand.hbm [shape: f32[2,2,8], index: 9, kind: output, shape index: {}]
  %s10 = sld [smem:[#allocation0]]
  $region89: #{encoder_forward.1} parent=0
    _
  %s12 = ssub.s32 1, %s10
  %s13 = scalar_select 0, %s12, %s10
  $region1: #{encoder_forward.1} parent=0
    #allocation10 [shape = 'u8[98304]{0}', space=vmem, size = 0x18000, scoped, tag = 'input window, operand 0']
    #allocation11 [shape = 's32[2]{0}', space=sflag, size = 0x8, scoped, tag = 'scoped memory for encoder_forward.1']
    #allocation12 [shape = 's32[2]{0}', space=sflag, size = 0x8, scoped, tag = 'scoped memory for encoder_forward.1']
    #allocation13 [shape = 'u8[20480]{0}', space=vmem, size = 0x5000, scoped, tag = 'input window, operand 1, single buffered']
    #allocation14 [shape = 's32[1]{0}', space=sflag, size = 0x4, scoped, tag = 'scoped memory for encoder_forward.1']
    #allocation15 [shape = 'u8[589824]{0}', space=vmem, size = 0x90000, scoped, tag = 'input window, operand 3, single buffered']
    #allocation16 [shape = 'u8[131072]{0}', space=vmem, size = 0x20000, scoped, tag = 'input window, operand 5, single buffered']
    #allocation17 [shape = 's32[1]{0}', space=sflag, size = 0x4, scoped, tag = 'scoped memory for encoder_forward.1']
    #allocation18 [shape = 'u8[65536]{0}', space=vmem, size = 0x10000, scoped, tag = 'input window, operand 7, single buffered']
    #allocation19 [shape = 'u8[2048]{0}', space=vmem, size = 0x800, scoped, tag = 'output window, operand 0']
    %14 = vsyncpa [#allocation11], 0
    %s15 = scalar_lea.sflag [#allocation11], 1
    %16 = vsyncpa %s15, 0
    %17 = vsyncpa [#allocation14], 0
    %18 = vsyncpa [#allocation17], 0
    %19 = vsyncpa [#allocation12], 0
    %s20 = scalar_lea.sflag [#allocation12], 1
    %21 = vsyncpa %s20, 0
    loop: start=0, step=1, limit=4
    $region2: #{encoder_forward.1} parent=1 // loop_pre_header
      _
    $region3: #{encoder_forward.1} parent=1 // loop_header
      %s23 = sphi 0, %s27
      %p24 = scmp.ge.s32.totalorder %s23, 4
      %s33 = sphi 0, %s35
      %s36 = sphi 0, %s33
      %s37 = sphi 0, %s36
      %s53 = sphi 0, %s37
      %s57 = sphi 0, %s57
      %s59 = sphi 0, %s57
      %s60 = sphi 0, %s59
      %s74 = sphi 0, %s60
      %s78 = sphi 0, %s78
      %s80 = sphi 0, %s78
      %s81 = sphi 0, %s80
      %s95 = sphi 0, %s81
      %s99 = sphi 0, %s99
      %s101 = sphi 0, %s99
      %s102 = sphi 0, %s101
      %s116 = sphi 0, %s102
      %s120 = sphi 0, %s120
      %s122 = sphi 0, %s120
      %s123 = sphi 0, %s122
      %s137 = sphi 0, %s123
      %s141 = sphi 0, %s141
      %s143 = sphi 0, %s141
      %s144 = sphi 0, %s143
      %s158 = sphi 0, %s144
      %s162 = sphi 0, %s162
      %s164 = sphi 0, %s162
      %s165 = sphi 0, %s164
      %s179 = sphi 0, %s165
      %s183 = sphi 0, %s183
      %s185 = sphi 0, %s183
      %s186 = sphi 0, %s185
      %s200 = sphi 0, %s186
      %s204 = sphi 0, %s204
      %s206 = sphi 0, %s204
      %s207 = sphi 0, %s206
      %s221 = sphi 0, %s207
      %s227 = sphi 0, %s229
      %s230 = sphi 0, %s227
      %s231 = sphi 0, %s230
      %s247 = sphi 0, %s231
    $region4: #{encoder_forward.1} parent=1 // loop_header_branch
      %26 = sbr.rel (%p24) target = $region8
    $region5: #{encoder_forward.1} parent=1 // loop_body
      %s28 = ssub.s32 %s23, 1
      %s29 = ssub.s32 %s23, 2
      %s30 = sadd.s32 %s23, 1
      %s31 = ssub.s32 %s23, %s30
      %p32 = scmp.eq.s32.totalorder %s31, 0
      %s34 = sadd.s32 %s33, 1
      %s35 = scalar_select %p32, %s33, %s34
      %p38 = pneg %p32
      %p39 = scmp.eq.s32.totalorder %s23, 1
      %p40 = por %p38, %p39
      %p41 = scmp.ne.s32.totalorder %s33, %s36
      %p42 = scmp.eq.s32.totalorder %s23, 0
      %p43 = por %p41, %p42
      %p44 = scmp.ne.s32.totalorder %s33, %s36
      %p45 = scmp.eq.s32.totalorder %s28, 1
      %p46 = por %p44, %p45
      %p47 = scmp.ne.s32.totalorder %s36, %s37
      %p48 = scmp.eq.s32.totalorder %s28, 0
      %p49 = por %p47, %p48
      %p50 = scmp.ne.s32.totalorder %s36, %s37
      %p51 = scmp.eq.s32.totalorder %s29, 1
      %p52 = por %p50, %p51
      %p54 = scmp.ne.s32.totalorder %s37, %s53
      %p55 = scmp.eq.s32.totalorder %s29, 0
      %p56 = por %p54, %p55
      %s58 = sadd.s32 %s57, 1
      %p61 = scmp.eq.s32.totalorder %s23, 1
      %p62 = scmp.ne.s32.totalorder %s57, %s59
      %p63 = scmp.eq.s32.totalorder %s23, 0
      %p64 = por %p62, %p63
      %p65 = scmp.ne.s32.totalorder %s57, %s59
      %p66 = scmp.eq.s32.totalorder %s28, 1
      %p67 = por %p65, %p66
      %p68 = scmp.ne.s32.totalorder %s59, %s60
      %p69 = scmp.eq.s32.totalorder %s28, 0
      %p70 = por %p68, %p69
      %p71 = scmp.ne.s32.totalorder %s59, %s60
      %p72 = scmp.eq.s32.totalorder %s29, 1
      %p73 = por %p71, %p72
      %p75 = scmp.ne.s32.totalorder %s60, %s74
      %p76 = scmp.eq.s32.totalorder %s29, 0
      %p77 = por %p75, %p76
      %s79 = sadd.s32 %s78, 1
      %p82 = scmp.eq.s32.totalorder %s23, 1
      %p83 = scmp.ne.s32.totalorder %s78, %s80
      %p84 = scmp.eq.s32.totalorder %s23, 0
      %p85 = por %p83, %p84
      %p86 = scmp.ne.s32.totalorder %s78, %s80
      %p87 = scmp.eq.s32.totalorder %s28, 1
      %p88 = por %p86, %p87
      %p89 = scmp.ne.s32.totalorder %s80, %s81
      %p90 = scmp.eq.s32.totalorder %s28, 0
      %p91 = por %p89, %p90
      %p92 = scmp.ne.s32.totalorder %s80, %s81
      %p93 = scmp.eq.s32.totalorder %s29, 1
      %p94 = por %p92, %p93
      %p96 = scmp.ne.s32.totalorder %s81, %s95
      %p97 = scmp.eq.s32.totalorder %s29, 0
      %p98 = por %p96, %p97
      %s100 = sadd.s32 %s99, 1
      %p103 = scmp.eq.s32.totalorder %s23, 1
      %p104 = scmp.ne.s32.totalorder %s99, %s101
      %p105 = scmp.eq.s32.totalorder %s23, 0
      %p106 = por %p104, %p105
      %p107 = scmp.ne.s32.totalorder %s99, %s101
      %p108 = scmp.eq.s32.totalorder %s28, 1
      %p109 = por %p107, %p108
      %p110 = scmp.ne.s32.totalorder %s101, %s102
      %p111 = scmp.eq.s32.totalorder %s28, 0
      %p112 = por %p110, %p111
      %p113 = scmp.ne.s32.totalorder %s101, %s102
      %p114 = scmp.eq.s32.totalorder %s29, 1
      %p115 = por %p113, %p114
      %p117 = scmp.ne.s32.totalorder %s102, %s116
      %p118 = scmp.eq.s32.totalorder %s29, 0
      %p119 = por %p117, %p118
      %s121 = sadd.s32 %s120, 1
      %p124 = scmp.eq.s32.totalorder %s23, 1
      %p125 = scmp.ne.s32.totalorder %s120, %s122
      %p126 = scmp.eq.s32.totalorder %s23, 0
      %p127 = por %p125, %p126
      %p128 = scmp.ne.s32.totalorder %s120, %s122
      %p129 = scmp.eq.s32.totalorder %s28, 1
      %p130 = por %p128, %p129
      %p131 = scmp.ne.s32.totalorder %s122, %s123
      %p132 = scmp.eq.s32.totalorder %s28, 0
      %p133 = por %p131, %p132
      %p134 = scmp.ne.s32.totalorder %s122, %s123
      %p135 = scmp.eq.s32.totalorder %s29, 1
      %p136 = por %p134, %p135
      %p138 = scmp.ne.s32.totalorder %s123, %s137
      %p139 = scmp.eq.s32.totalorder %s29, 0
      %p140 = por %p138, %p139
      %s142 = sadd.s32 %s141, 1
      %p145 = scmp.eq.s32.totalorder %s23, 1
      %p146 = scmp.ne.s32.totalorder %s141, %s143
      %p147 = scmp.eq.s32.totalorder %s23, 0
      %p148 = por %p146, %p147
      %p149 = scmp.ne.s32.totalorder %s141, %s143
      %p150 = scmp.eq.s32.totalorder %s28, 1
      %p151 = por %p149, %p150
      %p152 = scmp.ne.s32.totalorder %s143, %s144
      %p153 = scmp.eq.s32.totalorder %s28, 0
      %p154 = por %p152, %p153
      %p155 = scmp.ne.s32.totalorder %s143, %s144
      %p156 = scmp.eq.s32.totalorder %s29, 1
      %p157 = por %p155, %p156
      %p159 = scmp.ne.s32.totalorder %s144, %s158
      %p160 = scmp.eq.s32.totalorder %s29, 0
      %p161 = por %p159, %p160
      %s163 = sadd.s32 %s162, 1
      %p166 = scmp.eq.s32.totalorder %s23, 1
      %p167 = scmp.ne.s32.totalorder %s162, %s164
      %p168 = scmp.eq.s32.totalorder %s23, 0
      %p169 = por %p167, %p168
      %p170 = scmp.ne.s32.totalorder %s162, %s164
      %p171 = scmp.eq.s32.totalorder %s28, 1
      %p172 = por %p170, %p171
      %p173 = scmp.ne.s32.totalorder %s164, %s165
      %p174 = scmp.eq.s32.totalorder %s28, 0
      %p175 = por %p173, %p174
      %p176 = scmp.ne.s32.totalorder %s164, %s165
      %p177 = scmp.eq.s32.totalorder %s29, 1
      %p178 = por %p176, %p177
      %p180 = scmp.ne.s32.totalorder %s165, %s179
      %p181 = scmp.eq.s32.totalorder %s29, 0
      %p182 = por %p180, %p181
      %s184 = sadd.s32 %s183, 1
      %p187 = scmp.eq.s32.totalorder %s23, 1
      %p188 = scmp.ne.s32.totalorder %s183, %s185
      %p189 = scmp.eq.s32.totalorder %s23, 0
      %p190 = por %p188, %p189
      %p191 = scmp.ne.s32.totalorder %s183, %s185
      %p192 = scmp.eq.s32.totalorder %s28, 1
      %p193 = por %p191, %p192
      %p194 = scmp.ne.s32.totalorder %s185, %s186
      %p195 = scmp.eq.s32.totalorder %s28, 0
      %p196 = por %p194, %p195
      %p197 = scmp.ne.s32.totalorder %s185, %s186
      %p198 = scmp.eq.s32.totalorder %s29, 1
      %p199 = por %p197, %p198
      %p201 = scmp.ne.s32.totalorder %s186, %s200
      %p202 = scmp.eq.s32.totalorder %s29, 0
      %p203 = por %p201, %p202
      %s205 = sadd.s32 %s204, 1
      %p208 = scmp.eq.s32.totalorder %s23, 1
      %p209 = scmp.ne.s32.totalorder %s204, %s206
      %p210 = scmp.eq.s32.totalorder %s23, 0
      %p211 = por %p209, %p210
      %p212 = scmp.ne.s32.totalorder %s204, %s206
      %p213 = scmp.eq.s32.totalorder %s28, 1
      %p214 = por %p212, %p213
      %p215 = scmp.ne.s32.totalorder %s206, %s207
      %p216 = scmp.eq.s32.totalorder %s28, 0
      %p217 = por %p215, %p216
      %p218 = scmp.ne.s32.totalorder %s206, %s207
      %p219 = scmp.eq.s32.totalorder %s29, 1
      %p220 = por %p218, %p219
      %p222 = scmp.ne.s32.totalorder %s207, %s221
      %p223 = scmp.eq.s32.totalorder %s29, 0
      %p224 = por %p222, %p223
      %s225 = ssub.s32 %s23, %s30
      %p226 = scmp.eq.s32.totalorder %s225, 0
      %s228 = sadd.s32 %s227, 1
      %s229 = scalar_select %p226, %s227, %s228
      %p232 = pneg %p226
      %p233 = scmp.eq.s32.totalorder %s23, 1
      %p234 = por %p232, %p233
      %p235 = scmp.ne.s32.totalorder %s227, %s230
      %p236 = scmp.eq.s32.totalorder %s23, 0
      %p237 = por %p235, %p236
      %p238 = scmp.ne.s32.totalorder %s227, %s230
      %p239 = scmp.eq.s32.totalorder %s28, 1
      %p240 = por %p238, %p239
      %p241 = scmp.ne.s32.totalorder %s230, %s231
      %p242 = scmp.eq.s32.totalorder %s28, 0
      %p243 = por %p241, %p242
      %p244 = scmp.ne.s32.totalorder %s230, %s231
      %p245 = scmp.eq.s32.totalorder %s29, 1
      %p246 = por %p244, %p245
      %p248 = scmp.ne.s32.totalorder %s231, %s247
      %p249 = scmp.eq.s32.totalorder %s29, 0
      %p250 = por %p248, %p249
      %p251 = scmp.le.s32.totalorder 1, %s23
      %p252 = scmp.lt.s32.totalorder %s23, 3
      %p253 = pnand %p251, %p252
      %p254 = pneg %p253
      // Predicated region
      $region9: #{encoder_forward.1} parent=5 // pred_check
        _
      $region10: #{encoder_forward.1} parent=5 // pred_check_branch
        %256 = sbr.rel (%p253) target = $region12
      $region11: #{encoder_forward.1} parent=5 // pred_region
        %s257 = ssub.s32 %s23, 1
        // Predicated region
        $region13: #{encoder_forward.1} parent=11 // pred_check
          %p258 = pneg %p70
        $region14: #{encoder_forward.1} parent=11 // pred_check_branch
          %260 = sbr.rel (%p258) target = $region16
        $region15: #{encoder_forward.1} parent=11 // pred_region
          %s262 = ssub.s32 640, 640
          %263 = vsyncadd [#allocation14], %s262
          %s264 = sshll.u32 [#allocation13], 4
          %s265 = int_to_ptr.vmem [resolvable:$true] %s264
          %270 = dma.hbm_to_vmem [thread:$0]  %s1, 640, %s265, [#allocation14], 64, 64, 4
        $region16: #{encoder_forward.1} parent=11 // pred_fallthru
          _
        // Predicated region
        $region17: #{encoder_forward.1} parent=11 // pred_check
          %p271 = pneg %p91
        $region18: #{encoder_forward.1} parent=11 // pred_check_branch
          %273 = sbr.rel (%p271) target = $region20
        $region19: #{encoder_forward.1} parent=11 // pred_region
          _
        $region20: #{encoder_forward.1} parent=11 // pred_fallthru
          _
        // Predicated region
        $region21: #{encoder_forward.1} parent=11 // pred_check
          %p274 = pneg %p112
        $region22: #{encoder_forward.1} parent=11 // pred_check_branch
          %276 = sbr.rel (%p274) target = $region24
        $region23: #{encoder_forward.1} parent=11 // pred_region
          %s278 = ssub.s32 18432, 18432
          %279 = vsyncadd [#allocation14], %s278
          %s280 = sshll.u32 [#allocation15], 4
          %s281 = int_to_ptr.vmem [resolvable:$true] %s280
          %286 = dma.hbm_to_vmem [thread:$0]  %s3, 18432, %s281, [#allocation14], 64, 64, 4
        $region24: #{encoder_forward.1} parent=11 // pred_fallthru
          _
        // Predicated region
        $region25: #{encoder_forward.1} parent=11 // pred_check
          %p287 = pneg %p133
        $region26: #{encoder_forward.1} parent=11 // pred_check_branch
          %289 = sbr.rel (%p287) target = $region28
        $region27: #{encoder_forward.1} parent=11 // pred_region
          _
        $region28: #{encoder_forward.1} parent=11 // pred_fallthru
          _
        // Predicated region
        $region29: #{encoder_forward.1} parent=11 // pred_check
          %p290 = pneg %p154
        $region30: #{encoder_forward.1} parent=11 // pred_check_branch
          %292 = sbr.rel (%p290) target = $region32
        $region31: #{encoder_forward.1} parent=11 // pred_region
          %s294 = ssub.s32 4096, 4096
          %295 = vsyncadd [#allocation17], %s294
          %s296 = sshll.u32 [#allocation16], 4
          %s297 = int_to_ptr.vmem [resolvable:$true] %s296
          %302 = dma.hbm_to_vmem [thread:$0]  %s5, 4096, %s297, [#allocation17], 64, 64, 4
        $region32: #{encoder_forward.1} parent=11 // pred_fallthru
          _
        // Predicated region
        $region33: #{encoder_forward.1} parent=11 // pred_check
          %p303 = pneg %p175
        $region34: #{encoder_forward.1} parent=11 // pred_check_branch
          %305 = sbr.rel (%p303) target = $region36
        $region35: #{encoder_forward.1} parent=11 // pred_region
          _
        $region36: #{encoder_forward.1} parent=11 // pred_fallthru
          _
        // Predicated region
        $region37: #{encoder_forward.1} parent=11 // pred_check
          %p306 = pneg %p196
        $region38: #{encoder_forward.1} parent=11 // pred_check_branch
          %308 = sbr.rel (%p306) target = $region40
        $region39: #{encoder_forward.1} parent=11 // pred_region
          %s310 = ssub.s32 2048, 2048
          %311 = vsyncadd [#allocation17], %s310
          %s312 = sshll.u32 [#allocation18], 4
          %s313 = int_to_ptr.vmem [resolvable:$true] %s312
          %318 = dma.hbm_to_vmem [thread:$0]  %s7, 2048, %s313, [#allocation17], 128, 128, 8
        $region40: #{encoder_forward.1} parent=11 // pred_fallthru
          _
        // Predicated region
        $region41: #{encoder_forward.1} parent=11 // pred_check
          %p319 = pneg %p217
        $region42: #{encoder_forward.1} parent=11 // pred_check_branch
          %321 = sbr.rel (%p319) target = $region44
        $region43: #{encoder_forward.1} parent=11 // pred_region
          _
        $region44: #{encoder_forward.1} parent=11 // pred_fallthru
          _
      $region12: #{encoder_forward.1} parent=5 // pred_fallthru
        _
      %p322 = scmp.lt.s32.totalorder %s23, 2
      // Predicated region
      $region45: #{encoder_forward.1} parent=5 // pred_check
        %p323 = pneg %p322
      $region46: #{encoder_forward.1} parent=5 // pred_check_branch
        %325 = sbr.rel (%p323) target = $region48
      $region47: #{encoder_forward.1} parent=5 // pred_region
        // Predicated region
        $region49: #{encoder_forward.1} parent=47 // pred_check
          %p326 = pneg %p43
        $region50: #{encoder_forward.1} parent=47 // pred_check_branch
          %328 = sbr.rel (%p326) target = $region52
        $region51: #{encoder_forward.1} parent=47 // pred_region
          %s329 = sand.u32 %s33, 1
          %s330 = scalar_lea.sflag [#allocation11], %s329
          %s331 = sand.u32 %s33, 1
          %s332 = smul.addr %s331, 96
          %s333 = scalar_lea.vmem [#allocation10], %s332
          %s334 = smul.u32 2, %s23
          %s336 = ssub.s32 1536, 1536
          %337 = vsyncadd %s330, %s336
          %s338 = smul.addr %s334, 6
          %s339 = smul.addr %s338, 128
          %s340 = scalar_lea.hbm %s0, %s339
          %s341 = sshll.u32 %s333, 4
          %s342 = int_to_ptr.vmem [resolvable:$true] %s341
          %347 = dma.hbm_to_vmem [thread:$0]  %s340, 1536, %s342, %s330, 128, 128, 8
        $region52: #{encoder_forward.1} parent=47 // pred_fallthru
          _
      $region48: #{encoder_forward.1} parent=5 // pred_fallthru
        _
      %p348 = scmp.le.s32.totalorder 1, %s23
      %p349 = scmp.lt.s32.totalorder %s23, 3
      %p350 = pnand %p348, %p349
      %p351 = pneg %p350
      // Predicated region
      $region53: #{encoder_forward.1} parent=5 // pred_check
        _
      $region54: #{encoder_forward.1} parent=5 // pred_check_branch
        %353 = sbr.rel (%p350) target = $region56
      $region55: #{encoder_forward.1} parent=5 // pred_region
        %s354 = ssub.s32 %s23, 1
        %s355 = sand.u32 %s36, 1
        %s356 = scalar_lea.sflag [#allocation11], %s355
        %s357 = sand.u32 %s36, 1
        %s358 = smul.addr %s357, 96
        %s359 = scalar_lea.vmem [#allocation10], %s358
        // Predicated region
        $region57: #{encoder_forward.1} parent=55 // pred_check
          %p360 = pneg %p49
        $region58: #{encoder_forward.1} parent=55 // pred_check_branch
          %362 = sbr.rel (%p360) target = $region60
        $region59: #{encoder_forward.1} parent=55 // pred_region
          %363 = dma.done %s356, 1536
        $region60: #{encoder_forward.1} parent=55 // pred_fallthru
          _
        // Predicated region
        $region61: #{encoder_forward.1} parent=55 // pred_check
          %p364 = pneg %p70
        $region62: #{encoder_forward.1} parent=55 // pred_check_branch
          %366 = sbr.rel (%p364) target = $region64
        $region63: #{encoder_forward.1} parent=55 // pred_region
          %367 = dma.done [#allocation14], 640
        $region64: #{encoder_forward.1} parent=55 // pred_fallthru
          _
        // Predicated region
        $region65: #{encoder_forward.1} parent=55 // pred_check
          %p368 = pneg %p112
        $region66: #{encoder_forward.1} parent=55 // pred_check_branch
          %370 = sbr.rel (%p368) target = $region68
        $region67: #{encoder_forward.1} parent=55 // pred_region
          %371 = dma.done [#allocation14], 18432
        $region68: #{encoder_forward.1} parent=55 // pred_fallthru
          _
        // Predicated region
        $region69: #{encoder_forward.1} parent=55 // pred_check
          %p372 = pneg %p154
        $region70: #{encoder_forward.1} parent=55 // pred_check_branch
          %374 = sbr.rel (%p372) target = $region72
        $region71: #{encoder_forward.1} parent=55 // pred_region
          %375 = dma.done [#allocation17], 4096
        $region72: #{encoder_forward.1} parent=55 // pred_fallthru
          _
        // Predicated region
        $region73: #{encoder_forward.1} parent=55 // pred_check
          %p376 = pneg %p196
        $region74: #{encoder_forward.1} parent=55 // pred_check_branch
          %378 = sbr.rel (%p376) target = $region76
        $region75: #{encoder_forward.1} parent=55 // pred_region
          %379 = dma.done [#allocation17], 2048
        $region76: #{encoder_forward.1} parent=55 // pred_fallthru
          _
        %s380 = sand.u32 %s36, 1
        %s381 = scalar_lea.sflag [#allocation11], %s380
        %s382 = sand.u32 %s36, 1
        %s383 = smul.addr %s382, 96
        %s384 = scalar_lea.vmem [#allocation10], %s383
        %p385 = pneg %p49
        %p386 = pneg %p46
        %p387 = pneg %p70
        %p388 = pneg %p67
        %p389 = pneg %p91
        %p390 = pneg %p88
        %p391 = pneg %p112
        %p392 = pneg %p109
        %p393 = pneg %p133
        %p394 = pneg %p130
        %p395 = pneg %p154
        %p396 = pneg %p151
        %p397 = pneg %p175
        %p398 = pneg %p172
        %p399 = pneg %p196
        %p400 = pneg %p193
        %p401 = pneg %p217
        %p402 = pneg %p214
        %p403 = pneg %p243
        %p404 = pneg %p240
        %s405 = sand.u32 %s230, 1
        %s406 = scalar_lea.sflag [#allocation12], %s405
        %s407 = sand.u32 %s230, 1
        %s408 = smul.addr %s407, 2
        %s409 = scalar_lea.vmem [#allocation19], %s408
        %s410 = smul.u32 2, %s28
        %vm412 = vcmask 123904
        %413 = vst.msk [vmem:[#allocation2] sm:$0x3] %vm412, 0.0
        %414 = vst.msk [vmem:[#allocation2 + $0x12] sm:$0x3] %vm412, 0.0
        %415 = vst.msk [vmem:[#allocation2 + $0x14] sm:$0x3] %vm412, 0.0
        %416 = vst.msk [vmem:[#allocation2 + $0x26] sm:$0x3] %vm412, 0.0
        %417 = vst.msk [vmem:[#allocation2 + $0x28] sm:$0x3] %vm412, 0.0
        %418 = vst.msk [vmem:[#allocation2 + $0x3a] sm:$0x3] %vm412, 0.0
        %419 = vst.msk [vmem:[#allocation2 + $0x3c] sm:$0x3] %vm412, 0.0
        %420 = vst.msk [vmem:[#allocation2 + $0x4e] sm:$0x3] %vm412, 0.0
        %421 = vst.msk [vmem:[#allocation2 + $0x50] sm:$0x3] %vm412, 0.0
        %422 = vst.msk [vmem:[#allocation2 + $0x62] sm:$0x3] %vm412, 0.0
        %423 = vst.msk [vmem:[#allocation2 + $0x64] sm:$0x3] %vm412, 0.0
        %424 = vst.msk [vmem:[#allocation2 + $0x76] sm:$0x3] %vm412, 0.0
        %425 = vst [vmem:[#allocation3] sm:$0x1] 0.0
        %426 = vst [vmem:[#allocation3 + $0x6b] sm:$0x1] 0.0
        %427 = vst [vmem:[#allocation3 + $0x11] sm:$0x3] 0.0
        %428 = vst [vmem:[#allocation3 + $0x23] sm:$0x3] 0.0
        %429 = vst [vmem:[#allocation3 + $0x35] sm:$0x3] 0.0
        %430 = vst [vmem:[#allocation3 + $0x47] sm:$0x3] 0.0
        %431 = vst [vmem:[#allocation3 + $0x59] sm:$0x3] 0.0
        %432 = vst [vmem:[#allocation4] sm:$0x1] 0.0
        %433 = vst [vmem:[#allocation4 + $0x6b] sm:$0x1] 0.0
        %434 = vst [vmem:[#allocation4 + $0x11] sm:$0x3] 0.0
        %435 = vst [vmem:[#allocation4 + $0x23] sm:$0x3] 0.0
        %436 = vst [vmem:[#allocation4 + $0x35] sm:$0x3] 0.0
        %437 = vst [vmem:[#allocation4 + $0x47] sm:$0x3] 0.0
        %438 = vst [vmem:[#allocation4 + $0x59] sm:$0x3] 0.0
        %439 = vst [vmem:[#allocation5] sm:$0x1] 0.0
        %440 = vst [vmem:[#allocation5 + $0x3b] sm:$0x1] 0.0
        %441 = vst [vmem:[#allocation5 + $0x9] sm:$0x3] 0.0
        %442 = vst [vmem:[#allocation5 + $0x13] sm:$0x3] 0.0
        %443 = vst [vmem:[#allocation5 + $0x1d] sm:$0x3] 0.0
        %444 = vst [vmem:[#allocation5 + $0x27] sm:$0x3] 0.0
        %445 = vst [vmem:[#allocation5 + $0x31] sm:$0x3] 0.0
        %446 = vst [vmem:[#allocation6] sm:$0x1] 0.0
        %447 = vst [vmem:[#allocation6 + $0x3b] sm:$0x1] 0.0
        %448 = vst [vmem:[#allocation6 + $0x9] sm:$0x3] 0.0
        %449 = vst [vmem:[#allocation6 + $0x13] sm:$0x3] 0.0
        %450 = vst [vmem:[#allocation6 + $0x1d] sm:$0x3] 0.0
        %451 = vst [vmem:[#allocation6 + $0x27] sm:$0x3] 0.0
        %452 = vst [vmem:[#allocation6 + $0x31] sm:$0x3] 0.0
        %453 = vst [vmem:[#allocation7] sm:$0x1] 0.0
        %454 = vst [vmem:[#allocation7 + $0x23] sm:$0x1] 0.0
        %455 = vst [vmem:[#allocation7 + $0x5] sm:$0x3] 0.0
        %456 = vst [vmem:[#allocation7 + $0xb] sm:$0x3] 0.0
        %457 = vst [vmem:[#allocation7 + $0x11] sm:$0x3] 0.0
        %458 = vst [vmem:[#allocation7 + $0x17] sm:$0x3] 0.0
        %459 = vst [vmem:[#allocation7 + $0x1d] sm:$0x3] 0.0
        %460 = vst [vmem:[#allocation8] sm:$0x1] 0.0
        %461 = vst [vmem:[#allocation8 + $0x23] sm:$0x1] 0.0
        %462 = vst [vmem:[#allocation8 + $0x5] sm:$0x3] 0.0
        %463 = vst [vmem:[#allocation8 + $0xb] sm:$0x3] 0.0
        %464 = vst [vmem:[#allocation8 + $0x11] sm:$0x3] 0.0
        %465 = vst [vmem:[#allocation8 + $0x17] sm:$0x3] 0.0
        %466 = vst [vmem:[#allocation8 + $0x1d] sm:$0x3] 0.0
        %v467 = vld [vmem:[%s359] sm:$0xff]
        %v468 = vld [vmem:[%s359 + $0x8] sm:$0xff]
        %vm469 = vcmask 130048
        %470 = vst.msk [vmem:[#allocation2 + $0x2] sm:$0xff] %vm469, %v467
        %471 = vst.msk [vmem:[#allocation2 + $0xa] sm:$0xff] %vm469, %v468
        %v472 = vld [vmem:[%s359 + $0x10] sm:$0xff]
        %v473 = vld [vmem:[%s359 + $0x18] sm:$0xff]
        %474 = vst.msk [vmem:[#allocation2 + $0x16] sm:$0xff] %vm469, %v472
        %475 = vst.msk [vmem:[#allocation2 + $0x1e] sm:$0xff] %vm469, %v473
        %v476 = vld [vmem:[%s359 + $0x20] sm:$0xff]
        %v477 = vld [vmem:[%s359 + $0x28] sm:$0xff]
        %478 = vst.msk [vmem:[#allocation2 + $0x2a] sm:$0xff] %vm469, %v476
        %479 = vst.msk [vmem:[#allocation2 + $0x32] sm:$0xff] %vm469, %v477
        %s480 = scalar_lea.vmem %s359, 48 [#allocation10]
        %v481 = vld [vmem:[%s480] sm:$0xff]
        %v482 = vld [vmem:[%s480 + $0x8] sm:$0xff]
        %483 = vst.msk [vmem:[#allocation2 + $0x3e] sm:$0xff] %vm469, %v481
        %484 = vst.msk [vmem:[#allocation2 + $0x46] sm:$0xff] %vm469, %v482
        %v485 = vld [vmem:[%s480 + $0x10] sm:$0xff]
        %v486 = vld [vmem:[%s480 + $0x18] sm:$0xff]
        %487 = vst.msk [vmem:[#allocation2 + $0x52] sm:$0xff] %vm469, %v485
        %488 = vst.msk [vmem:[#allocation2 + $0x5a] sm:$0xff] %vm469, %v486
        %v489 = vld [vmem:[%s480 + $0x20] sm:$0xff]
        %v490 = vld [vmem:[%s480 + $0x28] sm:$0xff]
        %491 = vst.msk [vmem:[#allocation2 + $0x66] sm:$0xff] %vm469, %v489
        %492 = vst.msk [vmem:[#allocation2 + $0x6e] sm:$0xff] %vm469, %v490
        %v493 = vld [vmem:[%s2] sm:$0x1]
        %v495 = vlaneseq
        %v496 = vshrl.u32 %v495, 7
        %v497 = vsub.s32 0, %v496
        %v498 = vrot.slane %v493, %v497
        %v500 = vld [vmem:[#allocation2] sm:$0xff]
        %v501 = vld [vmem:[#allocation2 + $0x8] sm:$0xff]
        %v502 = vld [vmem:[#allocation2 + $0x10] sm:$0xff]
        %v503 = vld [vmem:[#allocation2 + $0x18] sm:$0xff]
        %v504 = vld [vmem:[#allocation2 + $0x20] sm:$0xff]
        %v505 = vld [vmem:[#allocation2 + $0x28] sm:$0xff]
        %v506 = vld [vmem:[#allocation2 + $0x30] sm:$0xff]
        %v507 = vld [vmem:[#allocation2 + $0x38] sm:$0xff]
        %v508 = vld [vmem:[#allocation2 + $0x40] sm:$0xff]
        %v509 = vld [vmem:[#allocation2 + $0x48] sm:$0xff]
        %v510 = vld [vmem:[#allocation2 + $0x50] sm:$0xff]
        %v511 = vld [vmem:[#allocation2 + $0x58] sm:$0xff]
        %v512 = vld [vmem:[#allocation2 + $0x60] sm:$0xff]
        %v513 = vld [vmem:[#allocation2 + $0x68] sm:$0xff]
        %v514 = vld [vmem:[#allocation2 + $0x70] sm:$0xf]
        %v515 = vpack.c.bf16 %v501, %v500
        %v516 = vpack.c.bf16 %v503, %v502
        %v517 = vpack.c.bf16 %v505, %v504
        %v518 = vpack.c.bf16 %v507, %v506
        %v519 = vpack.c.bf16 %v509, %v508
        %v520 = vpack.c.bf16 %v511, %v510
        %v521 = vpack.c.bf16 %v513, %v512
        %v522 = vpack.c.bf16 %v514, %v514
        %v523 = vld [vmem:[#allocation13] sm:$0xf]
        %v524 = vld [vmem:[#allocation13 + $0x4] sm:$0xf]
        %v527 = vunpack.c.l.b16 %v523
        %v528 = vunpack.c.l.b16 %v524
        %v529 = vpack.c.b16 %v528, %v527
        %v532 = vsel %vm469, %v515, 0
        %v535 = vsel %vm469, %v516, 0
        %v538 = vsel %vm469, %v517, 0
        %v541 = vsel %vm469, %v518, 0
        %v544 = vsel %vm469, %v519, 0
        %v547 = vsel %vm469, %v520, 0
        %v550 = vsel %vm469, %v521, 0
        %v553 = vsel %vm469, %v522, 0
        %555 = vmatprep.subr.bf16.mxu0 0
        %556 = vmatpush1.bf16.msra.mxu0 %v529
        %557 = vmatprep.subr.bf16.mxu0 0
        %558 = vmatpush1.bf16.msra.mxu0 0
        %559 = vmatprep.subr.bf16.mxu0 0
        %560 = vmatpush1.bf16.msra.mxu0 0
        %561 = vmatprep.subr.bf16.mxu0 0
        %562 = vmatpush1.bf16.msra.mxu0 0
        %563 = vmatprep.subr.bf16.mxu0 0
        %564 = vmatpush1.bf16.msra.mxu0 0
        %565 = vmatprep.subr.bf16.mxu0 0
        %566 = vmatpush1.bf16.msra.mxu0 0
        %567 = vmatprep.subr.bf16.mxu0 0
        %568 = vmatpush1.bf16.msra.mxu0 0
        %569 = vmatprep.subr.bf16.mxu0 0
        %570 = vmatpush1.bf16.msra.mxu0 0
        %571 = vmatprep.subr.bf16.mxu0 0
        %572 = vmatpush1.bf16.msra.mxu0 0
        %573 = vmatprep.subr.bf16.mxu0 0
        %574 = vmatpush1.bf16.msra.mxu0 0
        %575 = vmatprep.subr.bf16.mxu0 0
        %576 = vmatpush1.bf16.msra.mxu0 0
        %577 = vmatprep.subr.bf16.mxu0 0
        %578 = vmatpush1.bf16.msra.mxu0 0
        %579 = vmatprep.subr.bf16.mxu0 0
        %580 = vmatpush1.bf16.msra.mxu0 0
        %581 = vmatprep.subr.bf16.mxu0 0
        %582 = vmatpush1.bf16.msra.mxu0 0
        %583 = vmatprep.subr.bf16.mxu0 0
        %584 = vmatpush1.bf16.msra.mxu0 0
        %585 = vmatprep.subr.bf16.mxu0 0
        %586 = vmatpush1.bf16.msra.mxu0 0
        %587 = vmatprep.mubr.bf16.mxu0 0
        %588 = vmatmul.mubr.bf16.gmra.mrb[0].mxu0 %v532
        %v589 = vpop.f32.mrb[0].mxu0
        %v590 = vadd.f32 0.0, %v589
        %v591 = vpop.f32.mrb[0].mxu0
        %v592 = vpop.f32.mrb[0].mxu0
        %v593 = vadd.f32 0.0, %v592
        %v594 = vpop.f32.mrb[0].mxu0
        %595 = vmatprep.mubr.bf16.mxu0 0
        %596 = vmatmul.mubr.bf16.gmra.mrb[0].mxu0 %v535
        %v597 = vpop.f32.mrb[0].mxu0
        %v598 = vadd.f32 0.0, %v597
        %v599 = vpop.f32.mrb[0].mxu0
        %v600 = vpop.f32.mrb[0].mxu0
        %v601 = vadd.f32 0.0, %v600
        %v602 = vpop.f32.mrb[0].mxu0
        %603 = vmatprep.mubr.bf16.mxu0 0
        %604 = vmatmul.mubr.bf16.gmra.mrb[0].mxu0 %v538
        %v605 = vpop.f32.mrb[0].mxu0
        %v606 = vadd.f32 0.0, %v605
        %v607 = vpop.f32.mrb[0].mxu0
        %v608 = vpop.f32.mrb[0].mxu0
        %v609 = vadd.f32 0.0, %v608
        %v610 = vpop.f32.mrb[0].mxu0
        %611 = vmatprep.mubr.bf16.mxu0 0
        %612 = vmatmul.mubr.bf16.gmra.mrb[0].mxu0 %v541
        %v613 = vpop.f32.mrb[0].mxu0
        %v614 = vadd.f32 0.0, %v613
        %v615 = vpop.f32.mrb[0].mxu0
        %v616 = vpop.f32.mrb[0].mxu0
        %v617 = vadd.f32 0.0, %v616
        %v618 = vpop.f32.mrb[0].mxu0
        %619 = vmatprep.mubr.bf16.mxu0 0
        %620 = vmatmul.mubr.bf16.gmra.mrb[0].mxu0 %v544
        %v621 = vpop.f32.mrb[0].mxu0
        %v622 = vadd.f32 0.0, %v621
        %v623 = vpop.f32.mrb[0].mxu0
        %v624 = vpop.f32.mrb[0].mxu0
        %v625 = vadd.f32 0.0, %v624
        %v626 = vpop.f32.mrb[0].mxu0
        %627 = vmatprep.mubr.bf16.mxu0 0
        %628 = vmatmul.mubr.bf16.gmra.mrb[0].mxu0 %v547
        %v629 = vpop.f32.mrb[0].mxu0
        %v630 = vadd.f32 0.0, %v629
        %v631 = vpop.f32.mrb[0].mxu0
        %v632 = vpop.f32.mrb[0].mxu0
        %v633 = vadd.f32 0.0, %v632
        %v634 = vpop.f32.mrb[0].mxu0
        %635 = vmatprep.mubr.bf16.mxu0 0
        %636 = vmatmul.mubr.bf16.gmra.mrb[0].mxu0 %v550
        %v637 = vpop.f32.mrb[0].mxu0
        %v638 = vadd.f32 0.0, %v637
        %v639 = vpop.f32.mrb[0].mxu0
        %v640 = vpop.f32.mrb[0].mxu0
        %v641 = vadd.f32 0.0, %v640
        %v642 = vpop.f32.mrb[0].mxu0
        %643 = vmatprep.mubr.bf16.mxu0 0
        %644 = vmatmul.mubr.bf16.gmra.mrb[0].mxu0 %v553
        %v645 = vpop.f32.mrb[0].mxu0
        %v646 = vadd.f32 0.0, %v645
        %v647 = vpop.f32.mrb[0].mxu0
        %v648 = vpop.f32.mrb[0].mxu0
        %v649 = vpop.f32.mrb[0].mxu0
        %650 = vdwg.mxu0
        %v651 = vadd.f32 %v498, %v590
        %v652 = vadd.f32 %v498, %v593
        %v653 = vadd.f32 %v498, %v598
        %v654 = vadd.f32 %v498, %v601
        %v655 = vadd.f32 %v498, %v606
        %v656 = vadd.f32 %v498, %v609
        %v657 = vadd.f32 %v498, %v614
        %v658 = vadd.f32 %v498, %v617
        %v659 = vadd.f32 %v498, %v622
        %v660 = vadd.f32 %v498, %v625
        %v661 = vadd.f32 %v498, %v630
        %v662 = vadd.f32 %v498, %v633
        %v663 = vadd.f32 %v498, %v638
        %v664 = vadd.f32 %v498, %v641
        %v665 = vadd.f32 %v498, %v646
        %v666 = vld [vmem:[#allocation2 + $0x1] sm:$0xff]
        %v667 = vld [vmem:[#allocation2 + $0x9] sm:$0xff]
        %v668 = vld [vmem:[#allocation2 + $0x11] sm:$0xff]
        %v669 = vld [vmem:[#allocation2 + $0x19] sm:$0xff]
        %v670 = vld [vmem:[#allocation2 + $0x21] sm:$0xff]
        %v671 = vld [vmem:[#allocation2 + $0x29] sm:$0xff]
        %v672 = vld [vmem:[#allocation2 + $0x31] sm:$0xff]
        %v673 = vld [vmem:[#allocation2 + $0x39] sm:$0xff]
        %v674 = vld [vmem:[#allocation2 + $0x41] sm:$0xff]
        %v675 = vld [vmem:[#allocation2 + $0x49] sm:$0xff]
        %v676 = vld [vmem:[#allocation2 + $0x51] sm:$0xff]
        %v677 = vld [vmem:[#allocation2 + $0x59] sm:$0xff]
        %v678 = vld [vmem:[#allocation2 + $0x61] sm:$0xff]
        %v679 = vld [vmem:[#allocation2 + $0x69] sm:$0xff]
        %v680 = vld [vmem:[#allocation2 + $0x71] sm:$0xf]
        %v681 = vpack.c.bf16 %v667, %v666
        %v682 = vpack.c.bf16 %v669, %v668
        %v683 = vpack.c.bf16 %v671, %v670
        %v684 = vpack.c.bf16 %v673, %v672
        %v685 = vpack.c.bf16 %v675, %v674
        %v686 = vpack.c.bf16 %v677, %v676
        %v687 = vpack.c.bf16 %v679, %v678
        %v688 = vpack.c.bf16 %v680, %v680
        %s689 = scalar_lea.vmem [#allocation13], 8
        %v690 = vld [vmem:[%s689] sm:$0xf]
        %v691 = vld [vmem:[%s689 + $0x4] sm:$0xf]
        %v694 = vunpack.c.l.b16 %v690
        %v695 = vunpack.c.l.b16 %v691
        %v696 = vpack.c.b16 %v695, %v694
        %v699 = vsel %vm469, %v681, 0
        %v702 = vsel %vm469, %v682, 0
        %v705 = vsel %vm469, %v683, 0
        %v708 = vsel %vm469, %v684, 0
        %v711 = vsel %vm469, %v685, 0
        %v714 = vsel %vm469, %v686, 0
        %v717 = vsel %vm469, %v687, 0
        %v720 = vsel %vm469, %v688, 0
        %722 = vmatprep.subr.bf16.mxu0 0
        %723 = vmatpush1.bf16.msra.mxu0 %v696
        %724 = vmatprep.subr.bf16.mxu0 0
        %725 = vmatpush1.bf16.msra.mxu0 0
        %726 = vmatprep.subr.bf16.mxu0 0
        %727 = vmatpush1.bf16.msra.mxu0 0
        %728 = vmatprep.subr.bf16.mxu0 0
        %729 = vmatpush1.bf16.msra.mxu0 0
        %730 = vmatprep.subr.bf16.mxu0 0
        %731 = vmatpush1.bf16.msra.mxu0 0
        %732 = vmatprep.subr.bf16.mxu0 0
        %733 = vmatpush1.bf16.msra.mxu0 0
        %734 = vmatprep.subr.bf16.mxu0 0
        %735 = vmatpush1.bf16.msra.mxu0 0
        %736 = vmatprep.subr.bf16.mxu0 0
        %737 = vmatpush1.bf16.msra.mxu0 0
        %738 = vmatprep.subr.bf16.mxu0 0
        %739 = vmatpush1.bf16.msra.mxu0 0
        %740 = vmatprep.subr.bf16.mxu0 0
        %741 = vmatpush1.bf16.msra.mxu0 0
        %742 = vmatprep.subr.bf16.mxu0 0
        %743 = vmatpush1.bf16.msra.mxu0 0
        %744 = vmatprep.subr.bf16.mxu0 0
        %745 = vmatpush1.bf16.msra.mxu0 0
        %746 = vmatprep.subr.bf16.mxu0 0
        %747 = vmatpush1.bf16.msra.mxu0 0
        %748 = vmatprep.subr.bf16.mxu0 0
        %749 = vmatpush1.bf16.msra.mxu0 0
        %750 = vmatprep.subr.bf16.mxu0 0
        %751 = vmatpush1.bf16.msra.mxu0 0
        %752 = vmatprep.subr.bf16.mxu0 0
        %753 = vmatpush1.bf16.msra.mxu0 0
        %754 = vmatprep.mubr.bf16.mxu0 0
        %755 = vmatmul.mubr.bf16.gmra.mrb[0].mxu0 %v699
        %v756 = vpop.f32.mrb[0].mxu0
        %v757 = vadd.f32 0.0, %v756
        %v758 = vpop.f32.mrb[0].mxu0
        %v759 = vpop.f32.mrb[0].mxu0
        %v760 = vadd.f32 0.0, %v759
        %v761 = vpop.f32.mrb[0].mxu0
        %762 = vmatprep.mubr.bf16.mxu0 0
        %763 = vmatmul.mubr.bf16.gmra.mrb[0].mxu0 %v702
        %v764 = vpop.f32.mrb[0].mxu0
        %v765 = vadd.f32 0.0, %v764
        %v766 = vpop.f32.mrb[0].mxu0
        %v767 = vpop.f32.mrb[0].mxu0
        %v768 = vadd.f32 0.0, %v767
        %v769 = vpop.f32.mrb[0].mxu0
        %770 = vmatprep.mubr.bf16.mxu0 0
        %771 = vmatmul.mubr.bf16.gmra.mrb[0].mxu0 %v705
        %v772 = vpop.f32.mrb[0].mxu0
        %v773 = vadd.f32 0.0, %v772
        %v774 = vpop.f32.mrb[0].mxu0
        %v775 = vpop.f32.mrb[0].mxu0
        %v776 = vadd.f32 0.0, %v775
        %v777 = vpop.f32.mrb[0].mxu0
        %778 = vmatprep.mubr.bf16.mxu0 0
        %779 = vmatmul.mubr.bf16.gmra.mrb[0].mxu0 %v708
        %v780 = vpop.f32.mrb[0].mxu0
        %v781 = vadd.f32 0.0, %v780
        %v782 = vpop.f32.mrb[0].mxu0
        %v783 = vpop.f32.mrb[0].mxu0
        %v784 = vadd.f32 0.0, %v783
        %v785 = vpop.f32.mrb[0].mxu0
        %786 = vmatprep.mubr.bf16.mxu0 0
        %787 = vmatmul.mubr.bf16.gmra.mrb[0].mxu0 %v711
        %v788 = vpop.f32.mrb[0].mxu0
        %v789 = vadd.f32 0.0, %v788
        %v790 = vpop.f32.mrb[0].mxu0
        %v791 = vpop.f32.mrb[0].mxu0
        %v792 = vadd.f32 0.0, %v791
        %v793 = vpop.f32.mrb[0].mxu0
        %794 = vmatprep.mubr.bf16.mxu0 0
        %795 = vmatmul.mubr.bf16.gmra.mrb[0].mxu0 %v714
        %v796 = vpop.f32.mrb[0].mxu0
        %v797 = vadd.f32 0.0, %v796
        %v798 = vpop.f32.mrb[0].mxu0
        %v799 = vpop.f32.mrb[0].mxu0
        %v800 = vadd.f32 0.0, %v799
        %v801 = vpop.f32.mrb[0].mxu0
        %802 = vmatprep.mubr.bf16.mxu0 0
        %803 = vmatmul.mubr.bf16.gmra.mrb[0].mxu0 %v717
        %v804 = vpop.f32.mrb[0].mxu0
        %v805 = vadd.f32 0.0, %v804
        %v806 = vpop.f32.mrb[0].mxu0
        %v807 = vpop.f32.mrb[0].mxu0
        %v808 = vadd.f32 0.0, %v807
        %v809 = vpop.f32.mrb[0].mxu0
        %810 = vmatprep.mubr.bf16.mxu0 0
        %811 = vmatmul.mubr.bf16.gmra.mrb[0].mxu0 %v720
        %v812 = vpop.f32.mrb[0].mxu0
        %v813 = vadd.f32 0.0, %v812
        %v814 = vpop.f32.mrb[0].mxu0
        %v815 = vpop.f32.mrb[0].mxu0
        %v816 = vpop.f32.mrb[0].mxu0
        %817 = vdwg.mxu0
        %v818 = vadd.f32 %v651, %v757
        %v819 = vadd.f32 %v652, %v760
        %v820 = vadd.f32 %v653, %v765
        %v821 = vadd.f32 %v654, %v768
        %v822 = vadd.f32 %v655, %v773
        %v823 = vadd.f32 %v656, %v776
        %v824 = vadd.f32 %v657, %v781
        %v825 = vadd.f32 %v658, %v784
        %v826 = vadd.f32 %v659, %v789
        %v827 = vadd.f32 %v660, %v792
        %v828 = vadd.f32 %v661, %v797
        %v829 = vadd.f32 %v662, %v800
        %v830 = vadd.f32 %v663, %v805
        %v831 = vadd.f32 %v664, %v808
        %v832 = vadd.f32 %v665, %v813
        %v833 = vld [vmem:[#allocation2 + $0x2] sm:$0xff]
        %v834 = vld [vmem:[#allocation2 + $0xa] sm:$0xff]
        %v835 = vld [vmem:[#allocation2 + $0x12] sm:$0xff]
        %v836 = vld [vmem:[#allocation2 + $0x1a] sm:$0xff]
        %v837 = vld [vmem:[#allocation2 + $0x22] sm:$0xff]
        %v838 = vld [vmem:[#allocation2 + $0x2a] sm:$0xff]
        %v839 = vld [vmem:[#allocation2 + $0x32] sm:$0xff]
        %v840 = vld [vmem:[#allocation2 + $0x3a] sm:$0xff]
        %v841 = vld [vmem:[#allocation2 + $0x42] sm:$0xff]
        %v842 = vld [vmem:[#allocation2 + $0x4a] sm:$0xff]
        %v843 = vld [vmem:[#allocation2 + $0x52] sm:$0xff]
        %v844 = vld [vmem:[#allocation2 + $0x5a] sm:$0xff]
        %v845 = vld [vmem:[#allocation2 + $0x62] sm:$0xff]
        %v846 = vld [vmem:[#allocation2 + $0x6a] sm:$0xff]
        %v847 = vld [vmem:[#allocation2 + $0x72] sm:$0xf]
        %v848 = vpack.c.bf16 %v834, %v833
        %v849 = vpack.c.bf16 %v836, %v835
        %v850 = vpack.c.bf16 %v838, %v837
        %v851 = vpack.c.bf16 %v840, %v839
        %v852 = vpack.c.bf16 %v842, %v841
        %v853 = vpack.c.bf16 %v844, %v843
        %v854 = vpack.c.bf16 %v846, %v845
        %v855 = vpack.c.bf16 %v847, %v847
        %s856 = scalar_lea.vmem [#allocation13], 16
        %v857 = vld [vmem:[%s856] sm:$0xf]
        %v858 = vld [vmem:[%s856 + $0x4] sm:$0xf]
        %v861 = vunpack.c.l.b16 %v857
        %v862 = vunpack.c.l.b16 %v858
        %v863 = vpack.c.b16 %v862, %v861
        %v866 = vsel %vm469, %v848, 0
        %v869 = vsel %vm469, %v849, 0
        %v872 = vsel %vm469, %v850, 0
        %v875 = vsel %vm469, %v851, 0
        %v878 = vsel %vm469, %v852, 0
        %v881 = vsel %vm469, %v853, 0
        %v884 = vsel %vm469, %v854, 0
        %v887 = vsel %vm469, %v855, 0
        %889 = vmatprep.subr.bf16.mxu0 0
        %890 = vmatpush1.bf16.msra.mxu0 %v863
        %891 = vmatprep.subr.bf16.mxu0 0
        %892 = vmatpush1.bf16.msra.mxu0 0
        %893 = vmatprep.subr.bf16.mxu0 0
        %894 = vmatpush1.bf16.msra.mxu0 0
        %895 = vmatprep.subr.bf16.mxu0 0
        %896 = vmatpush1.bf16.msra.mxu0 0
        %897 = vmatprep.subr.bf16.mxu0 0
        %898 = vmatpush1.bf16.msra.mxu0 0
        %899 = vmatprep.subr.bf16.mxu0 0
        %900 = vmatpush1.bf16.msra.mxu0 0
        %901 = vmatprep.subr.bf16.mxu0 0
        %902 = vmatpush1.bf16.msra.mxu0 0
        %903 = vmatprep.subr.bf16.mxu0 0
        %904 = vmatpush1.bf16.msra.mxu0 0
        %905 = vmatprep.subr.bf16.mxu0 0
        %906 = vmatpush1.bf16.msra.mxu0 0
        %907 = vmatprep.subr.bf16.mxu0 0
        %908 = vmatpush1.bf16.msra.mxu0 0
        %909 = vmatprep.subr.bf16.mxu0 0
        %910 = vmatpush1.bf16.msra.mxu0 0
        %911 = vmatprep.subr.bf16.mxu0 0
        %912 = vmatpush1.bf16.msra.mxu0 0
        %913 = vmatprep.subr.bf16.mxu0 0
        %914 = vmatpush1.bf16.msra.mxu0 0
        %915 = vmatprep.subr.bf16.mxu0 0
        %916 = vmatpush1.bf16.msra.mxu0 0
        %917 = vmatprep.subr.bf16.mxu0 0
        %918 = vmatpush1.bf16.msra.mxu0 0
        %919 = vmatprep.subr.bf16.mxu0 0
        %920 = vmatpush1.bf16.msra.mxu0 0
        %921 = vmatprep.mubr.bf16.mxu0 0
        %922 = vmatmul.mubr.bf16.gmra.mrb[0].mxu0 %v866
        %v923 = vpop.f32.mrb[0].mxu0
        %v924 = vadd.f32 0.0, %v923
        %v925 = vpop.f32.mrb[0].mxu0
        %v926 = vpop.f32.mrb[0].mxu0
        %v927 = vadd.f32 0.0, %v926
        %v928 = vpop.f32.mrb[0].mxu0
        %929 = vmatprep.mubr.bf16.mxu0 0
        %930 = vmatmul.mubr.bf16.gmra.mrb[0].mxu0 %v869
        %v931 = vpop.f32.mrb[0].mxu0
        %v932 = vadd.f32 0.0, %v931
        %v933 = vpop.f32.mrb[0].mxu0
        %v934 = vpop.f32.mrb[0].mxu0
        %v935 = vadd.f32 0.0, %v934
        %v936 = vpop.f32.mrb[0].mxu0
        %937 = vmatprep.mubr.bf16.mxu0 0
        %938 = vmatmul.mubr.bf16.gmra.mrb[0].mxu0 %v872
        %v939 = vpop.f32.mrb[0].mxu0
        %v940 = vadd.f32 0.0, %v939
        %v941 = vpop.f32.mrb[0].mxu0
        %v942 = vpop.f32.mrb[0].mxu0
        %v943 = vadd.f32 0.0, %v942
        %v944 = vpop.f32.mrb[0].mxu0
        %945 = vmatprep.mubr.bf16.mxu0 0
        %946 = vmatmul.mubr.bf16.gmra.mrb[0].mxu0 %v875
        %v947 = vpop.f32.mrb[0].mxu0
        %v948 = vadd.f32 0.0, %v947
        %v949 = vpop.f32.mrb[0].mxu0
        %v950 = vpop.f32.mrb[0].mxu0
        %v951 = vadd.f32 0.0, %v950
        %v952 = vpop.f32.mrb[0].mxu0
        %953 = vmatprep.mubr.bf16.mxu0 0
        %954 = vmatmul.mubr.bf16.gmra.mrb[0].mxu0 %v878
        %v955 = vpop.f32.mrb[0].mxu0
        %v956 = vadd.f32 0.0, %v955
        %v957 = vpop.f32.mrb[0].mxu0
        %v958 = vpop.f32.mrb[0].mxu0
        %v959 = vadd.f32 0.0, %v958
        %v960 = vpop.f32.mrb[0].mxu0
        %961 = vmatprep.mubr.bf16.mxu0 0
        %962 = vmatmul.mubr.bf16.gmra.mrb[0].mxu0 %v881
        %v963 = vpop.f32.mrb[0].mxu0
        %v964 = vadd.f32 0.0, %v963
        %v965 = vpop.f32.mrb[0].mxu0
        %v966 = vpop.f32.mrb[0].mxu0
        %v967 = vadd.f32 0.0, %v966
        %v968 = vpop.f32.mrb[0].mxu0
        %969 = vmatprep.mubr.bf16.mxu0 0
        %970 = vmatmul.mubr.bf16.gmra.mrb[0].mxu0 %v884
        %v971 = vpop.f32.mrb[0].mxu0
        %v972 = vadd.f32 0.0, %v971
        %v973 = vpop.f32.mrb[0].mxu0
        %v974 = vpop.f32.mrb[0].mxu0
        %v975 = vadd.f32 0.0, %v974
        %v976 = vpop.f32.mrb[0].mxu0
        %977 = vmatprep.mubr.bf16.mxu0 0
        %978 = vmatmul.mubr.bf16.gmra.mrb[0].mxu0 %v887
        %v979 = vpop.f32.mrb[0].mxu0
        %v980 = vadd.f32 0.0, %v979
        %v981 = vpop.f32.mrb[0].mxu0
        %v982 = vpop.f32.mrb[0].mxu0
        %v983 = vpop.f32.mrb[0].mxu0
        %984 = vdwg.mxu0
        %v985 = vadd.f32 %v818, %v924
        %v986 = vadd.f32 %v819, %v927
        %v987 = vadd.f32 %v820, %v932
        %v988 = vadd.f32 %v821, %v935
        %v989 = vadd.f32 %v822, %v940
        %v990 = vadd.f32 %v823, %v943
        %v991 = vadd.f32 %v824, %v948
        %v992 = vadd.f32 %v825, %v951
        %v993 = vadd.f32 %v826, %v956
        %v994 = vadd.f32 %v827, %v959
        %v995 = vadd.f32 %v828, %v964
        %v996 = vadd.f32 %v829, %v967
        %v997 = vadd.f32 %v830, %v972
        %v998 = vadd.f32 %v831, %v975
        %v999 = vadd.f32 %v832, %v980
        %v1000 = vld [vmem:[#allocation2 + $0x3] sm:$0xff]
        %v1001 = vld [vmem:[#allocation2 + $0xb] sm:$0xff]
        %v1002 = vld [vmem:[#allocation2 + $0x13] sm:$0xff]
        %v1003 = vld [vmem:[#allocation2 + $0x1b] sm:$0xff]
        %v1004 = vld [vmem:[#allocation2 + $0x23] sm:$0xff]
        %v1005 = vld [vmem:[#allocation2 + $0x2b] sm:$0xff]
        %v1006 = vld [vmem:[#allocation2 + $0x33] sm:$0xff]
        %v1007 = vld [vmem:[#allocation2 + $0x3b] sm:$0xff]
        %v1008 = vld [vmem:[#allocation2 + $0x43] sm:$0xff]
        %v1009 = vld [vmem:[#allocation2 + $0x4b] sm:$0xff]
        %v1010 = vld [vmem:[#allocation2 + $0x53] sm:$0xff]
        %v1011 = vld [vmem:[#allocation2 + $0x5b] sm:$0xff]
        %v1012 = vld [vmem:[#allocation2 + $0x63] sm:$0xff]
        %v1013 = vld [vmem:[#allocation2 + $0x6b] sm:$0xff]
        %v1014 = vld [vmem:[#allocation2 + $0x73] sm:$0xf]
        %v1015 = vpack.c.bf16 %v1001, %v1000
        %v1016 = vpack.c.bf16 %v1003, %v1002
        %v1017 = vpack.c.bf16 %v1005, %v1004
        %v1018 = vpack.c.bf16 %v1007, %v1006
        %v1019 = vpack.c.bf16 %v1009, %v1008
        %v1020 = vpack.c.bf16 %v1011, %v1010
        %v1021 = vpack.c.bf16 %v1013, %v1012
        %v1022 = vpack.c.bf16 %v1014, %v1014
        %s1023 = scalar_lea.vmem [#allocation13], 24
        %v1024 = vld [vmem:[%s1023] sm:$0xf]
        %v1025 = vld [vmem:[%s1023 + $0x4] sm:$0xf]
        %v1028 = vunpack.c.l.b16 %v1024
        %v1029 = vunpack.c.l.b16 %v1025
        %v1030 = vpack.c.b16 %v1029, %v1028
        %v1033 = vsel %vm469, %v1015, 0
        %v1036 = vsel %vm469, %v1016, 0
        %v1039 = vsel %vm469, %v1017, 0
        %v1042 = vsel %vm469, %v1018, 0
        %v1045 = vsel %vm469, %v1019, 0
        %v1048 = vsel %vm469, %v1020, 0
        %v1051 = vsel %vm469, %v1021, 0
        %v1054 = vsel %vm469, %v1022, 0
        %1056 = vmatprep.subr.bf16.mxu0 0
        %1057 = vmatpush1.bf16.msra.mxu0 %v1030
        %1058 = vmatprep.subr.bf16.mxu0 0
        %1059 = vmatpush1.bf16.msra.mxu0 0
        %1060 = vmatprep.subr.bf16.mxu0 0
        %1061 = vmatpush1.bf16.msra.mxu0 0
        %1062 = vmatprep.subr.bf16.mxu0 0
        %1063 = vmatpush1.bf16.msra.mxu0 0
        %1064 = vmatprep.subr.bf16.mxu0 0
        %1065 = vmatpush1.bf16.msra.mxu0 0
        %1066 = vmatprep.subr.bf16.mxu0 0
        %1067 = vmatpush1.bf16.msra.mxu0 0
        %1068 = vmatprep.subr.bf16.mxu0 0
        %1069 = vmatpush1.bf16.msra.mxu0 0
        %1070 = vmatprep.subr.bf16.mxu0 0
        %1071 = vmatpush1.bf16.msra.mxu0 0
        %1072 = vmatprep.subr.bf16.mxu0 0
        %1073 = vmatpush1.bf16.msra.mxu0 0
        %1074 = vmatprep.subr.bf16.mxu0 0
        %1075 = vmatpush1.bf16.msra.mxu0 0
        %1076 = vmatprep.subr.bf16.mxu0 0
        %1077 = vmatpush1.bf16.msra.mxu0 0
        %1078 = vmatprep.subr.bf16.mxu0 0
        %1079 = vmatpush1.bf16.msra.mxu0 0
        %1080 = vmatprep.subr.bf16.mxu0 0
        %1081 = vmatpush1.bf16.msra.mxu0 0
        %1082 = vmatprep.subr.bf16.mxu0 0
        %1083 = vmatpush1.bf16.msra.mxu0 0
        %1084 = vmatprep.subr.bf16.mxu0 0
        %1085 = vmatpush1.bf16.msra.mxu0 0
        %1086 = vmatprep.subr.bf16.mxu0 0
        %1087 = vmatpush1.bf16.msra.mxu0 0
        %1088 = vmatprep.mubr.bf16.mxu0 0
        %1089 = vmatmul.mubr.bf16.gmra.mrb[0].mxu0 %v1033
        %v1090 = vpop.f32.mrb[0].mxu0
        %v1091 = vadd.f32 0.0, %v1090
        %v1092 = vpop.f32.mrb[0].mxu0
        %v1093 = vpop.f32.mrb[0].mxu0
        %v1094 = vadd.f32 0.0, %v1093
        %v1095 = vpop.f32.mrb[0].mxu0
        %1096 = vmatprep.mubr.bf16.mxu0 0
        %1097 = vmatmul.mubr.bf16.gmra.mrb[0].mxu0 %v1036
        %v1098 = vpop.f32.mrb[0].mxu0
        %v1099 = vadd.f32 0.0, %v1098
        %v1100 = vpop.f32.mrb[0].mxu0
        %v1101 = vpop.f32.mrb[0].mxu0
        %v1102 = vadd.f32 0.0, %v1101
        %v1103 = vpop.f32.mrb[0].mxu0
        %1104 = vmatprep.mubr.bf16.mxu0 0
        %1105 = vmatmul.mubr.bf16.gmra.mrb[0].mxu0 %v1039
        %v1106 = vpop.f32.mrb[0].mxu0
        %v1107 = vadd.f32 0.0, %v1106
        %v1108 = vpop.f32.mrb[0].mxu0
        %v1109 = vpop.f32.mrb[0].mxu0
        %v1110 = vadd.f32 0.0, %v1109
        %v1111 = vpop.f32.mrb[0].mxu0
        %1112 = vmatprep.mubr.bf16.mxu0 0
        %1113 = vmatmul.mubr.bf16.gmra.mrb[0].mxu0 %v1042
        %v1114 = vpop.f32.mrb[0].mxu0
        %v1115 = vadd.f32 0.0, %v1114
        %v1116 = vpop.f32.mrb[0].mxu0
        %v1117 = vpop.f32.mrb[0].mxu0
        %v1118 = vadd.f32 0.0, %v1117
        %v1119 = vpop.f32.mrb[0].mxu0
        %1120 = vmatprep.mubr.bf16.mxu0 0
        %1121 = vmatmul.mubr.bf16.gmra.mrb[0].mxu0 %v1045
        %v1122 = vpop.f32.mrb[0].mxu0
        %v1123 = vadd.f32 0.0, %v1122
        %v1124 = vpop.f32.mrb[0].mxu0
        %v1125 = vpop.f32.mrb[0].mxu0
        %v1126 = vadd.f32 0.0, %v1125
        %v1127 = vpop.f32.mrb[0].mxu0
        %1128 = vmatprep.mubr.bf16.mxu0 0
        %1129 = vmatmul.mubr.bf16.gmra.mrb[0].mxu0 %v1048
        %v1130 = vpop.f32.mrb[0].mxu0
        %v1131 = vadd.f32 0.0, %v1130
        %v1132 = vpop.f32.mrb[0].mxu0
        %v1133 = vpop.f32.mrb[0].mxu0
        %v1134 = vadd.f32 0.0, %v1133
        %v1135 = vpop.f32.mrb[0].mxu0
        %1136 = vmatprep.mubr.bf16.mxu0 0
        %1137 = vmatmul.mubr.bf16.gmra.mrb[0].mxu0 %v1051
        %v1138 = vpop.f32.mrb[0].mxu0
        %v1139 = vadd.f32 0.0, %v1138
        %v1140 = vpop.f32.mrb[0].mxu0
        %v1141 = vpop.f32.mrb[0].mxu0
        %v1142 = vadd.f32 0.0, %v1141
        %v1143 = vpop.f32.mrb[0].mxu0
        %1144 = vmatprep.mubr.bf16.mxu0 0
        %1145 = vmatmul.mubr.bf16.gmra.mrb[0].mxu0 %v1054
        %v1146 = vpop.f32.mrb[0].mxu0
        %v1147 = vadd.f32 0.0, %v1146
        %v1148 = vpop.f32.mrb[0].mxu0
        %v1149 = vpop.f32.mrb[0].mxu0
        %v1150 = vpop.f32.mrb[0].mxu0
        %1151 = vdwg.mxu0
        %v1152 = vadd.f32 %v985, %v1091
        %v1153 = vadd.f32 %v986, %v1094
        %v1154 = vadd.f32 %v987, %v1099
        %v1155 = vadd.f32 %v988, %v1102
        %v1156 = vadd.f32 %v989, %v1107
        %v1157 = vadd.f32 %v990, %v1110
        %v1158 = vadd.f32 %v991, %v1115
        %v1159 = vadd.f32 %v992, %v1118
        %v1160 = vadd.f32 %v993, %v1123
        %v1161 = vadd.f32 %v994, %v1126
        %v1162 = vadd.f32 %v995, %v1131
        %v1163 = vadd.f32 %v996, %v1134
        %v1164 = vadd.f32 %v997, %v1139
        %v1165 = vadd.f32 %v998, %v1142
        %v1166 = vadd.f32 %v999, %v1147
        %v1167 = vld [vmem:[#allocation2 + $0x4] sm:$0xff]
        %v1168 = vld [vmem:[#allocation2 + $0xc] sm:$0xff]
        %v1169 = vld [vmem:[#allocation2 + $0x14] sm:$0xff]
        %v1170 = vld [vmem:[#allocation2 + $0x1c] sm:$0xff]
        %v1171 = vld [vmem:[#allocation2 + $0x24] sm:$0xff]
        %v1172 = vld [vmem:[#allocation2 + $0x2c] sm:$0xff]
        %v1173 = vld [vmem:[#allocation2 + $0x34] sm:$0xff]
        %v1174 = vld [vmem:[#allocation2 + $0x3c] sm:$0xff]
        %v1175 = vld [vmem:[#allocation2 + $0x44] sm:$0xff]
        %v1176 = vld [vmem:[#allocation2 + $0x4c] sm:$0xff]
        %v1177 = vld [vmem:[#allocation2 + $0x54] sm:$0xff]
        %v1178 = vld [vmem:[#allocation2 + $0x5c] sm:$0xff]
        %v1179 = vld [vmem:[#allocation2 + $0x64] sm:$0xff]
        %v1180 = vld [vmem:[#allocation2 + $0x6c] sm:$0xff]
        %v1181 = vld [vmem:[#allocation2 + $0x74] sm:$0xf]
        %v1182 = vpack.c.bf16 %v1168, %v1167
        %v1183 = vpack.c.bf16 %v1170, %v1169
        %v1184 = vpack.c.bf16 %v1172, %v1171
        %v1185 = vpack.c.bf16 %v1174, %v1173
        %v1186 = vpack.c.bf16 %v1176, %v1175
        %v1187 = vpack.c.bf16 %v1178, %v1177
        %v1188 = vpack.c.bf16 %v1180, %v1179
        %v1189 = vpack.c.bf16 %v1181, %v1181
        %s1190 = scalar_lea.vmem [#allocation13], 32
        %v1191 = vld [vmem:[%s1190] sm:$0xf]
        %v1192 = vld [vmem:[%s1190 + $0x4] sm:$0xf]
        %v1195 = vunpack.c.l.b16 %v1191
        %v1196 = vunpack.c.l.b16 %v1192
        %v1197 = vpack.c.b16 %v1196, %v1195
        %v1200 = vsel %vm469, %v1182, 0
        %v1203 = vsel %vm469, %v1183, 0
        %v1206 = vsel %vm469, %v1184, 0
        %v1209 = vsel %vm469, %v1185, 0
        %v1212 = vsel %vm469, %v1186, 0
        %v1215 = vsel %vm469, %v1187, 0
        %v1218 = vsel %vm469, %v1188, 0
        %v1221 = vsel %vm469, %v1189, 0
        %1223 = vmatprep.subr.bf16.mxu0 0
        %1224 = vmatpush1.bf16.msra.mxu0 %v1197
        %1225 = vmatprep.subr.bf16.mxu0 0
        %1226 = vmatpush1.bf16.msra.mxu0 0
        %1227 = vmatprep.subr.bf16.mxu0 0
        %1228 = vmatpush1.bf16.msra.mxu0 0
        %1229 = vmatprep.subr.bf16.mxu0 0
        %1230 = vmatpush1.bf16.msra.mxu0 0
        %1231 = vmatprep.subr.bf16.mxu0 0
        %1232 = vmatpush1.bf16.msra.mxu0 0
        %1233 = vmatprep.subr.bf16.mxu0 0
        %1234 = vmatpush1.bf16.msra.mxu0 0
        %1235 = vmatprep.subr.bf16.mxu0 0
        %1236 = vmatpush1.bf16.msra.mxu0 0
        %1237 = vmatprep.subr.bf16.mxu0 0
        %1238 = vmatpush1.bf16.msra.mxu0 0
        %1239 = vmatprep.subr.bf16.mxu0 0
        %1240 = vmatpush1.bf16.msra.mxu0 0
        %1241 = vmatprep.subr.bf16.mxu0 0
        %1242 = vmatpush1.bf16.msra.mxu0 0
        %1243 = vmatprep.subr.bf16.mxu0 0
        %1244 = vmatpush1.bf16.msra.mxu0 0
        %1245 = vmatprep.subr.bf16.mxu0 0
        %1246 = vmatpush1.bf16.msra.mxu0 0
        %1247 = vmatprep.subr.bf16.mxu0 0
        %1248 = vmatpush1.bf16.msra.mxu0 0
        %1249 = vmatprep.subr.bf16.mxu0 0
        %1250 = vmatpush1.bf16.msra.mxu0 0
        %1251 = vmatprep.subr.bf16.mxu0 0
        %1252 = vmatpush1.bf16.msra.mxu0 0
        %1253 = vmatprep.subr.bf16.mxu0 0
        %1254 = vmatpush1.bf16.msra.mxu0 0
        %1255 = vmatprep.mubr.bf16.mxu0 0
        %1256 = vmatmul.mubr.bf16.gmra.mrb[0].mxu0 %v1200
        %v1257 = vpop.f32.mrb[0].mxu0
        %v1258 = vadd.f32 0.0, %v1257
        %v1259 = vpop.f32.mrb[0].mxu0
        %v1260 = vpop.f32.mrb[0].mxu0
        %v1261 = vadd.f32 0.0, %v1260
        %v1262 = vpop.f32.mrb[0].mxu0
        %1263 = vmatprep.mubr.bf16.mxu0 0
        %1264 = vmatmul.mubr.bf16.gmra.mrb[0].mxu0 %v1203
        %v1265 = vpop.f32.mrb[0].mxu0
        %v1266 = vadd.f32 0.0, %v1265
        %v1267 = vpop.f32.mrb[0].mxu0
        %v1268 = vpop.f32.mrb[0].mxu0
        %v1269 = vadd.f32 0.0, %v1268
        %v1270 = vpop.f32.mrb[0].mxu0
        %1271 = vmatprep.mubr.bf16.mxu0 0
        %1272 = vmatmul.mubr.bf16.gmra.mrb[0].mxu0 %v1206
        %v1273 = vpop.f32.mrb[0].mxu0
        %v1274 = vadd.f32 0.0, %v1273
        %v1275 = vpop.f32.mrb[0].mxu0
        %v1276 = vpop.f32.mrb[0].mxu0
        %v1277 = vadd.f32 0.0, %v1276
        %v1278 = vpop.f32.mrb[0].mxu0
        %1279 = vmatprep.mubr.bf16.mxu0 0
        %1280 = vmatmul.mubr.bf16.gmra.mrb[0].mxu0 %v1209
        %v1281 = vpop.f32.mrb[0].mxu0
        %v1282 = vadd.f32 0.0, %v1281
        %v1283 = vpop.f32.mrb[0].mxu0
        %v1284 = vpop.f32.mrb[0].mxu0
        %v1285 = vadd.f32 0.0, %v1284
        %v1286 = vpop.f32.mrb[0].mxu0
        %1287 = vmatprep.mubr.bf16.mxu0 0
        %1288 = vmatmul.mubr.bf16.gmra.mrb[0].mxu0 %v1212
        %v1289 = vpop.f32.mrb[0].mxu0
        %v1290 = vadd.f32 0.0, %v1289
        %v1291 = vpop.f32.mrb[0].mxu0
        %v1292 = vpop.f32.mrb[0].mxu0
        %v1293 = vadd.f32 0.0, %v1292
        %v1294 = vpop.f32.mrb[0].mxu0
        %1295 = vmatprep.mubr.bf16.mxu0 0
        %1296 = vmatmul.mubr.bf16.gmra.mrb[0].mxu0 %v1215
        %v1297 = vpop.f32.mrb[0].mxu0
        %v1298 = vadd.f32 0.0, %v1297
        %v1299 = vpop.f32.mrb[0].mxu0
        %v1300 = vpop.f32.mrb[0].mxu0
        %v1301 = vadd.f32 0.0, %v1300
        %v1302 = vpop.f32.mrb[0].mxu0
        %1303 = vmatprep.mubr.bf16.mxu0 0
        %1304 = vmatmul.mubr.bf16.gmra.mrb[0].mxu0 %v1218
        %v1305 = vpop.f32.mrb[0].mxu0
        %v1306 = vadd.f32 0.0, %v1305
        %v1307 = vpop.f32.mrb[0].mxu0
        %v1308 = vpop.f32.mrb[0].mxu0
        %v1309 = vadd.f32 0.0, %v1308
        %v1310 = vpop.f32.mrb[0].mxu0
        %1311 = vmatprep.mubr.bf16.mxu0 0
        %1312 = vmatmul.mubr.bf16.gmra.mrb[0].mxu0 %v1221
        %v1313 = vpop.f32.mrb[0].mxu0
        %v1314 = vadd.f32 0.0, %v1313
        %v1315 = vpop.f32.mrb[0].mxu0
        %v1316 = vpop.f32.mrb[0].mxu0
        %v1317 = vpop.f32.mrb[0].mxu0
        %1318 = vdwg.mxu0
        %v1319 = vadd.f32 %v1152, %v1258
        %v1320 = vadd.f32 %v1153, %v1261
        %v1321 = vadd.f32 %v1154, %v1266
        %v1322 = vadd.f32 %v1155, %v1269
        %v1323 = vadd.f32 %v1156, %v1274
        %v1324 = vadd.f32 %v1157, %v1277
        %v1325 = vadd.f32 %v1158, %v1282
        %v1326 = vadd.f32 %v1159, %v1285
        %v1327 = vadd.f32 %v1160, %v1290
        %v1328 = vadd.f32 %v1161, %v1293
        %v1329 = vadd.f32 %v1162, %v1298
        %v1330 = vadd.f32 %v1163, %v1301
        %v1331 = vadd.f32 %v1164, %v1306
        %v1332 = vadd.f32 %v1165, %v1309
        %v1333 = vadd.f32 %v1166, %v1314
        %1334 = vst [vmem:[#allocation3 + $0x1] sm:$0xff] %v1319
        %1335 = vst [vmem:[#allocation3 + $0x9] sm:$0xff] %v1320
        %1336 = vst [vmem:[#allocation3 + $0xf] sm:$0xf0] %v1321
        %1337 = vst [vmem:[#allocation3 + $0x17] sm:$0xff] %v1322
        %1338 = vst [vmem:[#allocation3 + $0x1f] sm:$0xf] %v1323
        %1339 = vst [vmem:[#allocation3 + $0x25] sm:$0xff] %v1324
        %1340 = vst [vmem:[#allocation3 + $0x2d] sm:$0xff] %v1325
        %1341 = vst [vmem:[#allocation3 + $0x33] sm:$0xf0] %v1326
        %1342 = vst [vmem:[#allocation3 + $0x3b] sm:$0xff] %v1327
        %1343 = vst [vmem:[#allocation3 + $0x43] sm:$0xf] %v1328
        %1344 = vst [vmem:[#allocation3 + $0x49] sm:$0xff] %v1329
        %1345 = vst [vmem:[#allocation3 + $0x51] sm:$0xff] %v1330
        %1346 = vst [vmem:[#allocation3 + $0x57] sm:$0xf0] %v1331
        %1347 = vst [vmem:[#allocation3 + $0x5f] sm:$0xff] %v1332
        %1348 = vst [vmem:[#allocation3 + $0x67] sm:$0xf] %v1333
        %v1349 = vld [vmem:[#allocation3] sm:$0xff]
        %v1350 = vld [vmem:[#allocation3 + $0x8] sm:$0xff]
        %v1351 = vld [vmem:[#allocation3 + $0x10] sm:$0xff]
        %v1352 = vld [vmem:[#allocation3 + $0x18] sm:$0xff]
        %v1353 = vld [vmem:[#allocation3 + $0x20] sm:$0xff]
        %v1354 = vld [vmem:[#allocation3 + $0x28] sm:$0xff]
        %v1355 = vld [vmem:[#allocation3 + $0x30] sm:$0xff]
        %v1356 = vld [vmem:[#allocation3 + $0x38] sm:$0xff]
        %v1357 = vld [vmem:[#allocation3 + $0x40] sm:$0xff]
        %v1358 = vld [vmem:[#allocation3 + $0x48] sm:$0xff]
        %v1359 = vld [vmem:[#allocation3 + $0x50] sm:$0xff]
        %v1360 = vld [vmem:[#allocation3 + $0x58] sm:$0xff]
        %v1361 = vld [vmem:[#allocation3 + $0x60] sm:$0xff]
        %v1362 = vld [vmem:[#allocation3 + $0x68] sm:$0x3]
        %v1363 = vpack.c.bf16 %v1350, %v1349
        %v1364 = vpack.c.bf16 %v1352, %v1351
        %v1365 = vpack.c.bf16 %v1354, %v1353
        %v1366 = vpack.c.bf16 %v1356, %v1355
        %v1367 = vpack.c.bf16 %v1358, %v1357
        %v1368 = vpack.c.bf16 %v1360, %v1359
        %v1369 = vpack.c.bf16 %v1362, %v1361
        %v1377 = vunpack.c.l.b16 %v1363
        %v1378 = vunpack.c.h.b16 %v1363
        %v1379 = vunpack.c.l.b16 %v1364
        %v1380 = vunpack.c.h.b16 %v1364
        %v1381 = vunpack.c.l.b16 %v1365
        %v1382 = vunpack.c.h.b16 %v1365
        %v1383 = vunpack.c.l.b16 %v1366
        %v1384 = vunpack.c.h.b16 %v1366
        %v1385 = vunpack.c.l.b16 %v1367
        %v1386 = vunpack.c.h.b16 %v1367
        %v1387 = vunpack.c.l.b16 %v1368
        %v1388 = vunpack.c.h.b16 %v1368
        %v1389 = vunpack.c.l.b16 %v1369
        %v1390 = vunpack.c.h.b16 %v1369
        %v1391 = vpack.c.b16 %v1377, %v1377
        %v1392 = vpack.c.b16 %v1378, %v1378
        %v1393 = vpack.c.b16 %v1379, %v1379
        %v1394 = vpack.c.b16 %v1380, %v1380
        %v1395 = vpack.c.b16 %v1381, %v1381
        %v1396 = vpack.c.b16 %v1382, %v1382
        %v1397 = vpack.c.b16 %v1383, %v1383
        %v1398 = vpack.c.b16 %v1384, %v1384
        %v1399 = vpack.c.b16 %v1385, %v1385
        %v1400 = vpack.c.b16 %v1386, %v1386
        %v1401 = vpack.c.b16 %v1387, %v1387
        %v1402 = vpack.c.b16 %v1388, %v1388
        %v1403 = vpack.c.b16 %v1389, %v1389
        %v1404 = vpack.c.b16 %v1390, %v1390
        %1419 = vst [vmem:[#allocation9] sm:$0xf] %v1391
        %1420 = vst [vmem:[#allocation9 + $0xc] sm:$0xf] %v1392
        %1421 = vst [vmem:[#allocation9 + $0x18] sm:$0xf] %v1393
        %1422 = vst [vmem:[#allocation9 + $0x24] sm:$0xf] %v1394
        %1423 = vst [vmem:[#allocation9 + $0x30] sm:$0xf] %v1395
        %1424 = vst [vmem:[#allocation9 + $0x3c] sm:$0xf] %v1396
        %1425 = vst [vmem:[#allocation9 + $0x48] sm:$0xf] %v1397
        %1426 = vst [vmem:[#allocation9 + $0x54] sm:$0xf] %v1398
        %1427 = vst [vmem:[#allocation9 + $0x60] sm:$0xf] %v1399
        %1428 = vst [vmem:[#allocation9 + $0x6c] sm:$0xf] %v1400
        %1429 = vst [vmem:[#allocation9 + $0x78] sm:$0xf] %v1401
        %1430 = vst [vmem:[#allocation9 + $0x84] sm:$0xf] %v1402
        %1431 = vst [vmem:[#allocation9 + $0x90] sm:$0xf] %v1403
        %1432 = vst [vmem:[#allocation9 + $0x9c] sm:$0x1] %v1404
        %v1433 = vld [vmem:[#allocation3 + $0x1] sm:$0xff]
        %v1434 = vld [vmem:[#allocation3 + $0x9] sm:$0xff]
        %v1435 = vld [vmem:[#allocation3 + $0x11] sm:$0xff]
        %v1436 = vld [vmem:[#allocation3 + $0x19] sm:$0xff]
        %v1437 = vld [vmem:[#allocation3 + $0x21] sm:$0xff]
        %v1438 = vld [vmem:[#allocation3 + $0x29] sm:$0xff]
        %v1439 = vld [vmem:[#allocation3 + $0x31] sm:$0xff]
        %v1440 = vld [vmem:[#allocation3 + $0x39] sm:$0xff]
        %v1441 = vld [vmem:[#allocation3 + $0x41] sm:$0xff]
        %v1442 = vld [vmem:[#allocation3 + $0x49] sm:$0xff]
        %v1443 = vld [vmem:[#allocation3 + $0x51] sm:$0xff]
        %v1444 = vld [vmem:[#allocation3 + $0x59] sm:$0xff]
        %v1445 = vld [vmem:[#allocation3 + $0x61] sm:$0xff]
        %v1446 = vld [vmem:[#allocation3 + $0x69] sm:$0x3]
        %v1447 = vpack.c.bf16 %v1434, %v1433
        %v1448 = vpack.c.bf16 %v1436, %v1435
        %v1449 = vpack.c.bf16 %v1438, %v1437
        %v1450 = vpack.c.bf16 %v1440, %v1439
        %v1451 = vpack.c.bf16 %v1442, %v1441
        %v1452 = vpack.c.bf16 %v1444, %v1443
        %v1453 = vpack.c.bf16 %v1446, %v1445
        %v1461 = vunpack.c.l.b16 %v1447
        %v1462 = vunpack.c.h.b16 %v1447
        %v1463 = vunpack.c.l.b16 %v1448
        %v1464 = vunpack.c.h.b16 %v1448
        %v1465 = vunpack.c.l.b16 %v1449
        %v1466 = vunpack.c.h.b16 %v1449
        %v1467 = vunpack.c.l.b16 %v1450
        %v1468 = vunpack.c.h.b16 %v1450
        %v1469 = vunpack.c.l.b16 %v1451
        %v1470 = vunpack.c.h.b16 %v1451
        %v1471 = vunpack.c.l.b16 %v1452
        %v1472 = vunpack.c.h.b16 %v1452
        %v1473 = vunpack.c.l.b16 %v1453
        %v1474 = vunpack.c.h.b16 %v1453
        %v1475 = vpack.c.b16 %v1461, %v1461
        %v1476 = vpack.c.b16 %v1462, %v1462
        %v1477 = vpack.c.b16 %v1463, %v1463
        %v1478 = vpack.c.b16 %v1464, %v1464
        %v1479 = vpack.c.b16 %v1465, %v1465
        %v1480 = vpack.c.b16 %v1466, %v1466
        %v1481 = vpack.c.b16 %v1467, %v1467
        %v1482 = vpack.c.b16 %v1468, %v1468
        %v1483 = vpack.c.b16 %v1469, %v1469
        %v1484 = vpack.c.b16 %v1470, %v1470
        %v1485 = vpack.c.b16 %v1471, %v1471
        %v1486 = vpack.c.b16 %v1472, %v1472
        %v1487 = vpack.c.b16 %v1473, %v1473
        %v1488 = vpack.c.b16 %v1474, %v1474
        %1503 = vst [vmem:[#allocation9 + $0x4] sm:$0xf] %v1475
        %1504 = vst [vmem:[#allocation9 + $0x10] sm:$0xf] %v1476
        %1505 = vst [vmem:[#allocation9 + $0x1c] sm:$0xf] %v1477
        %1506 = vst [vmem:[#allocation9 + $0x28] sm:$0xf] %v1478
        %1507 = vst [vmem:[#allocation9 + $0x34] sm:$0xf] %v1479
        %1508 = vst [vmem:[#allocation9 + $0x40] sm:$0xf] %v1480
        %1509 = vst [vmem:[#allocation9 + $0x4c] sm:$0xf] %v1481
        %1510 = vst [vmem:[#allocation9 + $0x58] sm:$0xf] %v1482
        %1511 = vst [vmem:[#allocation9 + $0x64] sm:$0xf] %v1483
        %1512 = vst [vmem:[#allocation9 + $0x70] sm:$0xf] %v1484
        %1513 = vst [vmem:[#allocation9 + $0x7c] sm:$0xf] %v1485
        %1514 = vst [vmem:[#allocation9 + $0x88] sm:$0xf] %v1486
        %1515 = vst [vmem:[#allocation9 + $0x94] sm:$0xf] %v1487
        %1516 = vst [vmem:[#allocation9 + $0xa0] sm:$0x1] %v1488
        %v1517 = vld [vmem:[#allocation3 + $0x2] sm:$0xff]
        %v1518 = vld [vmem:[#allocation3 + $0xa] sm:$0xff]
        %v1519 = vld [vmem:[#allocation3 + $0x12] sm:$0xff]
        %v1520 = vld [vmem:[#allocation3 + $0x1a] sm:$0xff]
        %v1521 = vld [vmem:[#allocation3 + $0x22] sm:$0xff]
        %v1522 = vld [vmem:[#allocation3 + $0x2a] sm:$0xff]
        %v1523 = vld [vmem:[#allocation3 + $0x32] sm:$0xff]
        %v1524 = vld [vmem:[#allocation3 + $0x3a] sm:$0xff]
        %v1525 = vld [vmem:[#allocation3 + $0x42] sm:$0xff]
        %v1526 = vld [vmem:[#allocation3 + $0x4a] sm:$0xff]
        %v1527 = vld [vmem:[#allocation3 + $0x52] sm:$0xff]
        %v1528 = vld [vmem:[#allocation3 + $0x5a] sm:$0xff]
        %v1529 = vld [vmem:[#allocation3 + $0x62] sm:$0xff]
        %v1530 = vld [vmem:[#allocation3 + $0x6a] sm:$0x3]
        %v1531 = vpack.c.bf16 %v1518, %v1517
        %v1532 = vpack.c.bf16 %v1520, %v1519
        %v1533 = vpack.c.bf16 %v1522, %v1521
        %v1534 = vpack.c.bf16 %v1524, %v1523
        %v1535 = vpack.c.bf16 %v1526, %v1525
        %v1536 = vpack.c.bf16 %v1528, %v1527
        %v1537 = vpack.c.bf16 %v1530, %v1529
        %v1545 = vunpack.c.l.b16 %v1531
        %v1546 = vunpack.c.h.b16 %v1531
        %v1547 = vunpack.c.l.b16 %v1532
        %v1548 = vunpack.c.h.b16 %v1532
        %v1549 = vunpack.c.l.b16 %v1533
        %v1550 = vunpack.c.h.b16 %v1533
        %v1551 = vunpack.c.l.b16 %v1534
        %v1552 = vunpack.c.h.b16 %v1534
        %v1553 = vunpack.c.l.b16 %v1535
        %v1554 = vunpack.c.h.b16 %v1535
        %v1555 = vunpack.c.l.b16 %v1536
        %v1556 = vunpack.c.h.b16 %v1536
        %v1557 = vunpack.c.l.b16 %v1537
        %v1558 = vunpack.c.h.b16 %v1537
        %v1559 = vpack.c.b16 %v1545, %v1545
        %v1560 = vpack.c.b16 %v1546, %v1546
        %v1561 = vpack.c.b16 %v1547, %v1547
        %v1562 = vpack.c.b16 %v1548, %v1548
        %v1563 = vpack.c.b16 %v1549, %v1549
        %v1564 = vpack.c.b16 %v1550, %v1550
        %v1565 = vpack.c.b16 %v1551, %v1551
        %v1566 = vpack.c.b16 %v1552, %v1552
        %v1567 = vpack.c.b16 %v1553, %v1553
        %v1568 = vpack.c.b16 %v1554, %v1554
        %v1569 = vpack.c.b16 %v1555, %v1555
        %v1570 = vpack.c.b16 %v1556, %v1556
        %v1571 = vpack.c.b16 %v1557, %v1557
        %v1572 = vpack.c.b16 %v1558, %v1558
        %1587 = vst [vmem:[#allocation9 + $0x8] sm:$0xf] %v1559
        %1588 = vst [vmem:[#allocation9 + $0x14] sm:$0xf] %v1560
        %1589 = vst [vmem:[#allocation9 + $0x20] sm:$0xf] %v1561
        %1590 = vst [vmem:[#allocation9 + $0x2c] sm:$0xf] %v1562
        %1591 = vst [vmem:[#allocation9 + $0x38] sm:$0xf] %v1563
        %1592 = vst [vmem:[#allocation9 + $0x44] sm:$0xf] %v1564
        %1593 = vst [vmem:[#allocation9 + $0x50] sm:$0xf] %v1565
        %1594 = vst [vmem:[#allocation9 + $0x5c] sm:$0xf] %v1566
        %1595 = vst [vmem:[#allocation9 + $0x68] sm:$0xf] %v1567
        %1596 = vst [vmem:[#allocation9 + $0x74] sm:$0xf] %v1568
        %1597 = vst [vmem:[#allocation9 + $0x80] sm:$0xf] %v1569
        %1598 = vst [vmem:[#allocation9 + $0x8c] sm:$0xf] %v1570
        %1599 = vst [vmem:[#allocation9 + $0x98] sm:$0xf] %v1571
        %1600 = vst [vmem:[#allocation9 + $0xa4] sm:$0x1] %v1572
        %v1601 = vld [vmem:[#allocation9] sm:$0xff]
        %v1602 = vld [vmem:[#allocation9 + $0x8] sm:$0xf]
        %v1603 = vld [vmem:[#allocation9 + $0xc] sm:$0xff]
        %v1604 = vld [vmem:[#allocation9 + $0x14] sm:$0xf]
        %v1605 = vld [vmem:[#allocation9 + $0x18] sm:$0xff]
        %v1606 = vld [vmem:[#allocation9 + $0x20] sm:$0xf]
        %v1607 = vld [vmem:[#allocation9 + $0x24] sm:$0xff]
        %v1608 = vld [vmem:[#allocation9 + $0x2c] sm:$0xf]
        %v1609 = vld [vmem:[#allocation9 + $0x30] sm:$0xff]
        %v1610 = vld [vmem:[#allocation9 + $0x38] sm:$0xf]
        %v1611 = vld [vmem:[#allocation9 + $0x3c] sm:$0xff]
        %v1612 = vld [vmem:[#allocation9 + $0x44] sm:$0xf]
        %v1613 = vld [vmem:[#allocation9 + $0x48] sm:$0xff]
        %v1614 = vld [vmem:[#allocation9 + $0x50] sm:$0xf]
        %v1615 = vld [vmem:[#allocation9 + $0x54] sm:$0xff]
        %v1616 = vld [vmem:[#allocation9 + $0x5c] sm:$0xf]
        %v1617 = vld [vmem:[#allocation9 + $0x60] sm:$0xff]
        %v1618 = vld [vmem:[#allocation9 + $0x68] sm:$0xf]
        %v1619 = vld [vmem:[#allocation9 + $0x6c] sm:$0xff]
        %v1620 = vld [vmem:[#allocation9 + $0x74] sm:$0xf]
        %v1621 = vld [vmem:[#allocation9 + $0x78] sm:$0xff]
        %v1622 = vld [vmem:[#allocation9 + $0x80] sm:$0xf]
        %v1623 = vld [vmem:[#allocation9 + $0x84] sm:$0xff]
        %v1624 = vld [vmem:[#allocation9 + $0x8c] sm:$0xf]
        %v1625 = vld [vmem:[#allocation9 + $0x90] sm:$0xff]
        %v1626 = vld [vmem:[#allocation9 + $0x98] sm:$0xf]
        %v1627 = vld [vmem:[#allocation9 + $0x9c] sm:$0x11]
        %v1628 = vld [vmem:[#allocation9 + $0xa4] sm:$0x1]
        %v1629 = vld [vmem:[#allocation15] sm:$0xf]
        %v1630 = vld [vmem:[#allocation15 + $0x4] sm:$0xf]
        %v1631 = vld [vmem:[#allocation15 + $0x8] sm:$0xf]
        %v1632 = vld [vmem:[#allocation15 + $0xc] sm:$0xf]
        %v1633 = vld [vmem:[#allocation15 + $0x10] sm:$0xf]
        %v1634 = vld [vmem:[#allocation15 + $0x14] sm:$0xf]
        %v1635 = vld [vmem:[#allocation15 + $0x18] sm:$0xf]
        %v1636 = vld [vmem:[#allocation15 + $0x1c] sm:$0xf]
        %v1637 = vld [vmem:[#allocation15 + $0x20] sm:$0xf]
        %v1638 = vld [vmem:[#allocation15 + $0x24] sm:$0xf]
        %v1639 = vld [vmem:[#allocation15 + $0x28] sm:$0xf]
        %v1640 = vld [vmem:[#allocation15 + $0x2c] sm:$0xf]
        %v1641 = vld [vmem:[#allocation15 + $0x30] sm:$0xf]
        %v1642 = vld [vmem:[#allocation15 + $0x34] sm:$0xf]
        %v1643 = vld [vmem:[#allocation15 + $0x38] sm:$0xf]
        %v1644 = vld [vmem:[#allocation15 + $0x3c] sm:$0xf]
        %v1645 = vld [vmem:[#allocation15 + $0x40] sm:$0xf]
        %v1646 = vld [vmem:[#allocation15 + $0x44] sm:$0xf]
        %v1647 = vld [vmem:[#allocation15 + $0x48] sm:$0xf]
        %v1648 = vld [vmem:[#allocation15 + $0x4c] sm:$0xf]
        %v1649 = vld [vmem:[#allocation15 + $0x50] sm:$0xf]
        %v1650 = vld [vmem:[#allocation15 + $0x54] sm:$0xf]
        %v1651 = vld [vmem:[#allocation15 + $0x58] sm:$0xf]
        %v1652 = vld [vmem:[#allocation15 + $0x5c] sm:$0xf]
        %v1653 = vld [vmem:[#allocation15 + $0x60] sm:$0xf]
        %v1654 = vld [vmem:[#allocation15 + $0x64] sm:$0xf]
        %v1655 = vld [vmem:[#allocation15 + $0x68] sm:$0xf]
        %v1656 = vld [vmem:[#allocation15 + $0x6c] sm:$0xf]
        %v1657 = vld [vmem:[#allocation15 + $0x70] sm:$0xf]
        %v1658 = vld [vmem:[#allocation15 + $0x74] sm:$0xf]
        %v1659 = vld [vmem:[#allocation15 + $0x78] sm:$0xf]
        %v1660 = vld [vmem:[#allocation15 + $0x7c] sm:$0xf]
        %v1661 = vld [vmem:[#allocation15 + $0x80] sm:$0xf]
        %v1662 = vld [vmem:[#allocation15 + $0x84] sm:$0xf]
        %v1663 = vld [vmem:[#allocation15 + $0x88] sm:$0xf]
        %v1664 = vld [vmem:[#allocation15 + $0x8c] sm:$0xf]
        %v1665 = vld [vmem:[#allocation15 + $0x90] sm:$0xf]
        %v1666 = vld [vmem:[#allocation15 + $0x94] sm:$0xf]
        %v1667 = vld [vmem:[#allocation15 + $0x98] sm:$0xf]
        %v1668 = vld [vmem:[#allocation15 + $0x9c] sm:$0xf]
        %v1669 = vld [vmem:[#allocation15 + $0xa0] sm:$0xf]
        %v1670 = vld [vmem:[#allocation15 + $0xa4] sm:$0xf]
        %v1671 = vld [vmem:[#allocation15 + $0xa8] sm:$0xf]
        %v1672 = vld [vmem:[#allocation15 + $0xac] sm:$0xf]
        %v1673 = vld [vmem:[#allocation15 + $0xb0] sm:$0xf]
        %v1674 = vld [vmem:[#allocation15 + $0xb4] sm:$0xf]
        %v1675 = vld [vmem:[#allocation15 + $0xb8] sm:$0xf]
        %v1676 = vld [vmem:[#allocation15 + $0xbc] sm:$0xf]
        %v1677 = vld [vmem:[%s4] sm:$0x1]
        %v1679 = vlaneseq
        %v1680 = vshrl.u32 %v1679, 7
        %v1681 = vsub.s32 0, %v1680
        %v1682 = vrot.slane %v1677, %v1681
        %v1712 = vunpack.c.l.b16 %v1601
        %v1713 = vunpack.c.h.b16 %v1601
        %v1714 = vunpack.c.l.b16 %v1602
        %v1715 = vunpack.c.l.b16 %v1603
        %v1716 = vunpack.c.h.b16 %v1603
        %v1717 = vunpack.c.l.b16 %v1604
        %v1718 = vunpack.c.l.b16 %v1605
        %v1719 = vunpack.c.h.b16 %v1605
        %v1720 = vunpack.c.l.b16 %v1606
        %v1721 = vunpack.c.l.b16 %v1607
        %v1722 = vunpack.c.h.b16 %v1607
        %v1723 = vunpack.c.l.b16 %v1608
        %v1724 = vunpack.c.l.b16 %v1609
        %v1725 = vunpack.c.h.b16 %v1609
        %v1726 = vunpack.c.l.b16 %v1610
        %v1727 = vunpack.c.l.b16 %v1611
        %v1728 = vunpack.c.h.b16 %v1611
        %v1729 = vunpack.c.l.b16 %v1612
        %v1730 = vunpack.c.l.b16 %v1613
        %v1731 = vunpack.c.h.b16 %v1613
        %v1732 = vunpack.c.l.b16 %v1614
        %v1733 = vunpack.c.l.b16 %v1615
        %v1734 = vunpack.c.h.b16 %v1615
        %v1735 = vunpack.c.l.b16 %v1616
        %v1736 = vunpack.c.l.b16 %v1617
        %v1737 = vunpack.c.h.b16 %v1617
        %v1738 = vunpack.c.l.b16 %v1618
        %v1739 = vunpack.c.l.b16 %v1619
        %v1740 = vunpack.c.h.b16 %v1619
        %v1741 = vunpack.c.l.b16 %v1620
        %v1742 = vunpack.c.l.b16 %v1621
        %v1743 = vunpack.c.h.b16 %v1621
        %v1744 = vunpack.c.l.b16 %v1622
        %v1745 = vunpack.c.l.b16 %v1623
        %v1746 = vunpack.c.h.b16 %v1623
        %v1747 = vunpack.c.l.b16 %v1624
        %v1748 = vunpack.c.l.b16 %v1625
        %v1749 = vunpack.c.h.b16 %v1625
        %v1750 = vunpack.c.l.b16 %v1626
        %v1751 = vunpack.c.l.b16 %v1627
        %v1752 = vunpack.c.h.b16 %v1627
        %v1753 = vunpack.c.l.b16 %v1628
        %v1754 = vpack.c.b16 %v1715, %v1712
        %v1755 = vpack.c.b16 %v1716, %v1713
        %v1756 = vpack.c.b16 %v1717, %v1714
        %v1757 = vpack.c.b16 %v1721, %v1718
        %v1758 = vpack.c.b16 %v1722, %v1719
        %v1759 = vpack.c.b16 %v1723, %v1720
        %v1760 = vpack.c.b16 %v1727, %v1724
        %v1761 = vpack.c.b16 %v1728, %v1725
        %v1762 = vpack.c.b16 %v1729, %v1726
        %v1763 = vpack.c.b16 %v1733, %v1730
        %v1764 = vpack.c.b16 %v1734, %v1731
        %v1765 = vpack.c.b16 %v1735, %v1732
        %v1766 = vpack.c.b16 %v1739, %v1736
        %v1767 = vpack.c.b16 %v1740, %v1737
        %v1768 = vpack.c.b16 %v1741, %v1738
        %v1769 = vpack.c.b16 %v1745, %v1742
        %v1770 = vpack.c.b16 %v1746, %v1743
        %v1771 = vpack.c.b16 %v1747, %v1744
        %v1772 = vpack.c.b16 %v1751, %v1748
        %v1773 = vpack.c.b16 %v1752, %v1749
        %v1774 = vpack.c.b16 %v1753, %v1750
        %v1844 = vunpack.c.l.b16 %v1629
        %v1845 = vunpack.c.l.b16 %v1630
        %v1846 = vunpack.c.l.b16 %v1631
        %v1847 = vunpack.c.l.b16 %v1632
        %v1848 = vunpack.c.l.b16 %v1633
        %v1849 = vunpack.c.l.b16 %v1634
        %v1850 = vunpack.c.l.b16 %v1635
        %v1851 = vunpack.c.l.b16 %v1636
        %v1852 = vunpack.c.l.b16 %v1637
        %v1853 = vunpack.c.l.b16 %v1638
        %v1854 = vunpack.c.l.b16 %v1639
        %v1855 = vunpack.c.l.b16 %v1640
        %v1856 = vunpack.c.l.b16 %v1641
        %v1857 = vunpack.c.l.b16 %v1642
        %v1858 = vunpack.c.l.b16 %v1643
        %v1859 = vunpack.c.l.b16 %v1644
        %v1860 = vunpack.c.l.b16 %v1645
        %v1861 = vunpack.c.l.b16 %v1646
        %v1862 = vunpack.c.l.b16 %v1647
        %v1863 = vunpack.c.l.b16 %v1648
        %v1864 = vunpack.c.l.b16 %v1649
        %v1865 = vunpack.c.l.b16 %v1650
        %v1866 = vunpack.c.l.b16 %v1651
        %v1867 = vunpack.c.l.b16 %v1652
        %v1868 = vunpack.c.l.b16 %v1653
        %v1869 = vunpack.c.l.b16 %v1654
        %v1870 = vunpack.c.l.b16 %v1655
        %v1871 = vunpack.c.l.b16 %v1656
        %v1872 = vunpack.c.l.b16 %v1657
        %v1873 = vunpack.c.l.b16 %v1658
        %v1874 = vunpack.c.l.b16 %v1659
        %v1875 = vunpack.c.l.b16 %v1660
        %v1876 = vunpack.c.l.b16 %v1661
        %v1877 = vunpack.c.l.b16 %v1662
        %v1878 = vunpack.c.l.b16 %v1663
        %v1879 = vunpack.c.l.b16 %v1664
        %v1880 = vunpack.c.l.b16 %v1665
        %v1881 = vunpack.c.l.b16 %v1666
        %v1882 = vunpack.c.l.b16 %v1667
        %v1883 = vunpack.c.l.b16 %v1668
        %v1884 = vunpack.c.l.b16 %v1669
        %v1885 = vunpack.c.l.b16 %v1670
        %v1886 = vunpack.c.l.b16 %v1671
        %v1887 = vunpack.c.l.b16 %v1672
        %v1888 = vunpack.c.l.b16 %v1673
        %v1889 = vunpack.c.l.b16 %v1674
        %v1890 = vunpack.c.l.b16 %v1675
        %v1891 = vunpack.c.l.b16 %v1676
        %v1892 = vpack.c.b16 %v1845, %v1844
        %v1893 = vpack.c.b16 %v1847, %v1846
        %v1894 = vpack.c.b16 %v1849, %v1848
        %v1895 = vpack.c.b16 %v1851, %v1850
        %v1896 = vpack.c.b16 %v1853, %v1852
        %v1897 = vpack.c.b16 %v1855, %v1854
        %v1898 = vpack.c.b16 %v1857, %v1856
        %v1899 = vpack.c.b16 %v1859, %v1858
        %v1900 = vpack.c.b16 %v1861, %v1860
        %v1901 = vpack.c.b16 %v1863, %v1862
        %v1902 = vpack.c.b16 %v1865, %v1864
        %v1903 = vpack.c.b16 %v1867, %v1866
        %v1904 = vpack.c.b16 %v1869, %v1868
        %v1905 = vpack.c.b16 %v1871, %v1870
        %v1906 = vpack.c.b16 %v1873, %v1872
        %v1907 = vpack.c.b16 %v1875, %v1874
        %v1908 = vpack.c.b16 %v1877, %v1876
        %v1909 = vpack.c.b16 %v1879, %v1878
        %v1910 = vpack.c.b16 %v1881, %v1880
        %v1911 = vpack.c.b16 %v1883, %v1882
        %v1912 = vpack.c.b16 %v1885, %v1884
        %v1913 = vpack.c.b16 %v1887, %v1886
        %v1914 = vpack.c.b16 %v1889, %v1888
        %v1915 = vpack.c.b16 %v1891, %v1890
        %1940 = vmatprep.subr.bf16.mxu0 0
        %1941 = vmatpush1.bf16.msra.mxu0 %v1892
        %1942 = vmatprep.subr.bf16.mxu0 0
        %1943 = vmatpush1.bf16.msra.mxu0 %v1893
        %1944 = vmatprep.subr.bf16.mxu0 0
        %1945 = vmatpush1.bf16.msra.mxu0 %v1894
        %1946 = vmatprep.subr.bf16.mxu0 0
        %1947 = vmatpush1.bf16.msra.mxu0 %v1895
        %1948 = vmatprep.subr.bf16.mxu0 0
        %1949 = vmatpush1.bf16.msra.mxu0 %v1896
        %1950 = vmatprep.subr.bf16.mxu0 0
        %1951 = vmatpush1.bf16.msra.mxu0 %v1897
        %1952 = vmatprep.subr.bf16.mxu0 0
        %1953 = vmatpush1.bf16.msra.mxu0 %v1898
        %1954 = vmatprep.subr.bf16.mxu0 0
        %1955 = vmatpush1.bf16.msra.mxu0 %v1899
        %1956 = vmatprep.subr.bf16.mxu0 0
        %1957 = vmatpush1.bf16.msra.mxu0 %v1900
        %1958 = vmatprep.subr.bf16.mxu0 0
        %1959 = vmatpush1.bf16.msra.mxu0 %v1901
        %1960 = vmatprep.subr.bf16.mxu0 0
        %1961 = vmatpush1.bf16.msra.mxu0 %v1902
        %1962 = vmatprep.subr.bf16.mxu0 0
        %1963 = vmatpush1.bf16.msra.mxu0 %v1903
        %1964 = vmatprep.subr.bf16.mxu0 0
        %1965 = vmatpush1.bf16.msra.mxu0 %v1904
        %1966 = vmatprep.subr.bf16.mxu0 0
        %1967 = vmatpush1.bf16.msra.mxu0 %v1905
        %1968 = vmatprep.subr.bf16.mxu0 0
        %1969 = vmatpush1.bf16.msra.mxu0 %v1906
        %1970 = vmatprep.subr.bf16.mxu0 0
        %1971 = vmatpush1.bf16.msra.mxu0 %v1907
        %1972 = vmatprep.mubr.bf16.mxu0 %v1755
        %1973 = vmatmul.mubr.bf16.gmra.mrb[0].mxu0 %v1754
        %v1974 = vpop.f32.mrb[0].mxu0
        %v1975 = vadd.f32 %v1682, %v1974
        %v1976 = vpop.f32.mrb[0].mxu0
        %v1977 = vpop.f32.mrb[0].mxu0
        %v1978 = vadd.f32 %v1682, %v1977
        %v1979 = vpop.f32.mrb[0].mxu0
        %1980 = vmatprep.mubr.bf16.mxu0 %v1758
        %1981 = vmatmul.mubr.bf16.gmra.mrb[0].mxu0 %v1757
        %v1982 = vpop.f32.mrb[0].mxu0
        %v1983 = vadd.f32 %v1682, %v1982
        %v1984 = vpop.f32.mrb[0].mxu0
        %v1985 = vpop.f32.mrb[0].mxu0
        %v1986 = vadd.f32 %v1682, %v1985
        %v1987 = vpop.f32.mrb[0].mxu0
        %1988 = vmatprep.mubr.bf16.mxu0 %v1761
        %1989 = vmatmul.mubr.bf16.gmra.mrb[0].mxu0 %v1760
        %v1990 = vpop.f32.mrb[0].mxu0
        %v1991 = vadd.f32 %v1682, %v1990
        %v1992 = vpop.f32.mrb[0].mxu0
        %v1993 = vpop.f32.mrb[0].mxu0
        %v1994 = vadd.f32 %v1682, %v1993
        %v1995 = vpop.f32.mrb[0].mxu0
        %1996 = vmatprep.mubr.bf16.mxu0 %v1764
        %1997 = vmatmul.mubr.bf16.gmra.mrb[0].mxu0 %v1763
        %v1998 = vpop.f32.mrb[0].mxu0
        %v1999 = vadd.f32 %v1682, %v1998
        %v2000 = vpop.f32.mrb[0].mxu0
        %v2001 = vpop.f32.mrb[0].mxu0
        %v2002 = vadd.f32 %v1682, %v2001
        %v2003 = vpop.f32.mrb[0].mxu0
        %2004 = vmatprep.mubr.bf16.mxu0 %v1767
        %2005 = vmatmul.mubr.bf16.gmra.mrb[0].mxu0 %v1766
        %v2006 = vpop.f32.mrb[0].mxu0
        %v2007 = vadd.f32 %v1682, %v2006
        %v2008 = vpop.f32.mrb[0].mxu0
        %v2009 = vpop.f32.mrb[0].mxu0
        %v2010 = vadd.f32 %v1682, %v2009
        %v2011 = vpop.f32.mrb[0].mxu0
        %2012 = vmatprep.mubr.bf16.mxu0 %v1770
        %2013 = vmatmul.mubr.bf16.gmra.mrb[0].mxu0 %v1769
        %v2014 = vpop.f32.mrb[0].mxu0
        %v2015 = vadd.f32 %v1682, %v2014
        %v2016 = vpop.f32.mrb[0].mxu0
        %v2017 = vpop.f32.mrb[0].mxu0
        %v2018 = vadd.f32 %v1682, %v2017
        %v2019 = vpop.f32.mrb[0].mxu0
        %2020 = vmatprep.mubr.bf16.mxu0 %v1773
        %2021 = vmatmul.mubr.bf16.gmra.mrb[0].mxu0 %v1772
        %v2022 = vpop.f32.mrb[0].mxu0
        %v2023 = vadd.f32 %v1682, %v2022
        %v2024 = vpop.f32.mrb[0].mxu0
        %v2025 = vpop.f32.mrb[0].mxu0
        %v2026 = vadd.f32 %v1682, %v2025
        %v2027 = vpop.f32.mrb[0].mxu0
        %2028 = vdwg.mxu0
        %2029 = vmatprep.subr.bf16.mxu0 0
        %2030 = vmatpush1.bf16.msra.mxu0 %v1908
        %2031 = vmatprep.subr.bf16.mxu0 0
        %2032 = vmatpush1.bf16.msra.mxu0 %v1909
        %2033 = vmatprep.subr.bf16.mxu0 0
        %2034 = vmatpush1.bf16.msra.mxu0 %v1910
        %2035 = vmatprep.subr.bf16.mxu0 0
        %2036 = vmatpush1.bf16.msra.mxu0 %v1911
        %2037 = vmatprep.subr.bf16.mxu0 0
        %2038 = vmatpush1.bf16.msra.mxu0 %v1912
        %2039 = vmatprep.subr.bf16.mxu0 0
        %2040 = vmatpush1.bf16.msra.mxu0 %v1913
        %2041 = vmatprep.subr.bf16.mxu0 0
        %2042 = vmatpush1.bf16.msra.mxu0 %v1914
        %2043 = vmatprep.subr.bf16.mxu0 0
        %2044 = vmatpush1.bf16.msra.mxu0 %v1915
        %2045 = vmatprep.subr.bf16.mxu0 0
        %2046 = vmatpush1.bf16.msra.mxu0 0
        %2047 = vmatprep.subr.bf16.mxu0 0
        %2048 = vmatpush1.bf16.msra.mxu0 0
        %2049 = vmatprep.subr.bf16.mxu0 0
        %2050 = vmatpush1.bf16.msra.mxu0 0
        %2051 = vmatprep.subr.bf16.mxu0 0
        %2052 = vmatpush1.bf16.msra.mxu0 0
        %2053 = vmatprep.subr.bf16.mxu0 0
        %2054 = vmatpush1.bf16.msra.mxu0 0
        %2055 = vmatprep.subr.bf16.mxu0 0
        %2056 = vmatpush1.bf16.msra.mxu0 0
        %2057 = vmatprep.subr.bf16.mxu0 0
        %2058 = vmatpush1.bf16.msra.mxu0 0
        %2059 = vmatprep.subr.bf16.mxu0 0
        %2060 = vmatpush1.bf16.msra.mxu0 0
        %2061 = vmatprep.mubr.bf16.mxu0 0
        %2062 = vmatmul.mubr.bf16.gmra.mrb[0].mxu0 %v1756
        %v2063 = vpop.f32.mrb[0].mxu0
        %v2064 = vadd.f32 %v1975, %v2063
        %v2065 = vpop.f32.mrb[0].mxu0
        %v2066 = vpop.f32.mrb[0].mxu0
        %v2067 = vadd.f32 %v1978, %v2066
        %v2068 = vpop.f32.mrb[0].mxu0
        %2069 = vmatprep.mubr.bf16.mxu0 0
        %2070 = vmatmul.mubr.bf16.gmra.mrb[0].mxu0 %v1759
        %v2071 = vpop.f32.mrb[0].mxu0
        %v2072 = vadd.f32 %v1983, %v2071
        %v2073 = vpop.f32.mrb[0].mxu0
        %v2074 = vpop.f32.mrb[0].mxu0
        %v2075 = vadd.f32 %v1986, %v2074
        %v2076 = vpop.f32.mrb[0].mxu0
        %2077 = vmatprep.mubr.bf16.mxu0 0
        %2078 = vmatmul.mubr.bf16.gmra.mrb[0].mxu0 %v1762
        %v2079 = vpop.f32.mrb[0].mxu0
        %v2080 = vadd.f32 %v1991, %v2079
        %v2081 = vpop.f32.mrb[0].mxu0
        %v2082 = vpop.f32.mrb[0].mxu0
        %v2083 = vadd.f32 %v1994, %v2082
        %v2084 = vpop.f32.mrb[0].mxu0
        %2085 = vmatprep.mubr.bf16.mxu0 0
        %2086 = vmatmul.mubr.bf16.gmra.mrb[0].mxu0 %v1765
        %v2087 = vpop.f32.mrb[0].mxu0
        %v2088 = vadd.f32 %v1999, %v2087
        %v2089 = vpop.f32.mrb[0].mxu0
        %v2090 = vpop.f32.mrb[0].mxu0
        %v2091 = vadd.f32 %v2002, %v2090
        %v2092 = vpop.f32.mrb[0].mxu0
        %2093 = vmatprep.mubr.bf16.mxu0 0
        %2094 = vmatmul.mubr.bf16.gmra.mrb[0].mxu0 %v1768
        %v2095 = vpop.f32.mrb[0].mxu0
        %v2096 = vadd.f32 %v2007, %v2095
        %v2097 = vpop.f32.mrb[0].mxu0
        %v2098 = vpop.f32.mrb[0].mxu0
        %v2099 = vadd.f32 %v2010, %v2098
        %v2100 = vpop.f32.mrb[0].mxu0
        %2101 = vmatprep.mubr.bf16.mxu0 0
        %2102 = vmatmul.mubr.bf16.gmra.mrb[0].mxu0 %v1771
        %v2103 = vpop.f32.mrb[0].mxu0
        %v2104 = vadd.f32 %v2015, %v2103
        %v2105 = vpop.f32.mrb[0].mxu0
        %v2106 = vpop.f32.mrb[0].mxu0
        %v2107 = vadd.f32 %v2018, %v2106
        %v2108 = vpop.f32.mrb[0].mxu0
        %2109 = vmatprep.mubr.bf16.mxu0 0
        %2110 = vmatmul.mubr.bf16.gmra.mrb[0].mxu0 %v1774
        %v2111 = vpop.f32.mrb[0].mxu0
        %v2112 = vadd.f32 %v2023, %v2111
        %v2113 = vpop.f32.mrb[0].mxu0
        %v2114 = vpop.f32.mrb[0].mxu0
        %v2115 = vadd.f32 %v2026, %v2114
        %v2116 = vpop.f32.mrb[0].mxu0
        %2117 = vdwg.mxu0
        %v2118 = vmax.f32 %v2064, 0.0
        %v2119 = vmax.f32 %v2067, 0.0
        %v2120 = vmax.f32 %v2072, 0.0
        %v2121 = vmax.f32 %v2075, 0.0
        %v2122 = vmax.f32 %v2080, 0.0
        %v2123 = vmax.f32 %v2083, 0.0
        %v2124 = vmax.f32 %v2088, 0.0
        %v2125 = vmax.f32 %v2091, 0.0
        %v2126 = vmax.f32 %v2096, 0.0
        %v2127 = vmax.f32 %v2099, 0.0
        %v2128 = vmax.f32 %v2104, 0.0
        %v2129 = vmax.f32 %v2107, 0.0
        %v2130 = vmax.f32 %v2112, 0.0
        %v2131 = vmax.f32 %v2115, 0.0
        %2132 = vst [vmem:[#allocation4 + $0x1] sm:$0xff] %v2118
        %2133 = vst [vmem:[#allocation4 + $0x9] sm:$0xff] %v2119
        %2134 = vst [vmem:[#allocation4 + $0x11] sm:$0xff] %v2120
        %2135 = vst [vmem:[#allocation4 + $0x19] sm:$0xff] %v2121
        %2136 = vst [vmem:[#allocation4 + $0x21] sm:$0xff] %v2122
        %2137 = vst [vmem:[#allocation4 + $0x29] sm:$0xff] %v2123
        %2138 = vst [vmem:[#allocation4 + $0x31] sm:$0xff] %v2124
        %2139 = vst [vmem:[#allocation4 + $0x39] sm:$0xff] %v2125
        %2140 = vst [vmem:[#allocation4 + $0x41] sm:$0xff] %v2126
        %2141 = vst [vmem:[#allocation4 + $0x49] sm:$0xff] %v2127
        %2142 = vst [vmem:[#allocation4 + $0x51] sm:$0xff] %v2128
        %2143 = vst [vmem:[#allocation4 + $0x59] sm:$0xff] %v2129
        %2144 = vst [vmem:[#allocation4 + $0x61] sm:$0xff] %v2130
        %2145 = vst [vmem:[#allocation4 + $0x69] sm:$0x3] %v2131
        %2146 = vst [vmem:[#allocation4 + $0x11] sm:$0x3] 0.0
        %2147 = vst [vmem:[#allocation4 + $0x23] sm:$0x3] 0.0
        %2148 = vst [vmem:[#allocation4 + $0x35] sm:$0x3] 0.0
        %2149 = vst [vmem:[#allocation4 + $0x47] sm:$0x3] 0.0
        %2150 = vst [vmem:[#allocation4 + $0x59] sm:$0x3] 0.0
        %v2151 = vld [vmem:[#allocation4] sm:$0xff]
        %v2152 = vld [vmem:[#allocation4 + $0x8] sm:$0xff]
        %v2153 = vld [vmem:[#allocation4 + $0x10] sm:$0xff]
        %v2154 = vld [vmem:[#allocation4 + $0x18] sm:$0xff]
        %v2155 = vld [vmem:[#allocation4 + $0x20] sm:$0xff]
        %v2156 = vld [vmem:[#allocation4 + $0x28] sm:$0xff]
        %v2157 = vld [vmem:[#allocation4 + $0x30] sm:$0xff]
        %v2158 = vld [vmem:[#allocation4 + $0x38] sm:$0xff]
        %v2159 = vld [vmem:[#allocation4 + $0x40] sm:$0xff]
        %v2160 = vld [vmem:[#allocation4 + $0x48] sm:$0xff]
        %v2161 = vld [vmem:[#allocation4 + $0x50] sm:$0xff]
        %v2162 = vld [vmem:[#allocation4 + $0x58] sm:$0xff]
        %v2163 = vld [vmem:[#allocation4 + $0x60] sm:$0xff]
        %v2164 = vld [vmem:[#allocation4 + $0x68] sm:$0x3]
        %v2165 = vpack.c.bf16 %v2152, %v2151
        %v2166 = vpack.c.bf16 %v2154, %v2153
        %v2167 = vpack.c.bf16 %v2156, %v2155
        %v2168 = vpack.c.bf16 %v2158, %v2157
        %v2169 = vpack.c.bf16 %v2160, %v2159
        %v2170 = vpack.c.bf16 %v2162, %v2161
        %v2171 = vpack.c.bf16 %v2164, %v2163
        %v2179 = vunpack.c.l.b16 %v2165
        %v2180 = vunpack.c.h.b16 %v2165
        %v2181 = vunpack.c.l.b16 %v2166
        %v2182 = vunpack.c.h.b16 %v2166
        %v2183 = vunpack.c.l.b16 %v2167
        %v2184 = vunpack.c.h.b16 %v2167
        %v2185 = vunpack.c.l.b16 %v2168
        %v2186 = vunpack.c.h.b16 %v2168
        %v2187 = vunpack.c.l.b16 %v2169
        %v2188 = vunpack.c.h.b16 %v2169
        %v2189 = vunpack.c.l.b16 %v2170
        %v2190 = vunpack.c.h.b16 %v2170
        %v2191 = vunpack.c.l.b16 %v2171
        %v2192 = vunpack.c.h.b16 %v2171
        %v2193 = vpack.c.b16 %v2179, %v2179
        %v2194 = vpack.c.b16 %v2180, %v2180
        %v2195 = vpack.c.b16 %v2181, %v2181
        %v2196 = vpack.c.b16 %v2182, %v2182
        %v2197 = vpack.c.b16 %v2183, %v2183
        %v2198 = vpack.c.b16 %v2184, %v2184
        %v2199 = vpack.c.b16 %v2185, %v2185
        %v2200 = vpack.c.b16 %v2186, %v2186
        %v2201 = vpack.c.b16 %v2187, %v2187
        %v2202 = vpack.c.b16 %v2188, %v2188
        %v2203 = vpack.c.b16 %v2189, %v2189
        %v2204 = vpack.c.b16 %v2190, %v2190
        %v2205 = vpack.c.b16 %v2191, %v2191
        %v2206 = vpack.c.b16 %v2192, %v2192
        %2221 = vst [vmem:[#allocation9] sm:$0xf] %v2193
        %2222 = vst [vmem:[#allocation9 + $0xc] sm:$0xf] %v2194
        %2223 = vst [vmem:[#allocation9 + $0x18] sm:$0xf] %v2195
        %2224 = vst [vmem:[#allocation9 + $0x24] sm:$0xf] %v2196
        %2225 = vst [vmem:[#allocation9 + $0x30] sm:$0xf] %v2197
        %2226 = vst [vmem:[#allocation9 + $0x3c] sm:$0xf] %v2198
        %2227 = vst [vmem:[#allocation9 + $0x48] sm:$0xf] %v2199
        %2228 = vst [vmem:[#allocation9 + $0x54] sm:$0xf] %v2200
        %2229 = vst [vmem:[#allocation9 + $0x60] sm:$0xf] %v2201
        %2230 = vst [vmem:[#allocation9 + $0x6c] sm:$0xf] %v2202
        %2231 = vst [vmem:[#allocation9 + $0x78] sm:$0xf] %v2203
        %2232 = vst [vmem:[#allocation9 + $0x84] sm:$0xf] %v2204
        %2233 = vst [vmem:[#allocation9 + $0x90] sm:$0xf] %v2205
        %2234 = vst [vmem:[#allocation9 + $0x9c] sm:$0x1] %v2206
        %v2235 = vld [vmem:[#allocation4 + $0x1] sm:$0xff]
        %v2236 = vld [vmem:[#allocation4 + $0x9] sm:$0xff]
        %v2237 = vld [vmem:[#allocation4 + $0x11] sm:$0xff]
        %v2238 = vld [vmem:[#allocation4 + $0x19] sm:$0xff]
        %v2239 = vld [vmem:[#allocation4 + $0x21] sm:$0xff]
        %v2240 = vld [vmem:[#allocation4 + $0x29] sm:$0xff]
        %v2241 = vld [vmem:[#allocation4 + $0x31] sm:$0xff]
        %v2242 = vld [vmem:[#allocation4 + $0x39] sm:$0xff]
        %v2243 = vld [vmem:[#allocation4 + $0x41] sm:$0xff]
        %v2244 = vld [vmem:[#allocation4 + $0x49] sm:$0xff]
        %v2245 = vld [vmem:[#allocation4 + $0x51] sm:$0xff]
        %v2246 = vld [vmem:[#allocation4 + $0x59] sm:$0xff]
        %v2247 = vld [vmem:[#allocation4 + $0x61] sm:$0xff]
        %v2248 = vld [vmem:[#allocation4 + $0x69] sm:$0x3]
        %v2249 = vpack.c.bf16 %v2236, %v2235
        %v2250 = vpack.c.bf16 %v2238, %v2237
        %v2251 = vpack.c.bf16 %v2240, %v2239
        %v2252 = vpack.c.bf16 %v2242, %v2241
        %v2253 = vpack.c.bf16 %v2244, %v2243
        %v2254 = vpack.c.bf16 %v2246, %v2245
        %v2255 = vpack.c.bf16 %v2248, %v2247
        %v2263 = vunpack.c.l.b16 %v2249
        %v2264 = vunpack.c.h.b16 %v2249
        %v2265 = vunpack.c.l.b16 %v2250
        %v2266 = vunpack.c.h.b16 %v2250
        %v2267 = vunpack.c.l.b16 %v2251
        %v2268 = vunpack.c.h.b16 %v2251
        %v2269 = vunpack.c.l.b16 %v2252
        %v2270 = vunpack.c.h.b16 %v2252
        %v2271 = vunpack.c.l.b16 %v2253
        %v2272 = vunpack.c.h.b16 %v2253
        %v2273 = vunpack.c.l.b16 %v2254
        %v2274 = vunpack.c.h.b16 %v2254
        %v2275 = vunpack.c.l.b16 %v2255
        %v2276 = vunpack.c.h.b16 %v2255
        %v2277 = vpack.c.b16 %v2263, %v2263
        %v2278 = vpack.c.b16 %v2264, %v2264
        %v2279 = vpack.c.b16 %v2265, %v2265
        %v2280 = vpack.c.b16 %v2266, %v2266
        %v2281 = vpack.c.b16 %v2267, %v2267
        %v2282 = vpack.c.b16 %v2268, %v2268
        %v2283 = vpack.c.b16 %v2269, %v2269
        %v2284 = vpack.c.b16 %v2270, %v2270
        %v2285 = vpack.c.b16 %v2271, %v2271
        %v2286 = vpack.c.b16 %v2272, %v2272
        %v2287 = vpack.c.b16 %v2273, %v2273
        %v2288 = vpack.c.b16 %v2274, %v2274
        %v2289 = vpack.c.b16 %v2275, %v2275
        %v2290 = vpack.c.b16 %v2276, %v2276
        %2305 = vst [vmem:[#allocation9 + $0x4] sm:$0xf] %v2277
        %2306 = vst [vmem:[#allocation9 + $0x10] sm:$0xf] %v2278
        %2307 = vst [vmem:[#allocation9 + $0x1c] sm:$0xf] %v2279
        %2308 = vst [vmem:[#allocation9 + $0x28] sm:$0xf] %v2280
        %2309 = vst [vmem:[#allocation9 + $0x34] sm:$0xf] %v2281
        %2310 = vst [vmem:[#allocation9 + $0x40] sm:$0xf] %v2282
        %2311 = vst [vmem:[#allocation9 + $0x4c] sm:$0xf] %v2283
        %2312 = vst [vmem:[#allocation9 + $0x58] sm:$0xf] %v2284
        %2313 = vst [vmem:[#allocation9 + $0x64] sm:$0xf] %v2285
        %2314 = vst [vmem:[#allocation9 + $0x70] sm:$0xf] %v2286
        %2315 = vst [vmem:[#allocation9 + $0x7c] sm:$0xf] %v2287
        %2316 = vst [vmem:[#allocation9 + $0x88] sm:$0xf] %v2288
        %2317 = vst [vmem:[#allocation9 + $0x94] sm:$0xf] %v2289
        %2318 = vst [vmem:[#allocation9 + $0xa0] sm:$0x1] %v2290
        %v2319 = vld [vmem:[#allocation4 + $0x2] sm:$0xff]
        %v2320 = vld [vmem:[#allocation4 + $0xa] sm:$0xff]
        %v2321 = vld [vmem:[#allocation4 + $0x12] sm:$0xff]
        %v2322 = vld [vmem:[#allocation4 + $0x1a] sm:$0xff]
        %v2323 = vld [vmem:[#allocation4 + $0x22] sm:$0xff]
        %v2324 = vld [vmem:[#allocation4 + $0x2a] sm:$0xff]
        %v2325 = vld [vmem:[#allocation4 + $0x32] sm:$0xff]
        %v2326 = vld [vmem:[#allocation4 + $0x3a] sm:$0xff]
        %v2327 = vld [vmem:[#allocation4 + $0x42] sm:$0xff]
        %v2328 = vld [vmem:[#allocation4 + $0x4a] sm:$0xff]
        %v2329 = vld [vmem:[#allocation4 + $0x52] sm:$0xff]
        %v2330 = vld [vmem:[#allocation4 + $0x5a] sm:$0xff]
        %v2331 = vld [vmem:[#allocation4 + $0x62] sm:$0xff]
        %v2332 = vld [vmem:[#allocation4 + $0x6a] sm:$0x3]
        %v2333 = vpack.c.bf16 %v2320, %v2319
        %v2334 = vpack.c.bf16 %v2322, %v2321
        %v2335 = vpack.c.bf16 %v2324, %v2323
        %v2336 = vpack.c.bf16 %v2326, %v2325
        %v2337 = vpack.c.bf16 %v2328, %v2327
        %v2338 = vpack.c.bf16 %v2330, %v2329
        %v2339 = vpack.c.bf16 %v2332, %v2331
        %v2347 = vunpack.c.l.b16 %v2333
        %v2348 = vunpack.c.h.b16 %v2333
        %v2349 = vunpack.c.l.b16 %v2334
        %v2350 = vunpack.c.h.b16 %v2334
        %v2351 = vunpack.c.l.b16 %v2335
        %v2352 = vunpack.c.h.b16 %v2335
        %v2353 = vunpack.c.l.b16 %v2336
        %v2354 = vunpack.c.h.b16 %v2336
        %v2355 = vunpack.c.l.b16 %v2337
        %v2356 = vunpack.c.h.b16 %v2337
        %v2357 = vunpack.c.l.b16 %v2338
        %v2358 = vunpack.c.h.b16 %v2338
        %v2359 = vunpack.c.l.b16 %v2339
        %v2360 = vunpack.c.h.b16 %v2339
        %v2361 = vpack.c.b16 %v2347, %v2347
        %v2362 = vpack.c.b16 %v2348, %v2348
        %v2363 = vpack.c.b16 %v2349, %v2349
        %v2364 = vpack.c.b16 %v2350, %v2350
        %v2365 = vpack.c.b16 %v2351, %v2351
        %v2366 = vpack.c.b16 %v2352, %v2352
        %v2367 = vpack.c.b16 %v2353, %v2353
        %v2368 = vpack.c.b16 %v2354, %v2354
        %v2369 = vpack.c.b16 %v2355, %v2355
        %v2370 = vpack.c.b16 %v2356, %v2356
        %v2371 = vpack.c.b16 %v2357, %v2357
        %v2372 = vpack.c.b16 %v2358, %v2358
        %v2373 = vpack.c.b16 %v2359, %v2359
        %v2374 = vpack.c.b16 %v2360, %v2360
        %2389 = vst [vmem:[#allocation9 + $0x8] sm:$0xf] %v2361
        %2390 = vst [vmem:[#allocation9 + $0x14] sm:$0xf] %v2362
        %2391 = vst [vmem:[#allocation9 + $0x20] sm:$0xf] %v2363
        %2392 = vst [vmem:[#allocation9 + $0x2c] sm:$0xf] %v2364
        %2393 = vst [vmem:[#allocation9 + $0x38] sm:$0xf] %v2365
        %2394 = vst [vmem:[#allocation9 + $0x44] sm:$0xf] %v2366
        %2395 = vst [vmem:[#allocation9 + $0x50] sm:$0xf] %v2367
        %2396 = vst [vmem:[#allocation9 + $0x5c] sm:$0xf] %v2368
        %2397 = vst [vmem:[#allocation9 + $0x68] sm:$0xf] %v2369
        %2398 = vst [vmem:[#allocation9 + $0x74] sm:$0xf] %v2370
        %2399 = vst [vmem:[#allocation9 + $0x80] sm:$0xf] %v2371
        %2400 = vst [vmem:[#allocation9 + $0x8c] sm:$0xf] %v2372
        %2401 = vst [vmem:[#allocation9 + $0x98] sm:$0xf] %v2373
        %2402 = vst [vmem:[#allocation9 + $0xa4] sm:$0x1] %v2374
        %v2403 = vld [vmem:[#allocation9] sm:$0xff]
        %v2404 = vld [vmem:[#allocation9 + $0x8] sm:$0xf]
        %v2405 = vld [vmem:[#allocation9 + $0xc] sm:$0xff]
        %v2406 = vld [vmem:[#allocation9 + $0x14] sm:$0xf]
        %v2407 = vld [vmem:[#allocation9 + $0x18] sm:$0xff]
        %v2408 = vld [vmem:[#allocation9 + $0x20] sm:$0xf]
        %v2409 = vld [vmem:[#allocation9 + $0x24] sm:$0xff]
        %v2410 = vld [vmem:[#allocation9 + $0x2c] sm:$0xf]
        %v2411 = vld [vmem:[#allocation9 + $0x30] sm:$0xff]
        %v2412 = vld [vmem:[#allocation9 + $0x38] sm:$0xf]
        %v2413 = vld [vmem:[#allocation9 + $0x3c] sm:$0xff]
        %v2414 = vld [vmem:[#allocation9 + $0x44] sm:$0xf]
        %v2415 = vld [vmem:[#allocation9 + $0x48] sm:$0xff]
        %v2416 = vld [vmem:[#allocation9 + $0x50] sm:$0xf]
        %v2417 = vld [vmem:[#allocation9 + $0x54] sm:$0xff]
        %v2418 = vld [vmem:[#allocation9 + $0x5c] sm:$0xf]
        %v2419 = vld [vmem:[#allocation9 + $0x60] sm:$0xff]
        %v2420 = vld [vmem:[#allocation9 + $0x68] sm:$0xf]
        %v2421 = vld [vmem:[#allocation9 + $0x6c] sm:$0xff]
        %v2422 = vld [vmem:[#allocation9 + $0x74] sm:$0xf]
        %v2423 = vld [vmem:[#allocation9 + $0x78] sm:$0xff]
        %v2424 = vld [vmem:[#allocation9 + $0x80] sm:$0xf]
        %v2425 = vld [vmem:[#allocation9 + $0x84] sm:$0xff]
        %v2426 = vld [vmem:[#allocation9 + $0x8c] sm:$0xf]
        %v2427 = vld [vmem:[#allocation9 + $0x90] sm:$0xff]
        %v2428 = vld [vmem:[#allocation9 + $0x98] sm:$0xf]
        %v2429 = vld [vmem:[#allocation9 + $0x9c] sm:$0x11]
        %v2430 = vld [vmem:[#allocation9 + $0xa4] sm:$0x1]
        %s2431 = scalar_lea.vmem [#allocation15], 192
        %v2432 = vld [vmem:[%s2431] sm:$0xf]
        %v2433 = vld [vmem:[%s2431 + $0x4] sm:$0xf]
        %v2434 = vld [vmem:[%s2431 + $0x8] sm:$0xf]
        %v2435 = vld [vmem:[%s2431 + $0xc] sm:$0xf]
        %v2436 = vld [vmem:[%s2431 + $0x10] sm:$0xf]
        %v2437 = vld [vmem:[%s2431 + $0x14] sm:$0xf]
        %v2438 = vld [vmem:[%s2431 + $0x18] sm:$0xf]
        %v2439 = vld [vmem:[%s2431 + $0x1c] sm:$0xf]
        %v2440 = vld [vmem:[%s2431 + $0x20] sm:$0xf]
        %v2441 = vld [vmem:[%s2431 + $0x24] sm:$0xf]
        %v2442 = vld [vmem:[%s2431 + $0x28] sm:$0xf]
        %v2443 = vld [vmem:[%s2431 + $0x2c] sm:$0xf]
        %v2444 = vld [vmem:[%s2431 + $0x30] sm:$0xf]
        %v2445 = vld [vmem:[%s2431 + $0x34] sm:$0xf]
        %v2446 = vld [vmem:[%s2431 + $0x38] sm:$0xf]
        %v2447 = vld [vmem:[%s2431 + $0x3c] sm:$0xf]
        %v2448 = vld [vmem:[%s2431 + $0x40] sm:$0xf]
        %v2449 = vld [vmem:[%s2431 + $0x44] sm:$0xf]
        %v2450 = vld [vmem:[%s2431 + $0x48] sm:$0xf]
        %v2451 = vld [vmem:[%s2431 + $0x4c] sm:$0xf]
        %v2452 = vld [vmem:[%s2431 + $0x50] sm:$0xf]
        %v2453 = vld [vmem:[%s2431 + $0x54] sm:$0xf]
        %v2454 = vld [vmem:[%s2431 + $0x58] sm:$0xf]
        %v2455 = vld [vmem:[%s2431 + $0x5c] sm:$0xf]
        %v2456 = vld [vmem:[%s2431 + $0x60] sm:$0xf]
        %v2457 = vld [vmem:[%s2431 + $0x64] sm:$0xf]
        %v2458 = vld [vmem:[%s2431 + $0x68] sm:$0xf]
        %v2459 = vld [vmem:[%s2431 + $0x6c] sm:$0xf]
        %v2460 = vld [vmem:[%s2431 + $0x70] sm:$0xf]
        %v2461 = vld [vmem:[%s2431 + $0x74] sm:$0xf]
        %v2462 = vld [vmem:[%s2431 + $0x78] sm:$0xf]
        %v2463 = vld [vmem:[%s2431 + $0x7c] sm:$0xf]
        %v2464 = vld [vmem:[%s2431 + $0x80] sm:$0xf]
        %v2465 = vld [vmem:[%s2431 + $0x84] sm:$0xf]
        %v2466 = vld [vmem:[%s2431 + $0x88] sm:$0xf]
        %v2467 = vld [vmem:[%s2431 + $0x8c] sm:$0xf]
        %v2468 = vld [vmem:[%s2431 + $0x90] sm:$0xf]
        %v2469 = vld [vmem:[%s2431 + $0x94] sm:$0xf]
        %v2470 = vld [vmem:[%s2431 + $0x98] sm:$0xf]
        %v2471 = vld [vmem:[%s2431 + $0x9c] sm:$0xf]
        %v2472 = vld [vmem:[%s2431 + $0xa0] sm:$0xf]
        %v2473 = vld [vmem:[%s2431 + $0xa4] sm:$0xf]
        %v2474 = vld [vmem:[%s2431 + $0xa8] sm:$0xf]
        %v2475 = vld [vmem:[%s2431 + $0xac] sm:$0xf]
        %v2476 = vld [vmem:[%s2431 + $0xb0] sm:$0xf]
        %v2477 = vld [vmem:[%s2431 + $0xb4] sm:$0xf]
        %v2478 = vld [vmem:[%s2431 + $0xb8] sm:$0xf]
        %v2479 = vld [vmem:[%s2431 + $0xbc] sm:$0xf]
        %s2480 = scalar_lea.vmem %s4, 1
        %v2481 = vld [vmem:[%s2480] sm:$0x1]
        %v2483 = vlaneseq
        %v2484 = vshrl.u32 %v2483, 7
        %v2485 = vsub.s32 0, %v2484
        %v2486 = vrot.slane %v2481, %v2485
        %v2516 = vunpack.c.l.b16 %v2403
        %v2517 = vunpack.c.h.b16 %v2403
        %v2518 = vunpack.c.l.b16 %v2404
        %v2519 = vunpack.c.l.b16 %v2405
        %v2520 = vunpack.c.h.b16 %v2405
        %v2521 = vunpack.c.l.b16 %v2406
        %v2522 = vunpack.c.l.b16 %v2407
        %v2523 = vunpack.c.h.b16 %v2407
        %v2524 = vunpack.c.l.b16 %v2408
        %v2525 = vunpack.c.l.b16 %v2409
        %v2526 = vunpack.c.h.b16 %v2409
        %v2527 = vunpack.c.l.b16 %v2410
        %v2528 = vunpack.c.l.b16 %v2411
        %v2529 = vunpack.c.h.b16 %v2411
        %v2530 = vunpack.c.l.b16 %v2412
        %v2531 = vunpack.c.l.b16 %v2413
        %v2532 = vunpack.c.h.b16 %v2413
        %v2533 = vunpack.c.l.b16 %v2414
        %v2534 = vunpack.c.l.b16 %v2415
        %v2535 = vunpack.c.h.b16 %v2415
        %v2536 = vunpack.c.l.b16 %v2416
        %v2537 = vunpack.c.l.b16 %v2417
        %v2538 = vunpack.c.h.b16 %v2417
        %v2539 = vunpack.c.l.b16 %v2418
        %v2540 = vunpack.c.l.b16 %v2419
        %v2541 = vunpack.c.h.b16 %v2419
        %v2542 = vunpack.c.l.b16 %v2420
        %v2543 = vunpack.c.l.b16 %v2421
        %v2544 = vunpack.c.h.b16 %v2421
        %v2545 = vunpack.c.l.b16 %v2422
        %v2546 = vunpack.c.l.b16 %v2423
        %v2547 = vunpack.c.h.b16 %v2423
        %v2548 = vunpack.c.l.b16 %v2424
        %v2549 = vunpack.c.l.b16 %v2425
        %v2550 = vunpack.c.h.b16 %v2425
        %v2551 = vunpack.c.l.b16 %v2426
        %v2552 = vunpack.c.l.b16 %v2427
        %v2553 = vunpack.c.h.b16 %v2427
        %v2554 = vunpack.c.l.b16 %v2428
        %v2555 = vunpack.c.l.b16 %v2429
        %v2556 = vunpack.c.h.b16 %v2429
        %v2557 = vunpack.c.l.b16 %v2430
        %v2558 = vpack.c.b16 %v2519, %v2516
        %v2559 = vpack.c.b16 %v2520, %v2517
        %v2560 = vpack.c.b16 %v2521, %v2518
        %v2561 = vpack.c.b16 %v2525, %v2522
        %v2562 = vpack.c.b16 %v2526, %v2523
        %v2563 = vpack.c.b16 %v2527, %v2524
        %v2564 = vpack.c.b16 %v2531, %v2528
        %v2565 = vpack.c.b16 %v2532, %v2529
        %v2566 = vpack.c.b16 %v2533, %v2530
        %v2567 = vpack.c.b16 %v2537, %v2534
        %v2568 = vpack.c.b16 %v2538, %v2535
        %v2569 = vpack.c.b16 %v2539, %v2536
        %v2570 = vpack.c.b16 %v2543, %v2540
        %v2571 = vpack.c.b16 %v2544, %v2541
        %v2572 = vpack.c.b16 %v2545, %v2542
        %v2573 = vpack.c.b16 %v2549, %v2546
        %v2574 = vpack.c.b16 %v2550, %v2547
        %v2575 = vpack.c.b16 %v2551, %v2548
        %v2576 = vpack.c.b16 %v2555, %v2552
        %v2577 = vpack.c.b16 %v2556, %v2553
        %v2578 = vpack.c.b16 %v2557, %v2554
        %v2648 = vunpack.c.l.b16 %v2432
        %v2649 = vunpack.c.l.b16 %v2433
        %v2650 = vunpack.c.l.b16 %v2434
        %v2651 = vunpack.c.l.b16 %v2435
        %v2652 = vunpack.c.l.b16 %v2436
        %v2653 = vunpack.c.l.b16 %v2437
        %v2654 = vunpack.c.l.b16 %v2438
        %v2655 = vunpack.c.l.b16 %v2439
        %v2656 = vunpack.c.l.b16 %v2440
        %v2657 = vunpack.c.l.b16 %v2441
        %v2658 = vunpack.c.l.b16 %v2442
        %v2659 = vunpack.c.l.b16 %v2443
        %v2660 = vunpack.c.l.b16 %v2444
        %v2661 = vunpack.c.l.b16 %v2445
        %v2662 = vunpack.c.l.b16 %v2446
        %v2663 = vunpack.c.l.b16 %v2447
        %v2664 = vunpack.c.l.b16 %v2448
        %v2665 = vunpack.c.l.b16 %v2449
        %v2666 = vunpack.c.l.b16 %v2450
        %v2667 = vunpack.c.l.b16 %v2451
        %v2668 = vunpack.c.l.b16 %v2452
        %v2669 = vunpack.c.l.b16 %v2453
        %v2670 = vunpack.c.l.b16 %v2454
        %v2671 = vunpack.c.l.b16 %v2455
        %v2672 = vunpack.c.l.b16 %v2456
        %v2673 = vunpack.c.l.b16 %v2457
        %v2674 = vunpack.c.l.b16 %v2458
        %v2675 = vunpack.c.l.b16 %v2459
        %v2676 = vunpack.c.l.b16 %v2460
        %v2677 = vunpack.c.l.b16 %v2461
        %v2678 = vunpack.c.l.b16 %v2462
        %v2679 = vunpack.c.l.b16 %v2463
        %v2680 = vunpack.c.l.b16 %v2464
        %v2681 = vunpack.c.l.b16 %v2465
        %v2682 = vunpack.c.l.b16 %v2466
        %v2683 = vunpack.c.l.b16 %v2467
        %v2684 = vunpack.c.l.b16 %v2468
        %v2685 = vunpack.c.l.b16 %v2469
        %v2686 = vunpack.c.l.b16 %v2470
        %v2687 = vunpack.c.l.b16 %v2471
        %v2688 = vunpack.c.l.b16 %v2472
        %v2689 = vunpack.c.l.b16 %v2473
        %v2690 = vunpack.c.l.b16 %v2474
        %v2691 = vunpack.c.l.b16 %v2475
        %v2692 = vunpack.c.l.b16 %v2476
        %v2693 = vunpack.c.l.b16 %v2477
        %v2694 = vunpack.c.l.b16 %v2478
        %v2695 = vunpack.c.l.b16 %v2479
        %v2696 = vpack.c.b16 %v2649, %v2648
        %v2697 = vpack.c.b16 %v2651, %v2650
        %v2698 = vpack.c.b16 %v2653, %v2652
        %v2699 = vpack.c.b16 %v2655, %v2654
        %v2700 = vpack.c.b16 %v2657, %v2656
        %v2701 = vpack.c.b16 %v2659, %v2658
        %v2702 = vpack.c.b16 %v2661, %v2660
        %v2703 = vpack.c.b16 %v2663, %v2662
        %v2704 = vpack.c.b16 %v2665, %v2664
        %v2705 = vpack.c.b16 %v2667, %v2666
        %v2706 = vpack.c.b16 %v2669, %v2668
        %v2707 = vpack.c.b16 %v2671, %v2670
        %v2708 = vpack.c.b16 %v2673, %v2672
        %v2709 = vpack.c.b16 %v2675, %v2674
        %v2710 = vpack.c.b16 %v2677, %v2676
        %v2711 = vpack.c.b16 %v2679, %v2678
        %v2712 = vpack.c.b16 %v2681, %v2680
        %v2713 = vpack.c.b16 %v2683, %v2682
        %v2714 = vpack.c.b16 %v2685, %v2684
        %v2715 = vpack.c.b16 %v2687, %v2686
        %v2716 = vpack.c.b16 %v2689, %v2688
        %v2717 = vpack.c.b16 %v2691, %v2690
        %v2718 = vpack.c.b16 %v2693, %v2692
        %v2719 = vpack.c.b16 %v2695, %v2694
        %2744 = vmatprep.subr.bf16.mxu0 0
        %2745 = vmatpush1.bf16.msra.mxu0 %v2696
        %2746 = vmatprep.subr.bf16.mxu0 0
        %2747 = vmatpush1.bf16.msra.mxu0 %v2697
        %2748 = vmatprep.subr.bf16.mxu0 0
        %2749 = vmatpush1.bf16.msra.mxu0 %v2698
        %2750 = vmatprep.subr.bf16.mxu0 0
        %2751 = vmatpush1.bf16.msra.mxu0 %v2699
        %2752 = vmatprep.subr.bf16.mxu0 0
        %2753 = vmatpush1.bf16.msra.mxu0 %v2700
        %2754 = vmatprep.subr.bf16.mxu0 0
        %2755 = vmatpush1.bf16.msra.mxu0 %v2701
        %2756 = vmatprep.subr.bf16.mxu0 0
        %2757 = vmatpush1.bf16.msra.mxu0 %v2702
        %2758 = vmatprep.subr.bf16.mxu0 0
        %2759 = vmatpush1.bf16.msra.mxu0 %v2703
        %2760 = vmatprep.subr.bf16.mxu0 0
        %2761 = vmatpush1.bf16.msra.mxu0 %v2704
        %2762 = vmatprep.subr.bf16.mxu0 0
        %2763 = vmatpush1.bf16.msra.mxu0 %v2705
        %2764 = vmatprep.subr.bf16.mxu0 0
        %2765 = vmatpush1.bf16.msra.mxu0 %v2706
        %2766 = vmatprep.subr.bf16.mxu0 0
        %2767 = vmatpush1.bf16.msra.mxu0 %v2707
        %2768 = vmatprep.subr.bf16.mxu0 0
        %2769 = vmatpush1.bf16.msra.mxu0 %v2708
        %2770 = vmatprep.subr.bf16.mxu0 0
        %2771 = vmatpush1.bf16.msra.mxu0 %v2709
        %2772 = vmatprep.subr.bf16.mxu0 0
        %2773 = vmatpush1.bf16.msra.mxu0 %v2710
        %2774 = vmatprep.subr.bf16.mxu0 0
        %2775 = vmatpush1.bf16.msra.mxu0 %v2711
        %2776 = vmatprep.mubr.bf16.mxu0 %v2559
        %2777 = vmatmul.mubr.bf16.gmra.mrb[0].mxu0 %v2558
        %v2778 = vpop.f32.mrb[0].mxu0
        %v2779 = vadd.f32 %v2486, %v2778
        %v2780 = vpop.f32.mrb[0].mxu0
        %v2781 = vpop.f32.mrb[0].mxu0
        %v2782 = vadd.f32 %v2486, %v2781
        %v2783 = vpop.f32.mrb[0].mxu0
        %2784 = vmatprep.mubr.bf16.mxu0 %v2562
        %2785 = vmatmul.mubr.bf16.gmra.mrb[0].mxu0 %v2561
        %v2786 = vpop.f32.mrb[0].mxu0
        %v2787 = vadd.f32 %v2486, %v2786
        %v2788 = vpop.f32.mrb[0].mxu0
        %v2789 = vpop.f32.mrb[0].mxu0
        %v2790 = vadd.f32 %v2486, %v2789
        %v2791 = vpop.f32.mrb[0].mxu0
        %2792 = vmatprep.mubr.bf16.mxu0 %v2565
        %2793 = vmatmul.mubr.bf16.gmra.mrb[0].mxu0 %v2564
        %v2794 = vpop.f32.mrb[0].mxu0
        %v2795 = vadd.f32 %v2486, %v2794
        %v2796 = vpop.f32.mrb[0].mxu0
        %v2797 = vpop.f32.mrb[0].mxu0
        %v2798 = vadd.f32 %v2486, %v2797
        %v2799 = vpop.f32.mrb[0].mxu0
        %2800 = vmatprep.mubr.bf16.mxu0 %v2568
        %2801 = vmatmul.mubr.bf16.gmra.mrb[0].mxu0 %v2567
        %v2802 = vpop.f32.mrb[0].mxu0
        %v2803 = vadd.f32 %v2486, %v2802
        %v2804 = vpop.f32.mrb[0].mxu0
        %v2805 = vpop.f32.mrb[0].mxu0
        %v2806 = vadd.f32 %v2486, %v2805
        %v2807 = vpop.f32.mrb[0].mxu0
        %2808 = vmatprep.mubr.bf16.mxu0 %v2571
        %2809 = vmatmul.mubr.bf16.gmra.mrb[0].mxu0 %v2570
        %v2810 = vpop.f32.mrb[0].mxu0
        %v2811 = vadd.f32 %v2486, %v2810
        %v2812 = vpop.f32.mrb[0].mxu0
        %v2813 = vpop.f32.mrb[0].mxu0
        %v2814 = vadd.f32 %v2486, %v2813
        %v2815 = vpop.f32.mrb[0].mxu0
        %2816 = vmatprep.mubr.bf16.mxu0 %v2574
        %2817 = vmatmul.mubr.bf16.gmra.mrb[0].mxu0 %v2573
        %v2818 = vpop.f32.mrb[0].mxu0
        %v2819 = vadd.f32 %v2486, %v2818
        %v2820 = vpop.f32.mrb[0].mxu0
        %v2821 = vpop.f32.mrb[0].mxu0
        %v2822 = vadd.f32 %v2486, %v2821
        %v2823 = vpop.f32.mrb[0].mxu0
        %2824 = vmatprep.mubr.bf16.mxu0 %v2577
        %2825 = vmatmul.mubr.bf16.gmra.mrb[0].mxu0 %v2576
        %v2826 = vpop.f32.mrb[0].mxu0
        %v2827 = vadd.f32 %v2486, %v2826
        %v2828 = vpop.f32.mrb[0].mxu0
        %v2829 = vpop.f32.mrb[0].mxu0
        %v2830 = vadd.f32 %v2486, %v2829
        %v2831 = vpop.f32.mrb[0].mxu0
        %2832 = vdwg.mxu0
        %2833 = vmatprep.subr.bf16.mxu0 0
        %2834 = vmatpush1.bf16.msra.mxu0 %v2712
        %2835 = vmatprep.subr.bf16.mxu0 0
        %2836 = vmatpush1.bf16.msra.mxu0 %v2713
        %2837 = vmatprep.subr.bf16.mxu0 0
        %2838 = vmatpush1.bf16.msra.mxu0 %v2714
        %2839 = vmatprep.subr.bf16.mxu0 0
        %2840 = vmatpush1.bf16.msra.mxu0 %v2715
        %2841 = vmatprep.subr.bf16.mxu0 0
        %2842 = vmatpush1.bf16.msra.mxu0 %v2716
        %2843 = vmatprep.subr.bf16.mxu0 0
        %2844 = vmatpush1.bf16.msra.mxu0 %v2717
        %2845 = vmatprep.subr.bf16.mxu0 0
        %2846 = vmatpush1.bf16.msra.mxu0 %v2718
        %2847 = vmatprep.subr.bf16.mxu0 0
        %2848 = vmatpush1.bf16.msra.mxu0 %v2719
        %2849 = vmatprep.subr.bf16.mxu0 0
        %2850 = vmatpush1.bf16.msra.mxu0 0
        %2851 = vmatprep.subr.bf16.mxu0 0
        %2852 = vmatpush1.bf16.msra.mxu0 0
        %2853 = vmatprep.subr.bf16.mxu0 0
        %2854 = vmatpush1.bf16.msra.mxu0 0
        %2855 = vmatprep.subr.bf16.mxu0 0
        %2856 = vmatpush1.bf16.msra.mxu0 0
        %2857 = vmatprep.subr.bf16.mxu0 0
        %2858 = vmatpush1.bf16.msra.mxu0 0
        %2859 = vmatprep.subr.bf16.mxu0 0
        %2860 = vmatpush1.bf16.msra.mxu0 0
        %2861 = vmatprep.subr.bf16.mxu0 0
        %2862 = vmatpush1.bf16.msra.mxu0 0
        %2863 = vmatprep.subr.bf16.mxu0 0
        %2864 = vmatpush1.bf16.msra.mxu0 0
        %2865 = vmatprep.mubr.bf16.mxu0 0
        %2866 = vmatmul.mubr.bf16.gmra.mrb[0].mxu0 %v2560
        %v2867 = vpop.f32.mrb[0].mxu0
        %v2868 = vadd.f32 %v2779, %v2867
        %v2869 = vpop.f32.mrb[0].mxu0
        %v2870 = vpop.f32.mrb[0].mxu0
        %v2871 = vadd.f32 %v2782, %v2870
        %v2872 = vpop.f32.mrb[0].mxu0
        %2873 = vmatprep.mubr.bf16.mxu0 0
        %2874 = vmatmul.mubr.bf16.gmra.mrb[0].mxu0 %v2563
        %v2875 = vpop.f32.mrb[0].mxu0
        %v2876 = vadd.f32 %v2787, %v2875
        %v2877 = vpop.f32.mrb[0].mxu0
        %v2878 = vpop.f32.mrb[0].mxu0
        %v2879 = vadd.f32 %v2790, %v2878
        %v2880 = vpop.f32.mrb[0].mxu0
        %2881 = vmatprep.mubr.bf16.mxu0 0
        %2882 = vmatmul.mubr.bf16.gmra.mrb[0].mxu0 %v2566
        %v2883 = vpop.f32.mrb[0].mxu0
        %v2884 = vadd.f32 %v2795, %v2883
        %v2885 = vpop.f32.mrb[0].mxu0
        %v2886 = vpop.f32.mrb[0].mxu0
        %v2887 = vadd.f32 %v2798, %v2886
        %v2888 = vpop.f32.mrb[0].mxu0
        %2889 = vmatprep.mubr.bf16.mxu0 0
        %2890 = vmatmul.mubr.bf16.gmra.mrb[0].mxu0 %v2569
        %v2891 = vpop.f32.mrb[0].mxu0
        %v2892 = vadd.f32 %v2803, %v2891
        %v2893 = vpop.f32.mrb[0].mxu0
        %v2894 = vpop.f32.mrb[0].mxu0
        %v2895 = vadd.f32 %v2806, %v2894
        %v2896 = vpop.f32.mrb[0].mxu0
        %2897 = vmatprep.mubr.bf16.mxu0 0
        %2898 = vmatmul.mubr.bf16.gmra.mrb[0].mxu0 %v2572
        %v2899 = vpop.f32.mrb[0].mxu0
        %v2900 = vadd.f32 %v2811, %v2899
        %v2901 = vpop.f32.mrb[0].mxu0
        %v2902 = vpop.f32.mrb[0].mxu0
        %v2903 = vadd.f32 %v2814, %v2902
        %v2904 = vpop.f32.mrb[0].mxu0
        %2905 = vmatprep.mubr.bf16.mxu0 0
        %2906 = vmatmul.mubr.bf16.gmra.mrb[0].mxu0 %v2575
        %v2907 = vpop.f32.mrb[0].mxu0
        %v2908 = vadd.f32 %v2819, %v2907
        %v2909 = vpop.f32.mrb[0].mxu0
        %v2910 = vpop.f32.mrb[0].mxu0
        %v2911 = vadd.f32 %v2822, %v2910
        %v2912 = vpop.f32.mrb[0].mxu0
        %2913 = vmatprep.mubr.bf16.mxu0 0
        %2914 = vmatmul.mubr.bf16.gmra.mrb[0].mxu0 %v2578
        %v2915 = vpop.f32.mrb[0].mxu0
        %v2916 = vadd.f32 %v2827, %v2915
        %v2917 = vpop.f32.mrb[0].mxu0
        %v2918 = vpop.f32.mrb[0].mxu0
        %v2919 = vadd.f32 %v2830, %v2918
        %v2920 = vpop.f32.mrb[0].mxu0
        %2921 = vdwg.mxu0
        %v2922 = vmax.f32 %v2868, 0.0
        %v2923 = vmax.f32 %v2871, 0.0
        %v2924 = vmax.f32 %v2876, 0.0
        %v2925 = vmax.f32 %v2879, 0.0
        %v2926 = vmax.f32 %v2884, 0.0
        %v2927 = vmax.f32 %v2887, 0.0
        %v2928 = vmax.f32 %v2892, 0.0
        %v2929 = vmax.f32 %v2895, 0.0
        %v2930 = vmax.f32 %v2900, 0.0
        %v2931 = vmax.f32 %v2903, 0.0
        %v2932 = vmax.f32 %v2908, 0.0
        %v2933 = vmax.f32 %v2911, 0.0
        %v2934 = vmax.f32 %v2916, 0.0
        %v2935 = vmax.f32 %v2919, 0.0
        %2936 = vst [vmem:[#allocation3 + $0x1] sm:$0xff] %v2922
        %2937 = vst [vmem:[#allocation3 + $0x9] sm:$0xff] %v2923
        %2938 = vst [vmem:[#allocation3 + $0x11] sm:$0xff] %v2924
        %2939 = vst [vmem:[#allocation3 + $0x19] sm:$0xff] %v2925
        %2940 = vst [vmem:[#allocation3 + $0x21] sm:$0xff] %v2926
        %2941 = vst [vmem:[#allocation3 + $0x29] sm:$0xff] %v2927
        %2942 = vst [vmem:[#allocation3 + $0x31] sm:$0xff] %v2928
        %2943 = vst [vmem:[#allocation3 + $0x39] sm:$0xff] %v2929
        %2944 = vst [vmem:[#allocation3 + $0x41] sm:$0xff] %v2930
        %2945 = vst [vmem:[#allocation3 + $0x49] sm:$0xff] %v2931
        %2946 = vst [vmem:[#allocation3 + $0x51] sm:$0xff] %v2932
        %2947 = vst [vmem:[#allocation3 + $0x59] sm:$0xff] %v2933
        %2948 = vst [vmem:[#allocation3 + $0x61] sm:$0xff] %v2934
        %2949 = vst [vmem:[#allocation3 + $0x69] sm:$0x3] %v2935
        %2950 = vst [vmem:[#allocation3 + $0x11] sm:$0x3] 0.0
        %2951 = vst [vmem:[#allocation3 + $0x23] sm:$0x3] 0.0
        %2952 = vst [vmem:[#allocation3 + $0x35] sm:$0x3] 0.0
        %2953 = vst [vmem:[#allocation3 + $0x47] sm:$0x3] 0.0
        %2954 = vst [vmem:[#allocation3 + $0x59] sm:$0x3] 0.0
        %v2955 = vld [vmem:[%s6] sm:$0x1]
        %v2957 = vlaneseq
        %v2958 = vshrl.u32 %v2957, 7
        %v2959 = vsub.s32 0, %v2958
        %v2960 = vrot.slane %v2955, %v2959
        %s2962 = scalar_lea.vmem [#allocation3], 1
        %v2963 = vld [vmem:[%s2962] ss:$2 sm:$0xff]
        %s2964 = scalar_lea.vmem [#allocation3], 17
        %v2965 = vld [vmem:[%s2964] ss:$2 sm:$0xff]
        %s2966 = scalar_lea.vmem [#allocation3], 33
        %v2967 = vld [vmem:[%s2966] ss:$2 sm:$0xff]
        %s2968 = scalar_lea.vmem [#allocation3], 49
        %v2969 = vld [vmem:[%s2968] ss:$2 sm:$0xff]
        %s2970 = scalar_lea.vmem [#allocation3], 65
        %v2971 = vld [vmem:[%s2970] ss:$2 sm:$0xff]
        %s2972 = scalar_lea.vmem [#allocation3], 81
        %v2973 = vld [vmem:[%s2972] ss:$2 sm:$0xff]
        %s2974 = scalar_lea.vmem [#allocation3], 97
        %v2975 = vld [vmem:[%s2974] ss:$2 sm:$0x1f]
        %v2976 = vpack.c.bf16 %v2965, %v2963
        %v2977 = vpack.c.bf16 %v2969, %v2967
        %v2978 = vpack.c.bf16 %v2973, %v2971
        %v2979 = vpack.c.bf16 %v2975, %v2975
        %v2980 = vld [vmem:[#allocation16] sm:$0xf]
        %v2981 = vld [vmem:[#allocation16 + $0x4] sm:$0xf]
        %v2982 = vld [vmem:[#allocation16 + $0x8] sm:$0xf]
        %v2983 = vld [vmem:[#allocation16 + $0xc] sm:$0xf]
        %v2984 = vld [vmem:[#allocation16 + $0x10] sm:$0xf]
        %v2985 = vld [vmem:[#allocation16 + $0x14] sm:$0xf]
        %v2986 = vld [vmem:[#allocation16 + $0x18] sm:$0xf]
        %v2987 = vld [vmem:[#allocation16 + $0x1c] sm:$0xf]
        %v2988 = vld [vmem:[#allocation16 + $0x20] sm:$0xf]
        %v2989 = vld [vmem:[#allocation16 + $0x24] sm:$0xf]
        %v2990 = vld [vmem:[#allocation16 + $0x28] sm:$0xf]
        %v2991 = vld [vmem:[#allocation16 + $0x2c] sm:$0xf]
        %v2992 = vld [vmem:[#allocation16 + $0x30] sm:$0xf]
        %v2993 = vld [vmem:[#allocation16 + $0x34] sm:$0xf]
        %v2994 = vld [vmem:[#allocation16 + $0x38] sm:$0xf]
        %v2995 = vld [vmem:[#allocation16 + $0x3c] sm:$0xf]
        %v3012 = vunpack.c.l.b16 %v2980
        %v3013 = vunpack.c.l.b16 %v2981
        %v3014 = vunpack.c.l.b16 %v2982
        %v3015 = vunpack.c.l.b16 %v2983
        %v3016 = vunpack.c.l.b16 %v2984
        %v3017 = vunpack.c.l.b16 %v2985
        %v3018 = vunpack.c.l.b16 %v2986
        %v3019 = vunpack.c.l.b16 %v2987
        %v3020 = vunpack.c.l.b16 %v2988
        %v3021 = vunpack.c.l.b16 %v2989
        %v3022 = vunpack.c.l.b16 %v2990
        %v3023 = vunpack.c.l.b16 %v2991
        %v3024 = vunpack.c.l.b16 %v2992
        %v3025 = vunpack.c.l.b16 %v2993
        %v3026 = vunpack.c.l.b16 %v2994
        %v3027 = vunpack.c.l.b16 %v2995
        %v3028 = vpack.c.b16 %v3013, %v3012
        %v3029 = vpack.c.b16 %v3015, %v3014
        %v3030 = vpack.c.b16 %v3017, %v3016
        %v3031 = vpack.c.b16 %v3019, %v3018
        %v3032 = vpack.c.b16 %v3021, %v3020
        %v3033 = vpack.c.b16 %v3023, %v3022
        %v3034 = vpack.c.b16 %v3025, %v3024
        %v3035 = vpack.c.b16 %v3027, %v3026
        %3044 = vmatprep.subr.bf16.mxu0 0
        %3045 = vmatpush1.bf16.msra.mxu0 %v3028
        %3046 = vmatprep.subr.bf16.mxu0 0
        %3047 = vmatpush1.bf16.msra.mxu0 %v3029
        %3048 = vmatprep.subr.bf16.mxu0 0
        %3049 = vmatpush1.bf16.msra.mxu0 %v3030
        %3050 = vmatprep.subr.bf16.mxu0 0
        %3051 = vmatpush1.bf16.msra.mxu0 %v3031
        %3052 = vmatprep.subr.bf16.mxu0 0
        %3053 = vmatpush1.bf16.msra.mxu0 %v3032
        %3054 = vmatprep.subr.bf16.mxu0 0
        %3055 = vmatpush1.bf16.msra.mxu0 %v3033
        %3056 = vmatprep.subr.bf16.mxu0 0
        %3057 = vmatpush1.bf16.msra.mxu0 %v3034
        %3058 = vmatprep.subr.bf16.mxu0 0
        %3059 = vmatpush1.bf16.msra.mxu0 %v3035
        %3060 = vmatprep.subr.bf16.mxu0 0
        %3061 = vmatpush1.bf16.msra.mxu0 0
        %3062 = vmatprep.subr.bf16.mxu0 0
        %3063 = vmatpush1.bf16.msra.mxu0 0
        %3064 = vmatprep.subr.bf16.mxu0 0
        %3065 = vmatpush1.bf16.msra.mxu0 0
        %3066 = vmatprep.subr.bf16.mxu0 0
        %3067 = vmatpush1.bf16.msra.mxu0 0
        %3068 = vmatprep.subr.bf16.mxu0 0
        %3069 = vmatpush1.bf16.msra.mxu0 0
        %3070 = vmatprep.subr.bf16.mxu0 0
        %3071 = vmatpush1.bf16.msra.mxu0 0
        %3072 = vmatprep.subr.bf16.mxu0 0
        %3073 = vmatpush1.bf16.msra.mxu0 0
        %3074 = vmatprep.subr.bf16.mxu0 0
        %3075 = vmatpush1.bf16.msra.mxu0 0
        %3076 = vmatprep.mubr.bf16.mxu0 0
        %3077 = vmatmul.mubr.bf16.gmra.mrb[0].mxu0 %v2976
        %v3078 = vpop.f32.mrb[0].mxu0
        %v3079 = vadd.f32 0.0, %v3078
        %v3080 = vpop.f32.mrb[0].mxu0
        %v3081 = vpop.f32.mrb[0].mxu0
        %v3082 = vadd.f32 0.0, %v3081
        %v3083 = vpop.f32.mrb[0].mxu0
        %3084 = vmatprep.mubr.bf16.mxu0 0
        %3085 = vmatmul.mubr.bf16.gmra.mrb[0].mxu0 %v2977
        %v3086 = vpop.f32.mrb[0].mxu0
        %v3087 = vadd.f32 0.0, %v3086
        %v3088 = vpop.f32.mrb[0].mxu0
        %v3089 = vpop.f32.mrb[0].mxu0
        %v3090 = vadd.f32 0.0, %v3089
        %v3091 = vpop.f32.mrb[0].mxu0
        %3092 = vmatprep.mubr.bf16.mxu0 0
        %3093 = vmatmul.mubr.bf16.gmra.mrb[0].mxu0 %v2978
        %v3094 = vpop.f32.mrb[0].mxu0
        %v3095 = vadd.f32 0.0, %v3094
        %v3096 = vpop.f32.mrb[0].mxu0
        %v3097 = vpop.f32.mrb[0].mxu0
        %v3098 = vadd.f32 0.0, %v3097
        %v3099 = vpop.f32.mrb[0].mxu0
        %3100 = vmatprep.mubr.bf16.mxu0 0
        %3101 = vmatmul.mubr.bf16.gmra.mrb[0].mxu0 %v2979
        %v3102 = vpop.f32.mrb[0].mxu0
        %v3103 = vadd.f32 0.0, %v3102
        %v3104 = vpop.f32.mrb[0].mxu0
        %v3105 = vpop.f32.mrb[0].mxu0
        %v3106 = vpop.f32.mrb[0].mxu0
        %3107 = vdwg.mxu0
        %v3108 = vadd.f32 %v2960, %v3079
        %v3109 = vadd.f32 %v2960, %v3082
        %v3110 = vadd.f32 %v2960, %v3087
        %v3111 = vadd.f32 %v2960, %v3090
        %v3112 = vadd.f32 %v2960, %v3095
        %v3113 = vadd.f32 %v2960, %v3098
        %v3114 = vadd.f32 %v2960, %v3103
        %s3115 = scalar_lea.vmem [#allocation3], 2
        %v3116 = vld [vmem:[%s3115] ss:$2 sm:$0xff]
        %s3117 = scalar_lea.vmem [#allocation3], 18
        %v3118 = vld [vmem:[%s3117] ss:$2 sm:$0xff]
        %s3119 = scalar_lea.vmem [#allocation3], 34
        %v3120 = vld [vmem:[%s3119] ss:$2 sm:$0xff]
        %s3121 = scalar_lea.vmem [#allocation3], 50
        %v3122 = vld [vmem:[%s3121] ss:$2 sm:$0xff]
        %s3123 = scalar_lea.vmem [#allocation3], 66
        %v3124 = vld [vmem:[%s3123] ss:$2 sm:$0xff]
        %s3125 = scalar_lea.vmem [#allocation3], 82
        %v3126 = vld [vmem:[%s3125] ss:$2 sm:$0xff]
        %s3127 = scalar_lea.vmem [#allocation3], 98
        %v3128 = vld [vmem:[%s3127] ss:$2 sm:$0x1f]
        %v3129 = vpack.c.bf16 %v3118, %v3116
        %v3130 = vpack.c.bf16 %v3122, %v3120
        %v3131 = vpack.c.bf16 %v3126, %v3124
        %v3132 = vpack.c.bf16 %v3128, %v3128
        %s3133 = scalar_lea.vmem [#allocation16], 64
        %v3134 = vld [vmem:[%s3133] sm:$0xf]
        %v3135 = vld [vmem:[%s3133 + $0x4] sm:$0xf]
        %v3136 = vld [vmem:[%s3133 + $0x8] sm:$0xf]
        %v3137 = vld [vmem:[%s3133 + $0xc] sm:$0xf]
        %v3138 = vld [vmem:[%s3133 + $0x10] sm:$0xf]
        %v3139 = vld [vmem:[%s3133 + $0x14] sm:$0xf]
        %v3140 = vld [vmem:[%s3133 + $0x18] sm:$0xf]
        %v3141 = vld [vmem:[%s3133 + $0x1c] sm:$0xf]
        %v3142 = vld [vmem:[%s3133 + $0x20] sm:$0xf]
        %v3143 = vld [vmem:[%s3133 + $0x24] sm:$0xf]
        %v3144 = vld [vmem:[%s3133 + $0x28] sm:$0xf]
        %v3145 = vld [vmem:[%s3133 + $0x2c] sm:$0xf]
        %v3146 = vld [vmem:[%s3133 + $0x30] sm:$0xf]
        %v3147 = vld [vmem:[%s3133 + $0x34] sm:$0xf]
        %v3148 = vld [vmem:[%s3133 + $0x38] sm:$0xf]
        %v3149 = vld [vmem:[%s3133 + $0x3c] sm:$0xf]
        %v3166 = vunpack.c.l.b16 %v3134
        %v3167 = vunpack.c.l.b16 %v3135
        %v3168 = vunpack.c.l.b16 %v3136
        %v3169 = vunpack.c.l.b16 %v3137
        %v3170 = vunpack.c.l.b16 %v3138
        %v3171 = vunpack.c.l.b16 %v3139
        %v3172 = vunpack.c.l.b16 %v3140
        %v3173 = vunpack.c.l.b16 %v3141
        %v3174 = vunpack.c.l.b16 %v3142
        %v3175 = vunpack.c.l.b16 %v3143
        %v3176 = vunpack.c.l.b16 %v3144
        %v3177 = vunpack.c.l.b16 %v3145
        %v3178 = vunpack.c.l.b16 %v3146
        %v3179 = vunpack.c.l.b16 %v3147
        %v3180 = vunpack.c.l.b16 %v3148
        %v3181 = vunpack.c.l.b16 %v3149
        %v3182 = vpack.c.b16 %v3167, %v3166
        %v3183 = vpack.c.b16 %v3169, %v3168
        %v3184 = vpack.c.b16 %v3171, %v3170
        %v3185 = vpack.c.b16 %v3173, %v3172
        %v3186 = vpack.c.b16 %v3175, %v3174
        %v3187 = vpack.c.b16 %v3177, %v3176
        %v3188 = vpack.c.b16 %v3179, %v3178
        %v3189 = vpack.c.b16 %v3181, %v3180
        %3198 = vmatprep.subr.bf16.mxu0 0
        %3199 = vmatpush1.bf16.msra.mxu0 %v3182
        %3200 = vmatprep.subr.bf16.mxu0 0
        %3201 = vmatpush1.bf16.msra.mxu0 %v3183
        %3202 = vmatprep.subr.bf16.mxu0 0
        %3203 = vmatpush1.bf16.msra.mxu0 %v3184
        %3204 = vmatprep.subr.bf16.mxu0 0
        %3205 = vmatpush1.bf16.msra.mxu0 %v3185
        %3206 = vmatprep.subr.bf16.mxu0 0
        %3207 = vmatpush1.bf16.msra.mxu0 %v3186
        %3208 = vmatprep.subr.bf16.mxu0 0
        %3209 = vmatpush1.bf16.msra.mxu0 %v3187
        %3210 = vmatprep.subr.bf16.mxu0 0
        %3211 = vmatpush1.bf16.msra.mxu0 %v3188
        %3212 = vmatprep.subr.bf16.mxu0 0
        %3213 = vmatpush1.bf16.msra.mxu0 %v3189
        %3214 = vmatprep.subr.bf16.mxu0 0
        %3215 = vmatpush1.bf16.msra.mxu0 0
        %3216 = vmatprep.subr.bf16.mxu0 0
        %3217 = vmatpush1.bf16.msra.mxu0 0
        %3218 = vmatprep.subr.bf16.mxu0 0
        %3219 = vmatpush1.bf16.msra.mxu0 0
        %3220 = vmatprep.subr.bf16.mxu0 0
        %3221 = vmatpush1.bf16.msra.mxu0 0
        %3222 = vmatprep.subr.bf16.mxu0 0
        %3223 = vmatpush1.bf16.msra.mxu0 0
        %3224 = vmatprep.subr.bf16.mxu0 0
        %3225 = vmatpush1.bf16.msra.mxu0 0
        %3226 = vmatprep.subr.bf16.mxu0 0
        %3227 = vmatpush1.bf16.msra.mxu0 0
        %3228 = vmatprep.subr.bf16.mxu0 0
        %3229 = vmatpush1.bf16.msra.mxu0 0
        %3230 = vmatprep.mubr.bf16.mxu0 0
        %3231 = vmatmul.mubr.bf16.gmra.mrb[0].mxu0 %v3129
        %v3232 = vpop.f32.mrb[0].mxu0
        %v3233 = vadd.f32 0.0, %v3232
        %v3234 = vpop.f32.mrb[0].mxu0
        %v3235 = vpop.f32.mrb[0].mxu0
        %v3236 = vadd.f32 0.0, %v3235
        %v3237 = vpop.f32.mrb[0].mxu0
        %3238 = vmatprep.mubr.bf16.mxu0 0
        %3239 = vmatmul.mubr.bf16.gmra.mrb[0].mxu0 %v3130
        %v3240 = vpop.f32.mrb[0].mxu0
        %v3241 = vadd.f32 0.0, %v3240
        %v3242 = vpop.f32.mrb[0].mxu0
        %v3243 = vpop.f32.mrb[0].mxu0
        %v3244 = vadd.f32 0.0, %v3243
        %v3245 = vpop.f32.mrb[0].mxu0
        %3246 = vmatprep.mubr.bf16.mxu0 0
        %3247 = vmatmul.mubr.bf16.gmra.mrb[0].mxu0 %v3131
        %v3248 = vpop.f32.mrb[0].mxu0
        %v3249 = vadd.f32 0.0, %v3248
        %v3250 = vpop.f32.mrb[0].mxu0
        %v3251 = vpop.f32.mrb[0].mxu0
        %v3252 = vadd.f32 0.0, %v3251
        %v3253 = vpop.f32.mrb[0].mxu0
        %3254 = vmatprep.mubr.bf16.mxu0 0
        %3255 = vmatmul.mubr.bf16.gmra.mrb[0].mxu0 %v3132
        %v3256 = vpop.f32.mrb[0].mxu0
        %v3257 = vadd.f32 0.0, %v3256
        %v3258 = vpop.f32.mrb[0].mxu0
        %v3259 = vpop.f32.mrb[0].mxu0
        %v3260 = vpop.f32.mrb[0].mxu0
        %3261 = vdwg.mxu0
        %v3262 = vadd.f32 %v3108, %v3233
        %v3263 = vadd.f32 %v3109, %v3236
        %v3264 = vadd.f32 %v3110, %v3241
        %v3265 = vadd.f32 %v3111, %v3244
        %v3266 = vadd.f32 %v3112, %v3249
        %v3267 = vadd.f32 %v3113, %v3252
        %v3268 = vadd.f32 %v3114, %v3257
        %v3269 = vmax.f32 %v3262, 0.0
        %v3270 = vmax.f32 %v3263, 0.0
        %v3271 = vmax.f32 %v3264, 0.0
        %v3272 = vmax.f32 %v3265, 0.0
        %v3273 = vmax.f32 %v3266, 0.0
        %v3274 = vmax.f32 %v3267, 0.0
        %v3275 = vmax.f32 %v3268, 0.0
        %3276 = vst [vmem:[#allocation5 + $0x1] sm:$0xff] %v3269
        %3277 = vst [vmem:[#allocation5 + $0xa] sm:$0xfe] %v3270
        %3278 = vst [vmem:[#allocation5 + $0x12] sm:$0x1] %v3271
        %3279 = vst [vmem:[#allocation5 + $0x13] sm:$0xfc] %v3271
        %3280 = vst [vmem:[#allocation5 + $0x1b] sm:$0x3] %v3272
        %3281 = vst [vmem:[#allocation5 + $0x1c] sm:$0xf8] %v3272
        %3282 = vst [vmem:[#allocation5 + $0x24] sm:$0x7] %v3273
        %3283 = vst [vmem:[#allocation5 + $0x25] sm:$0xf0] %v3273
        %3284 = vst [vmem:[#allocation5 + $0x2d] sm:$0xf] %v3274
        %3285 = vst [vmem:[#allocation5 + $0x2e] sm:$0xe0] %v3274
        %3286 = vst [vmem:[#allocation5 + $0x36] sm:$0x1f] %v3275
        %v3287 = vld [vmem:[#allocation5] sm:$0xff]
        %v3288 = vld [vmem:[#allocation5 + $0x8] sm:$0xff]
        %v3289 = vld [vmem:[#allocation5 + $0x10] sm:$0xff]
        %v3290 = vld [vmem:[#allocation5 + $0x18] sm:$0xff]
        %v3291 = vld [vmem:[#allocation5 + $0x20] sm:$0xff]
        %v3292 = vld [vmem:[#allocation5 + $0x28] sm:$0xff]
        %v3293 = vld [vmem:[#allocation5 + $0x30] sm:$0xff]
        %v3294 = vld [vmem:[#allocation5 + $0x38] sm:$0x3]
        %v3295 = vpack.c.bf16 %v3288, %v3287
        %v3296 = vpack.c.bf16 %v3290, %v3289
        %v3297 = vpack.c.bf16 %v3292, %v3291
        %v3298 = vpack.c.bf16 %v3294, %v3293
        %v3303 = vunpack.c.l.b16 %v3295
        %v3304 = vunpack.c.h.b16 %v3295
        %v3305 = vunpack.c.l.b16 %v3296
        %v3306 = vunpack.c.h.b16 %v3296
        %v3307 = vunpack.c.l.b16 %v3297
        %v3308 = vunpack.c.h.b16 %v3297
        %v3309 = vunpack.c.l.b16 %v3298
        %v3310 = vunpack.c.h.b16 %v3298
        %v3311 = vpack.c.b16 %v3303, %v3303
        %v3312 = vpack.c.b16 %v3304, %v3304
        %v3313 = vpack.c.b16 %v3305, %v3305
        %v3314 = vpack.c.b16 %v3306, %v3306
        %v3315 = vpack.c.b16 %v3307, %v3307
        %v3316 = vpack.c.b16 %v3308, %v3308
        %v3317 = vpack.c.b16 %v3309, %v3309
        %v3318 = vpack.c.b16 %v3310, %v3310
        %3327 = vst [vmem:[#allocation9] sm:$0xf] %v3311
        %3328 = vst [vmem:[#allocation9 + $0xc] sm:$0xf] %v3312
        %3329 = vst [vmem:[#allocation9 + $0x18] sm:$0xf] %v3313
        %3330 = vst [vmem:[#allocation9 + $0x24] sm:$0xf] %v3314
        %3331 = vst [vmem:[#allocation9 + $0x30] sm:$0xf] %v3315
        %3332 = vst [vmem:[#allocation9 + $0x3c] sm:$0xf] %v3316
        %3333 = vst [vmem:[#allocation9 + $0x48] sm:$0xf] %v3317
        %3334 = vst [vmem:[#allocation9 + $0x54] sm:$0x1] %v3318
        %v3335 = vld [vmem:[#allocation5 + $0x1] sm:$0xff]
        %v3336 = vld [vmem:[#allocation5 + $0x9] sm:$0xff]
        %v3337 = vld [vmem:[#allocation5 + $0x11] sm:$0xff]
        %v3338 = vld [vmem:[#allocation5 + $0x19] sm:$0xff]
        %v3339 = vld [vmem:[#allocation5 + $0x21] sm:$0xff]
        %v3340 = vld [vmem:[#allocation5 + $0x29] sm:$0xff]
        %v3341 = vld [vmem:[#allocation5 + $0x31] sm:$0xff]
        %v3342 = vld [vmem:[#allocation5 + $0x39] sm:$0x3]
        %v3343 = vpack.c.bf16 %v3336, %v3335
        %v3344 = vpack.c.bf16 %v3338, %v3337
        %v3345 = vpack.c.bf16 %v3340, %v3339
        %v3346 = vpack.c.bf16 %v3342, %v3341
        %v3351 = vunpack.c.l.b16 %v3343
        %v3352 = vunpack.c.h.b16 %v3343
        %v3353 = vunpack.c.l.b16 %v3344
        %v3354 = vunpack.c.h.b16 %v3344
        %v3355 = vunpack.c.l.b16 %v3345
        %v3356 = vunpack.c.h.b16 %v3345
        %v3357 = vunpack.c.l.b16 %v3346
        %v3358 = vunpack.c.h.b16 %v3346
        %v3359 = vpack.c.b16 %v3351, %v3351
        %v3360 = vpack.c.b16 %v3352, %v3352
        %v3361 = vpack.c.b16 %v3353, %v3353
        %v3362 = vpack.c.b16 %v3354, %v3354
        %v3363 = vpack.c.b16 %v3355, %v3355
        %v3364 = vpack.c.b16 %v3356, %v3356
        %v3365 = vpack.c.b16 %v3357, %v3357
        %v3366 = vpack.c.b16 %v3358, %v3358
        %3375 = vst [vmem:[#allocation9 + $0x4] sm:$0xf] %v3359
        %3376 = vst [vmem:[#allocation9 + $0x10] sm:$0xf] %v3360
        %3377 = vst [vmem:[#allocation9 + $0x1c] sm:$0xf] %v3361
        %3378 = vst [vmem:[#allocation9 + $0x28] sm:$0xf] %v3362
        %3379 = vst [vmem:[#allocation9 + $0x34] sm:$0xf] %v3363
        %3380 = vst [vmem:[#allocation9 + $0x40] sm:$0xf] %v3364
        %3381 = vst [vmem:[#allocation9 + $0x4c] sm:$0xf] %v3365
        %3382 = vst [vmem:[#allocation9 + $0x58] sm:$0x1] %v3366
        %v3383 = vld [vmem:[#allocation5 + $0x2] sm:$0xff]
        %v3384 = vld [vmem:[#allocation5 + $0xa] sm:$0xff]
        %v3385 = vld [vmem:[#allocation5 + $0x12] sm:$0xff]
        %v3386 = vld [vmem:[#allocation5 + $0x1a] sm:$0xff]
        %v3387 = vld [vmem:[#allocation5 + $0x22] sm:$0xff]
        %v3388 = vld [vmem:[#allocation5 + $0x2a] sm:$0xff]
        %v3389 = vld [vmem:[#allocation5 + $0x32] sm:$0xff]
        %v3390 = vld [vmem:[#allocation5 + $0x3a] sm:$0x3]
        %v3391 = vpack.c.bf16 %v3384, %v3383
        %v3392 = vpack.c.bf16 %v3386, %v3385
        %v3393 = vpack.c.bf16 %v3388, %v3387
        %v3394 = vpack.c.bf16 %v3390, %v3389
        %v3399 = vunpack.c.l.b16 %v3391
        %v3400 = vunpack.c.h.b16 %v3391
        %v3401 = vunpack.c.l.b16 %v3392
        %v3402 = vunpack.c.h.b16 %v3392
        %v3403 = vunpack.c.l.b16 %v3393
        %v3404 = vunpack.c.h.b16 %v3393
        %v3405 = vunpack.c.l.b16 %v3394
        %v3406 = vunpack.c.h.b16 %v3394
        %v3407 = vpack.c.b16 %v3399, %v3399
        %v3408 = vpack.c.b16 %v3400, %v3400
        %v3409 = vpack.c.b16 %v3401, %v3401
        %v3410 = vpack.c.b16 %v3402, %v3402
        %v3411 = vpack.c.b16 %v3403, %v3403
        %v3412 = vpack.c.b16 %v3404, %v3404
        %v3413 = vpack.c.b16 %v3405, %v3405
        %v3414 = vpack.c.b16 %v3406, %v3406
        %3423 = vst [vmem:[#allocation9 + $0x8] sm:$0xf] %v3407
        %3424 = vst [vmem:[#allocation9 + $0x14] sm:$0xf] %v3408
        %3425 = vst [vmem:[#allocation9 + $0x20] sm:$0xf] %v3409
        %3426 = vst [vmem:[#allocation9 + $0x2c] sm:$0xf] %v3410
        %3427 = vst [vmem:[#allocation9 + $0x38] sm:$0xf] %v3411
        %3428 = vst [vmem:[#allocation9 + $0x44] sm:$0xf] %v3412
        %3429 = vst [vmem:[#allocation9 + $0x50] sm:$0xf] %v3413
        %3430 = vst [vmem:[#allocation9 + $0x5c] sm:$0x1] %v3414
        %v3431 = vld [vmem:[#allocation9] sm:$0xff]
        %v3432 = vld [vmem:[#allocation9 + $0x8] sm:$0xf]
        %v3433 = vld [vmem:[#allocation9 + $0xc] sm:$0xff]
        %v3434 = vld [vmem:[#allocation9 + $0x14] sm:$0xf]
        %v3435 = vld [vmem:[#allocation9 + $0x18] sm:$0xff]
        %v3436 = vld [vmem:[#allocation9 + $0x20] sm:$0xf]
        %v3437 = vld [vmem:[#allocation9 + $0x24] sm:$0xff]
        %v3438 = vld [vmem:[#allocation9 + $0x2c] sm:$0xf]
        %v3439 = vld [vmem:[#allocation9 + $0x30] sm:$0xff]
        %v3440 = vld [vmem:[#allocation9 + $0x38] sm:$0xf]
        %v3441 = vld [vmem:[#allocation9 + $0x3c] sm:$0xff]
        %v3442 = vld [vmem:[#allocation9 + $0x44] sm:$0xf]
        %v3443 = vld [vmem:[#allocation9 + $0x48] sm:$0xff]
        %v3444 = vld [vmem:[#allocation9 + $0x50] sm:$0xf]
        %v3445 = vld [vmem:[#allocation9 + $0x54] sm:$0x11]
        %v3446 = vld [vmem:[#allocation9 + $0x5c] sm:$0x1]
        %s3447 = scalar_lea.vmem [#allocation15], 384
        %v3448 = vld [vmem:[%s3447] sm:$0xf]
        %v3449 = vld [vmem:[%s3447 + $0x4] sm:$0xf]
        %v3450 = vld [vmem:[%s3447 + $0x8] sm:$0xf]
        %v3451 = vld [vmem:[%s3447 + $0xc] sm:$0xf]
        %v3452 = vld [vmem:[%s3447 + $0x10] sm:$0xf]
        %v3453 = vld [vmem:[%s3447 + $0x14] sm:$0xf]
        %v3454 = vld [vmem:[%s3447 + $0x18] sm:$0xf]
        %v3455 = vld [vmem:[%s3447 + $0x1c] sm:$0xf]
        %v3456 = vld [vmem:[%s3447 + $0x20] sm:$0xf]
        %v3457 = vld [vmem:[%s3447 + $0x24] sm:$0xf]
        %v3458 = vld [vmem:[%s3447 + $0x28] sm:$0xf]
        %v3459 = vld [vmem:[%s3447 + $0x2c] sm:$0xf]
        %v3460 = vld [vmem:[%s3447 + $0x30] sm:$0xf]
        %v3461 = vld [vmem:[%s3447 + $0x34] sm:$0xf]
        %v3462 = vld [vmem:[%s3447 + $0x38] sm:$0xf]
        %v3463 = vld [vmem:[%s3447 + $0x3c] sm:$0xf]
        %v3464 = vld [vmem:[%s3447 + $0x40] sm:$0xf]
        %v3465 = vld [vmem:[%s3447 + $0x44] sm:$0xf]
        %v3466 = vld [vmem:[%s3447 + $0x48] sm:$0xf]
        %v3467 = vld [vmem:[%s3447 + $0x4c] sm:$0xf]
        %v3468 = vld [vmem:[%s3447 + $0x50] sm:$0xf]
        %v3469 = vld [vmem:[%s3447 + $0x54] sm:$0xf]
        %v3470 = vld [vmem:[%s3447 + $0x58] sm:$0xf]
        %v3471 = vld [vmem:[%s3447 + $0x5c] sm:$0xf]
        %v3472 = vld [vmem:[%s3447 + $0x60] sm:$0xf]
        %v3473 = vld [vmem:[%s3447 + $0x64] sm:$0xf]
        %v3474 = vld [vmem:[%s3447 + $0x68] sm:$0xf]
        %v3475 = vld [vmem:[%s3447 + $0x6c] sm:$0xf]
        %v3476 = vld [vmem:[%s3447 + $0x70] sm:$0xf]
        %v3477 = vld [vmem:[%s3447 + $0x74] sm:$0xf]
        %v3478 = vld [vmem:[%s3447 + $0x78] sm:$0xf]
        %v3479 = vld [vmem:[%s3447 + $0x7c] sm:$0xf]
        %v3480 = vld [vmem:[%s3447 + $0x80] sm:$0xf]
        %v3481 = vld [vmem:[%s3447 + $0x84] sm:$0xf]
        %v3482 = vld [vmem:[%s3447 + $0x88] sm:$0xf]
        %v3483 = vld [vmem:[%s3447 + $0x8c] sm:$0xf]
        %v3484 = vld [vmem:[%s3447 + $0x90] sm:$0xf]
        %v3485 = vld [vmem:[%s3447 + $0x94] sm:$0xf]
        %v3486 = vld [vmem:[%s3447 + $0x98] sm:$0xf]
        %v3487 = vld [vmem:[%s3447 + $0x9c] sm:$0xf]
        %v3488 = vld [vmem:[%s3447 + $0xa0] sm:$0xf]
        %v3489 = vld [vmem:[%s3447 + $0xa4] sm:$0xf]
        %v3490 = vld [vmem:[%s3447 + $0xa8] sm:$0xf]
        %v3491 = vld [vmem:[%s3447 + $0xac] sm:$0xf]
        %v3492 = vld [vmem:[%s3447 + $0xb0] sm:$0xf]
        %v3493 = vld [vmem:[%s3447 + $0xb4] sm:$0xf]
        %v3494 = vld [vmem:[%s3447 + $0xb8] sm:$0xf]
        %v3495 = vld [vmem:[%s3447 + $0xbc] sm:$0xf]
        %s3496 = scalar_lea.vmem %s4, 2
        %v3497 = vld [vmem:[%s3496] sm:$0x1]
        %v3499 = vlaneseq
        %v3500 = vshrl.u32 %v3499, 7
        %v3501 = vsub.s32 0, %v3500
        %v3502 = vrot.slane %v3497, %v3501
        %v3520 = vunpack.c.l.b16 %v3431
        %v3521 = vunpack.c.h.b16 %v3431
        %v3522 = vunpack.c.l.b16 %v3432
        %v3523 = vunpack.c.l.b16 %v3433
        %v3524 = vunpack.c.h.b16 %v3433
        %v3525 = vunpack.c.l.b16 %v3434
        %v3526 = vunpack.c.l.b16 %v3435
        %v3527 = vunpack.c.h.b16 %v3435
        %v3528 = vunpack.c.l.b16 %v3436
        %v3529 = vunpack.c.l.b16 %v3437
        %v3530 = vunpack.c.h.b16 %v3437
        %v3531 = vunpack.c.l.b16 %v3438
        %v3532 = vunpack.c.l.b16 %v3439
        %v3533 = vunpack.c.h.b16 %v3439
        %v3534 = vunpack.c.l.b16 %v3440
        %v3535 = vunpack.c.l.b16 %v3441
        %v3536 = vunpack.c.h.b16 %v3441
        %v3537 = vunpack.c.l.b16 %v3442
        %v3538 = vunpack.c.l.b16 %v3443
        %v3539 = vunpack.c.h.b16 %v3443
        %v3540 = vunpack.c.l.b16 %v3444
        %v3541 = vunpack.c.l.b16 %v3445
        %v3542 = vunpack.c.h.b16 %v3445
        %v3543 = vunpack.c.l.b16 %v3446
        %v3544 = vpack.c.b16 %v3523, %v3520
        %v3545 = vpack.c.b16 %v3524, %v3521
        %v3546 = vpack.c.b16 %v3525, %v3522
        %v3547 = vpack.c.b16 %v3529, %v3526
        %v3548 = vpack.c.b16 %v3530, %v3527
        %v3549 = vpack.c.b16 %v3531, %v3528
        %v3550 = vpack.c.b16 %v3535, %v3532
        %v3551 = vpack.c.b16 %v3536, %v3533
        %v3552 = vpack.c.b16 %v3537, %v3534
        %v3553 = vpack.c.b16 %v3541, %v3538
        %v3554 = vpack.c.b16 %v3542, %v3539
        %v3555 = vpack.c.b16 %v3543, %v3540
        %v3616 = vunpack.c.l.b16 %v3448
        %v3617 = vunpack.c.l.b16 %v3449
        %v3618 = vunpack.c.l.b16 %v3450
        %v3619 = vunpack.c.l.b16 %v3451
        %v3620 = vunpack.c.l.b16 %v3452
        %v3621 = vunpack.c.l.b16 %v3453
        %v3622 = vunpack.c.l.b16 %v3454
        %v3623 = vunpack.c.l.b16 %v3455
        %v3624 = vunpack.c.l.b16 %v3456
        %v3625 = vunpack.c.l.b16 %v3457
        %v3626 = vunpack.c.l.b16 %v3458
        %v3627 = vunpack.c.l.b16 %v3459
        %v3628 = vunpack.c.l.b16 %v3460
        %v3629 = vunpack.c.l.b16 %v3461
        %v3630 = vunpack.c.l.b16 %v3462
        %v3631 = vunpack.c.l.b16 %v3463
        %v3632 = vunpack.c.l.b16 %v3464
        %v3633 = vunpack.c.l.b16 %v3465
        %v3634 = vunpack.c.l.b16 %v3466
        %v3635 = vunpack.c.l.b16 %v3467
        %v3636 = vunpack.c.l.b16 %v3468
        %v3637 = vunpack.c.l.b16 %v3469
        %v3638 = vunpack.c.l.b16 %v3470
        %v3639 = vunpack.c.l.b16 %v3471
        %v3640 = vunpack.c.l.b16 %v3472
        %v3641 = vunpack.c.l.b16 %v3473
        %v3642 = vunpack.c.l.b16 %v3474
        %v3643 = vunpack.c.l.b16 %v3475
        %v3644 = vunpack.c.l.b16 %v3476
        %v3645 = vunpack.c.l.b16 %v3477
        %v3646 = vunpack.c.l.b16 %v3478
        %v3647 = vunpack.c.l.b16 %v3479
        %v3648 = vunpack.c.l.b16 %v3480
        %v3649 = vunpack.c.l.b16 %v3481
        %v3650 = vunpack.c.l.b16 %v3482
        %v3651 = vunpack.c.l.b16 %v3483
        %v3652 = vunpack.c.l.b16 %v3484
        %v3653 = vunpack.c.l.b16 %v3485
        %v3654 = vunpack.c.l.b16 %v3486
        %v3655 = vunpack.c.l.b16 %v3487
        %v3656 = vunpack.c.l.b16 %v3488
        %v3657 = vunpack.c.l.b16 %v3489
        %v3658 = vunpack.c.l.b16 %v3490
        %v3659 = vunpack.c.l.b16 %v3491
        %v3660 = vunpack.c.l.b16 %v3492
        %v3661 = vunpack.c.l.b16 %v3493
        %v3662 = vunpack.c.l.b16 %v3494
        %v3663 = vunpack.c.l.b16 %v3495
        %v3664 = vpack.c.b16 %v3617, %v3616
        %v3665 = vpack.c.b16 %v3619, %v3618
        %v3666 = vpack.c.b16 %v3621, %v3620
        %v3667 = vpack.c.b16 %v3623, %v3622
        %v3668 = vpack.c.b16 %v3625, %v3624
        %v3669 = vpack.c.b16 %v3627, %v3626
        %v3670 = vpack.c.b16 %v3629, %v3628
        %v3671 = vpack.c.b16 %v3631, %v3630
        %v3672 = vpack.c.b16 %v3633, %v3632
        %v3673 = vpack.c.b16 %v3635, %v3634
        %v3674 = vpack.c.b16 %v3637, %v3636
        %v3675 = vpack.c.b16 %v3639, %v3638
        %v3676 = vpack.c.b16 %v3641, %v3640
        %v3677 = vpack.c.b16 %v3643, %v3642
        %v3678 = vpack.c.b16 %v3645, %v3644
        %v3679 = vpack.c.b16 %v3647, %v3646
        %v3680 = vpack.c.b16 %v3649, %v3648
        %v3681 = vpack.c.b16 %v3651, %v3650
        %v3682 = vpack.c.b16 %v3653, %v3652
        %v3683 = vpack.c.b16 %v3655, %v3654
        %v3684 = vpack.c.b16 %v3657, %v3656
        %v3685 = vpack.c.b16 %v3659, %v3658
        %v3686 = vpack.c.b16 %v3661, %v3660
        %v3687 = vpack.c.b16 %v3663, %v3662
        %3712 = vmatprep.subr.bf16.mxu0 0
        %3713 = vmatpush1.bf16.msra.mxu0 %v3664
        %3714 = vmatprep.subr.bf16.mxu0 0
        %3715 = vmatpush1.bf16.msra.mxu0 %v3665
        %3716 = vmatprep.subr.bf16.mxu0 0
        %3717 = vmatpush1.bf16.msra.mxu0 %v3666
        %3718 = vmatprep.subr.bf16.mxu0 0
        %3719 = vmatpush1.bf16.msra.mxu0 %v3667
        %3720 = vmatprep.subr.bf16.mxu0 0
        %3721 = vmatpush1.bf16.msra.mxu0 %v3668
        %3722 = vmatprep.subr.bf16.mxu0 0
        %3723 = vmatpush1.bf16.msra.mxu0 %v3669
        %3724 = vmatprep.subr.bf16.mxu0 0
        %3725 = vmatpush1.bf16.msra.mxu0 %v3670
        %3726 = vmatprep.subr.bf16.mxu0 0
        %3727 = vmatpush1.bf16.msra.mxu0 %v3671
        %3728 = vmatprep.subr.bf16.mxu0 0
        %3729 = vmatpush1.bf16.msra.mxu0 %v3672
        %3730 = vmatprep.subr.bf16.mxu0 0
        %3731 = vmatpush1.bf16.msra.mxu0 %v3673
        %3732 = vmatprep.subr.bf16.mxu0 0
        %3733 = vmatpush1.bf16.msra.mxu0 %v3674
        %3734 = vmatprep.subr.bf16.mxu0 0
        %3735 = vmatpush1.bf16.msra.mxu0 %v3675
        %3736 = vmatprep.subr.bf16.mxu0 0
        %3737 = vmatpush1.bf16.msra.mxu0 %v3676
        %3738 = vmatprep.subr.bf16.mxu0 0
        %3739 = vmatpush1.bf16.msra.mxu0 %v3677
        %3740 = vmatprep.subr.bf16.mxu0 0
        %3741 = vmatpush1.bf16.msra.mxu0 %v3678
        %3742 = vmatprep.subr.bf16.mxu0 0
        %3743 = vmatpush1.bf16.msra.mxu0 %v3679
        %3744 = vmatprep.mubr.bf16.mxu0 %v3545
        %3745 = vmatmul.mubr.bf16.gmra.mrb[0].mxu0 %v3544
        %v3746 = vpop.f32.mrb[0].mxu0
        %v3747 = vadd.f32 %v3502, %v3746
        %v3748 = vpop.f32.mrb[0].mxu0
        %v3749 = vpop.f32.mrb[0].mxu0
        %v3750 = vadd.f32 %v3502, %v3749
        %v3751 = vpop.f32.mrb[0].mxu0
        %3752 = vmatprep.mubr.bf16.mxu0 %v3548
        %3753 = vmatmul.mubr.bf16.gmra.mrb[0].mxu0 %v3547
        %v3754 = vpop.f32.mrb[0].mxu0
        %v3755 = vadd.f32 %v3502, %v3754
        %v3756 = vpop.f32.mrb[0].mxu0
        %v3757 = vpop.f32.mrb[0].mxu0
        %v3758 = vadd.f32 %v3502, %v3757
        %v3759 = vpop.f32.mrb[0].mxu0
        %3760 = vmatprep.mubr.bf16.mxu0 %v3551
        %3761 = vmatmul.mubr.bf16.gmra.mrb[0].mxu0 %v3550
        %v3762 = vpop.f32.mrb[0].mxu0
        %v3763 = vadd.f32 %v3502, %v3762
        %v3764 = vpop.f32.mrb[0].mxu0
        %v3765 = vpop.f32.mrb[0].mxu0
        %v3766 = vadd.f32 %v3502, %v3765
        %v3767 = vpop.f32.mrb[0].mxu0
        %3768 = vmatprep.mubr.bf16.mxu0 %v3554
        %3769 = vmatmul.mubr.bf16.gmra.mrb[0].mxu0 %v3553
        %v3770 = vpop.f32.mrb[0].mxu0
        %v3771 = vadd.f32 %v3502, %v3770
        %v3772 = vpop.f32.mrb[0].mxu0
        %v3773 = vpop.f32.mrb[0].mxu0
        %v3774 = vadd.f32 %v3502, %v3773
        %v3775 = vpop.f32.mrb[0].mxu0
        %3776 = vdwg.mxu0
        %3777 = vmatprep.subr.bf16.mxu0 0
        %3778 = vmatpush1.bf16.msra.mxu0 %v3680
        %3779 = vmatprep.subr.bf16.mxu0 0
        %3780 = vmatpush1.bf16.msra.mxu0 %v3681
        %3781 = vmatprep.subr.bf16.mxu0 0
        %3782 = vmatpush1.bf16.msra.mxu0 %v3682
        %3783 = vmatprep.subr.bf16.mxu0 0
        %3784 = vmatpush1.bf16.msra.mxu0 %v3683
        %3785 = vmatprep.subr.bf16.mxu0 0
        %3786 = vmatpush1.bf16.msra.mxu0 %v3684
        %3787 = vmatprep.subr.bf16.mxu0 0
        %3788 = vmatpush1.bf16.msra.mxu0 %v3685
        %3789 = vmatprep.subr.bf16.mxu0 0
        %3790 = vmatpush1.bf16.msra.mxu0 %v3686
        %3791 = vmatprep.subr.bf16.mxu0 0
        %3792 = vmatpush1.bf16.msra.mxu0 %v3687
        %3793 = vmatprep.subr.bf16.mxu0 0
        %3794 = vmatpush1.bf16.msra.mxu0 0
        %3795 = vmatprep.subr.bf16.mxu0 0
        %3796 = vmatpush1.bf16.msra.mxu0 0
        %3797 = vmatprep.subr.bf16.mxu0 0
        %3798 = vmatpush1.bf16.msra.mxu0 0
        %3799 = vmatprep.subr.bf16.mxu0 0
        %3800 = vmatpush1.bf16.msra.mxu0 0
        %3801 = vmatprep.subr.bf16.mxu0 0
        %3802 = vmatpush1.bf16.msra.mxu0 0
        %3803 = vmatprep.subr.bf16.mxu0 0
        %3804 = vmatpush1.bf16.msra.mxu0 0
        %3805 = vmatprep.subr.bf16.mxu0 0
        %3806 = vmatpush1.bf16.msra.mxu0 0
        %3807 = vmatprep.subr.bf16.mxu0 0
        %3808 = vmatpush1.bf16.msra.mxu0 0
        %3809 = vmatprep.mubr.bf16.mxu0 0
        %3810 = vmatmul.mubr.bf16.gmra.mrb[0].mxu0 %v3546
        %v3811 = vpop.f32.mrb[0].mxu0
        %v3812 = vadd.f32 %v3747, %v3811
        %v3813 = vpop.f32.mrb[0].mxu0
        %v3814 = vpop.f32.mrb[0].mxu0
        %v3815 = vadd.f32 %v3750, %v3814
        %v3816 = vpop.f32.mrb[0].mxu0
        %3817 = vmatprep.mubr.bf16.mxu0 0
        %3818 = vmatmul.mubr.bf16.gmra.mrb[0].mxu0 %v3549
        %v3819 = vpop.f32.mrb[0].mxu0
        %v3820 = vadd.f32 %v3755, %v3819
        %v3821 = vpop.f32.mrb[0].mxu0
        %v3822 = vpop.f32.mrb[0].mxu0
        %v3823 = vadd.f32 %v3758, %v3822
        %v3824 = vpop.f32.mrb[0].mxu0
        %3825 = vmatprep.mubr.bf16.mxu0 0
        %3826 = vmatmul.mubr.bf16.gmra.mrb[0].mxu0 %v3552
        %v3827 = vpop.f32.mrb[0].mxu0
        %v3828 = vadd.f32 %v3763, %v3827
        %v3829 = vpop.f32.mrb[0].mxu0
        %v3830 = vpop.f32.mrb[0].mxu0
        %v3831 = vadd.f32 %v3766, %v3830
        %v3832 = vpop.f32.mrb[0].mxu0
        %3833 = vmatprep.mubr.bf16.mxu0 0
        %3834 = vmatmul.mubr.bf16.gmra.mrb[0].mxu0 %v3555
        %v3835 = vpop.f32.mrb[0].mxu0
        %v3836 = vadd.f32 %v3771, %v3835
        %v3837 = vpop.f32.mrb[0].mxu0
        %v3838 = vpop.f32.mrb[0].mxu0
        %v3839 = vadd.f32 %v3774, %v3838
        %v3840 = vpop.f32.mrb[0].mxu0
        %3841 = vdwg.mxu0
        %v3842 = vmax.f32 %v3812, 0.0
        %v3843 = vmax.f32 %v3815, 0.0
        %v3844 = vmax.f32 %v3820, 0.0
        %v3845 = vmax.f32 %v3823, 0.0
        %v3846 = vmax.f32 %v3828, 0.0
        %v3847 = vmax.f32 %v3831, 0.0
        %v3848 = vmax.f32 %v3836, 0.0
        %v3849 = vmax.f32 %v3839, 0.0
        %3850 = vst [vmem:[#allocation6 + $0x1] sm:$0xff] %v3842
        %3851 = vst [vmem:[#allocation6 + $0x9] sm:$0xff] %v3843
        %3852 = vst [vmem:[#allocation6 + $0x11] sm:$0xff] %v3844
        %3853 = vst [vmem:[#allocation6 + $0x19] sm:$0xff] %v3845
        %3854 = vst [vmem:[#allocation6 + $0x21] sm:$0xff] %v3846
        %3855 = vst [vmem:[#allocation6 + $0x29] sm:$0xff] %v3847
        %3856 = vst [vmem:[#allocation6 + $0x31] sm:$0xff] %v3848
        %3857 = vst [vmem:[#allocation6 + $0x39] sm:$0x3] %v3849
        %3858 = vst [vmem:[#allocation6 + $0x9] sm:$0x3] 0.0
        %3859 = vst [vmem:[#allocation6 + $0x13] sm:$0x3] 0.0
        %3860 = vst [vmem:[#allocation6 + $0x1d] sm:$0x3] 0.0
        %3861 = vst [vmem:[#allocation6 + $0x27] sm:$0x3] 0.0
        %3862 = vst [vmem:[#allocation6 + $0x31] sm:$0x3] 0.0
        %v3863 = vld [vmem:[#allocation6] sm:$0xff]
        %v3864 = vld [vmem:[#allocation6 + $0x8] sm:$0xff]
        %v3865 = vld [vmem:[#allocation6 + $0x10] sm:$0xff]
        %v3866 = vld [vmem:[#allocation6 + $0x18] sm:$0xff]
        %v3867 = vld [vmem:[#allocation6 + $0x20] sm:$0xff]
        %v3868 = vld [vmem:[#allocation6 + $0x28] sm:$0xff]
        %v3869 = vld [vmem:[#allocation6 + $0x30] sm:$0xff]
        %v3870 = vld [vmem:[#allocation6 + $0x38] sm:$0x3]
        %v3871 = vpack.c.bf16 %v3864, %v3863
        %v3872 = vpack.c.bf16 %v3866, %v3865
        %v3873 = vpack.c.bf16 %v3868, %v3867
        %v3874 = vpack.c.bf16 %v3870, %v3869
        %v3879 = vunpack.c.l.b16 %v3871
        %v3880 = vunpack.c.h.b16 %v3871
        %v3881 = vunpack.c.l.b16 %v3872
        %v3882 = vunpack.c.h.b16 %v3872
        %v3883 = vunpack.c.l.b16 %v3873
        %v3884 = vunpack.c.h.b16 %v3873
        %v3885 = vunpack.c.l.b16 %v3874
        %v3886 = vunpack.c.h.b16 %v3874
        %v3887 = vpack.c.b16 %v3879, %v3879
        %v3888 = vpack.c.b16 %v3880, %v3880
        %v3889 = vpack.c.b16 %v3881, %v3881
        %v3890 = vpack.c.b16 %v3882, %v3882
        %v3891 = vpack.c.b16 %v3883, %v3883
        %v3892 = vpack.c.b16 %v3884, %v3884
        %v3893 = vpack.c.b16 %v3885, %v3885
        %v3894 = vpack.c.b16 %v3886, %v3886
        %3903 = vst [vmem:[#allocation9] sm:$0xf] %v3887
        %3904 = vst [vmem:[#allocation9 + $0xc] sm:$0xf] %v3888
        %3905 = vst [vmem:[#allocation9 + $0x18] sm:$0xf] %v3889
        %3906 = vst [vmem:[#allocation9 + $0x24] sm:$0xf] %v3890
        %3907 = vst [vmem:[#allocation9 + $0x30] sm:$0xf] %v3891
        %3908 = vst [vmem:[#allocation9 + $0x3c] sm:$0xf] %v3892
        %3909 = vst [vmem:[#allocation9 + $0x48] sm:$0xf] %v3893
        %3910 = vst [vmem:[#allocation9 + $0x54] sm:$0x1] %v3894
        %v3911 = vld [vmem:[#allocation6 + $0x1] sm:$0xff]
        %v3912 = vld [vmem:[#allocation6 + $0x9] sm:$0xff]
        %v3913 = vld [vmem:[#allocation6 + $0x11] sm:$0xff]
        %v3914 = vld [vmem:[#allocation6 + $0x19] sm:$0xff]
        %v3915 = vld [vmem:[#allocation6 + $0x21] sm:$0xff]
        %v3916 = vld [vmem:[#allocation6 + $0x29] sm:$0xff]
        %v3917 = vld [vmem:[#allocation6 + $0x31] sm:$0xff]
        %v3918 = vld [vmem:[#allocation6 + $0x39] sm:$0x3]
        %v3919 = vpack.c.bf16 %v3912, %v3911
        %v3920 = vpack.c.bf16 %v3914, %v3913
        %v3921 = vpack.c.bf16 %v3916, %v3915
        %v3922 = vpack.c.bf16 %v3918, %v3917
        %v3927 = vunpack.c.l.b16 %v3919
        %v3928 = vunpack.c.h.b16 %v3919
        %v3929 = vunpack.c.l.b16 %v3920
        %v3930 = vunpack.c.h.b16 %v3920
        %v3931 = vunpack.c.l.b16 %v3921
        %v3932 = vunpack.c.h.b16 %v3921
        %v3933 = vunpack.c.l.b16 %v3922
        %v3934 = vunpack.c.h.b16 %v3922
        %v3935 = vpack.c.b16 %v3927, %v3927
        %v3936 = vpack.c.b16 %v3928, %v3928
        %v3937 = vpack.c.b16 %v3929, %v3929
        %v3938 = vpack.c.b16 %v3930, %v3930
        %v3939 = vpack.c.b16 %v3931, %v3931
        %v3940 = vpack.c.b16 %v3932, %v3932
        %v3941 = vpack.c.b16 %v3933, %v3933
        %v3942 = vpack.c.b16 %v3934, %v3934
        %3951 = vst [vmem:[#allocation9 + $0x4] sm:$0xf] %v3935
        %3952 = vst [vmem:[#allocation9 + $0x10] sm:$0xf] %v3936
        %3953 = vst [vmem:[#allocation9 + $0x1c] sm:$0xf] %v3937
        %3954 = vst [vmem:[#allocation9 + $0x28] sm:$0xf] %v3938
        %3955 = vst [vmem:[#allocation9 + $0x34] sm:$0xf] %v3939
        %3956 = vst [vmem:[#allocation9 + $0x40] sm:$0xf] %v3940
        %3957 = vst [vmem:[#allocation9 + $0x4c] sm:$0xf] %v3941
        %3958 = vst [vmem:[#allocation9 + $0x58] sm:$0x1] %v3942
        %v3959 = vld [vmem:[#allocation6 + $0x2] sm:$0xff]
        %v3960 = vld [vmem:[#allocation6 + $0xa] sm:$0xff]
        %v3961 = vld [vmem:[#allocation6 + $0x12] sm:$0xff]
        %v3962 = vld [vmem:[#allocation6 + $0x1a] sm:$0xff]
        %v3963 = vld [vmem:[#allocation6 + $0x22] sm:$0xff]
        %v3964 = vld [vmem:[#allocation6 + $0x2a] sm:$0xff]
        %v3965 = vld [vmem:[#allocation6 + $0x32] sm:$0xff]
        %v3966 = vld [vmem:[#allocation6 + $0x3a] sm:$0x3]
        %v3967 = vpack.c.bf16 %v3960, %v3959
        %v3968 = vpack.c.bf16 %v3962, %v3961
        %v3969 = vpack.c.bf16 %v3964, %v3963
        %v3970 = vpack.c.bf16 %v3966, %v3965
        %v3975 = vunpack.c.l.b16 %v3967
        %v3976 = vunpack.c.h.b16 %v3967
        %v3977 = vunpack.c.l.b16 %v3968
        %v3978 = vunpack.c.h.b16 %v3968
        %v3979 = vunpack.c.l.b16 %v3969
        %v3980 = vunpack.c.h.b16 %v3969
        %v3981 = vunpack.c.l.b16 %v3970
        %v3982 = vunpack.c.h.b16 %v3970
        %v3983 = vpack.c.b16 %v3975, %v3975
        %v3984 = vpack.c.b16 %v3976, %v3976
        %v3985 = vpack.c.b16 %v3977, %v3977
        %v3986 = vpack.c.b16 %v3978, %v3978
        %v3987 = vpack.c.b16 %v3979, %v3979
        %v3988 = vpack.c.b16 %v3980, %v3980
        %v3989 = vpack.c.b16 %v3981, %v3981
        %v3990 = vpack.c.b16 %v3982, %v3982
        %3999 = vst [vmem:[#allocation9 + $0x8] sm:$0xf] %v3983
        %4000 = vst [vmem:[#allocation9 + $0x14] sm:$0xf] %v3984
        %4001 = vst [vmem:[#allocation9 + $0x20] sm:$0xf] %v3985
        %4002 = vst [vmem:[#allocation9 + $0x2c] sm:$0xf] %v3986
        %4003 = vst [vmem:[#allocation9 + $0x38] sm:$0xf] %v3987
        %4004 = vst [vmem:[#allocation9 + $0x44] sm:$0xf] %v3988
        %4005 = vst [vmem:[#allocation9 + $0x50] sm:$0xf] %v3989
        %4006 = vst [vmem:[#allocation9 + $0x5c] sm:$0x1] %v3990
        %v4007 = vld [vmem:[#allocation9] sm:$0xff]
        %v4008 = vld [vmem:[#allocation9 + $0x8] sm:$0xf]
        %v4009 = vld [vmem:[#allocation9 + $0xc] sm:$0xff]
        %v4010 = vld [vmem:[#allocation9 + $0x14] sm:$0xf]
        %v4011 = vld [vmem:[#allocation9 + $0x18] sm:$0xff]
        %v4012 = vld [vmem:[#allocation9 + $0x20] sm:$0xf]
        %v4013 = vld [vmem:[#allocation9 + $0x24] sm:$0xff]
        %v4014 = vld [vmem:[#allocation9 + $0x2c] sm:$0xf]
        %v4015 = vld [vmem:[#allocation9 + $0x30] sm:$0xff]
        %v4016 = vld [vmem:[#allocation9 + $0x38] sm:$0xf]
        %v4017 = vld [vmem:[#allocation9 + $0x3c] sm:$0xff]
        %v4018 = vld [vmem:[#allocation9 + $0x44] sm:$0xf]
        %v4019 = vld [vmem:[#allocation9 + $0x48] sm:$0xff]
        %v4020 = vld [vmem:[#allocation9 + $0x50] sm:$0xf]
        %v4021 = vld [vmem:[#allocation9 + $0x54] sm:$0x11]
        %v4022 = vld [vmem:[#allocation9 + $0x5c] sm:$0x1]
        %s4023 = scalar_lea.vmem [#allocation15], 576
        %v4024 = vld [vmem:[%s4023] sm:$0xf]
        %v4025 = vld [vmem:[%s4023 + $0x4] sm:$0xf]
        %v4026 = vld [vmem:[%s4023 + $0x8] sm:$0xf]
        %v4027 = vld [vmem:[%s4023 + $0xc] sm:$0xf]
        %v4028 = vld [vmem:[%s4023 + $0x10] sm:$0xf]
        %v4029 = vld [vmem:[%s4023 + $0x14] sm:$0xf]
        %v4030 = vld [vmem:[%s4023 + $0x18] sm:$0xf]
        %v4031 = vld [vmem:[%s4023 + $0x1c] sm:$0xf]
        %v4032 = vld [vmem:[%s4023 + $0x20] sm:$0xf]
        %v4033 = vld [vmem:[%s4023 + $0x24] sm:$0xf]
        %v4034 = vld [vmem:[%s4023 + $0x28] sm:$0xf]
        %v4035 = vld [vmem:[%s4023 + $0x2c] sm:$0xf]
        %v4036 = vld [vmem:[%s4023 + $0x30] sm:$0xf]
        %v4037 = vld [vmem:[%s4023 + $0x34] sm:$0xf]
        %v4038 = vld [vmem:[%s4023 + $0x38] sm:$0xf]
        %v4039 = vld [vmem:[%s4023 + $0x3c] sm:$0xf]
        %v4040 = vld [vmem:[%s4023 + $0x40] sm:$0xf]
        %v4041 = vld [vmem:[%s4023 + $0x44] sm:$0xf]
        %v4042 = vld [vmem:[%s4023 + $0x48] sm:$0xf]
        %v4043 = vld [vmem:[%s4023 + $0x4c] sm:$0xf]
        %v4044 = vld [vmem:[%s4023 + $0x50] sm:$0xf]
        %v4045 = vld [vmem:[%s4023 + $0x54] sm:$0xf]
        %v4046 = vld [vmem:[%s4023 + $0x58] sm:$0xf]
        %v4047 = vld [vmem:[%s4023 + $0x5c] sm:$0xf]
        %v4048 = vld [vmem:[%s4023 + $0x60] sm:$0xf]
        %v4049 = vld [vmem:[%s4023 + $0x64] sm:$0xf]
        %v4050 = vld [vmem:[%s4023 + $0x68] sm:$0xf]
        %v4051 = vld [vmem:[%s4023 + $0x6c] sm:$0xf]
        %v4052 = vld [vmem:[%s4023 + $0x70] sm:$0xf]
        %v4053 = vld [vmem:[%s4023 + $0x74] sm:$0xf]
        %v4054 = vld [vmem:[%s4023 + $0x78] sm:$0xf]
        %v4055 = vld [vmem:[%s4023 + $0x7c] sm:$0xf]
        %v4056 = vld [vmem:[%s4023 + $0x80] sm:$0xf]
        %v4057 = vld [vmem:[%s4023 + $0x84] sm:$0xf]
        %v4058 = vld [vmem:[%s4023 + $0x88] sm:$0xf]
        %v4059 = vld [vmem:[%s4023 + $0x8c] sm:$0xf]
        %v4060 = vld [vmem:[%s4023 + $0x90] sm:$0xf]
        %v4061 = vld [vmem:[%s4023 + $0x94] sm:$0xf]
        %v4062 = vld [vmem:[%s4023 + $0x98] sm:$0xf]
        %v4063 = vld [vmem:[%s4023 + $0x9c] sm:$0xf]
        %v4064 = vld [vmem:[%s4023 + $0xa0] sm:$0xf]
        %v4065 = vld [vmem:[%s4023 + $0xa4] sm:$0xf]
        %v4066 = vld [vmem:[%s4023 + $0xa8] sm:$0xf]
        %v4067 = vld [vmem:[%s4023 + $0xac] sm:$0xf]
        %v4068 = vld [vmem:[%s4023 + $0xb0] sm:$0xf]
        %v4069 = vld [vmem:[%s4023 + $0xb4] sm:$0xf]
        %v4070 = vld [vmem:[%s4023 + $0xb8] sm:$0xf]
        %v4071 = vld [vmem:[%s4023 + $0xbc] sm:$0xf]
        %s4072 = scalar_lea.vmem %s4, 3
        %v4073 = vld [vmem:[%s4072] sm:$0x1]
        %v4075 = vlaneseq
        %v4076 = vshrl.u32 %v4075, 7
        %v4077 = vsub.s32 0, %v4076
        %v4078 = vrot.slane %v4073, %v4077
        %v4096 = vunpack.c.l.b16 %v4007
        %v4097 = vunpack.c.h.b16 %v4007
        %v4098 = vunpack.c.l.b16 %v4008
        %v4099 = vunpack.c.l.b16 %v4009
        %v4100 = vunpack.c.h.b16 %v4009
        %v4101 = vunpack.c.l.b16 %v4010
        %v4102 = vunpack.c.l.b16 %v4011
        %v4103 = vunpack.c.h.b16 %v4011
        %v4104 = vunpack.c.l.b16 %v4012
        %v4105 = vunpack.c.l.b16 %v4013
        %v4106 = vunpack.c.h.b16 %v4013
        %v4107 = vunpack.c.l.b16 %v4014
        %v4108 = vunpack.c.l.b16 %v4015
        %v4109 = vunpack.c.h.b16 %v4015
        %v4110 = vunpack.c.l.b16 %v4016
        %v4111 = vunpack.c.l.b16 %v4017
        %v4112 = vunpack.c.h.b16 %v4017
        %v4113 = vunpack.c.l.b16 %v4018
        %v4114 = vunpack.c.l.b16 %v4019
        %v4115 = vunpack.c.h.b16 %v4019
        %v4116 = vunpack.c.l.b16 %v4020
        %v4117 = vunpack.c.l.b16 %v4021
        %v4118 = vunpack.c.h.b16 %v4021
        %v4119 = vunpack.c.l.b16 %v4022
        %v4120 = vpack.c.b16 %v4099, %v4096
        %v4121 = vpack.c.b16 %v4100, %v4097
        %v4122 = vpack.c.b16 %v4101, %v4098
        %v4123 = vpack.c.b16 %v4105, %v4102
        %v4124 = vpack.c.b16 %v4106, %v4103
        %v4125 = vpack.c.b16 %v4107, %v4104
        %v4126 = vpack.c.b16 %v4111, %v4108
        %v4127 = vpack.c.b16 %v4112, %v4109
        %v4128 = vpack.c.b16 %v4113, %v4110
        %v4129 = vpack.c.b16 %v4117, %v4114
        %v4130 = vpack.c.b16 %v4118, %v4115
        %v4131 = vpack.c.b16 %v4119, %v4116
        %v4192 = vunpack.c.l.b16 %v4024
        %v4193 = vunpack.c.l.b16 %v4025
        %v4194 = vunpack.c.l.b16 %v4026
        %v4195 = vunpack.c.l.b16 %v4027
        %v4196 = vunpack.c.l.b16 %v4028
        %v4197 = vunpack.c.l.b16 %v4029
        %v4198 = vunpack.c.l.b16 %v4030
        %v4199 = vunpack.c.l.b16 %v4031
        %v4200 = vunpack.c.l.b16 %v4032
        %v4201 = vunpack.c.l.b16 %v4033
        %v4202 = vunpack.c.l.b16 %v4034
        %v4203 = vunpack.c.l.b16 %v4035
        %v4204 = vunpack.c.l.b16 %v4036
        %v4205 = vunpack.c.l.b16 %v4037
        %v4206 = vunpack.c.l.b16 %v4038
        %v4207 = vunpack.c.l.b16 %v4039
        %v4208 = vunpack.c.l.b16 %v4040
        %v4209 = vunpack.c.l.b16 %v4041
        %v4210 = vunpack.c.l.b16 %v4042
        %v4211 = vunpack.c.l.b16 %v4043
        %v4212 = vunpack.c.l.b16 %v4044
        %v4213 = vunpack.c.l.b16 %v4045
        %v4214 = vunpack.c.l.b16 %v4046
        %v4215 = vunpack.c.l.b16 %v4047
        %v4216 = vunpack.c.l.b16 %v4048
        %v4217 = vunpack.c.l.b16 %v4049
        %v4218 = vunpack.c.l.b16 %v4050
        %v4219 = vunpack.c.l.b16 %v4051
        %v4220 = vunpack.c.l.b16 %v4052
        %v4221 = vunpack.c.l.b16 %v4053
        %v4222 = vunpack.c.l.b16 %v4054
        %v4223 = vunpack.c.l.b16 %v4055
        %v4224 = vunpack.c.l.b16 %v4056
        %v4225 = vunpack.c.l.b16 %v4057
        %v4226 = vunpack.c.l.b16 %v4058
        %v4227 = vunpack.c.l.b16 %v4059
        %v4228 = vunpack.c.l.b16 %v4060
        %v4229 = vunpack.c.l.b16 %v4061
        %v4230 = vunpack.c.l.b16 %v4062
        %v4231 = vunpack.c.l.b16 %v4063
        %v4232 = vunpack.c.l.b16 %v4064
        %v4233 = vunpack.c.l.b16 %v4065
        %v4234 = vunpack.c.l.b16 %v4066
        %v4235 = vunpack.c.l.b16 %v4067
        %v4236 = vunpack.c.l.b16 %v4068
        %v4237 = vunpack.c.l.b16 %v4069
        %v4238 = vunpack.c.l.b16 %v4070
        %v4239 = vunpack.c.l.b16 %v4071
        %v4240 = vpack.c.b16 %v4193, %v4192
        %v4241 = vpack.c.b16 %v4195, %v4194
        %v4242 = vpack.c.b16 %v4197, %v4196
        %v4243 = vpack.c.b16 %v4199, %v4198
        %v4244 = vpack.c.b16 %v4201, %v4200
        %v4245 = vpack.c.b16 %v4203, %v4202
        %v4246 = vpack.c.b16 %v4205, %v4204
        %v4247 = vpack.c.b16 %v4207, %v4206
        %v4248 = vpack.c.b16 %v4209, %v4208
        %v4249 = vpack.c.b16 %v4211, %v4210
        %v4250 = vpack.c.b16 %v4213, %v4212
        %v4251 = vpack.c.b16 %v4215, %v4214
        %v4252 = vpack.c.b16 %v4217, %v4216
        %v4253 = vpack.c.b16 %v4219, %v4218
        %v4254 = vpack.c.b16 %v4221, %v4220
        %v4255 = vpack.c.b16 %v4223, %v4222
        %v4256 = vpack.c.b16 %v4225, %v4224
        %v4257 = vpack.c.b16 %v4227, %v4226
        %v4258 = vpack.c.b16 %v4229, %v4228
        %v4259 = vpack.c.b16 %v4231, %v4230
        %v4260 = vpack.c.b16 %v4233, %v4232
        %v4261 = vpack.c.b16 %v4235, %v4234
        %v4262 = vpack.c.b16 %v4237, %v4236
        %v4263 = vpack.c.b16 %v4239, %v4238
        %4288 = vmatprep.subr.bf16.mxu0 0
        %4289 = vmatpush1.bf16.msra.mxu0 %v4240
        %4290 = vmatprep.subr.bf16.mxu0 0
        %4291 = vmatpush1.bf16.msra.mxu0 %v4241
        %4292 = vmatprep.subr.bf16.mxu0 0
        %4293 = vmatpush1.bf16.msra.mxu0 %v4242
        %4294 = vmatprep.subr.bf16.mxu0 0
        %4295 = vmatpush1.bf16.msra.mxu0 %v4243
        %4296 = vmatprep.subr.bf16.mxu0 0
        %4297 = vmatpush1.bf16.msra.mxu0 %v4244
        %4298 = vmatprep.subr.bf16.mxu0 0
        %4299 = vmatpush1.bf16.msra.mxu0 %v4245
        %4300 = vmatprep.subr.bf16.mxu0 0
        %4301 = vmatpush1.bf16.msra.mxu0 %v4246
        %4302 = vmatprep.subr.bf16.mxu0 0
        %4303 = vmatpush1.bf16.msra.mxu0 %v4247
        %4304 = vmatprep.subr.bf16.mxu0 0
        %4305 = vmatpush1.bf16.msra.mxu0 %v4248
        %4306 = vmatprep.subr.bf16.mxu0 0
        %4307 = vmatpush1.bf16.msra.mxu0 %v4249
        %4308 = vmatprep.subr.bf16.mxu0 0
        %4309 = vmatpush1.bf16.msra.mxu0 %v4250
        %4310 = vmatprep.subr.bf16.mxu0 0
        %4311 = vmatpush1.bf16.msra.mxu0 %v4251
        %4312 = vmatprep.subr.bf16.mxu0 0
        %4313 = vmatpush1.bf16.msra.mxu0 %v4252
        %4314 = vmatprep.subr.bf16.mxu0 0
        %4315 = vmatpush1.bf16.msra.mxu0 %v4253
        %4316 = vmatprep.subr.bf16.mxu0 0
        %4317 = vmatpush1.bf16.msra.mxu0 %v4254
        %4318 = vmatprep.subr.bf16.mxu0 0
        %4319 = vmatpush1.bf16.msra.mxu0 %v4255
        %4320 = vmatprep.mubr.bf16.mxu0 %v4121
        %4321 = vmatmul.mubr.bf16.gmra.mrb[0].mxu0 %v4120
        %v4322 = vpop.f32.mrb[0].mxu0
        %v4323 = vadd.f32 %v4078, %v4322
        %v4324 = vpop.f32.mrb[0].mxu0
        %v4325 = vpop.f32.mrb[0].mxu0
        %v4326 = vadd.f32 %v4078, %v4325
        %v4327 = vpop.f32.mrb[0].mxu0
        %4328 = vmatprep.mubr.bf16.mxu0 %v4124
        %4329 = vmatmul.mubr.bf16.gmra.mrb[0].mxu0 %v4123
        %v4330 = vpop.f32.mrb[0].mxu0
        %v4331 = vadd.f32 %v4078, %v4330
        %v4332 = vpop.f32.mrb[0].mxu0
        %v4333 = vpop.f32.mrb[0].mxu0
        %v4334 = vadd.f32 %v4078, %v4333
        %v4335 = vpop.f32.mrb[0].mxu0
        %4336 = vmatprep.mubr.bf16.mxu0 %v4127
        %4337 = vmatmul.mubr.bf16.gmra.mrb[0].mxu0 %v4126
        %v4338 = vpop.f32.mrb[0].mxu0
        %v4339 = vadd.f32 %v4078, %v4338
        %v4340 = vpop.f32.mrb[0].mxu0
        %v4341 = vpop.f32.mrb[0].mxu0
        %v4342 = vadd.f32 %v4078, %v4341
        %v4343 = vpop.f32.mrb[0].mxu0
        %4344 = vmatprep.mubr.bf16.mxu0 %v4130
        %4345 = vmatmul.mubr.bf16.gmra.mrb[0].mxu0 %v4129
        %v4346 = vpop.f32.mrb[0].mxu0
        %v4347 = vadd.f32 %v4078, %v4346
        %v4348 = vpop.f32.mrb[0].mxu0
        %v4349 = vpop.f32.mrb[0].mxu0
        %v4350 = vadd.f32 %v4078, %v4349
        %v4351 = vpop.f32.mrb[0].mxu0
        %4352 = vdwg.mxu0
        %4353 = vmatprep.subr.bf16.mxu0 0
        %4354 = vmatpush1.bf16.msra.mxu0 %v4256
        %4355 = vmatprep.subr.bf16.mxu0 0
        %4356 = vmatpush1.bf16.msra.mxu0 %v4257
        %4357 = vmatprep.subr.bf16.mxu0 0
        %4358 = vmatpush1.bf16.msra.mxu0 %v4258
        %4359 = vmatprep.subr.bf16.mxu0 0
        %4360 = vmatpush1.bf16.msra.mxu0 %v4259
        %4361 = vmatprep.subr.bf16.mxu0 0
        %4362 = vmatpush1.bf16.msra.mxu0 %v4260
        %4363 = vmatprep.subr.bf16.mxu0 0
        %4364 = vmatpush1.bf16.msra.mxu0 %v4261
        %4365 = vmatprep.subr.bf16.mxu0 0
        %4366 = vmatpush1.bf16.msra.mxu0 %v4262
        %4367 = vmatprep.subr.bf16.mxu0 0
        %4368 = vmatpush1.bf16.msra.mxu0 %v4263
        %4369 = vmatprep.subr.bf16.mxu0 0
        %4370 = vmatpush1.bf16.msra.mxu0 0
        %4371 = vmatprep.subr.bf16.mxu0 0
        %4372 = vmatpush1.bf16.msra.mxu0 0
        %4373 = vmatprep.subr.bf16.mxu0 0
        %4374 = vmatpush1.bf16.msra.mxu0 0
        %4375 = vmatprep.subr.bf16.mxu0 0
        %4376 = vmatpush1.bf16.msra.mxu0 0
        %4377 = vmatprep.subr.bf16.mxu0 0
        %4378 = vmatpush1.bf16.msra.mxu0 0
        %4379 = vmatprep.subr.bf16.mxu0 0
        %4380 = vmatpush1.bf16.msra.mxu0 0
        %4381 = vmatprep.subr.bf16.mxu0 0
        %4382 = vmatpush1.bf16.msra.mxu0 0
        %4383 = vmatprep.subr.bf16.mxu0 0
        %4384 = vmatpush1.bf16.msra.mxu0 0
        %4385 = vmatprep.mubr.bf16.mxu0 0
        %4386 = vmatmul.mubr.bf16.gmra.mrb[0].mxu0 %v4122
        %v4387 = vpop.f32.mrb[0].mxu0
        %v4388 = vadd.f32 %v4323, %v4387
        %v4389 = vpop.f32.mrb[0].mxu0
        %v4390 = vpop.f32.mrb[0].mxu0
        %v4391 = vadd.f32 %v4326, %v4390
        %v4392 = vpop.f32.mrb[0].mxu0
        %4393 = vmatprep.mubr.bf16.mxu0 0
        %4394 = vmatmul.mubr.bf16.gmra.mrb[0].mxu0 %v4125
        %v4395 = vpop.f32.mrb[0].mxu0
        %v4396 = vadd.f32 %v4331, %v4395
        %v4397 = vpop.f32.mrb[0].mxu0
        %v4398 = vpop.f32.mrb[0].mxu0
        %v4399 = vadd.f32 %v4334, %v4398
        %v4400 = vpop.f32.mrb[0].mxu0
        %4401 = vmatprep.mubr.bf16.mxu0 0
        %4402 = vmatmul.mubr.bf16.gmra.mrb[0].mxu0 %v4128
        %v4403 = vpop.f32.mrb[0].mxu0
        %v4404 = vadd.f32 %v4339, %v4403
        %v4405 = vpop.f32.mrb[0].mxu0
        %v4406 = vpop.f32.mrb[0].mxu0
        %v4407 = vadd.f32 %v4342, %v4406
        %v4408 = vpop.f32.mrb[0].mxu0
        %4409 = vmatprep.mubr.bf16.mxu0 0
        %4410 = vmatmul.mubr.bf16.gmra.mrb[0].mxu0 %v4131
        %v4411 = vpop.f32.mrb[0].mxu0
        %v4412 = vadd.f32 %v4347, %v4411
        %v4413 = vpop.f32.mrb[0].mxu0
        %v4414 = vpop.f32.mrb[0].mxu0
        %v4415 = vadd.f32 %v4350, %v4414
        %v4416 = vpop.f32.mrb[0].mxu0
        %4417 = vdwg.mxu0
        %v4418 = vmax.f32 %v4388, 0.0
        %v4419 = vmax.f32 %v4391, 0.0
        %v4420 = vmax.f32 %v4396, 0.0
        %v4421 = vmax.f32 %v4399, 0.0
        %v4422 = vmax.f32 %v4404, 0.0
        %v4423 = vmax.f32 %v4407, 0.0
        %v4424 = vmax.f32 %v4412, 0.0
        %v4425 = vmax.f32 %v4415, 0.0
        %4426 = vst [vmem:[#allocation5 + $0x1] sm:$0xff] %v4418
        %4427 = vst [vmem:[#allocation5 + $0x9] sm:$0xff] %v4419
        %4428 = vst [vmem:[#allocation5 + $0x11] sm:$0xff] %v4420
        %4429 = vst [vmem:[#allocation5 + $0x19] sm:$0xff] %v4421
        %4430 = vst [vmem:[#allocation5 + $0x21] sm:$0xff] %v4422
        %4431 = vst [vmem:[#allocation5 + $0x29] sm:$0xff] %v4423
        %4432 = vst [vmem:[#allocation5 + $0x31] sm:$0xff] %v4424
        %4433 = vst [vmem:[#allocation5 + $0x39] sm:$0x3] %v4425
        %4434 = vst [vmem:[#allocation5 + $0x9] sm:$0x3] 0.0
        %4435 = vst [vmem:[#allocation5 + $0x13] sm:$0x3] 0.0
        %4436 = vst [vmem:[#allocation5 + $0x1d] sm:$0x3] 0.0
        %4437 = vst [vmem:[#allocation5 + $0x27] sm:$0x3] 0.0
        %4438 = vst [vmem:[#allocation5 + $0x31] sm:$0x3] 0.0
        %s4439 = scalar_lea.vmem %s6, 1
        %v4440 = vld [vmem:[%s4439] sm:$0x1]
        %v4442 = vlaneseq
        %v4443 = vshrl.u32 %v4442, 7
        %v4444 = vsub.s32 0, %v4443
        %v4445 = vrot.slane %v4440, %v4444
        %s4447 = scalar_lea.vmem [#allocation5], 1
        %v4448 = vld [vmem:[%s4447] ss:$2 sm:$0xff]
        %s4449 = scalar_lea.vmem [#allocation5], 17
        %v4450 = vld [vmem:[%s4449] ss:$2 sm:$0xff]
        %s4451 = scalar_lea.vmem [#allocation5], 33
        %v4452 = vld [vmem:[%s4451] ss:$2 sm:$0xff]
        %s4453 = scalar_lea.vmem [#allocation5], 49
        %v4454 = vld [vmem:[%s4453] ss:$2 sm:$0x1f]
        %v4455 = vpack.c.bf16 %v4450, %v4448
        %v4456 = vpack.c.bf16 %v4454, %v4452
        %s4457 = scalar_lea.vmem [#allocation16], 128
        %v4458 = vld [vmem:[%s4457] sm:$0xf]
        %v4459 = vld [vmem:[%s4457 + $0x4] sm:$0xf]
        %v4460 = vld [vmem:[%s4457 + $0x8] sm:$0xf]
        %v4461 = vld [vmem:[%s4457 + $0xc] sm:$0xf]
        %v4462 = vld [vmem:[%s4457 + $0x10] sm:$0xf]
        %v4463 = vld [vmem:[%s4457 + $0x14] sm:$0xf]
        %v4464 = vld [vmem:[%s4457 + $0x18] sm:$0xf]
        %v4465 = vld [vmem:[%s4457 + $0x1c] sm:$0xf]
        %v4466 = vld [vmem:[%s4457 + $0x20] sm:$0xf]
        %v4467 = vld [vmem:[%s4457 + $0x24] sm:$0xf]
        %v4468 = vld [vmem:[%s4457 + $0x28] sm:$0xf]
        %v4469 = vld [vmem:[%s4457 + $0x2c] sm:$0xf]
        %v4470 = vld [vmem:[%s4457 + $0x30] sm:$0xf]
        %v4471 = vld [vmem:[%s4457 + $0x34] sm:$0xf]
        %v4472 = vld [vmem:[%s4457 + $0x38] sm:$0xf]
        %v4473 = vld [vmem:[%s4457 + $0x3c] sm:$0xf]
        %v4490 = vunpack.c.l.b16 %v4458
        %v4491 = vunpack.c.l.b16 %v4459
        %v4492 = vunpack.c.l.b16 %v4460
        %v4493 = vunpack.c.l.b16 %v4461
        %v4494 = vunpack.c.l.b16 %v4462
        %v4495 = vunpack.c.l.b16 %v4463
        %v4496 = vunpack.c.l.b16 %v4464
        %v4497 = vunpack.c.l.b16 %v4465
        %v4498 = vunpack.c.l.b16 %v4466
        %v4499 = vunpack.c.l.b16 %v4467
        %v4500 = vunpack.c.l.b16 %v4468
        %v4501 = vunpack.c.l.b16 %v4469
        %v4502 = vunpack.c.l.b16 %v4470
        %v4503 = vunpack.c.l.b16 %v4471
        %v4504 = vunpack.c.l.b16 %v4472
        %v4505 = vunpack.c.l.b16 %v4473
        %v4506 = vpack.c.b16 %v4491, %v4490
        %v4507 = vpack.c.b16 %v4493, %v4492
        %v4508 = vpack.c.b16 %v4495, %v4494
        %v4509 = vpack.c.b16 %v4497, %v4496
        %v4510 = vpack.c.b16 %v4499, %v4498
        %v4511 = vpack.c.b16 %v4501, %v4500
        %v4512 = vpack.c.b16 %v4503, %v4502
        %v4513 = vpack.c.b16 %v4505, %v4504
        %4522 = vmatprep.subr.bf16.mxu0 0
        %4523 = vmatpush1.bf16.msra.mxu0 %v4506
        %4524 = vmatprep.subr.bf16.mxu0 0
        %4525 = vmatpush1.bf16.msra.mxu0 %v4507
        %4526 = vmatprep.subr.bf16.mxu0 0
        %4527 = vmatpush1.bf16.msra.mxu0 %v4508
        %4528 = vmatprep.subr.bf16.mxu0 0
        %4529 = vmatpush1.bf16.msra.mxu0 %v4509
        %4530 = vmatprep.subr.bf16.mxu0 0
        %4531 = vmatpush1.bf16.msra.mxu0 %v4510
        %4532 = vmatprep.subr.bf16.mxu0 0
        %4533 = vmatpush1.bf16.msra.mxu0 %v4511
        %4534 = vmatprep.subr.bf16.mxu0 0
        %4535 = vmatpush1.bf16.msra.mxu0 %v4512
        %4536 = vmatprep.subr.bf16.mxu0 0
        %4537 = vmatpush1.bf16.msra.mxu0 %v4513
        %4538 = vmatprep.subr.bf16.mxu0 0
        %4539 = vmatpush1.bf16.msra.mxu0 0
        %4540 = vmatprep.subr.bf16.mxu0 0
        %4541 = vmatpush1.bf16.msra.mxu0 0
        %4542 = vmatprep.subr.bf16.mxu0 0
        %4543 = vmatpush1.bf16.msra.mxu0 0
        %4544 = vmatprep.subr.bf16.mxu0 0
        %4545 = vmatpush1.bf16.msra.mxu0 0
        %4546 = vmatprep.subr.bf16.mxu0 0
        %4547 = vmatpush1.bf16.msra.mxu0 0
        %4548 = vmatprep.subr.bf16.mxu0 0
        %4549 = vmatpush1.bf16.msra.mxu0 0
        %4550 = vmatprep.subr.bf16.mxu0 0
        %4551 = vmatpush1.bf16.msra.mxu0 0
        %4552 = vmatprep.subr.bf16.mxu0 0
        %4553 = vmatpush1.bf16.msra.mxu0 0
        %4554 = vmatprep.mubr.bf16.mxu0 0
        %4555 = vmatmul.mubr.bf16.gmra.mrb[0].mxu0 %v4455
        %v4556 = vpop.f32.mrb[0].mxu0
        %v4557 = vadd.f32 0.0, %v4556
        %v4558 = vpop.f32.mrb[0].mxu0
        %v4559 = vpop.f32.mrb[0].mxu0
        %v4560 = vadd.f32 0.0, %v4559
        %v4561 = vpop.f32.mrb[0].mxu0
        %4562 = vmatprep.mubr.bf16.mxu0 0
        %4563 = vmatmul.mubr.bf16.gmra.mrb[0].mxu0 %v4456
        %v4564 = vpop.f32.mrb[0].mxu0
        %v4565 = vadd.f32 0.0, %v4564
        %v4566 = vpop.f32.mrb[0].mxu0
        %v4567 = vpop.f32.mrb[0].mxu0
        %v4568 = vadd.f32 0.0, %v4567
        %v4569 = vpop.f32.mrb[0].mxu0
        %4570 = vdwg.mxu0
        %v4571 = vadd.f32 %v4445, %v4557
        %v4572 = vadd.f32 %v4445, %v4560
        %v4573 = vadd.f32 %v4445, %v4565
        %v4574 = vadd.f32 %v4445, %v4568
        %s4575 = scalar_lea.vmem [#allocation5], 2
        %v4576 = vld [vmem:[%s4575] ss:$2 sm:$0xff]
        %s4577 = scalar_lea.vmem [#allocation5], 18
        %v4578 = vld [vmem:[%s4577] ss:$2 sm:$0xff]
        %s4579 = scalar_lea.vmem [#allocation5], 34
        %v4580 = vld [vmem:[%s4579] ss:$2 sm:$0xff]
        %s4581 = scalar_lea.vmem [#allocation5], 50
        %v4582 = vld [vmem:[%s4581] ss:$2 sm:$0x1f]
        %v4583 = vpack.c.bf16 %v4578, %v4576
        %v4584 = vpack.c.bf16 %v4582, %v4580
        %s4585 = scalar_lea.vmem [#allocation16], 192
        %v4586 = vld [vmem:[%s4585] sm:$0xf]
        %v4587 = vld [vmem:[%s4585 + $0x4] sm:$0xf]
        %v4588 = vld [vmem:[%s4585 + $0x8] sm:$0xf]
        %v4589 = vld [vmem:[%s4585 + $0xc] sm:$0xf]
        %v4590 = vld [vmem:[%s4585 + $0x10] sm:$0xf]
        %v4591 = vld [vmem:[%s4585 + $0x14] sm:$0xf]
        %v4592 = vld [vmem:[%s4585 + $0x18] sm:$0xf]
        %v4593 = vld [vmem:[%s4585 + $0x1c] sm:$0xf]
        %v4594 = vld [vmem:[%s4585 + $0x20] sm:$0xf]
        %v4595 = vld [vmem:[%s4585 + $0x24] sm:$0xf]
        %v4596 = vld [vmem:[%s4585 + $0x28] sm:$0xf]
        %v4597 = vld [vmem:[%s4585 + $0x2c] sm:$0xf]
        %v4598 = vld [vmem:[%s4585 + $0x30] sm:$0xf]
        %v4599 = vld [vmem:[%s4585 + $0x34] sm:$0xf]
        %v4600 = vld [vmem:[%s4585 + $0x38] sm:$0xf]
        %v4601 = vld [vmem:[%s4585 + $0x3c] sm:$0xf]
        %v4618 = vunpack.c.l.b16 %v4586
        %v4619 = vunpack.c.l.b16 %v4587
        %v4620 = vunpack.c.l.b16 %v4588
        %v4621 = vunpack.c.l.b16 %v4589
        %v4622 = vunpack.c.l.b16 %v4590
        %v4623 = vunpack.c.l.b16 %v4591
        %v4624 = vunpack.c.l.b16 %v4592
        %v4625 = vunpack.c.l.b16 %v4593
        %v4626 = vunpack.c.l.b16 %v4594
        %v4627 = vunpack.c.l.b16 %v4595
        %v4628 = vunpack.c.l.b16 %v4596
        %v4629 = vunpack.c.l.b16 %v4597
        %v4630 = vunpack.c.l.b16 %v4598
        %v4631 = vunpack.c.l.b16 %v4599
        %v4632 = vunpack.c.l.b16 %v4600
        %v4633 = vunpack.c.l.b16 %v4601
        %v4634 = vpack.c.b16 %v4619, %v4618
        %v4635 = vpack.c.b16 %v4621, %v4620
        %v4636 = vpack.c.b16 %v4623, %v4622
        %v4637 = vpack.c.b16 %v4625, %v4624
        %v4638 = vpack.c.b16 %v4627, %v4626
        %v4639 = vpack.c.b16 %v4629, %v4628
        %v4640 = vpack.c.b16 %v4631, %v4630
        %v4641 = vpack.c.b16 %v4633, %v4632
        %4650 = vmatprep.subr.bf16.mxu0 0
        %4651 = vmatpush1.bf16.msra.mxu0 %v4634
        %4652 = vmatprep.subr.bf16.mxu0 0
        %4653 = vmatpush1.bf16.msra.mxu0 %v4635
        %4654 = vmatprep.subr.bf16.mxu0 0
        %4655 = vmatpush1.bf16.msra.mxu0 %v4636
        %4656 = vmatprep.subr.bf16.mxu0 0
        %4657 = vmatpush1.bf16.msra.mxu0 %v4637
        %4658 = vmatprep.subr.bf16.mxu0 0
        %4659 = vmatpush1.bf16.msra.mxu0 %v4638
        %4660 = vmatprep.subr.bf16.mxu0 0
        %4661 = vmatpush1.bf16.msra.mxu0 %v4639
        %4662 = vmatprep.subr.bf16.mxu0 0
        %4663 = vmatpush1.bf16.msra.mxu0 %v4640
        %4664 = vmatprep.subr.bf16.mxu0 0
        %4665 = vmatpush1.bf16.msra.mxu0 %v4641
        %4666 = vmatprep.subr.bf16.mxu0 0
        %4667 = vmatpush1.bf16.msra.mxu0 0
        %4668 = vmatprep.subr.bf16.mxu0 0
        %4669 = vmatpush1.bf16.msra.mxu0 0
        %4670 = vmatprep.subr.bf16.mxu0 0
        %4671 = vmatpush1.bf16.msra.mxu0 0
        %4672 = vmatprep.subr.bf16.mxu0 0
        %4673 = vmatpush1.bf16.msra.mxu0 0
        %4674 = vmatprep.subr.bf16.mxu0 0
        %4675 = vmatpush1.bf16.msra.mxu0 0
        %4676 = vmatprep.subr.bf16.mxu0 0
        %4677 = vmatpush1.bf16.msra.mxu0 0
        %4678 = vmatprep.subr.bf16.mxu0 0
        %4679 = vmatpush1.bf16.msra.mxu0 0
        %4680 = vmatprep.subr.bf16.mxu0 0
        %4681 = vmatpush1.bf16.msra.mxu0 0
        %4682 = vmatprep.mubr.bf16.mxu0 0
        %4683 = vmatmul.mubr.bf16.gmra.mrb[0].mxu0 %v4583
        %v4684 = vpop.f32.mrb[0].mxu0
        %v4685 = vadd.f32 0.0, %v4684
        %v4686 = vpop.f32.mrb[0].mxu0
        %v4687 = vpop.f32.mrb[0].mxu0
        %v4688 = vadd.f32 0.0, %v4687
        %v4689 = vpop.f32.mrb[0].mxu0
        %4690 = vmatprep.mubr.bf16.mxu0 0
        %4691 = vmatmul.mubr.bf16.gmra.mrb[0].mxu0 %v4584
        %v4692 = vpop.f32.mrb[0].mxu0
        %v4693 = vadd.f32 0.0, %v4692
        %v4694 = vpop.f32.mrb[0].mxu0
        %v4695 = vpop.f32.mrb[0].mxu0
        %v4696 = vadd.f32 0.0, %v4695
        %v4697 = vpop.f32.mrb[0].mxu0
        %4698 = vdwg.mxu0
        %v4699 = vadd.f32 %v4571, %v4685
        %v4700 = vadd.f32 %v4572, %v4688
        %v4701 = vadd.f32 %v4573, %v4693
        %v4702 = vadd.f32 %v4574, %v4696
        %v4703 = vmax.f32 %v4699, 0.0
        %v4704 = vmax.f32 %v4700, 0.0
        %v4705 = vmax.f32 %v4701, 0.0
        %v4706 = vmax.f32 %v4702, 0.0
        %4707 = vst [vmem:[#allocation7 + $0x1] sm:$0xf] %v4703
        %4708 = vst [vmem:[#allocation7 + $0x2] sm:$0xe0] %v4703
        %4709 = vst [vmem:[#allocation7 + $0xa] sm:$0x1] %v4704
        %4710 = vst [vmem:[#allocation7 + $0xb] sm:$0x3c] %v4704
        %4711 = vst [vmem:[#allocation7 + $0xc] sm:$0x80] %v4704
        %4712 = vst [vmem:[#allocation7 + $0x14] sm:$0x7] %v4705
        %4713 = vst [vmem:[#allocation7 + $0x15] sm:$0xf0] %v4705
        %4714 = vst [vmem:[#allocation7 + $0x1e] sm:$0x1e] %v4706
        %v4715 = vld [vmem:[#allocation7] sm:$0xff]
        %v4716 = vld [vmem:[#allocation7 + $0x8] sm:$0xff]
        %v4717 = vld [vmem:[#allocation7 + $0x10] sm:$0xff]
        %v4718 = vld [vmem:[#allocation7 + $0x18] sm:$0xff]
        %v4719 = vld [vmem:[#allocation7 + $0x20] sm:$0x3]
        %v4720 = vpack.c.bf16 %v4716, %v4715
        %v4721 = vpack.c.bf16 %v4718, %v4717
        %v4722 = vpack.c.bf16 %v4719, %v4719
        %v4726 = vunpack.c.l.b16 %v4720
        %v4727 = vunpack.c.h.b16 %v4720
        %v4728 = vunpack.c.l.b16 %v4721
        %v4729 = vunpack.c.h.b16 %v4721
        %v4730 = vunpack.c.l.b16 %v4722
        %v4731 = vpack.c.b16 %v4726, %v4726
        %v4732 = vpack.c.b16 %v4727, %v4727
        %v4733 = vpack.c.b16 %v4728, %v4728
        %v4734 = vpack.c.b16 %v4729, %v4729
        %v4735 = vpack.c.b16 %v4730, %v4730
        %4741 = vst [vmem:[#allocation9] sm:$0xf] %v4731
        %4742 = vst [vmem:[#allocation9 + $0xc] sm:$0xf] %v4732
        %4743 = vst [vmem:[#allocation9 + $0x18] sm:$0xf] %v4733
        %4744 = vst [vmem:[#allocation9 + $0x24] sm:$0xf] %v4734
        %4745 = vst [vmem:[#allocation9 + $0x30] sm:$0x1] %v4735
        %v4746 = vld [vmem:[#allocation7 + $0x1] sm:$0xff]
        %v4747 = vld [vmem:[#allocation7 + $0x9] sm:$0xff]
        %v4748 = vld [vmem:[#allocation7 + $0x11] sm:$0xff]
        %v4749 = vld [vmem:[#allocation7 + $0x19] sm:$0xff]
        %v4750 = vld [vmem:[#allocation7 + $0x21] sm:$0x3]
        %v4751 = vpack.c.bf16 %v4747, %v4746
        %v4752 = vpack.c.bf16 %v4749, %v4748
        %v4753 = vpack.c.bf16 %v4750, %v4750
        %v4757 = vunpack.c.l.b16 %v4751
        %v4758 = vunpack.c.h.b16 %v4751
        %v4759 = vunpack.c.l.b16 %v4752
        %v4760 = vunpack.c.h.b16 %v4752
        %v4761 = vunpack.c.l.b16 %v4753
        %v4762 = vpack.c.b16 %v4757, %v4757
        %v4763 = vpack.c.b16 %v4758, %v4758
        %v4764 = vpack.c.b16 %v4759, %v4759
        %v4765 = vpack.c.b16 %v4760, %v4760
        %v4766 = vpack.c.b16 %v4761, %v4761
        %4772 = vst [vmem:[#allocation9 + $0x4] sm:$0xf] %v4762
        %4773 = vst [vmem:[#allocation9 + $0x10] sm:$0xf] %v4763
        %4774 = vst [vmem:[#allocation9 + $0x1c] sm:$0xf] %v4764
        %4775 = vst [vmem:[#allocation9 + $0x28] sm:$0xf] %v4765
        %4776 = vst [vmem:[#allocation9 + $0x34] sm:$0x1] %v4766
        %v4777 = vld [vmem:[#allocation7 + $0x2] sm:$0xff]
        %v4778 = vld [vmem:[#allocation7 + $0xa] sm:$0xff]
        %v4779 = vld [vmem:[#allocation7 + $0x12] sm:$0xff]
        %v4780 = vld [vmem:[#allocation7 + $0x1a] sm:$0xff]
        %v4781 = vld [vmem:[#allocation7 + $0x22] sm:$0x3]
        %v4782 = vpack.c.bf16 %v4778, %v4777
        %v4783 = vpack.c.bf16 %v4780, %v4779
        %v4784 = vpack.c.bf16 %v4781, %v4781
        %v4788 = vunpack.c.l.b16 %v4782
        %v4789 = vunpack.c.h.b16 %v4782
        %v4790 = vunpack.c.l.b16 %v4783
        %v4791 = vunpack.c.h.b16 %v4783
        %v4792 = vunpack.c.l.b16 %v4784
        %v4793 = vpack.c.b16 %v4788, %v4788
        %v4794 = vpack.c.b16 %v4789, %v4789
        %v4795 = vpack.c.b16 %v4790, %v4790
        %v4796 = vpack.c.b16 %v4791, %v4791
        %v4797 = vpack.c.b16 %v4792, %v4792
        %4803 = vst [vmem:[#allocation9 + $0x8] sm:$0xf] %v4793
        %4804 = vst [vmem:[#allocation9 + $0x14] sm:$0xf] %v4794
        %4805 = vst [vmem:[#allocation9 + $0x20] sm:$0xf] %v4795
        %4806 = vst [vmem:[#allocation9 + $0x2c] sm:$0xf] %v4796
        %4807 = vst [vmem:[#allocation9 + $0x38] sm:$0x1] %v4797
        %v4808 = vld [vmem:[#allocation9] sm:$0xff]
        %v4809 = vld [vmem:[#allocation9 + $0x8] sm:$0xf]
        %v4810 = vld [vmem:[#allocation9 + $0xc] sm:$0xff]
        %v4811 = vld [vmem:[#allocation9 + $0x14] sm:$0xf]
        %v4812 = vld [vmem:[#allocation9 + $0x18] sm:$0xff]
        %v4813 = vld [vmem:[#allocation9 + $0x20] sm:$0xf]
        %v4814 = vld [vmem:[#allocation9 + $0x24] sm:$0xff]
        %v4815 = vld [vmem:[#allocation9 + $0x2c] sm:$0xf]
        %v4816 = vld [vmem:[#allocation9 + $0x30] sm:$0x11]
        %v4817 = vld [vmem:[#allocation9 + $0x38] sm:$0x1]
        %s4818 = scalar_lea.vmem [#allocation15], 768
        %v4819 = vld [vmem:[%s4818] sm:$0xf]
        %v4820 = vld [vmem:[%s4818 + $0x4] sm:$0xf]
        %v4821 = vld [vmem:[%s4818 + $0x8] sm:$0xf]
        %v4822 = vld [vmem:[%s4818 + $0xc] sm:$0xf]
        %v4823 = vld [vmem:[%s4818 + $0x10] sm:$0xf]
        %v4824 = vld [vmem:[%s4818 + $0x14] sm:$0xf]
        %v4825 = vld [vmem:[%s4818 + $0x18] sm:$0xf]
        %v4826 = vld [vmem:[%s4818 + $0x1c] sm:$0xf]
        %v4827 = vld [vmem:[%s4818 + $0x20] sm:$0xf]
        %v4828 = vld [vmem:[%s4818 + $0x24] sm:$0xf]
        %v4829 = vld [vmem:[%s4818 + $0x28] sm:$0xf]
        %v4830 = vld [vmem:[%s4818 + $0x2c] sm:$0xf]
        %v4831 = vld [vmem:[%s4818 + $0x30] sm:$0xf]
        %v4832 = vld [vmem:[%s4818 + $0x34] sm:$0xf]
        %v4833 = vld [vmem:[%s4818 + $0x38] sm:$0xf]
        %v4834 = vld [vmem:[%s4818 + $0x3c] sm:$0xf]
        %v4835 = vld [vmem:[%s4818 + $0x40] sm:$0xf]
        %v4836 = vld [vmem:[%s4818 + $0x44] sm:$0xf]
        %v4837 = vld [vmem:[%s4818 + $0x48] sm:$0xf]
        %v4838 = vld [vmem:[%s4818 + $0x4c] sm:$0xf]
        %v4839 = vld [vmem:[%s4818 + $0x50] sm:$0xf]
        %v4840 = vld [vmem:[%s4818 + $0x54] sm:$0xf]
        %v4841 = vld [vmem:[%s4818 + $0x58] sm:$0xf]
        %v4842 = vld [vmem:[%s4818 + $0x5c] sm:$0xf]
        %v4843 = vld [vmem:[%s4818 + $0x60] sm:$0xf]
        %v4844 = vld [vmem:[%s4818 + $0x64] sm:$0xf]
        %v4845 = vld [vmem:[%s4818 + $0x68] sm:$0xf]
        %v4846 = vld [vmem:[%s4818 + $0x6c] sm:$0xf]
        %v4847 = vld [vmem:[%s4818 + $0x70] sm:$0xf]
        %v4848 = vld [vmem:[%s4818 + $0x74] sm:$0xf]
        %v4849 = vld [vmem:[%s4818 + $0x78] sm:$0xf]
        %v4850 = vld [vmem:[%s4818 + $0x7c] sm:$0xf]
        %v4851 = vld [vmem:[%s4818 + $0x80] sm:$0xf]
        %v4852 = vld [vmem:[%s4818 + $0x84] sm:$0xf]
        %v4853 = vld [vmem:[%s4818 + $0x88] sm:$0xf]
        %v4854 = vld [vmem:[%s4818 + $0x8c] sm:$0xf]
        %v4855 = vld [vmem:[%s4818 + $0x90] sm:$0xf]
        %v4856 = vld [vmem:[%s4818 + $0x94] sm:$0xf]
        %v4857 = vld [vmem:[%s4818 + $0x98] sm:$0xf]
        %v4858 = vld [vmem:[%s4818 + $0x9c] sm:$0xf]
        %v4859 = vld [vmem:[%s4818 + $0xa0] sm:$0xf]
        %v4860 = vld [vmem:[%s4818 + $0xa4] sm:$0xf]
        %v4861 = vld [vmem:[%s4818 + $0xa8] sm:$0xf]
        %v4862 = vld [vmem:[%s4818 + $0xac] sm:$0xf]
        %v4863 = vld [vmem:[%s4818 + $0xb0] sm:$0xf]
        %v4864 = vld [vmem:[%s4818 + $0xb4] sm:$0xf]
        %v4865 = vld [vmem:[%s4818 + $0xb8] sm:$0xf]
        %v4866 = vld [vmem:[%s4818 + $0xbc] sm:$0xf]
        %s4867 = scalar_lea.vmem %s4, 4
        %v4868 = vld [vmem:[%s4867] sm:$0x1]
        %v4870 = vlaneseq
        %v4871 = vshrl.u32 %v4870, 7
        %v4872 = vsub.s32 0, %v4871
        %v4873 = vrot.slane %v4868, %v4872
        %v4885 = vunpack.c.l.b16 %v4808
        %v4886 = vunpack.c.h.b16 %v4808
        %v4887 = vunpack.c.l.b16 %v4809
        %v4888 = vunpack.c.l.b16 %v4810
        %v4889 = vunpack.c.h.b16 %v4810
        %v4890 = vunpack.c.l.b16 %v4811
        %v4891 = vunpack.c.l.b16 %v4812
        %v4892 = vunpack.c.h.b16 %v4812
        %v4893 = vunpack.c.l.b16 %v4813
        %v4894 = vunpack.c.l.b16 %v4814
        %v4895 = vunpack.c.h.b16 %v4814
        %v4896 = vunpack.c.l.b16 %v4815
        %v4897 = vunpack.c.l.b16 %v4816
        %v4898 = vunpack.c.h.b16 %v4816
        %v4899 = vunpack.c.l.b16 %v4817
        %v4900 = vpack.c.b16 %v4888, %v4885
        %v4901 = vpack.c.b16 %v4889, %v4886
        %v4902 = vpack.c.b16 %v4890, %v4887
        %v4903 = vpack.c.b16 %v4894, %v4891
        %v4904 = vpack.c.b16 %v4895, %v4892
        %v4905 = vpack.c.b16 %v4896, %v4893
        %v4906 = vpack.c.b16 %v4897, %v4897
        %v4907 = vpack.c.b16 %v4898, %v4898
        %v4908 = vpack.c.b16 %v4899, %v4899
        %v4966 = vunpack.c.l.b16 %v4819
        %v4967 = vunpack.c.l.b16 %v4820
        %v4968 = vunpack.c.l.b16 %v4821
        %v4969 = vunpack.c.l.b16 %v4822
        %v4970 = vunpack.c.l.b16 %v4823
        %v4971 = vunpack.c.l.b16 %v4824
        %v4972 = vunpack.c.l.b16 %v4825
        %v4973 = vunpack.c.l.b16 %v4826
        %v4974 = vunpack.c.l.b16 %v4827
        %v4975 = vunpack.c.l.b16 %v4828
        %v4976 = vunpack.c.l.b16 %v4829
        %v4977 = vunpack.c.l.b16 %v4830
        %v4978 = vunpack.c.l.b16 %v4831
        %v4979 = vunpack.c.l.b16 %v4832
        %v4980 = vunpack.c.l.b16 %v4833
        %v4981 = vunpack.c.l.b16 %v4834
        %v4982 = vunpack.c.l.b16 %v4835
        %v4983 = vunpack.c.l.b16 %v4836
        %v4984 = vunpack.c.l.b16 %v4837
        %v4985 = vunpack.c.l.b16 %v4838
        %v4986 = vunpack.c.l.b16 %v4839
        %v4987 = vunpack.c.l.b16 %v4840
        %v4988 = vunpack.c.l.b16 %v4841
        %v4989 = vunpack.c.l.b16 %v4842
        %v4990 = vunpack.c.l.b16 %v4843
        %v4991 = vunpack.c.l.b16 %v4844
        %v4992 = vunpack.c.l.b16 %v4845
        %v4993 = vunpack.c.l.b16 %v4846
        %v4994 = vunpack.c.l.b16 %v4847
        %v4995 = vunpack.c.l.b16 %v4848
        %v4996 = vunpack.c.l.b16 %v4849
        %v4997 = vunpack.c.l.b16 %v4850
        %v4998 = vunpack.c.l.b16 %v4851
        %v4999 = vunpack.c.l.b16 %v4852
        %v5000 = vunpack.c.l.b16 %v4853
        %v5001 = vunpack.c.l.b16 %v4854
        %v5002 = vunpack.c.l.b16 %v4855
        %v5003 = vunpack.c.l.b16 %v4856
        %v5004 = vunpack.c.l.b16 %v4857
        %v5005 = vunpack.c.l.b16 %v4858
        %v5006 = vunpack.c.l.b16 %v4859
        %v5007 = vunpack.c.l.b16 %v4860
        %v5008 = vunpack.c.l.b16 %v4861
        %v5009 = vunpack.c.l.b16 %v4862
        %v5010 = vunpack.c.l.b16 %v4863
        %v5011 = vunpack.c.l.b16 %v4864
        %v5012 = vunpack.c.l.b16 %v4865
        %v5013 = vunpack.c.l.b16 %v4866
        %v5014 = vpack.c.b16 %v4967, %v4966
        %v5015 = vpack.c.b16 %v4969, %v4968
        %v5016 = vpack.c.b16 %v4971, %v4970
        %v5017 = vpack.c.b16 %v4973, %v4972
        %v5018 = vpack.c.b16 %v4975, %v4974
        %v5019 = vpack.c.b16 %v4977, %v4976
        %v5020 = vpack.c.b16 %v4979, %v4978
        %v5021 = vpack.c.b16 %v4981, %v4980
        %v5022 = vpack.c.b16 %v4983, %v4982
        %v5023 = vpack.c.b16 %v4985, %v4984
        %v5024 = vpack.c.b16 %v4987, %v4986
        %v5025 = vpack.c.b16 %v4989, %v4988
        %v5026 = vpack.c.b16 %v4991, %v4990
        %v5027 = vpack.c.b16 %v4993, %v4992
        %v5028 = vpack.c.b16 %v4995, %v4994
        %v5029 = vpack.c.b16 %v4997, %v4996
        %v5030 = vpack.c.b16 %v4999, %v4998
        %v5031 = vpack.c.b16 %v5001, %v5000
        %v5032 = vpack.c.b16 %v5003, %v5002
        %v5033 = vpack.c.b16 %v5005, %v5004
        %v5034 = vpack.c.b16 %v5007, %v5006
        %v5035 = vpack.c.b16 %v5009, %v5008
        %v5036 = vpack.c.b16 %v5011, %v5010
        %v5037 = vpack.c.b16 %v5013, %v5012
        %5062 = vmatprep.subr.bf16.mxu0 0
        %5063 = vmatpush1.bf16.msra.mxu0 %v5014
        %5064 = vmatprep.subr.bf16.mxu0 0
        %5065 = vmatpush1.bf16.msra.mxu0 %v5015
        %5066 = vmatprep.subr.bf16.mxu0 0
        %5067 = vmatpush1.bf16.msra.mxu0 %v5016
        %5068 = vmatprep.subr.bf16.mxu0 0
        %5069 = vmatpush1.bf16.msra.mxu0 %v5017
        %5070 = vmatprep.subr.bf16.mxu0 0
        %5071 = vmatpush1.bf16.msra.mxu0 %v5018
        %5072 = vmatprep.subr.bf16.mxu0 0
        %5073 = vmatpush1.bf16.msra.mxu0 %v5019
        %5074 = vmatprep.subr.bf16.mxu0 0
        %5075 = vmatpush1.bf16.msra.mxu0 %v5020
        %5076 = vmatprep.subr.bf16.mxu0 0
        %5077 = vmatpush1.bf16.msra.mxu0 %v5021
        %5078 = vmatprep.subr.bf16.mxu0 0
        %5079 = vmatpush1.bf16.msra.mxu0 %v5022
        %5080 = vmatprep.subr.bf16.mxu0 0
        %5081 = vmatpush1.bf16.msra.mxu0 %v5023
        %5082 = vmatprep.subr.bf16.mxu0 0
        %5083 = vmatpush1.bf16.msra.mxu0 %v5024
        %5084 = vmatprep.subr.bf16.mxu0 0
        %5085 = vmatpush1.bf16.msra.mxu0 %v5025
        %5086 = vmatprep.subr.bf16.mxu0 0
        %5087 = vmatpush1.bf16.msra.mxu0 %v5026
        %5088 = vmatprep.subr.bf16.mxu0 0
        %5089 = vmatpush1.bf16.msra.mxu0 %v5027
        %5090 = vmatprep.subr.bf16.mxu0 0
        %5091 = vmatpush1.bf16.msra.mxu0 %v5028
        %5092 = vmatprep.subr.bf16.mxu0 0
        %5093 = vmatpush1.bf16.msra.mxu0 %v5029
        %5094 = vmatprep.mubr.bf16.mxu0 %v4901
        %5095 = vmatmul.mubr.bf16.gmra.mrb[0].mxu0 %v4900
        %v5096 = vpop.f32.mrb[0].mxu0
        %v5097 = vadd.f32 %v4873, %v5096
        %v5098 = vpop.f32.mrb[0].mxu0
        %v5099 = vpop.f32.mrb[0].mxu0
        %v5100 = vadd.f32 %v4873, %v5099
        %v5101 = vpop.f32.mrb[0].mxu0
        %5102 = vmatprep.mubr.bf16.mxu0 %v4904
        %5103 = vmatmul.mubr.bf16.gmra.mrb[0].mxu0 %v4903
        %v5104 = vpop.f32.mrb[0].mxu0
        %v5105 = vadd.f32 %v4873, %v5104
        %v5106 = vpop.f32.mrb[0].mxu0
        %v5107 = vpop.f32.mrb[0].mxu0
        %v5108 = vadd.f32 %v4873, %v5107
        %v5109 = vpop.f32.mrb[0].mxu0
        %5110 = vmatprep.mubr.bf16.mxu0 %v4907
        %5111 = vmatmul.mubr.bf16.gmra.mrb[0].mxu0 %v4906
        %v5112 = vpop.f32.mrb[0].mxu0
        %v5113 = vadd.f32 %v4873, %v5112
        %v5114 = vpop.f32.mrb[0].mxu0
        %v5115 = vpop.f32.mrb[0].mxu0
        %v5116 = vpop.f32.mrb[0].mxu0
        %5117 = vdwg.mxu0
        %5118 = vmatprep.subr.bf16.mxu0 0
        %5119 = vmatpush1.bf16.msra.mxu0 %v5030
        %5120 = vmatprep.subr.bf16.mxu0 0
        %5121 = vmatpush1.bf16.msra.mxu0 %v5031
        %5122 = vmatprep.subr.bf16.mxu0 0
        %5123 = vmatpush1.bf16.msra.mxu0 %v5032
        %5124 = vmatprep.subr.bf16.mxu0 0
        %5125 = vmatpush1.bf16.msra.mxu0 %v5033
        %5126 = vmatprep.subr.bf16.mxu0 0
        %5127 = vmatpush1.bf16.msra.mxu0 %v5034
        %5128 = vmatprep.subr.bf16.mxu0 0
        %5129 = vmatpush1.bf16.msra.mxu0 %v5035
        %5130 = vmatprep.subr.bf16.mxu0 0
        %5131 = vmatpush1.bf16.msra.mxu0 %v5036
        %5132 = vmatprep.subr.bf16.mxu0 0
        %5133 = vmatpush1.bf16.msra.mxu0 %v5037
        %5134 = vmatprep.subr.bf16.mxu0 0
        %5135 = vmatpush1.bf16.msra.mxu0 0
        %5136 = vmatprep.subr.bf16.mxu0 0
        %5137 = vmatpush1.bf16.msra.mxu0 0
        %5138 = vmatprep.subr.bf16.mxu0 0
        %5139 = vmatpush1.bf16.msra.mxu0 0
        %5140 = vmatprep.subr.bf16.mxu0 0
        %5141 = vmatpush1.bf16.msra.mxu0 0
        %5142 = vmatprep.subr.bf16.mxu0 0
        %5143 = vmatpush1.bf16.msra.mxu0 0
        %5144 = vmatprep.subr.bf16.mxu0 0
        %5145 = vmatpush1.bf16.msra.mxu0 0
        %5146 = vmatprep.subr.bf16.mxu0 0
        %5147 = vmatpush1.bf16.msra.mxu0 0
        %5148 = vmatprep.subr.bf16.mxu0 0
        %5149 = vmatpush1.bf16.msra.mxu0 0
        %5150 = vmatprep.mubr.bf16.mxu0 0
        %5151 = vmatmul.mubr.bf16.gmra.mrb[0].mxu0 %v4902
        %v5152 = vpop.f32.mrb[0].mxu0
        %v5153 = vadd.f32 %v5097, %v5152
        %v5154 = vpop.f32.mrb[0].mxu0
        %v5155 = vpop.f32.mrb[0].mxu0
        %v5156 = vadd.f32 %v5100, %v5155
        %v5157 = vpop.f32.mrb[0].mxu0
        %5158 = vmatprep.mubr.bf16.mxu0 0
        %5159 = vmatmul.mubr.bf16.gmra.mrb[0].mxu0 %v4905
        %v5160 = vpop.f32.mrb[0].mxu0
        %v5161 = vadd.f32 %v5105, %v5160
        %v5162 = vpop.f32.mrb[0].mxu0
        %v5163 = vpop.f32.mrb[0].mxu0
        %v5164 = vadd.f32 %v5108, %v5163
        %v5165 = vpop.f32.mrb[0].mxu0
        %5166 = vmatprep.mubr.bf16.mxu0 0
        %5167 = vmatmul.mubr.bf16.gmra.mrb[0].mxu0 %v4908
        %v5168 = vpop.f32.mrb[0].mxu0
        %v5169 = vadd.f32 %v5113, %v5168
        %v5170 = vpop.f32.mrb[0].mxu0
        %v5171 = vpop.f32.mrb[0].mxu0
        %v5172 = vpop.f32.mrb[0].mxu0
        %5173 = vdwg.mxu0
        %v5174 = vmax.f32 %v5153, 0.0
        %v5175 = vmax.f32 %v5156, 0.0
        %v5176 = vmax.f32 %v5161, 0.0
        %v5177 = vmax.f32 %v5164, 0.0
        %v5178 = vmax.f32 %v5169, 0.0
        %5179 = vst [vmem:[#allocation8 + $0x1] sm:$0xff] %v5174
        %5180 = vst [vmem:[#allocation8 + $0x9] sm:$0xff] %v5175
        %5181 = vst [vmem:[#allocation8 + $0x11] sm:$0xff] %v5176
        %5182 = vst [vmem:[#allocation8 + $0x19] sm:$0xff] %v5177
        %5183 = vst [vmem:[#allocation8 + $0x21] sm:$0x3] %v5178
        %5184 = vst [vmem:[#allocation8 + $0x5] sm:$0x3] 0.0
        %5185 = vst [vmem:[#allocation8 + $0xb] sm:$0x3] 0.0
        %5186 = vst [vmem:[#allocation8 + $0x11] sm:$0x3] 0.0
        %5187 = vst [vmem:[#allocation8 + $0x17] sm:$0x3] 0.0
        %5188 = vst [vmem:[#allocation8 + $0x1d] sm:$0x3] 0.0
        %v5189 = vld [vmem:[#allocation8] sm:$0xff]
        %v5190 = vld [vmem:[#allocation8 + $0x8] sm:$0xff]
        %v5191 = vld [vmem:[#allocation8 + $0x10] sm:$0xff]
        %v5192 = vld [vmem:[#allocation8 + $0x18] sm:$0xff]
        %v5193 = vld [vmem:[#allocation8 + $0x20] sm:$0x3]
        %v5194 = vpack.c.bf16 %v5190, %v5189
        %v5195 = vpack.c.bf16 %v5192, %v5191
        %v5196 = vpack.c.bf16 %v5193, %v5193
        %v5200 = vunpack.c.l.b16 %v5194
        %v5201 = vunpack.c.h.b16 %v5194
        %v5202 = vunpack.c.l.b16 %v5195
        %v5203 = vunpack.c.h.b16 %v5195
        %v5204 = vunpack.c.l.b16 %v5196
        %v5205 = vpack.c.b16 %v5200, %v5200
        %v5206 = vpack.c.b16 %v5201, %v5201
        %v5207 = vpack.c.b16 %v5202, %v5202
        %v5208 = vpack.c.b16 %v5203, %v5203
        %v5209 = vpack.c.b16 %v5204, %v5204
        %5215 = vst [vmem:[#allocation9] sm:$0xf] %v5205
        %5216 = vst [vmem:[#allocation9 + $0xc] sm:$0xf] %v5206
        %5217 = vst [vmem:[#allocation9 + $0x18] sm:$0xf] %v5207
        %5218 = vst [vmem:[#allocation9 + $0x24] sm:$0xf] %v5208
        %5219 = vst [vmem:[#allocation9 + $0x30] sm:$0x1] %v5209
        %v5220 = vld [vmem:[#allocation8 + $0x1] sm:$0xff]
        %v5221 = vld [vmem:[#allocation8 + $0x9] sm:$0xff]
        %v5222 = vld [vmem:[#allocation8 + $0x11] sm:$0xff]
        %v5223 = vld [vmem:[#allocation8 + $0x19] sm:$0xff]
        %v5224 = vld [vmem:[#allocation8 + $0x21] sm:$0x3]
        %v5225 = vpack.c.bf16 %v5221, %v5220
        %v5226 = vpack.c.bf16 %v5223, %v5222
        %v5227 = vpack.c.bf16 %v5224, %v5224
        %v5231 = vunpack.c.l.b16 %v5225
        %v5232 = vunpack.c.h.b16 %v5225
        %v5233 = vunpack.c.l.b16 %v5226
        %v5234 = vunpack.c.h.b16 %v5226
        %v5235 = vunpack.c.l.b16 %v5227
        %v5236 = vpack.c.b16 %v5231, %v5231
        %v5237 = vpack.c.b16 %v5232, %v5232
        %v5238 = vpack.c.b16 %v5233, %v5233
        %v5239 = vpack.c.b16 %v5234, %v5234
        %v5240 = vpack.c.b16 %v5235, %v5235
        %5246 = vst [vmem:[#allocation9 + $0x4] sm:$0xf] %v5236
        %5247 = vst [vmem:[#allocation9 + $0x10] sm:$0xf] %v5237
        %5248 = vst [vmem:[#allocation9 + $0x1c] sm:$0xf] %v5238
        %5249 = vst [vmem:[#allocation9 + $0x28] sm:$0xf] %v5239
        %5250 = vst [vmem:[#allocation9 + $0x34] sm:$0x1] %v5240
        %v5251 = vld [vmem:[#allocation8 + $0x2] sm:$0xff]
        %v5252 = vld [vmem:[#allocation8 + $0xa] sm:$0xff]
        %v5253 = vld [vmem:[#allocation8 + $0x12] sm:$0xff]
        %v5254 = vld [vmem:[#allocation8 + $0x1a] sm:$0xff]
        %v5255 = vld [vmem:[#allocation8 + $0x22] sm:$0x3]
        %v5256 = vpack.c.bf16 %v5252, %v5251
        %v5257 = vpack.c.bf16 %v5254, %v5253
        %v5258 = vpack.c.bf16 %v5255, %v5255
        %v5262 = vunpack.c.l.b16 %v5256
        %v5263 = vunpack.c.h.b16 %v5256
        %v5264 = vunpack.c.l.b16 %v5257
        %v5265 = vunpack.c.h.b16 %v5257
        %v5266 = vunpack.c.l.b16 %v5258
        %v5267 = vpack.c.b16 %v5262, %v5262
        %v5268 = vpack.c.b16 %v5263, %v5263
        %v5269 = vpack.c.b16 %v5264, %v5264
        %v5270 = vpack.c.b16 %v5265, %v5265
        %v5271 = vpack.c.b16 %v5266, %v5266
        %5277 = vst [vmem:[#allocation9 + $0x8] sm:$0xf] %v5267
        %5278 = vst [vmem:[#allocation9 + $0x14] sm:$0xf] %v5268
        %5279 = vst [vmem:[#allocation9 + $0x20] sm:$0xf] %v5269
        %5280 = vst [vmem:[#allocation9 + $0x2c] sm:$0xf] %v5270
        %5281 = vst [vmem:[#allocation9 + $0x38] sm:$0x1] %v5271
        %v5282 = vld [vmem:[#allocation9] sm:$0xff]
        %v5283 = vld [vmem:[#allocation9 + $0x8] sm:$0xf]
        %v5284 = vld [vmem:[#allocation9 + $0xc] sm:$0xff]
        %v5285 = vld [vmem:[#allocation9 + $0x14] sm:$0xf]
        %v5286 = vld [vmem:[#allocation9 + $0x18] sm:$0xff]
        %v5287 = vld [vmem:[#allocation9 + $0x20] sm:$0xf]
        %v5288 = vld [vmem:[#allocation9 + $0x24] sm:$0xff]
        %v5289 = vld [vmem:[#allocation9 + $0x2c] sm:$0xf]
        %v5290 = vld [vmem:[#allocation9 + $0x30] sm:$0x11]
        %v5291 = vld [vmem:[#allocation9 + $0x38] sm:$0x1]
        %s5292 = scalar_lea.vmem [#allocation15], 960
        %v5293 = vld [vmem:[%s5292] sm:$0xf]
        %v5294 = vld [vmem:[%s5292 + $0x4] sm:$0xf]
        %v5295 = vld [vmem:[%s5292 + $0x8] sm:$0xf]
        %v5296 = vld [vmem:[%s5292 + $0xc] sm:$0xf]
        %v5297 = vld [vmem:[%s5292 + $0x10] sm:$0xf]
        %v5298 = vld [vmem:[%s5292 + $0x14] sm:$0xf]
        %v5299 = vld [vmem:[%s5292 + $0x18] sm:$0xf]
        %v5300 = vld [vmem:[%s5292 + $0x1c] sm:$0xf]
        %v5301 = vld [vmem:[%s5292 + $0x20] sm:$0xf]
        %v5302 = vld [vmem:[%s5292 + $0x24] sm:$0xf]
        %v5303 = vld [vmem:[%s5292 + $0x28] sm:$0xf]
        %v5304 = vld [vmem:[%s5292 + $0x2c] sm:$0xf]
        %v5305 = vld [vmem:[%s5292 + $0x30] sm:$0xf]
        %v5306 = vld [vmem:[%s5292 + $0x34] sm:$0xf]
        %v5307 = vld [vmem:[%s5292 + $0x38] sm:$0xf]
        %v5308 = vld [vmem:[%s5292 + $0x3c] sm:$0xf]
        %v5309 = vld [vmem:[%s5292 + $0x40] sm:$0xf]
        %v5310 = vld [vmem:[%s5292 + $0x44] sm:$0xf]
        %v5311 = vld [vmem:[%s5292 + $0x48] sm:$0xf]
        %v5312 = vld [vmem:[%s5292 + $0x4c] sm:$0xf]
        %v5313 = vld [vmem:[%s5292 + $0x50] sm:$0xf]
        %v5314 = vld [vmem:[%s5292 + $0x54] sm:$0xf]
        %v5315 = vld [vmem:[%s5292 + $0x58] sm:$0xf]
        %v5316 = vld [vmem:[%s5292 + $0x5c] sm:$0xf]
        %v5317 = vld [vmem:[%s5292 + $0x60] sm:$0xf]
        %v5318 = vld [vmem:[%s5292 + $0x64] sm:$0xf]
        %v5319 = vld [vmem:[%s5292 + $0x68] sm:$0xf]
        %v5320 = vld [vmem:[%s5292 + $0x6c] sm:$0xf]
        %v5321 = vld [vmem:[%s5292 + $0x70] sm:$0xf]
        %v5322 = vld [vmem:[%s5292 + $0x74] sm:$0xf]
        %v5323 = vld [vmem:[%s5292 + $0x78] sm:$0xf]
        %v5324 = vld [vmem:[%s5292 + $0x7c] sm:$0xf]
        %v5325 = vld [vmem:[%s5292 + $0x80] sm:$0xf]
        %v5326 = vld [vmem:[%s5292 + $0x84] sm:$0xf]
        %v5327 = vld [vmem:[%s5292 + $0x88] sm:$0xf]
        %v5328 = vld [vmem:[%s5292 + $0x8c] sm:$0xf]
        %v5329 = vld [vmem:[%s5292 + $0x90] sm:$0xf]
        %v5330 = vld [vmem:[%s5292 + $0x94] sm:$0xf]
        %v5331 = vld [vmem:[%s5292 + $0x98] sm:$0xf]
        %v5332 = vld [vmem:[%s5292 + $0x9c] sm:$0xf]
        %v5333 = vld [vmem:[%s5292 + $0xa0] sm:$0xf]
        %v5334 = vld [vmem:[%s5292 + $0xa4] sm:$0xf]
        %v5335 = vld [vmem:[%s5292 + $0xa8] sm:$0xf]
        %v5336 = vld [vmem:[%s5292 + $0xac] sm:$0xf]
        %v5337 = vld [vmem:[%s5292 + $0xb0] sm:$0xf]
        %v5338 = vld [vmem:[%s5292 + $0xb4] sm:$0xf]
        %v5339 = vld [vmem:[%s5292 + $0xb8] sm:$0xf]
        %v5340 = vld [vmem:[%s5292 + $0xbc] sm:$0xf]
        %s5341 = scalar_lea.vmem %s4, 5
        %v5342 = vld [vmem:[%s5341] sm:$0x1]
        %v5344 = vlaneseq
        %v5345 = vshrl.u32 %v5344, 7
        %v5346 = vsub.s32 0, %v5345
        %v5347 = vrot.slane %v5342, %v5346
        %v5359 = vunpack.c.l.b16 %v5282
        %v5360 = vunpack.c.h.b16 %v5282
        %v5361 = vunpack.c.l.b16 %v5283
        %v5362 = vunpack.c.l.b16 %v5284
        %v5363 = vunpack.c.h.b16 %v5284
        %v5364 = vunpack.c.l.b16 %v5285
        %v5365 = vunpack.c.l.b16 %v5286
        %v5366 = vunpack.c.h.b16 %v5286
        %v5367 = vunpack.c.l.b16 %v5287
        %v5368 = vunpack.c.l.b16 %v5288
        %v5369 = vunpack.c.h.b16 %v5288
        %v5370 = vunpack.c.l.b16 %v5289
        %v5371 = vunpack.c.l.b16 %v5290
        %v5372 = vunpack.c.h.b16 %v5290
        %v5373 = vunpack.c.l.b16 %v5291
        %v5374 = vpack.c.b16 %v5362, %v5359
        %v5375 = vpack.c.b16 %v5363, %v5360
        %v5376 = vpack.c.b16 %v5364, %v5361
        %v5377 = vpack.c.b16 %v5368, %v5365
        %v5378 = vpack.c.b16 %v5369, %v5366
        %v5379 = vpack.c.b16 %v5370, %v5367
        %v5380 = vpack.c.b16 %v5371, %v5371
        %v5381 = vpack.c.b16 %v5372, %v5372
        %v5382 = vpack.c.b16 %v5373, %v5373
        %v5440 = vunpack.c.l.b16 %v5293
        %v5441 = vunpack.c.l.b16 %v5294
        %v5442 = vunpack.c.l.b16 %v5295
        %v5443 = vunpack.c.l.b16 %v5296
        %v5444 = vunpack.c.l.b16 %v5297
        %v5445 = vunpack.c.l.b16 %v5298
        %v5446 = vunpack.c.l.b16 %v5299
        %v5447 = vunpack.c.l.b16 %v5300
        %v5448 = vunpack.c.l.b16 %v5301
        %v5449 = vunpack.c.l.b16 %v5302
        %v5450 = vunpack.c.l.b16 %v5303
        %v5451 = vunpack.c.l.b16 %v5304
        %v5452 = vunpack.c.l.b16 %v5305
        %v5453 = vunpack.c.l.b16 %v5306
        %v5454 = vunpack.c.l.b16 %v5307
        %v5455 = vunpack.c.l.b16 %v5308
        %v5456 = vunpack.c.l.b16 %v5309
        %v5457 = vunpack.c.l.b16 %v5310
        %v5458 = vunpack.c.l.b16 %v5311
        %v5459 = vunpack.c.l.b16 %v5312
        %v5460 = vunpack.c.l.b16 %v5313
        %v5461 = vunpack.c.l.b16 %v5314
        %v5462 = vunpack.c.l.b16 %v5315
        %v5463 = vunpack.c.l.b16 %v5316
        %v5464 = vunpack.c.l.b16 %v5317
        %v5465 = vunpack.c.l.b16 %v5318
        %v5466 = vunpack.c.l.b16 %v5319
        %v5467 = vunpack.c.l.b16 %v5320
        %v5468 = vunpack.c.l.b16 %v5321
        %v5469 = vunpack.c.l.b16 %v5322
        %v5470 = vunpack.c.l.b16 %v5323
        %v5471 = vunpack.c.l.b16 %v5324
        %v5472 = vunpack.c.l.b16 %v5325
        %v5473 = vunpack.c.l.b16 %v5326
        %v5474 = vunpack.c.l.b16 %v5327
        %v5475 = vunpack.c.l.b16 %v5328
        %v5476 = vunpack.c.l.b16 %v5329
        %v5477 = vunpack.c.l.b16 %v5330
        %v5478 = vunpack.c.l.b16 %v5331
        %v5479 = vunpack.c.l.b16 %v5332
        %v5480 = vunpack.c.l.b16 %v5333
        %v5481 = vunpack.c.l.b16 %v5334
        %v5482 = vunpack.c.l.b16 %v5335
        %v5483 = vunpack.c.l.b16 %v5336
        %v5484 = vunpack.c.l.b16 %v5337
        %v5485 = vunpack.c.l.b16 %v5338
        %v5486 = vunpack.c.l.b16 %v5339
        %v5487 = vunpack.c.l.b16 %v5340
        %v5488 = vpack.c.b16 %v5441, %v5440
        %v5489 = vpack.c.b16 %v5443, %v5442
        %v5490 = vpack.c.b16 %v5445, %v5444
        %v5491 = vpack.c.b16 %v5447, %v5446
        %v5492 = vpack.c.b16 %v5449, %v5448
        %v5493 = vpack.c.b16 %v5451, %v5450
        %v5494 = vpack.c.b16 %v5453, %v5452
        %v5495 = vpack.c.b16 %v5455, %v5454
        %v5496 = vpack.c.b16 %v5457, %v5456
        %v5497 = vpack.c.b16 %v5459, %v5458
        %v5498 = vpack.c.b16 %v5461, %v5460
        %v5499 = vpack.c.b16 %v5463, %v5462
        %v5500 = vpack.c.b16 %v5465, %v5464
        %v5501 = vpack.c.b16 %v5467, %v5466
        %v5502 = vpack.c.b16 %v5469, %v5468
        %v5503 = vpack.c.b16 %v5471, %v5470
        %v5504 = vpack.c.b16 %v5473, %v5472
        %v5505 = vpack.c.b16 %v5475, %v5474
        %v5506 = vpack.c.b16 %v5477, %v5476
        %v5507 = vpack.c.b16 %v5479, %v5478
        %v5508 = vpack.c.b16 %v5481, %v5480
        %v5509 = vpack.c.b16 %v5483, %v5482
        %v5510 = vpack.c.b16 %v5485, %v5484
        %v5511 = vpack.c.b16 %v5487, %v5486
        %5536 = vmatprep.subr.bf16.mxu0 0
        %5537 = vmatpush1.bf16.msra.mxu0 %v5488
        %5538 = vmatprep.subr.bf16.mxu0 0
        %5539 = vmatpush1.bf16.msra.mxu0 %v5489
        %5540 = vmatprep.subr.bf16.mxu0 0
        %5541 = vmatpush1.bf16.msra.mxu0 %v5490
        %5542 = vmatprep.subr.bf16.mxu0 0
        %5543 = vmatpush1.bf16.msra.mxu0 %v5491
        %5544 = vmatprep.subr.bf16.mxu0 0
        %5545 = vmatpush1.bf16.msra.mxu0 %v5492
        %5546 = vmatprep.subr.bf16.mxu0 0
        %5547 = vmatpush1.bf16.msra.mxu0 %v5493
        %5548 = vmatprep.subr.bf16.mxu0 0
        %5549 = vmatpush1.bf16.msra.mxu0 %v5494
        %5550 = vmatprep.subr.bf16.mxu0 0
        %5551 = vmatpush1.bf16.msra.mxu0 %v5495
        %5552 = vmatprep.subr.bf16.mxu0 0
        %5553 = vmatpush1.bf16.msra.mxu0 %v5496
        %5554 = vmatprep.subr.bf16.mxu0 0
        %5555 = vmatpush1.bf16.msra.mxu0 %v5497
        %5556 = vmatprep.subr.bf16.mxu0 0
        %5557 = vmatpush1.bf16.msra.mxu0 %v5498
        %5558 = vmatprep.subr.bf16.mxu0 0
        %5559 = vmatpush1.bf16.msra.mxu0 %v5499
        %5560 = vmatprep.subr.bf16.mxu0 0
        %5561 = vmatpush1.bf16.msra.mxu0 %v5500
        %5562 = vmatprep.subr.bf16.mxu0 0
        %5563 = vmatpush1.bf16.msra.mxu0 %v5501
        %5564 = vmatprep.subr.bf16.mxu0 0
        %5565 = vmatpush1.bf16.msra.mxu0 %v5502
        %5566 = vmatprep.subr.bf16.mxu0 0
        %5567 = vmatpush1.bf16.msra.mxu0 %v5503
        %5568 = vmatprep.mubr.bf16.mxu0 %v5375
        %5569 = vmatmul.mubr.bf16.gmra.mrb[0].mxu0 %v5374
        %v5570 = vpop.f32.mrb[0].mxu0
        %v5571 = vadd.f32 %v5347, %v5570
        %v5572 = vpop.f32.mrb[0].mxu0
        %v5573 = vpop.f32.mrb[0].mxu0
        %v5574 = vadd.f32 %v5347, %v5573
        %v5575 = vpop.f32.mrb[0].mxu0
        %5576 = vmatprep.mubr.bf16.mxu0 %v5378
        %5577 = vmatmul.mubr.bf16.gmra.mrb[0].mxu0 %v5377
        %v5578 = vpop.f32.mrb[0].mxu0
        %v5579 = vadd.f32 %v5347, %v5578
        %v5580 = vpop.f32.mrb[0].mxu0
        %v5581 = vpop.f32.mrb[0].mxu0
        %v5582 = vadd.f32 %v5347, %v5581
        %v5583 = vpop.f32.mrb[0].mxu0
        %5584 = vmatprep.mubr.bf16.mxu0 %v5381
        %5585 = vmatmul.mubr.bf16.gmra.mrb[0].mxu0 %v5380
        %v5586 = vpop.f32.mrb[0].mxu0
        %v5587 = vadd.f32 %v5347, %v5586
        %v5588 = vpop.f32.mrb[0].mxu0
        %v5589 = vpop.f32.mrb[0].mxu0
        %v5590 = vpop.f32.mrb[0].mxu0
        %5591 = vdwg.mxu0
        %5592 = vmatprep.subr.bf16.mxu0 0
        %5593 = vmatpush1.bf16.msra.mxu0 %v5504
        %5594 = vmatprep.subr.bf16.mxu0 0
        %5595 = vmatpush1.bf16.msra.mxu0 %v5505
        %5596 = vmatprep.subr.bf16.mxu0 0
        %5597 = vmatpush1.bf16.msra.mxu0 %v5506
        %5598 = vmatprep.subr.bf16.mxu0 0
        %5599 = vmatpush1.bf16.msra.mxu0 %v5507
        %5600 = vmatprep.subr.bf16.mxu0 0
        %5601 = vmatpush1.bf16.msra.mxu0 %v5508
        %5602 = vmatprep.subr.bf16.mxu0 0
        %5603 = vmatpush1.bf16.msra.mxu0 %v5509
        %5604 = vmatprep.subr.bf16.mxu0 0
        %5605 = vmatpush1.bf16.msra.mxu0 %v5510
        %5606 = vmatprep.subr.bf16.mxu0 0
        %5607 = vmatpush1.bf16.msra.mxu0 %v5511
        %5608 = vmatprep.subr.bf16.mxu0 0
        %5609 = vmatpush1.bf16.msra.mxu0 0
        %5610 = vmatprep.subr.bf16.mxu0 0
        %5611 = vmatpush1.bf16.msra.mxu0 0
        %5612 = vmatprep.subr.bf16.mxu0 0
        %5613 = vmatpush1.bf16.msra.mxu0 0
        %5614 = vmatprep.subr.bf16.mxu0 0
        %5615 = vmatpush1.bf16.msra.mxu0 0
        %5616 = vmatprep.subr.bf16.mxu0 0
        %5617 = vmatpush1.bf16.msra.mxu0 0
        %5618 = vmatprep.subr.bf16.mxu0 0
        %5619 = vmatpush1.bf16.msra.mxu0 0
        %5620 = vmatprep.subr.bf16.mxu0 0
        %5621 = vmatpush1.bf16.msra.mxu0 0
        %5622 = vmatprep.subr.bf16.mxu0 0
        %5623 = vmatpush1.bf16.msra.mxu0 0
        %5624 = vmatprep.mubr.bf16.mxu0 0
        %5625 = vmatmul.mubr.bf16.gmra.mrb[0].mxu0 %v5376
        %v5626 = vpop.f32.mrb[0].mxu0
        %v5627 = vadd.f32 %v5571, %v5626
        %v5628 = vpop.f32.mrb[0].mxu0
        %v5629 = vpop.f32.mrb[0].mxu0
        %v5630 = vadd.f32 %v5574, %v5629
        %v5631 = vpop.f32.mrb[0].mxu0
        %5632 = vmatprep.mubr.bf16.mxu0 0
        %5633 = vmatmul.mubr.bf16.gmra.mrb[0].mxu0 %v5379
        %v5634 = vpop.f32.mrb[0].mxu0
        %v5635 = vadd.f32 %v5579, %v5634
        %v5636 = vpop.f32.mrb[0].mxu0
        %v5637 = vpop.f32.mrb[0].mxu0
        %v5638 = vadd.f32 %v5582, %v5637
        %v5639 = vpop.f32.mrb[0].mxu0
        %5640 = vmatprep.mubr.bf16.mxu0 0
        %5641 = vmatmul.mubr.bf16.gmra.mrb[0].mxu0 %v5382
        %v5642 = vpop.f32.mrb[0].mxu0
        %v5643 = vadd.f32 %v5587, %v5642
        %v5644 = vpop.f32.mrb[0].mxu0
        %v5645 = vpop.f32.mrb[0].mxu0
        %v5646 = vpop.f32.mrb[0].mxu0
        %5647 = vdwg.mxu0
        %v5648 = vmax.f32 %v5627, 0.0
        %v5649 = vmax.f32 %v5630, 0.0
        %v5650 = vmax.f32 %v5635, 0.0
        %v5651 = vmax.f32 %v5638, 0.0
        %v5652 = vmax.f32 %v5643, 0.0
        %5653 = vst [vmem:[#allocation7 + $0x1] sm:$0xff] %v5648
        %5654 = vst [vmem:[#allocation7 + $0x9] sm:$0xff] %v5649
        %5655 = vst [vmem:[#allocation7 + $0x11] sm:$0xff] %v5650
        %5656 = vst [vmem:[#allocation7 + $0x19] sm:$0xff] %v5651
        %5657 = vst [vmem:[#allocation7 + $0x21] sm:$0x3] %v5652
        %5658 = vst [vmem:[#allocation7 + $0x5] sm:$0x3] 0.0
        %5659 = vst [vmem:[#allocation7 + $0xb] sm:$0x3] 0.0
        %5660 = vst [vmem:[#allocation7 + $0x11] sm:$0x3] 0.0
        %5661 = vst [vmem:[#allocation7 + $0x17] sm:$0x3] 0.0
        %5662 = vst [vmem:[#allocation7 + $0x1d] sm:$0x3] 0.0
        %v5663 = vld [vmem:[#allocation7] sm:$0xff]
        %v5664 = vld [vmem:[#allocation7 + $0x8] sm:$0xff]
        %v5665 = vld [vmem:[#allocation7 + $0x10] sm:$0x3]
        %v5666 = vadd.f32 %v5663, %v5664
        %vm5667 = vcmask 1041408
        %v5668 = vsel %vm5667, %v5665, 0.0
        %v5669 = vadd.f32 %v5666, %v5668
        %v5670 = vrot.slane %v5669, 4
        %v5671 = vadd.f32 %v5669, %v5670
        %v5672 = vrot.slane %v5671, 2
        %v5673 = vadd.f32 %v5671, %v5672
        %v5674 = vrot.slane %v5673, 1
        %v5675 = vadd.f32 %v5673, %v5674
        %v5676 = vld [vmem:[#allocation7 + $0x12] sm:$0xff]
        %v5677 = vld [vmem:[#allocation7 + $0x1a] sm:$0xff]
        %v5678 = vld [vmem:[#allocation7 + $0x22] sm:$0x3]
        %v5679 = vadd.f32 %v5676, %v5677
        %v5680 = vsel %vm5667, %v5678, 0.0
        %v5681 = vadd.f32 %v5679, %v5680
        %v5682 = vrot.slane %v5681, 4
        %v5683 = vadd.f32 %v5681, %v5682
        %v5684 = vrot.slane %v5683, 2
        %v5685 = vadd.f32 %v5683, %v5684
        %v5686 = vrot.slane %v5685, 1
        %v5687 = vadd.f32 %v5685, %v5686
        %vm5688 = vcmask 1040384
        %v5689 = vsel %vm5688, %v5675, %v5687
        %v5690 = vld [vmem:[#allocation18] sm:$0xff]
        %v5691 = vld [vmem:[#allocation18 + $0x8] sm:$0xff]
        %v5692 = vld [vmem:[#allocation18 + $0x10] sm:$0xff]
        %v5693 = vld [vmem:[#allocation18 + $0x18] sm:$0xff]
        %v5694 = vld [vmem:[#allocation18 + $0x20] sm:$0xff]
        %v5695 = vld [vmem:[#allocation18 + $0x28] sm:$0xff]
        %v5696 = vld [vmem:[#allocation18 + $0x30] sm:$0xff]
        %v5697 = vld [vmem:[#allocation18 + $0x38] sm:$0xff]
        %v5698 = vld [vmem:[#allocation18 + $0x40] sm:$0xff]
        %v5699 = vld [vmem:[#allocation18 + $0x48] sm:$0xff]
        %v5700 = vld [vmem:[#allocation18 + $0x50] sm:$0xff]
        %v5701 = vld [vmem:[#allocation18 + $0x58] sm:$0xff]
        %v5702 = vld [vmem:[#allocation18 + $0x60] sm:$0xff]
        %v5703 = vld [vmem:[#allocation18 + $0x68] sm:$0xff]
        %v5704 = vld [vmem:[#allocation18 + $0x70] sm:$0xff]
        %v5705 = vld [vmem:[#allocation18 + $0x78] sm:$0xff]
        %v5706 = vld [vmem:[%s8] sm:$0x1]
        %v5708 = vlaneseq
        %v5709 = vshrl.u32 %v5708, 7
        %v5710 = vsub.s32 0, %v5709
        %v5711 = vrot.slane %v5706, %v5710
        %5713 = vmatprep.subr.mxu0 0.0
        %5714 = vmatpush1.msra.mxu0 %v5690
        %5715 = vmatprep.subr.mxu0 0.0
        %5716 = vmatpush1.msra.mxu0 %v5691
        %5717 = vmatprep.subr.mxu0 0.0
        %5718 = vmatpush1.msra.mxu0 %v5692
        %5719 = vmatprep.subr.mxu0 0.0
        %5720 = vmatpush1.msra.mxu0 %v5693
        %5721 = vmatprep.subr.mxu0 0.0
        %5722 = vmatpush1.msra.mxu0 %v5694
        %5723 = vmatprep.subr.mxu0 0.0
        %5724 = vmatpush1.msra.mxu0 %v5695
        %5725 = vmatprep.subr.mxu0 0.0
        %5726 = vmatpush1.msra.mxu0 %v5696
        %5727 = vmatprep.subr.mxu0 0.0
        %5728 = vmatpush1.msra.mxu0 %v5697
        %5729 = vmatprep.subr.mxu0 0.0
        %5730 = vmatpush1.msra.mxu0 %v5698
        %5731 = vmatprep.subr.mxu0 0.0
        %5732 = vmatpush1.msra.mxu0 %v5699
        %5733 = vmatprep.subr.mxu0 0.0
        %5734 = vmatpush1.msra.mxu0 %v5700
        %5735 = vmatprep.subr.mxu0 0.0
        %5736 = vmatpush1.msra.mxu0 %v5701
        %5737 = vmatprep.subr.mxu0 0.0
        %5738 = vmatpush1.msra.mxu0 %v5702
        %5739 = vmatprep.subr.mxu0 0.0
        %5740 = vmatpush1.msra.mxu0 %v5703
        %5741 = vmatprep.subr.mxu0 0.0
        %5742 = vmatpush1.msra.mxu0 %v5704
        %5743 = vmatprep.subr.mxu0 0.0
        %5744 = vmatpush1.msra.mxu0 %v5705
        %5745 = vmatprep.subr.mxu0 0.0
        %5746 = vmatpush1.msra.mxu0 0.0
        %5747 = vmatprep.subr.mxu0 0.0
        %5748 = vmatpush1.msra.mxu0 0.0
        %5749 = vmatprep.subr.mxu0 0.0
        %5750 = vmatpush1.msra.mxu0 0.0
        %5751 = vmatprep.subr.mxu0 0.0
        %5752 = vmatpush1.msra.mxu0 0.0
        %5753 = vmatprep.subr.mxu0 0.0
        %5754 = vmatpush1.msra.mxu0 0.0
        %5755 = vmatprep.subr.mxu0 0.0
        %5756 = vmatpush1.msra.mxu0 0.0
        %5757 = vmatprep.subr.mxu0 0.0
        %5758 = vmatpush1.msra.mxu0 0.0
        %5759 = vmatprep.subr.mxu0 0.0
        %5760 = vmatpush1.msra.mxu0 0.0
        %5761 = vmatprep.subr.mxu0 0.0
        %5762 = vmatpush1.msra.mxu0 0.0
        %5763 = vmatprep.subr.mxu0 0.0
        %5764 = vmatpush1.msra.mxu0 0.0
        %5765 = vmatprep.subr.mxu0 0.0
        %5766 = vmatpush1.msra.mxu0 0.0
        %5767 = vmatprep.subr.mxu0 0.0
        %5768 = vmatpush1.msra.mxu0 0.0
        %5769 = vmatprep.subr.mxu0 0.0
        %5770 = vmatpush1.msra.mxu0 0.0
        %5771 = vmatprep.subr.mxu0 0.0
        %5772 = vmatpush1.msra.mxu0 0.0
        %5773 = vmatprep.subr.mxu0 0.0
        %5774 = vmatpush1.msra.mxu0 0.0
        %5775 = vmatprep.subr.mxu0 0.0
        %5776 = vmatpush1.msra.mxu0 0.0
        %5777 = vmatprep.mubr.f32.mxu0 0.0
        %5778 = vmatmul.mubr.f32.gmra.mrb[0].mxu0 %v5689
        %v5779 = vpop.f32.mrb[0].mxu0
        %v5780 = vadd.f32 %v5711, %v5779
        %v5781 = vpop.f32.mrb[0].mxu0
        %5782 = vdwg.mxu0
        %v5783 = vtanh.pop %v5780
        %vm5784 = vcmask 58368
        %5785 = vst.msk [vmem:[%s409] sm:$0x3] %vm5784, %v5783
        %s5786 = sand.u32 %s230, 1
        %s5787 = scalar_lea.sflag [#allocation12], %s5786
        %s5788 = sand.u32 %s230, 1
        %s5789 = smul.addr %s5788, 2
        %s5790 = scalar_lea.vmem [#allocation19], %s5789
        // Predicated region
        $region77: #{encoder_forward.1} parent=55 // pred_check
          %p5791 = pneg %p240
        $region78: #{encoder_forward.1} parent=55 // pred_check_branch
          %5793 = sbr.rel (%p5791) target = $region80
        $region79: #{encoder_forward.1} parent=55 // pred_region
          %s5795 = ssub.s32 32, 32
          %5796 = vsyncadd %s5787, %s5795
          %s5797 = smul.addr %s28, 32
          %s5798 = scalar_lea.hbm %s9, %s5797
          %s5800 = sshll.u32 %s5790, 4
          %s5801 = int_to_ptr.vmem [resolvable:$true] %s5800
          %5803 = dma.vmem_to_hbm [thread:$0]  %s5801, 32, %s5798, %s5787
        $region80: #{encoder_forward.1} parent=55 // pred_fallthru
          _
      $region56: #{encoder_forward.1} parent=5 // pred_fallthru
        _
      %p5804 = scmp.le.s32.totalorder 2, %s23
      // Predicated region
      $region81: #{encoder_forward.1} parent=5 // pred_check
        %p5805 = pneg %p5804
      $region82: #{encoder_forward.1} parent=5 // pred_check_branch
        %5807 = sbr.rel (%p5805) target = $region84
      $region83: #{encoder_forward.1} parent=5 // pred_region
        %s5808 = ssub.s32 %s23, 2
        // Predicated region
        $region85: #{encoder_forward.1} parent=83 // pred_check
          %p5809 = pneg %p246
        $region86: #{encoder_forward.1} parent=83 // pred_check_branch
          %5811 = sbr.rel (%p5809) target = $region88
        $region87: #{encoder_forward.1} parent=83 // pred_region
          %s5812 = sand.u32 %s231, 1
          %s5813 = scalar_lea.sflag [#allocation12], %s5812
          %s5814 = sand.u32 %s231, 1
          %s5815 = smul.addr %s5814, 2
          %s5816 = scalar_lea.vmem [#allocation19], %s5815
          %5817 = dma.done %s5813, 32
        $region88: #{encoder_forward.1} parent=83 // pred_fallthru
          _
      $region84: #{encoder_forward.1} parent=5 // pred_fallthru
        _
    $region6: #{encoder_forward.1} parent=1 // loop_footer
      %s27 = sadd.s32 1, %s23
    $region7: #{encoder_forward.1} parent=1 // loop_footer_branch
      %22 = sbr.rel target = $region3
    $region8: #{encoder_forward.1} parent=1 // loop_exit
      _
    %5818 = vsyncpa [#allocation11], 1
    %s5819 = scalar_lea.sflag [#allocation11], 1
    %5820 = vsyncpa %s5819, 1
    %5821 = vsyncpa [#allocation14], 1
    %5822 = vsyncpa [#allocation17], 1
    %5823 = vsyncpa [#allocation12], 1
    %s5824 = scalar_lea.sflag [#allocation12], 1
    %5825 = vsyncpa %s5824, 1

</llo_original>
